<compile_context>
chip_gen: v6e
topology: v6e:2x2x1
jax: 0.10.0
libtpu: 0.0.40
codegen_flags: <defaults>
</compile_context>

<pallas_src>
import functools
import math

import jax
import jax.numpy as jnp
from jax.experimental import pallas as pl
from jax.experimental.pallas import tpu as pltpu

INPUT_DIM = 64
HIDDEN_DIM = 256
OUT_DIM = 2


def _round_up(n, m):
    return ((n + m - 1) // m) * m


def _erf_poly(z):
    # Abramowitz & Stegun 7.1.26 (max abs error ~1.5e-7).  Only mul/add/div/exp/
    # where, so it lowers on every TPU generation regardless of lax.erf support.
    a1, a2, a3, a4, a5 = (0.254829592, -0.284496736, 1.421413741,
                          -1.453152027, 1.061405429)
    p = 0.3275911
    az = jnp.abs(z)
    t = 1.0 / (1.0 + p * az)
    poly = ((((a5 * t + a4) * t + a3) * t + a2) * t + a1) * t
    y = 1.0 - poly * jnp.exp(-az * az)
    return jnp.where(z >= 0.0, y, -y)


def _gelu_exact(x):
    # PyTorch F.gelu default = exact erf-based GELU (to ~1e-7 abs).
    return 0.5 * x * (1.0 + _erf_poly(x * (1.0 / math.sqrt(2.0))))


def _gelu_tanh(x):
    # tanh approximation: the transcendental runs on the EUP (its own VLIW slot)
    # instead of a long VPU polynomial.  Opt-in perf mode; not bit-matching F.gelu.
    c = math.sqrt(2.0 / math.pi)
    return 0.5 * x * (1.0 + jnp.tanh(c * (x + 0.044715 * x * x * x)))


def mlp_kernel(xt_ref, w1_ref, b1_ref, w2_ref, b2_ref, w3t_ref, b3_ref, o_ref, *, gelu):
    # Matmul operand dtype is inferred from the (prepared) weights: f32 (exact
    # parity mode) or bf16 (perf mode).  Accumulation is always f32.
    mm_dtype = w1_ref.dtype

    xt = xt_ref[...].astype(mm_dtype)                                   # [64, bb]

    # fc1: [256, 64] @ [64, bb] -> [256, bb]   (K=64 underfill accepted, ~14% of MACs)
    h1 = gelu(jnp.dot(w1_ref[...], xt,
                      preferred_element_type=jnp.float32) + b1_ref[...])  # f32 [256, bb]

    # fc2: [256, 256] @ [256, bb] -> [256, bb]  (dominant matmul)
    h2 = gelu(jnp.dot(w2_ref[...], h1.astype(mm_dtype),
                      preferred_element_type=jnp.float32) + b2_ref[...])  # f32 [256, bb]

    # out_layer (256 -> 2) off the MXU: VPU broadcast-multiply + XLU sublane
    # reduce per class, directly in the lane-dense [2, bb] output layout.
    cols = []
    for c in range(OUT_DIM):
        wc = w3t_ref[:, c:c + 1]                                         # f32 [256, 1]
        cols.append(jnp.sum(h2 * wc, axis=0, keepdims=True))             # f32 [1, bb]
    logits_t = jnp.concatenate(cols, axis=0) + b3_ref[...]               # f32 [2, bb]

    o_ref[...] = logits_t.astype(o_ref.dtype)                            # unmasked, lane-dense store


def prepare_params(w1, b1, w2, b2, w3, b3, *, use_bf16=False):
    """One-time parameter prep (call OUTSIDE the per-step hot path).

    Weights stay in the PyTorch [out, in] layout (used as matmul LHS in the
    transposed formulation); biases become [out, 1] columns.  With
    use_bf16=True, W1/W2 are stored as bfloat16 for single-pass MXU matmuls
    (accumulation stays f32 in-kernel).  The tiny 256->2 head weights stay f32
    (they are consumed on the VPU, which has no bf16 benefit on v5e)."""
    wdt = jnp.bfloat16 if use_bf16 else jnp.float32
    w1p = jnp.asarray(w1, jnp.float32).astype(wdt)                 # [256, 64]
    w2p = jnp.asarray(w2, jnp.float32).astype(wdt)                 # [256, 256]
    w3p = jnp.asarray(w3, jnp.float32).T                           # [256, 2]  (f32 always)
    b1p = jnp.asarray(b1, jnp.float32).reshape(HIDDEN_DIM, 1)      # [256, 1]
    b2p = jnp.asarray(b2, jnp.float32).reshape(HIDDEN_DIM, 1)      # [256, 1]
    b3p = jnp.asarray(b3, jnp.float32).reshape(OUT_DIM, 1)         # [2, 1]
    return w1p, b1p, w2p, b2p, w3p, b3p


@functools.partial(jax.jit, static_argnames=("block_b", "approximate_gelu"))
def mlp_forward(x, w1p, b1p, w2p, b2p, w3p, b3p, *, block_b=512, approximate_gelu=False):
    """x: [B, 64] f32 -> logits [B, 2] f32.

    block_b: batch tile (lane) width; multiple of 128.  Sweep 512-1024 for large
    batches; on v7x pick it so the grid has an even number of >= 2 steps so both
    TensorCores get balanced work."""
    B = x.shape[0]

    bb = max(128, _round_up(int(block_b), 128))
    if B <= bb:
        bb = max(8, _round_up(B, 8))   # single grid step; block dims == full array dims
    Bp = _round_up(B, bb)

    # Layout plumbing outside the kernel: batch goes on the lane axis.
    xt = x.T                                                           # [64, B]
    if Bp != B:
        xt = jnp.pad(xt, ((0, 0), (0, Bp - B)))                        # [64, Bp]

    grid = (Bp // bb,)
    gelu = _gelu_tanh if approximate_gelu else _gelu_exact
    kernel = functools.partial(mlp_kernel, gelu=gelu)

    out_t = pl.pallas_call(
        kernel,
        out_shape=jax.ShapeDtypeStruct((OUT_DIM, Bp), jnp.float32),
        grid_spec=pltpu.PrefetchScalarGridSpec(
            num_scalar_prefetch=0,
            grid=grid,
            in_specs=[
                pl.BlockSpec((INPUT_DIM, bb), lambda i: (0, i)),       # x^T tile
                pl.BlockSpec(w1p.shape, lambda i: (0, 0)),             # W1 (resident)
                pl.BlockSpec(b1p.shape, lambda i: (0, 0)),             # b1
                pl.BlockSpec(w2p.shape, lambda i: (0, 0)),             # W2 (resident)
                pl.BlockSpec(b2p.shape, lambda i: (0, 0)),             # b2
                pl.BlockSpec(w3p.shape, lambda i: (0, 0)),             # W3^T [256, 2]
                pl.BlockSpec(b3p.shape, lambda i: (0, 0)),             # b3  [2, 1]
            ],
            out_specs=pl.BlockSpec((OUT_DIM, bb), lambda i: (0, i)),   # lane-dense [2, bb]
        ),
        compiler_params=pltpu.CompilerParams(
            dimension_semantics=("parallel",)),                        # megacore / v7x sharding
    )(xt, w1p, b1p, w2p, b2p, w3p, b3p)

    return out_t[:, :B].T                                              # [B, 2]


def _torch_linear_init(key, fan_in, fan_out):
    """nn.Linear-style init, returned in PyTorch layout: W [out, in], b [out]."""
    kw, kb = jax.random.split(key)
    bound = 1.0 / math.sqrt(fan_in)
    w = jax.random.uniform(kw, (fan_out, fan_in), jnp.float32, -bound, bound)
    b = jax.random.uniform(kb, (fan_out,), jnp.float32, -bound, bound)
    return w, b


def reference_forward(x, w1, b1, w2, b2, w3, b3):
    hi = jax.lax.Precision.HIGHEST   # pin f32 dots so the parity check is not flaky
    h1 = jax.nn.gelu(jnp.dot(x, w1.T, precision=hi) + b1, approximate=False)
    h2 = jax.nn.gelu(jnp.dot(h1, w2.T, precision=hi) + b2, approximate=False)
    return jnp.dot(h2, w3.T, precision=hi) + b3


if __name__ == "__main__":
    key = jax.random.PRNGKey(0)
    k_x, k1, k2, k3 = jax.random.split(key, 4)

    # Not a multiple of the tile: exercises batch padding + a 2-step parallel grid
    # (Bp = 1024, bb = 512 -> balanced across both v7x TensorCores).
    B = 600
    x = jax.random.normal(k_x, (B, INPUT_DIM), jnp.float32)

    w1, b1 = _torch_linear_init(k1, INPUT_DIM, HIDDEN_DIM)
    w2, b2 = _torch_linear_init(k2, HIDDEN_DIM, HIDDEN_DIM)
    w3, b3 = _torch_linear_init(k3, HIDDEN_DIM, OUT_DIM)

    ref = reference_forward(x, w1, b1, w2, b2, w3, b3)

    # 1) Default parity mode: f32 MXU matmuls + exact (erf) GELU.
    params = prepare_params(w1, b1, w2, b2, w3, b3)
    logits = jax.block_until_ready(mlp_forward(x, *params, block_b=512))
    assert logits.shape == (B, OUT_DIM)
    assert jnp.allclose(logits, ref, atol=1e-4, rtol=1e-4), "f32/erf path mismatch vs reference"

    # 2) Opt-in perf mode: bf16 MXU operands (f32 accumulation) + tanh GELU.
    #    Intentionally checked at a loose tolerance (bf16 + tanh approximation).
    params_fast = prepare_params(w1, b1, w2, b2, w3, b3, use_bf16=True)
    logits_fast = jax.block_until_ready(
        mlp_forward(x, *params_fast, block_b=512, approximate_gelu=True))
    assert logits_fast.shape == (B, OUT_DIM)
    assert jnp.allclose(logits_fast, ref, atol=2e-1, rtol=1e-1), "bf16/tanh path deviates too much"

    print("KERNEL_OK")
</pallas_src>

<mosaic_0001>
module attributes {stable_mosaic.version = 11 : i64} {
  func.func @mlp_kernel(%arg0: i32, %arg1: memref<64x512xf32, #tpu.memory_space<vmem>>, %arg2: memref<256x64xf32, #tpu.memory_space<vmem>>, %arg3: memref<256x1xf32, #tpu.memory_space<vmem>>, %arg4: memref<256x256xf32, #tpu.memory_space<vmem>>, %arg5: memref<256x1xf32, #tpu.memory_space<vmem>>, %arg6: memref<256x2xf32, #tpu.memory_space<vmem>>, %arg7: memref<2x1xf32, #tpu.memory_space<vmem>>, %arg8: memref<2x512xf32, #tpu.memory_space<vmem>>) attributes {dimension_semantics = [#tpu.dimension_semantics<parallel>], iteration_bounds = array<i64: 2>, scalar_prefetch = 0 : i64, scratch_operands = 0 : i64, tpu.core_type = #tpu.core_type<tc>, window_params = [{transform_indices = @transform_0, window_bounds = array<i64: 64, 512>}, {pipeline_mode = #tpu.pipeline_mode<synchronous>, transform_indices = @transform_1, window_bounds = array<i64: 256, 64>}, {pipeline_mode = #tpu.pipeline_mode<synchronous>, transform_indices = @transform_2, window_bounds = array<i64: 256, 1>}, {pipeline_mode = #tpu.pipeline_mode<synchronous>, transform_indices = @transform_3, window_bounds = array<i64: 256, 256>}, {pipeline_mode = #tpu.pipeline_mode<synchronous>, transform_indices = @transform_4, window_bounds = array<i64: 256, 1>}, {pipeline_mode = #tpu.pipeline_mode<synchronous>, transform_indices = @transform_5, window_bounds = array<i64: 256, 2>}, {pipeline_mode = #tpu.pipeline_mode<synchronous>, transform_indices = @transform_6, window_bounds = array<i64: 2, 1>}, {transform_indices = @transform_7, window_bounds = array<i64: 2, 512>}]} {
    %c0 = arith.constant 0 : index
    %c0_0 = arith.constant 0 : index
    %0 = vector.load %arg1[%c0, %c0_0] : memref<64x512xf32, #tpu.memory_space<vmem>>, vector<64x512xf32>
    %c0_1 = arith.constant 0 : index
    %c0_2 = arith.constant 0 : index
    %1 = vector.load %arg2[%c0_1, %c0_2] : memref<256x64xf32, #tpu.memory_space<vmem>>, vector<256x64xf32>
    %cst = arith.constant dense<0.000000e+00> : vector<256x512xf32>
    %2 = tpu.matmul %1, %0, %cst {dimension_numbers = #tpu.dot_dimension_numbers<[1], [0], [0], [1], [0, 0, 1, 1], [], []>} : vector<256x64xf32>, vector<64x512xf32>, vector<256x512xf32> -> vector<256x512xf32>
    %c0_3 = arith.constant 0 : index
    %c0_4 = arith.constant 0 : index
    %3 = vector.load %arg3[%c0_3, %c0_4] : memref<256x1xf32, #tpu.memory_space<vmem>>, vector<256x1xf32>
    %4 = vector.broadcast %3 : vector<256x1xf32> to vector<256x512xf32>
    %5 = arith.addf %2, %4 : vector<256x512xf32>
    %cst_5 = arith.constant 5.000000e-01 : f32
    %6 = vector.broadcast %cst_5 : f32 to vector<256x512xf32>
    %7 = arith.mulf %6, %5 : vector<256x512xf32>
    %cst_6 = arith.constant 0.707106769 : f32
    %8 = vector.broadcast %cst_6 : f32 to vector<256x512xf32>
    %9 = arith.mulf %5, %8 : vector<256x512xf32>
    %10 = math.absf %9 : vector<256x512xf32>
    %cst_7 = arith.constant 0.327591091 : f32
    %11 = vector.broadcast %cst_7 : f32 to vector<256x512xf32>
    %12 = arith.mulf %11, %10 : vector<256x512xf32>
    %cst_8 = arith.constant 1.000000e+00 : f32
    %13 = vector.broadcast %cst_8 : f32 to vector<256x512xf32>
    %14 = arith.addf %13, %12 : vector<256x512xf32>
    %cst_9 = arith.constant 1.000000e+00 : f32
    %15 = vector.broadcast %cst_9 : f32 to vector<256x512xf32>
    %16 = arith.divf %15, %14 : vector<256x512xf32>
    %cst_10 = arith.constant 1.06140542 : f32
    %17 = vector.broadcast %cst_10 : f32 to vector<256x512xf32>
    %18 = arith.mulf %17, %16 : vector<256x512xf32>
    %cst_11 = arith.constant -1.45315206 : f32
    %19 = vector.broadcast %cst_11 : f32 to vector<256x512xf32>
    %20 = arith.addf %18, %19 : vector<256x512xf32>
    %21 = arith.mulf %20, %16 : vector<256x512xf32>
    %cst_12 = arith.constant 1.42141378 : f32
    %22 = vector.broadcast %cst_12 : f32 to vector<256x512xf32>
    %23 = arith.addf %21, %22 : vector<256x512xf32>
    %24 = arith.mulf %23, %16 : vector<256x512xf32>
    %cst_13 = arith.constant -0.284496725 : f32
    %25 = vector.broadcast %cst_13 : f32 to vector<256x512xf32>
    %26 = arith.addf %24, %25 : vector<256x512xf32>
    %27 = arith.mulf %26, %16 : vector<256x512xf32>
    %cst_14 = arith.constant 0.254829586 : f32
    %28 = vector.broadcast %cst_14 : f32 to vector<256x512xf32>
    %29 = arith.addf %27, %28 : vector<256x512xf32>
    %30 = arith.mulf %29, %16 : vector<256x512xf32>
    %cst_15 = arith.constant 0.000000e+00 : f32
    %31 = vector.broadcast %cst_15 : f32 to vector<256x512xf32>
    %32 = arith.subf %31, %10 : vector<256x512xf32>
    %33 = arith.mulf %32, %10 : vector<256x512xf32>
    %34 = math.exp %33 : vector<256x512xf32>
    %35 = arith.mulf %30, %34 : vector<256x512xf32>
    %cst_16 = arith.constant 1.000000e+00 : f32
    %36 = vector.broadcast %cst_16 : f32 to vector<256x512xf32>
    %37 = arith.subf %36, %35 : vector<256x512xf32>
    %cst_17 = arith.constant 0.000000e+00 : f32
    %38 = vector.broadcast %cst_17 : f32 to vector<256x512xf32>
    %39 = arith.cmpf oge, %9, %38 : vector<256x512xf32>
    %cst_18 = arith.constant 0.000000e+00 : f32
    %40 = vector.broadcast %cst_18 : f32 to vector<256x512xf32>
    %41 = arith.subf %40, %37 : vector<256x512xf32>
    %42 = arith.select %39, %37, %41 : vector<256x512xi1>, vector<256x512xf32>
    %cst_19 = arith.constant 1.000000e+00 : f32
    %43 = vector.broadcast %cst_19 : f32 to vector<256x512xf32>
    %44 = arith.addf %43, %42 : vector<256x512xf32>
    %45 = arith.mulf %7, %44 : vector<256x512xf32>
    %c0_20 = arith.constant 0 : index
    %c0_21 = arith.constant 0 : index
    %46 = vector.load %arg4[%c0_20, %c0_21] : memref<256x256xf32, #tpu.memory_space<vmem>>, vector<256x256xf32>
    %cst_22 = arith.constant dense<0.000000e+00> : vector<256x512xf32>
    %47 = tpu.matmul %46, %45, %cst_22 {dimension_numbers = #tpu.dot_dimension_numbers<[1], [0], [0], [1], [0, 0, 1, 1], [], []>} : vector<256x256xf32>, vector<256x512xf32>, vector<256x512xf32> -> vector<256x512xf32>
    %c0_23 = arith.constant 0 : index
    %c0_24 = arith.constant 0 : index
    %48 = vector.load %arg5[%c0_23, %c0_24] : memref<256x1xf32, #tpu.memory_space<vmem>>, vector<256x1xf32>
    %49 = vector.broadcast %48 : vector<256x1xf32> to vector<256x512xf32>
    %50 = arith.addf %47, %49 : vector<256x512xf32>
    %cst_25 = arith.constant 5.000000e-01 : f32
    %51 = vector.broadcast %cst_25 : f32 to vector<256x512xf32>
    %52 = arith.mulf %51, %50 : vector<256x512xf32>
    %cst_26 = arith.constant 0.707106769 : f32
    %53 = vector.broadcast %cst_26 : f32 to vector<256x512xf32>
    %54 = arith.mulf %50, %53 : vector<256x512xf32>
    %55 = math.absf %54 : vector<256x512xf32>
    %cst_27 = arith.constant 0.327591091 : f32
    %56 = vector.broadcast %cst_27 : f32 to vector<256x512xf32>
    %57 = arith.mulf %56, %55 : vector<256x512xf32>
    %cst_28 = arith.constant 1.000000e+00 : f32
    %58 = vector.broadcast %cst_28 : f32 to vector<256x512xf32>
    %59 = arith.addf %58, %57 : vector<256x512xf32>
    %cst_29 = arith.constant 1.000000e+00 : f32
    %60 = vector.broadcast %cst_29 : f32 to vector<256x512xf32>
    %61 = arith.divf %60, %59 : vector<256x512xf32>
    %cst_30 = arith.constant 1.06140542 : f32
    %62 = vector.broadcast %cst_30 : f32 to vector<256x512xf32>
    %63 = arith.mulf %62, %61 : vector<256x512xf32>
    %cst_31 = arith.constant -1.45315206 : f32
    %64 = vector.broadcast %cst_31 : f32 to vector<256x512xf32>
    %65 = arith.addf %63, %64 : vector<256x512xf32>
    %66 = arith.mulf %65, %61 : vector<256x512xf32>
    %cst_32 = arith.constant 1.42141378 : f32
    %67 = vector.broadcast %cst_32 : f32 to vector<256x512xf32>
    %68 = arith.addf %66, %67 : vector<256x512xf32>
    %69 = arith.mulf %68, %61 : vector<256x512xf32>
    %cst_33 = arith.constant -0.284496725 : f32
    %70 = vector.broadcast %cst_33 : f32 to vector<256x512xf32>
    %71 = arith.addf %69, %70 : vector<256x512xf32>
    %72 = arith.mulf %71, %61 : vector<256x512xf32>
    %cst_34 = arith.constant 0.254829586 : f32
    %73 = vector.broadcast %cst_34 : f32 to vector<256x512xf32>
    %74 = arith.addf %72, %73 : vector<256x512xf32>
    %75 = arith.mulf %74, %61 : vector<256x512xf32>
    %cst_35 = arith.constant 0.000000e+00 : f32
    %76 = vector.broadcast %cst_35 : f32 to vector<256x512xf32>
    %77 = arith.subf %76, %55 : vector<256x512xf32>
    %78 = arith.mulf %77, %55 : vector<256x512xf32>
    %79 = math.exp %78 : vector<256x512xf32>
    %80 = arith.mulf %75, %79 : vector<256x512xf32>
    %cst_36 = arith.constant 1.000000e+00 : f32
    %81 = vector.broadcast %cst_36 : f32 to vector<256x512xf32>
    %82 = arith.subf %81, %80 : vector<256x512xf32>
    %cst_37 = arith.constant 0.000000e+00 : f32
    %83 = vector.broadcast %cst_37 : f32 to vector<256x512xf32>
    %84 = arith.cmpf oge, %54, %83 : vector<256x512xf32>
    %cst_38 = arith.constant 0.000000e+00 : f32
    %85 = vector.broadcast %cst_38 : f32 to vector<256x512xf32>
    %86 = arith.subf %85, %82 : vector<256x512xf32>
    %87 = arith.select %84, %82, %86 : vector<256x512xi1>, vector<256x512xf32>
    %cst_39 = arith.constant 1.000000e+00 : f32
    %88 = vector.broadcast %cst_39 : f32 to vector<256x512xf32>
    %89 = arith.addf %88, %87 : vector<256x512xf32>
    %90 = arith.mulf %52, %89 : vector<256x512xf32>
    %c0_40 = arith.constant 0 : index
    %c0_41 = arith.constant 0 : index
    %91 = vector.load %arg6[%c0_40, %c0_41] : memref<256x2xf32, #tpu.memory_space<vmem>>, vector<256x1xf32>
    %92 = vector.broadcast %91 : vector<256x1xf32> to vector<256x512xf32>
    %93 = arith.mulf %90, %92 : vector<256x512xf32>
    %cst_42 = arith.constant dense<0.000000e+00> : vector<512xf32>
    %94 = vector.multi_reduction <add>, %93, %cst_42 [0] : vector<256x512xf32> to vector<512xf32>
    %95 = vector.shape_cast %94 : vector<512xf32> to vector<1x512xf32>
    %c0_43 = arith.constant 0 : index
    %c1 = arith.constant 1 : index
    %96 = vector.load %arg6[%c0_43, %c1] : memref<256x2xf32, #tpu.memory_space<vmem>>, vector<256x1xf32>
    %97 = vector.broadcast %96 : vector<256x1xf32> to vector<256x512xf32>
    %98 = arith.mulf %90, %97 : vector<256x512xf32>
    %cst_44 = arith.constant dense<0.000000e+00> : vector<512xf32>
    %99 = vector.multi_reduction <add>, %98, %cst_44 [0] : vector<256x512xf32> to vector<512xf32>
    %100 = vector.shape_cast %99 : vector<512xf32> to vector<1x512xf32>
    %101 = tpu.concatenate %95, %100 in 0 : vector<1x512xf32>, vector<1x512xf32> -> vector<2x512xf32>
    %c0_45 = arith.constant 0 : index
    %c0_46 = arith.constant 0 : index
    %102 = vector.load %arg7[%c0_45, %c0_46] : memref<2x1xf32, #tpu.memory_space<vmem>>, vector<2x1xf32>
    %103 = vector.broadcast %102 : vector<2x1xf32> to vector<2x512xf32>
    %104 = arith.addf %101, %103 : vector<2x512xf32>
    %c0_47 = arith.constant 0 : index
    %c0_48 = arith.constant 0 : index
    %105 = vector.load %arg8[%c0_47, %c0_48] : memref<2x512xf32, #tpu.memory_space<vmem>>, vector<2x512xf32>
    tpu.vector_store %arg8[%c0_47, %c0_48], %104 {strides = array<i32>} : memref<2x512xf32, #tpu.memory_space<vmem>>, vector<2x512xf32>,
    return
  }
  func.func @transform_0(%arg0: i32) -> (i32, i32) {
    %c0_i32 = arith.constant 0 : i32
    %c0_i32_0 = arith.constant 0 : i32
    return %c0_i32, %arg0 : i32, i32
  }
  func.func @transform_1(%arg0: i32) -> (i32, i32) {
    %c0_i32 = arith.constant 0 : i32
    %c0_i32_0 = arith.constant 0 : i32
    %c0_i32_1 = arith.constant 0 : i32
    return %c0_i32, %c0_i32_0 : i32, i32
  }
  func.func @transform_2(%arg0: i32) -> (i32, i32) {
    %c0_i32 = arith.constant 0 : i32
    %c0_i32_0 = arith.constant 0 : i32
    %c0_i32_1 = arith.constant 0 : i32
    return %c0_i32, %c0_i32_0 : i32, i32
  }
  func.func @transform_3(%arg0: i32) -> (i32, i32) {
    %c0_i32 = arith.constant 0 : i32
    %c0_i32_0 = arith.constant 0 : i32
    %c0_i32_1 = arith.constant 0 : i32
    return %c0_i32, %c0_i32_0 : i32, i32
  }
  func.func @transform_4(%arg0: i32) -> (i32, i32) {
    %c0_i32 = arith.constant 0 : i32
    %c0_i32_0 = arith.constant 0 : i32
    %c0_i32_1 = arith.constant 0 : i32
    return %c0_i32, %c0_i32_0 : i32, i32
  }
  func.func @transform_5(%arg0: i32) -> (i32, i32) {
    %c0_i32 = arith.constant 0 : i32
    %c0_i32_0 = arith.constant 0 : i32
    %c0_i32_1 = arith.constant 0 : i32
    return %c0_i32, %c0_i32_0 : i32, i32
  }
  func.func @transform_6(%arg0: i32) -> (i32, i32) {
    %c0_i32 = arith.constant 0 : i32
    %c0_i32_0 = arith.constant 0 : i32
    %c0_i32_1 = arith.constant 0 : i32
    return %c0_i32, %c0_i32_0 : i32, i32
  }
  func.func @transform_7(%arg0: i32) -> (i32, i32) {
    %c0_i32 = arith.constant 0 : i32
    %c0_i32_0 = arith.constant 0 : i32
    return %c0_i32, %arg0 : i32, i32
  }
}

</mosaic_0001>

<llo_original>
// kernel: mlp_forward.1
$region0: #{mlp_forward.1}
  #allocation0 [shape = 'u32[]', space=smem, size = 0x4, offset = 0x4, fixed_abs, tag = 'smem constant byte address 0x4 - core index']
  #allocation1 [shape = 'u32[144,128]{1,0:T(1,128)}', space=vmem, size = 0x12000, scoped, tag = 'internal scratch']
  %s0 = inlined_call_operand.vmem [shape: f32[64,1024], index: 0, kind: input, shape index: {}]
  %s1 = inlined_call_operand.vmem [shape: f32[256,64], index: 1, kind: input, shape index: {}]
  %s2 = inlined_call_operand.vmem [shape: f32[256,1], index: 2, kind: input, shape index: {}]
  %s3 = inlined_call_operand.vmem [shape: f32[256,256], index: 3, kind: input, shape index: {}]
  %s4 = inlined_call_operand.vmem [shape: f32[256,1], index: 4, kind: input, shape index: {}]
  %s5 = inlined_call_operand.vmem [shape: f32[256,2], index: 5, kind: input, shape index: {}]
  %s6 = inlined_call_operand.vmem [shape: f32[2,1], index: 6, kind: input, shape index: {}]
  %s7 = inlined_call_operand.vmem [shape: f32[2,1024], index: 7, kind: output, shape index: {}]
  %s8 = sld [smem:[#allocation0]]
  $region84: #{mlp_forward.1} parent=0
    _
  %s10 = ssub.s32 1, %s8
  %s11 = scalar_select 0, %s10, %s8
  $region1: #{mlp_forward.1} parent=0
    #allocation2 [shape = 'u8[262144]{0}', space=vmem, size = 0x40000, scoped, tag = 'input window, operand 0']
    loop: start=0, step=1, limit=4
    $region2: #{mlp_forward.1} parent=1 // loop_pre_header
      _
    $region3: #{mlp_forward.1} parent=1 // loop_header
      %s13 = sphi 0, %s17
      %p14 = scmp.ge.s32.totalorder %s13, 4
      %s23 = sphi 0, %s25
      %s26 = sphi 0, %s23
      %s27 = sphi 0, %s26
      %s43 = sphi 0, %s27
      %s47 = sphi 0, %s47
      %s49 = sphi 0, %s47
      %s50 = sphi 0, %s49
      %s64 = sphi 0, %s50
      %s68 = sphi 0, %s68
      %s70 = sphi 0, %s68
      %s71 = sphi 0, %s70
      %s85 = sphi 0, %s71
      %s89 = sphi 0, %s89
      %s91 = sphi 0, %s89
      %s92 = sphi 0, %s91
      %s106 = sphi 0, %s92
      %s110 = sphi 0, %s110
      %s112 = sphi 0, %s110
      %s113 = sphi 0, %s112
      %s127 = sphi 0, %s113
      %s131 = sphi 0, %s131
      %s133 = sphi 0, %s131
      %s134 = sphi 0, %s133
      %s148 = sphi 0, %s134
      %s152 = sphi 0, %s152
      %s154 = sphi 0, %s152
      %s155 = sphi 0, %s154
      %s169 = sphi 0, %s155
      %s175 = sphi 0, %s177
      %s178 = sphi 0, %s175
      %s179 = sphi 0, %s178
      %s195 = sphi 0, %s179
    $region4: #{mlp_forward.1} parent=1 // loop_header_branch
      %16 = sbr.rel (%p14) target = $region8
    $region5: #{mlp_forward.1} parent=1 // loop_body
      %s18 = ssub.s32 %s13, 1
      %s19 = ssub.s32 %s13, 2
      %s20 = sadd.s32 %s13, 1
      %s21 = ssub.s32 %s13, %s20
      %p22 = scmp.eq.s32.totalorder %s21, 0
      %s24 = sadd.s32 %s23, 1
      %s25 = scalar_select %p22, %s23, %s24
      %p28 = pneg %p22
      %p29 = scmp.eq.s32.totalorder %s13, 1
      %p30 = por %p28, %p29
      %p31 = scmp.ne.s32.totalorder %s23, %s26
      %p32 = scmp.eq.s32.totalorder %s13, 0
      %p33 = por %p31, %p32
      %p34 = scmp.ne.s32.totalorder %s23, %s26
      %p35 = scmp.eq.s32.totalorder %s18, 1
      %p36 = por %p34, %p35
      %p37 = scmp.ne.s32.totalorder %s26, %s27
      %p38 = scmp.eq.s32.totalorder %s18, 0
      %p39 = por %p37, %p38
      %p40 = scmp.ne.s32.totalorder %s26, %s27
      %p41 = scmp.eq.s32.totalorder %s19, 1
      %p42 = por %p40, %p41
      %p44 = scmp.ne.s32.totalorder %s27, %s43
      %p45 = scmp.eq.s32.totalorder %s19, 0
      %p46 = por %p44, %p45
      %s48 = sadd.s32 %s47, 1
      %p51 = scmp.eq.s32.totalorder %s13, 1
      %p52 = scmp.ne.s32.totalorder %s47, %s49
      %p53 = scmp.eq.s32.totalorder %s13, 0
      %p54 = por %p52, %p53
      %p55 = scmp.ne.s32.totalorder %s47, %s49
      %p56 = scmp.eq.s32.totalorder %s18, 1
      %p57 = por %p55, %p56
      %p58 = scmp.ne.s32.totalorder %s49, %s50
      %p59 = scmp.eq.s32.totalorder %s18, 0
      %p60 = por %p58, %p59
      %p61 = scmp.ne.s32.totalorder %s49, %s50
      %p62 = scmp.eq.s32.totalorder %s19, 1
      %p63 = por %p61, %p62
      %p65 = scmp.ne.s32.totalorder %s50, %s64
      %p66 = scmp.eq.s32.totalorder %s19, 0
      %p67 = por %p65, %p66
      %s69 = sadd.s32 %s68, 1
      %p72 = scmp.eq.s32.totalorder %s13, 1
      %p73 = scmp.ne.s32.totalorder %s68, %s70
      %p74 = scmp.eq.s32.totalorder %s13, 0
      %p75 = por %p73, %p74
      %p76 = scmp.ne.s32.totalorder %s68, %s70
      %p77 = scmp.eq.s32.totalorder %s18, 1
      %p78 = por %p76, %p77
      %p79 = scmp.ne.s32.totalorder %s70, %s71
      %p80 = scmp.eq.s32.totalorder %s18, 0
      %p81 = por %p79, %p80
      %p82 = scmp.ne.s32.totalorder %s70, %s71
      %p83 = scmp.eq.s32.totalorder %s19, 1
      %p84 = por %p82, %p83
      %p86 = scmp.ne.s32.totalorder %s71, %s85
      %p87 = scmp.eq.s32.totalorder %s19, 0
      %p88 = por %p86, %p87
      %s90 = sadd.s32 %s89, 1
      %p93 = scmp.eq.s32.totalorder %s13, 1
      %p94 = scmp.ne.s32.totalorder %s89, %s91
      %p95 = scmp.eq.s32.totalorder %s13, 0
      %p96 = por %p94, %p95
      %p97 = scmp.ne.s32.totalorder %s89, %s91
      %p98 = scmp.eq.s32.totalorder %s18, 1
      %p99 = por %p97, %p98
      %p100 = scmp.ne.s32.totalorder %s91, %s92
      %p101 = scmp.eq.s32.totalorder %s18, 0
      %p102 = por %p100, %p101
      %p103 = scmp.ne.s32.totalorder %s91, %s92
      %p104 = scmp.eq.s32.totalorder %s19, 1
      %p105 = por %p103, %p104
      %p107 = scmp.ne.s32.totalorder %s92, %s106
      %p108 = scmp.eq.s32.totalorder %s19, 0
      %p109 = por %p107, %p108
      %s111 = sadd.s32 %s110, 1
      %p114 = scmp.eq.s32.totalorder %s13, 1
      %p115 = scmp.ne.s32.totalorder %s110, %s112
      %p116 = scmp.eq.s32.totalorder %s13, 0
      %p117 = por %p115, %p116
      %p118 = scmp.ne.s32.totalorder %s110, %s112
      %p119 = scmp.eq.s32.totalorder %s18, 1
      %p120 = por %p118, %p119
      %p121 = scmp.ne.s32.totalorder %s112, %s113
      %p122 = scmp.eq.s32.totalorder %s18, 0
      %p123 = por %p121, %p122
      %p124 = scmp.ne.s32.totalorder %s112, %s113
      %p125 = scmp.eq.s32.totalorder %s19, 1
      %p126 = por %p124, %p125
      %p128 = scmp.ne.s32.totalorder %s113, %s127
      %p129 = scmp.eq.s32.totalorder %s19, 0
      %p130 = por %p128, %p129
      %s132 = sadd.s32 %s131, 1
      %p135 = scmp.eq.s32.totalorder %s13, 1
      %p136 = scmp.ne.s32.totalorder %s131, %s133
      %p137 = scmp.eq.s32.totalorder %s13, 0
      %p138 = por %p136, %p137
      %p139 = scmp.ne.s32.totalorder %s131, %s133
      %p140 = scmp.eq.s32.totalorder %s18, 1
      %p141 = por %p139, %p140
      %p142 = scmp.ne.s32.totalorder %s133, %s134
      %p143 = scmp.eq.s32.totalorder %s18, 0
      %p144 = por %p142, %p143
      %p145 = scmp.ne.s32.totalorder %s133, %s134
      %p146 = scmp.eq.s32.totalorder %s19, 1
      %p147 = por %p145, %p146
      %p149 = scmp.ne.s32.totalorder %s134, %s148
      %p150 = scmp.eq.s32.totalorder %s19, 0
      %p151 = por %p149, %p150
      %s153 = sadd.s32 %s152, 1
      %p156 = scmp.eq.s32.totalorder %s13, 1
      %p157 = scmp.ne.s32.totalorder %s152, %s154
      %p158 = scmp.eq.s32.totalorder %s13, 0
      %p159 = por %p157, %p158
      %p160 = scmp.ne.s32.totalorder %s152, %s154
      %p161 = scmp.eq.s32.totalorder %s18, 1
      %p162 = por %p160, %p161
      %p163 = scmp.ne.s32.totalorder %s154, %s155
      %p164 = scmp.eq.s32.totalorder %s18, 0
      %p165 = por %p163, %p164
      %p166 = scmp.ne.s32.totalorder %s154, %s155
      %p167 = scmp.eq.s32.totalorder %s19, 1
      %p168 = por %p166, %p167
      %p170 = scmp.ne.s32.totalorder %s155, %s169
      %p171 = scmp.eq.s32.totalorder %s19, 0
      %p172 = por %p170, %p171
      %s173 = ssub.s32 %s13, %s20
      %p174 = scmp.eq.s32.totalorder %s173, 0
      %s176 = sadd.s32 %s175, 1
      %s177 = scalar_select %p174, %s175, %s176
      %p180 = pneg %p174
      %p181 = scmp.eq.s32.totalorder %s13, 1
      %p182 = por %p180, %p181
      %p183 = scmp.ne.s32.totalorder %s175, %s178
      %p184 = scmp.eq.s32.totalorder %s13, 0
      %p185 = por %p183, %p184
      %p186 = scmp.ne.s32.totalorder %s175, %s178
      %p187 = scmp.eq.s32.totalorder %s18, 1
      %p188 = por %p186, %p187
      %p189 = scmp.ne.s32.totalorder %s178, %s179
      %p190 = scmp.eq.s32.totalorder %s18, 0
      %p191 = por %p189, %p190
      %p192 = scmp.ne.s32.totalorder %s178, %s179
      %p193 = scmp.eq.s32.totalorder %s19, 1
      %p194 = por %p192, %p193
      %p196 = scmp.ne.s32.totalorder %s179, %s195
      %p197 = scmp.eq.s32.totalorder %s19, 0
      %p198 = por %p196, %p197
      %p199 = scmp.le.s32.totalorder 1, %s13
      %p200 = scmp.lt.s32.totalorder %s13, 3
      %p201 = pnand %p199, %p200
      %p202 = pneg %p201
      // Predicated region
      $region9: #{mlp_forward.1} parent=5 // pred_check
        _
      $region10: #{mlp_forward.1} parent=5 // pred_check_branch
        %204 = sbr.rel (%p201) target = $region12
      $region11: #{mlp_forward.1} parent=5 // pred_region
        %s205 = ssub.s32 %s13, 1
        // Predicated region
        $region13: #{mlp_forward.1} parent=11 // pred_check
          %p206 = pneg %p60
        $region14: #{mlp_forward.1} parent=11 // pred_check_branch
          %208 = sbr.rel (%p206) target = $region16
        $region15: #{mlp_forward.1} parent=11 // pred_region
          _
        $region16: #{mlp_forward.1} parent=11 // pred_fallthru
          _
        // Predicated region
        $region17: #{mlp_forward.1} parent=11 // pred_check
          %p209 = pneg %p81
        $region18: #{mlp_forward.1} parent=11 // pred_check_branch
          %211 = sbr.rel (%p209) target = $region20
        $region19: #{mlp_forward.1} parent=11 // pred_region
          _
        $region20: #{mlp_forward.1} parent=11 // pred_fallthru
          _
        // Predicated region
        $region21: #{mlp_forward.1} parent=11 // pred_check
          %p212 = pneg %p102
        $region22: #{mlp_forward.1} parent=11 // pred_check_branch
          %214 = sbr.rel (%p212) target = $region24
        $region23: #{mlp_forward.1} parent=11 // pred_region
          _
        $region24: #{mlp_forward.1} parent=11 // pred_fallthru
          _
        // Predicated region
        $region25: #{mlp_forward.1} parent=11 // pred_check
          %p215 = pneg %p123
        $region26: #{mlp_forward.1} parent=11 // pred_check_branch
          %217 = sbr.rel (%p215) target = $region28
        $region27: #{mlp_forward.1} parent=11 // pred_region
          _
        $region28: #{mlp_forward.1} parent=11 // pred_fallthru
          _
        // Predicated region
        $region29: #{mlp_forward.1} parent=11 // pred_check
          %p218 = pneg %p144
        $region30: #{mlp_forward.1} parent=11 // pred_check_branch
          %220 = sbr.rel (%p218) target = $region32
        $region31: #{mlp_forward.1} parent=11 // pred_region
          _
        $region32: #{mlp_forward.1} parent=11 // pred_fallthru
          _
        // Predicated region
        $region33: #{mlp_forward.1} parent=11 // pred_check
          %p221 = pneg %p165
        $region34: #{mlp_forward.1} parent=11 // pred_check_branch
          %223 = sbr.rel (%p221) target = $region36
        $region35: #{mlp_forward.1} parent=11 // pred_region
          _
        $region36: #{mlp_forward.1} parent=11 // pred_fallthru
          _
      $region12: #{mlp_forward.1} parent=5 // pred_fallthru
        _
      %p224 = scmp.lt.s32.totalorder %s13, 2
      // Predicated region
      $region37: #{mlp_forward.1} parent=5 // pred_check
        %p225 = pneg %p224
      $region38: #{mlp_forward.1} parent=5 // pred_check_branch
        %227 = sbr.rel (%p225) target = $region40
      $region39: #{mlp_forward.1} parent=5 // pred_region
        // Predicated region
        $region41: #{mlp_forward.1} parent=39 // pred_check
          %p228 = pneg %p33
        $region42: #{mlp_forward.1} parent=39 // pred_check_branch
          %230 = sbr.rel (%p228) target = $region44
        $region43: #{mlp_forward.1} parent=39 // pred_region
          %s231 = sand.u32 %s23, 1
          %s232 = sand.u32 %s23, 1
          %s233 = smul.addr %s232, 256
          %s234 = scalar_lea.vmem [#allocation2], %s233
          %s235 = smul.u32 4, %s13
          %s236 = smul.addr %s235, 8
          %s237 = scalar_lea.vmem %s0, %s236
          // Predicated region
          $region45: #{mlp_forward.1} parent=43 // pred_check
            _
          $region46: #{mlp_forward.1} parent=43 // pred_check_branch
            %239 = sbr.rel (0) target = $region48
          $region47: #{mlp_forward.1} parent=43 // pred_region
            // Predicated region
            $region49: #{mlp_forward.1} parent=47 // pred_check
              _
            $region50: #{mlp_forward.1} parent=47 // pred_check_branch
              %241 = sbr.rel (0) target = $region52
            $region51: #{mlp_forward.1} parent=47 // pred_region
              loop: start=0, step=1, limit=1
              $region53: #{mlp_forward.1} parent=51 // loop_pre_header
                _
              $region54: #{mlp_forward.1} parent=51 // loop_header
                %s243 = sphi 0, %s247
                %p244 = scmp.ge.s32.totalorder %s243, 1
                %s248 = sphi %s237, %s237
                %s249 = sphi %s234, %s234
              $region55: #{mlp_forward.1} parent=51 // loop_header_branch
                %246 = sbr.rel (%p244) target = $region59
              $region56: #{mlp_forward.1} parent=51 // loop_body
                %v250 = vld [vmem:[%s248] sm:$0xff]
                %251 = vst [vmem:[%s249] sm:$0xff] %v250
                %v252 = vld [vmem:[%s248 + $0x8] sm:$0xff]
                %253 = vst [vmem:[%s249 + $0x8] sm:$0xff] %v252
                %v254 = vld [vmem:[%s248 + $0x10] sm:$0xff]
                %255 = vst [vmem:[%s249 + $0x10] sm:$0xff] %v254
                %v256 = vld [vmem:[%s248 + $0x18] sm:$0xff]
                %257 = vst [vmem:[%s249 + $0x18] sm:$0xff] %v256
                %v258 = vld [vmem:[%s248 + $0x40] sm:$0xff]
                %259 = vst [vmem:[%s249 + $0x20] sm:$0xff] %v258
                %v260 = vld [vmem:[%s248 + $0x48] sm:$0xff]
                %261 = vst [vmem:[%s249 + $0x28] sm:$0xff] %v260
                %v262 = vld [vmem:[%s248 + $0x50] sm:$0xff]
                %263 = vst [vmem:[%s249 + $0x30] sm:$0xff] %v262
                %v264 = vld [vmem:[%s248 + $0x58] sm:$0xff]
                %265 = vst [vmem:[%s249 + $0x38] sm:$0xff] %v264
                %v266 = vld [vmem:[%s248 + $0x80] sm:$0xff]
                %267 = vst [vmem:[%s249 + $0x40] sm:$0xff] %v266
                %v268 = vld [vmem:[%s248 + $0x88] sm:$0xff]
                %269 = vst [vmem:[%s249 + $0x48] sm:$0xff] %v268
                %v270 = vld [vmem:[%s248 + $0x90] sm:$0xff]
                %271 = vst [vmem:[%s249 + $0x50] sm:$0xff] %v270
                %v272 = vld [vmem:[%s248 + $0x98] sm:$0xff]
                %273 = vst [vmem:[%s249 + $0x58] sm:$0xff] %v272
                %v274 = vld [vmem:[%s248 + $0xc0] sm:$0xff]
                %275 = vst [vmem:[%s249 + $0x60] sm:$0xff] %v274
                %v276 = vld [vmem:[%s248 + $0xc8] sm:$0xff]
                %277 = vst [vmem:[%s249 + $0x68] sm:$0xff] %v276
                %v278 = vld [vmem:[%s248 + $0xd0] sm:$0xff]
                %279 = vst [vmem:[%s249 + $0x70] sm:$0xff] %v278
                %v280 = vld [vmem:[%s248 + $0xd8] sm:$0xff]
                %281 = vst [vmem:[%s249 + $0x78] sm:$0xff] %v280
                %v282 = vld [vmem:[%s248 + $0x100] sm:$0xff]
                %283 = vst [vmem:[%s249 + $0x80] sm:$0xff] %v282
                %v284 = vld [vmem:[%s248 + $0x108] sm:$0xff]
                %285 = vst [vmem:[%s249 + $0x88] sm:$0xff] %v284
                %v286 = vld [vmem:[%s248 + $0x110] sm:$0xff]
                %287 = vst [vmem:[%s249 + $0x90] sm:$0xff] %v286
                %v288 = vld [vmem:[%s248 + $0x118] sm:$0xff]
                %289 = vst [vmem:[%s249 + $0x98] sm:$0xff] %v288
                %v290 = vld [vmem:[%s248 + $0x140] sm:$0xff]
                %291 = vst [vmem:[%s249 + $0xa0] sm:$0xff] %v290
                %v292 = vld [vmem:[%s248 + $0x148] sm:$0xff]
                %293 = vst [vmem:[%s249 + $0xa8] sm:$0xff] %v292
                %v294 = vld [vmem:[%s248 + $0x150] sm:$0xff]
                %295 = vst [vmem:[%s249 + $0xb0] sm:$0xff] %v294
                %v296 = vld [vmem:[%s248 + $0x158] sm:$0xff]
                %297 = vst [vmem:[%s249 + $0xb8] sm:$0xff] %v296
                %v298 = vld [vmem:[%s248 + $0x180] sm:$0xff]
                %299 = vst [vmem:[%s249 + $0xc0] sm:$0xff] %v298
                %v300 = vld [vmem:[%s248 + $0x188] sm:$0xff]
                %301 = vst [vmem:[%s249 + $0xc8] sm:$0xff] %v300
                %v302 = vld [vmem:[%s248 + $0x190] sm:$0xff]
                %303 = vst [vmem:[%s249 + $0xd0] sm:$0xff] %v302
                %v304 = vld [vmem:[%s248 + $0x198] sm:$0xff]
                %305 = vst [vmem:[%s249 + $0xd8] sm:$0xff] %v304
                %v306 = vld [vmem:[%s248 + $0x1c0] sm:$0xff]
                %307 = vst [vmem:[%s249 + $0xe0] sm:$0xff] %v306
                %v308 = vld [vmem:[%s248 + $0x1c8] sm:$0xff]
                %309 = vst [vmem:[%s249 + $0xe8] sm:$0xff] %v308
                %v310 = vld [vmem:[%s248 + $0x1d0] sm:$0xff]
                %311 = vst [vmem:[%s249 + $0xf0] sm:$0xff] %v310
                %v312 = vld [vmem:[%s248 + $0x1d8] sm:$0xff]
                %313 = vst [vmem:[%s249 + $0xf8] sm:$0xff] %v312
              $region57: #{mlp_forward.1} parent=51 // loop_footer
                %s247 = sadd.s32 1, %s243
              $region58: #{mlp_forward.1} parent=51 // loop_footer_branch
                %242 = sbr.rel target = $region54
              $region59: #{mlp_forward.1} parent=51 // loop_exit
                _
            $region52: #{mlp_forward.1} parent=47 // pred_fallthru
              _
            // Predicated region
            $region60: #{mlp_forward.1} parent=47 // pred_check
              _
            $region61: #{mlp_forward.1} parent=47 // pred_check_branch
              %315 = sbr.rel target = $region63
            $region62: #{mlp_forward.1} parent=47 // pred_region
              _
            $region63: #{mlp_forward.1} parent=47 // pred_fallthru
              _
          $region48: #{mlp_forward.1} parent=43 // pred_fallthru
            _
          %316 = vnop
        $region44: #{mlp_forward.1} parent=39 // pred_fallthru
          _
      $region40: #{mlp_forward.1} parent=5 // pred_fallthru
        _
      %p317 = scmp.le.s32.totalorder 1, %s13
      %p318 = scmp.lt.s32.totalorder %s13, 3
      %p319 = pnand %p317, %p318
      %p320 = pneg %p319
      // Predicated region
      $region64: #{mlp_forward.1} parent=5 // pred_check
        _
      $region65: #{mlp_forward.1} parent=5 // pred_check_branch
        %322 = sbr.rel (%p319) target = $region67
      $region66: #{mlp_forward.1} parent=5 // pred_region
        %s323 = ssub.s32 %s13, 1
        %s324 = sand.u32 %s26, 1
        %s325 = sand.u32 %s26, 1
        %s326 = smul.addr %s325, 256
        %s327 = scalar_lea.vmem [#allocation2], %s326
        // Predicated region
        $region68: #{mlp_forward.1} parent=66 // pred_check
          %p328 = pneg %p39
        $region69: #{mlp_forward.1} parent=66 // pred_check_branch
          %330 = sbr.rel (%p328) target = $region71
        $region70: #{mlp_forward.1} parent=66 // pred_region
          _
        $region71: #{mlp_forward.1} parent=66 // pred_fallthru
          _
        %s331 = sand.u32 %s26, 1
        %s332 = sand.u32 %s26, 1
        %s333 = smul.addr %s332, 256
        %s334 = scalar_lea.vmem [#allocation2], %s333
        %p335 = pneg %p39
        %p336 = pneg %p36
        %p337 = pneg %p60
        %p338 = pneg %p57
        %p339 = pneg %p81
        %p340 = pneg %p78
        %p341 = pneg %p102
        %p342 = pneg %p99
        %p343 = pneg %p123
        %p344 = pneg %p120
        %p345 = pneg %p144
        %p346 = pneg %p141
        %p347 = pneg %p165
        %p348 = pneg %p162
        %p349 = pneg %p191
        %p350 = pneg %p188
        %s351 = smul.u32 4, %s18
        %p352 = scmp.lt.s32.totalorder %s351, 7
        %s353 = scalar_select %p352, %s351, 7
        %s354 = smul.addr %s353, 2
        %s355 = scalar_lea.vmem %s7, %s354
        %s356 = smul.u32 4, %s18
        %s357 = smul.u32 4, %s18
        %p358 = scmp.lt.s32.totalorder %s357, 7
        %s359 = scalar_select %p358, %s357, 7
        %s360 = smul.addr %s359, 2
        %s361 = scalar_lea.vmem %s7, %s360
        %s362 = smul.u32 4, %s18
        %v363 = vld [vmem:[%s327] sm:$0xff]
        %v364 = vld [vmem:[%s327 + $0x8] sm:$0xff]
        %v365 = vld [vmem:[%s327 + $0x10] sm:$0xff]
        %v366 = vld [vmem:[%s327 + $0x18] sm:$0xff]
        %v367 = vld [vmem:[%s327 + $0x20] sm:$0xff]
        %v368 = vld [vmem:[%s327 + $0x28] sm:$0xff]
        %v369 = vld [vmem:[%s327 + $0x30] sm:$0xff]
        %v370 = vld [vmem:[%s327 + $0x38] sm:$0xff]
        %v371 = vld [vmem:[%s327 + $0x40] sm:$0xff]
        %v372 = vld [vmem:[%s327 + $0x48] sm:$0xff]
        %v373 = vld [vmem:[%s327 + $0x50] sm:$0xff]
        %v374 = vld [vmem:[%s327 + $0x58] sm:$0xff]
        %v375 = vld [vmem:[%s327 + $0x60] sm:$0xff]
        %v376 = vld [vmem:[%s327 + $0x68] sm:$0xff]
        %v377 = vld [vmem:[%s327 + $0x70] sm:$0xff]
        %v378 = vld [vmem:[%s327 + $0x78] sm:$0xff]
        %v379 = vld [vmem:[%s327 + $0x80] sm:$0xff]
        %v380 = vld [vmem:[%s327 + $0x88] sm:$0xff]
        %v381 = vld [vmem:[%s327 + $0x90] sm:$0xff]
        %v382 = vld [vmem:[%s327 + $0x98] sm:$0xff]
        %v383 = vld [vmem:[%s327 + $0xa0] sm:$0xff]
        %v384 = vld [vmem:[%s327 + $0xa8] sm:$0xff]
        %v385 = vld [vmem:[%s327 + $0xb0] sm:$0xff]
        %v386 = vld [vmem:[%s327 + $0xb8] sm:$0xff]
        %v387 = vld [vmem:[%s327 + $0xc0] sm:$0xff]
        %v388 = vld [vmem:[%s327 + $0xc8] sm:$0xff]
        %v389 = vld [vmem:[%s327 + $0xd0] sm:$0xff]
        %v390 = vld [vmem:[%s327 + $0xd8] sm:$0xff]
        %v391 = vld [vmem:[%s327 + $0xe0] sm:$0xff]
        %v392 = vld [vmem:[%s327 + $0xe8] sm:$0xff]
        %v393 = vld [vmem:[%s327 + $0xf0] sm:$0xff]
        %v394 = vld [vmem:[%s327 + $0xf8] sm:$0xff]
        %v395 = vld [vmem:[%s1] sm:$0xff]
        %v396 = vld [vmem:[%s1 + $0x8] sm:$0xff]
        %v397 = vld [vmem:[%s1 + $0x10] sm:$0xff]
        %v398 = vld [vmem:[%s1 + $0x18] sm:$0xff]
        %v399 = vld [vmem:[%s1 + $0x20] sm:$0xff]
        %v400 = vld [vmem:[%s1 + $0x28] sm:$0xff]
        %v401 = vld [vmem:[%s1 + $0x30] sm:$0xff]
        %v402 = vld [vmem:[%s1 + $0x38] sm:$0xff]
        %v403 = vld [vmem:[%s1 + $0x40] sm:$0xff]
        %v404 = vld [vmem:[%s1 + $0x48] sm:$0xff]
        %v405 = vld [vmem:[%s1 + $0x50] sm:$0xff]
        %v406 = vld [vmem:[%s1 + $0x58] sm:$0xff]
        %v407 = vld [vmem:[%s1 + $0x60] sm:$0xff]
        %v408 = vld [vmem:[%s1 + $0x68] sm:$0xff]
        %v409 = vld [vmem:[%s1 + $0x70] sm:$0xff]
        %v410 = vld [vmem:[%s1 + $0x78] sm:$0xff]
        %v411 = vld [vmem:[%s1 + $0x80] sm:$0xff]
        %v412 = vld [vmem:[%s1 + $0x88] sm:$0xff]
        %v413 = vld [vmem:[%s1 + $0x90] sm:$0xff]
        %v414 = vld [vmem:[%s1 + $0x98] sm:$0xff]
        %v415 = vld [vmem:[%s1 + $0xa0] sm:$0xff]
        %v416 = vld [vmem:[%s1 + $0xa8] sm:$0xff]
        %v417 = vld [vmem:[%s1 + $0xb0] sm:$0xff]
        %v418 = vld [vmem:[%s1 + $0xb8] sm:$0xff]
        %v419 = vld [vmem:[%s1 + $0xc0] sm:$0xff]
        %v420 = vld [vmem:[%s1 + $0xc8] sm:$0xff]
        %v421 = vld [vmem:[%s1 + $0xd0] sm:$0xff]
        %v422 = vld [vmem:[%s1 + $0xd8] sm:$0xff]
        %v423 = vld [vmem:[%s1 + $0xe0] sm:$0xff]
        %v424 = vld [vmem:[%s1 + $0xe8] sm:$0xff]
        %v425 = vld [vmem:[%s1 + $0xf0] sm:$0xff]
        %v426 = vld [vmem:[%s1 + $0xf8] sm:$0xff]
        %v427 = vld [vmem:[%s2] sm:$0xff]
        %v428 = vld [vmem:[%s2 + $0x8] sm:$0xff]
        %v429 = vld [vmem:[%s2 + $0x10] sm:$0xff]
        %v430 = vld [vmem:[%s2 + $0x18] sm:$0xff]
        %v431 = vld [vmem:[%s2 + $0x20] sm:$0xff]
        %v432 = vld [vmem:[%s2 + $0x28] sm:$0xff]
        %v433 = vld [vmem:[%s2 + $0x30] sm:$0xff]
        %v434 = vld [vmem:[%s2 + $0x38] sm:$0xff]
        %v435 = vld [vmem:[%s2 + $0x40] sm:$0xff]
        %v436 = vld [vmem:[%s2 + $0x48] sm:$0xff]
        %v437 = vld [vmem:[%s2 + $0x50] sm:$0xff]
        %v438 = vld [vmem:[%s2 + $0x58] sm:$0xff]
        %v439 = vld [vmem:[%s2 + $0x60] sm:$0xff]
        %v440 = vld [vmem:[%s2 + $0x68] sm:$0xff]
        %v441 = vld [vmem:[%s2 + $0x70] sm:$0xff]
        %v442 = vld [vmem:[%s2 + $0x78] sm:$0xff]
        %v443 = vld [vmem:[%s2 + $0x80] sm:$0xff]
        %v444 = vld [vmem:[%s2 + $0x88] sm:$0xff]
        %v445 = vld [vmem:[%s2 + $0x90] sm:$0xff]
        %v446 = vld [vmem:[%s2 + $0x98] sm:$0xff]
        %v447 = vld [vmem:[%s2 + $0xa0] sm:$0xff]
        %v448 = vld [vmem:[%s2 + $0xa8] sm:$0xff]
        %v449 = vld [vmem:[%s2 + $0xb0] sm:$0xff]
        %v450 = vld [vmem:[%s2 + $0xb8] sm:$0xff]
        %v451 = vld [vmem:[%s2 + $0xc0] sm:$0xff]
        %v452 = vld [vmem:[%s2 + $0xc8] sm:$0xff]
        %v453 = vld [vmem:[%s2 + $0xd0] sm:$0xff]
        %v454 = vld [vmem:[%s2 + $0xd8] sm:$0xff]
        %v455 = vld [vmem:[%s2 + $0xe0] sm:$0xff]
        %v456 = vld [vmem:[%s2 + $0xe8] sm:$0xff]
        %v457 = vld [vmem:[%s2 + $0xf0] sm:$0xff]
        %v458 = vld [vmem:[%s2 + $0xf8] sm:$0xff]
        %460 = vset.pattern.permute.xlu0 0
        %461 = vperm.xlu0 %460, %v427
        %v462 = vpop.permute.xlu0 %461
        %465 = vset.pattern.permute.xlu0 0
        %466 = vperm.xlu0 %465, %v428
        %v467 = vpop.permute.xlu0 %466
        %470 = vset.pattern.permute.xlu0 0
        %471 = vperm.xlu0 %470, %v429
        %v472 = vpop.permute.xlu0 %471
        %475 = vset.pattern.permute.xlu0 0
        %476 = vperm.xlu0 %475, %v430
        %v477 = vpop.permute.xlu0 %476
        %480 = vset.pattern.permute.xlu0 0
        %481 = vperm.xlu0 %480, %v431
        %v482 = vpop.permute.xlu0 %481
        %485 = vset.pattern.permute.xlu0 0
        %486 = vperm.xlu0 %485, %v432
        %v487 = vpop.permute.xlu0 %486
        %490 = vset.pattern.permute.xlu0 0
        %491 = vperm.xlu0 %490, %v433
        %v492 = vpop.permute.xlu0 %491
        %495 = vset.pattern.permute.xlu0 0
        %496 = vperm.xlu0 %495, %v434
        %v497 = vpop.permute.xlu0 %496
        %500 = vset.pattern.permute.xlu0 0
        %501 = vperm.xlu0 %500, %v435
        %v502 = vpop.permute.xlu0 %501
        %505 = vset.pattern.permute.xlu0 0
        %506 = vperm.xlu0 %505, %v436
        %v507 = vpop.permute.xlu0 %506
        %510 = vset.pattern.permute.xlu0 0
        %511 = vperm.xlu0 %510, %v437
        %v512 = vpop.permute.xlu0 %511
        %515 = vset.pattern.permute.xlu0 0
        %516 = vperm.xlu0 %515, %v438
        %v517 = vpop.permute.xlu0 %516
        %520 = vset.pattern.permute.xlu0 0
        %521 = vperm.xlu0 %520, %v439
        %v522 = vpop.permute.xlu0 %521
        %525 = vset.pattern.permute.xlu0 0
        %526 = vperm.xlu0 %525, %v440
        %v527 = vpop.permute.xlu0 %526
        %530 = vset.pattern.permute.xlu0 0
        %531 = vperm.xlu0 %530, %v441
        %v532 = vpop.permute.xlu0 %531
        %535 = vset.pattern.permute.xlu0 0
        %536 = vperm.xlu0 %535, %v442
        %v537 = vpop.permute.xlu0 %536
        %540 = vset.pattern.permute.xlu0 0
        %541 = vperm.xlu0 %540, %v443
        %v542 = vpop.permute.xlu0 %541
        %545 = vset.pattern.permute.xlu0 0
        %546 = vperm.xlu0 %545, %v444
        %v547 = vpop.permute.xlu0 %546
        %550 = vset.pattern.permute.xlu0 0
        %551 = vperm.xlu0 %550, %v445
        %v552 = vpop.permute.xlu0 %551
        %555 = vset.pattern.permute.xlu0 0
        %556 = vperm.xlu0 %555, %v446
        %v557 = vpop.permute.xlu0 %556
        %560 = vset.pattern.permute.xlu0 0
        %561 = vperm.xlu0 %560, %v447
        %v562 = vpop.permute.xlu0 %561
        %565 = vset.pattern.permute.xlu0 0
        %566 = vperm.xlu0 %565, %v448
        %v567 = vpop.permute.xlu0 %566
        %570 = vset.pattern.permute.xlu0 0
        %571 = vperm.xlu0 %570, %v449
        %v572 = vpop.permute.xlu0 %571
        %575 = vset.pattern.permute.xlu0 0
        %576 = vperm.xlu0 %575, %v450
        %v577 = vpop.permute.xlu0 %576
        %580 = vset.pattern.permute.xlu0 0
        %581 = vperm.xlu0 %580, %v451
        %v582 = vpop.permute.xlu0 %581
        %585 = vset.pattern.permute.xlu0 0
        %586 = vperm.xlu0 %585, %v452
        %v587 = vpop.permute.xlu0 %586
        %590 = vset.pattern.permute.xlu0 0
        %591 = vperm.xlu0 %590, %v453
        %v592 = vpop.permute.xlu0 %591
        %595 = vset.pattern.permute.xlu0 0
        %596 = vperm.xlu0 %595, %v454
        %v597 = vpop.permute.xlu0 %596
        %600 = vset.pattern.permute.xlu0 0
        %601 = vperm.xlu0 %600, %v455
        %v602 = vpop.permute.xlu0 %601
        %605 = vset.pattern.permute.xlu0 0
        %606 = vperm.xlu0 %605, %v456
        %v607 = vpop.permute.xlu0 %606
        %610 = vset.pattern.permute.xlu0 0
        %611 = vperm.xlu0 %610, %v457
        %v612 = vpop.permute.xlu0 %611
        %615 = vset.pattern.permute.xlu0 0
        %616 = vperm.xlu0 %615, %v458
        %v617 = vpop.permute.xlu0 %616
        %vm619 = vcmask 523264
        %v621 = vsel %vm619, %v395, 0
        %v624 = vsel %vm619, %v396, 0
        %v627 = vsel %vm619, %v397, 0
        %v630 = vsel %vm619, %v398, 0
        %v633 = vsel %vm619, %v399, 0
        %v636 = vsel %vm619, %v400, 0
        %v639 = vsel %vm619, %v401, 0
        %v642 = vsel %vm619, %v402, 0
        %v645 = vsel %vm619, %v403, 0
        %v648 = vsel %vm619, %v404, 0
        %v651 = vsel %vm619, %v405, 0
        %v654 = vsel %vm619, %v406, 0
        %v657 = vsel %vm619, %v407, 0
        %v660 = vsel %vm619, %v408, 0
        %v663 = vsel %vm619, %v409, 0
        %v666 = vsel %vm619, %v410, 0
        %v669 = vsel %vm619, %v411, 0
        %v672 = vsel %vm619, %v412, 0
        %v675 = vsel %vm619, %v413, 0
        %v678 = vsel %vm619, %v414, 0
        %v681 = vsel %vm619, %v415, 0
        %v684 = vsel %vm619, %v416, 0
        %v687 = vsel %vm619, %v417, 0
        %v690 = vsel %vm619, %v418, 0
        %v693 = vsel %vm619, %v419, 0
        %v696 = vsel %vm619, %v420, 0
        %v699 = vsel %vm619, %v421, 0
        %v702 = vsel %vm619, %v422, 0
        %v705 = vsel %vm619, %v423, 0
        %v708 = vsel %vm619, %v424, 0
        %v711 = vsel %vm619, %v425, 0
        %v714 = vsel %vm619, %v426, 0
        %716 = vmatprep.subr.mxu0 0.0
        %717 = vmatpush1.msra.mxu0 0.0
        %718 = vmatprep.subr.mxu0 0.0
        %719 = vmatpush1.msra.mxu0 0.0
        %720 = vmatprep.subr.mxu0 0.0
        %721 = vmatpush1.msra.mxu0 0.0
        %722 = vmatprep.subr.mxu0 0.0
        %723 = vmatpush1.msra.mxu0 0.0
        %724 = vmatprep.subr.mxu0 0.0
        %725 = vmatpush1.msra.mxu0 0.0
        %726 = vmatprep.subr.mxu0 0.0
        %727 = vmatpush1.msra.mxu0 0.0
        %728 = vmatprep.subr.mxu0 0.0
        %729 = vmatpush1.msra.mxu0 0.0
        %730 = vmatprep.subr.mxu0 0.0
        %731 = vmatpush1.msra.mxu0 0.0
        %732 = vmatprep.subr.mxu0 %v392
        %733 = vmatpush1.msra.mxu0 %v391
        %734 = vmatprep.subr.mxu0 %v388
        %735 = vmatpush1.msra.mxu0 %v387
        %736 = vmatprep.subr.mxu0 %v384
        %737 = vmatpush1.msra.mxu0 %v383
        %738 = vmatprep.subr.mxu0 %v380
        %739 = vmatpush1.msra.mxu0 %v379
        %740 = vmatprep.subr.mxu0 %v376
        %741 = vmatpush1.msra.mxu0 %v375
        %742 = vmatprep.subr.mxu0 %v372
        %743 = vmatpush1.msra.mxu0 %v371
        %744 = vmatprep.subr.mxu0 %v368
        %745 = vmatpush1.msra.mxu0 %v367
        %746 = vmatprep.subr.mxu0 %v364
        %747 = vmatpush1.msra.mxu0 %v363
        %748 = vmatprep.subr.mxu0 0.0
        %749 = vmatpush2.msra.mxu0 0.0
        %750 = vmatprep.subr.mxu0 0.0
        %751 = vmatpush2.msra.mxu0 0.0
        %752 = vmatprep.subr.mxu0 0.0
        %753 = vmatpush2.msra.mxu0 0.0
        %754 = vmatprep.subr.mxu0 0.0
        %755 = vmatpush2.msra.mxu0 0.0
        %756 = vmatprep.subr.mxu0 0.0
        %757 = vmatpush2.msra.mxu0 0.0
        %758 = vmatprep.subr.mxu0 0.0
        %759 = vmatpush2.msra.mxu0 0.0
        %760 = vmatprep.subr.mxu0 0.0
        %761 = vmatpush2.msra.mxu0 0.0
        %762 = vmatprep.subr.mxu0 0.0
        %763 = vmatpush2.msra.mxu0 0.0
        %764 = vmatprep.subr.mxu0 0.0
        %765 = vmatpush2.msra.mxu0 0.0
        %766 = vmatprep.subr.mxu0 0.0
        %767 = vmatpush2.msra.mxu0 0.0
        %768 = vmatprep.subr.mxu0 0.0
        %769 = vmatpush2.msra.mxu0 0.0
        %770 = vmatprep.subr.mxu0 0.0
        %771 = vmatpush2.msra.mxu0 0.0
        %772 = vmatprep.subr.mxu0 0.0
        %773 = vmatpush2.msra.mxu0 0.0
        %774 = vmatprep.subr.mxu0 0.0
        %775 = vmatpush2.msra.mxu0 0.0
        %776 = vmatprep.subr.mxu0 0.0
        %777 = vmatpush2.msra.mxu0 0.0
        %778 = vmatprep.subr.mxu0 0.0
        %779 = vmatpush2.msra.mxu0 0.0
        %780 = vmatprep.mubr.f32.mxu0 0.0
        %781 = vmatmul.mubr.f32.gmra.mxu0 %v621
        %v782 = vpop.f32.mrf.mxu0
        %v783 = vadd.f32 %v462, %v782
        %v784 = vpop.f32.mrf.mxu0
        %v785 = vadd.f32 %v462, %v784
        %786 = vmatprep.mubr.f32.mxu0 0.0
        %787 = vmatmul.mubr.f32.gmra.mxu0 %v624
        %v788 = vpop.f32.mrf.mxu0
        %v789 = vadd.f32 %v467, %v788
        %v790 = vpop.f32.mrf.mxu0
        %v791 = vadd.f32 %v467, %v790
        %792 = vmatprep.mubr.f32.mxu0 0.0
        %793 = vmatmul.mubr.f32.gmra.mxu0 %v627
        %v794 = vpop.f32.mrf.mxu0
        %v795 = vadd.f32 %v472, %v794
        %v796 = vpop.f32.mrf.mxu0
        %v797 = vadd.f32 %v472, %v796
        %798 = vmatprep.mubr.f32.mxu0 0.0
        %799 = vmatmul.mubr.f32.gmra.mxu0 %v630
        %v800 = vpop.f32.mrf.mxu0
        %v801 = vadd.f32 %v477, %v800
        %v802 = vpop.f32.mrf.mxu0
        %v803 = vadd.f32 %v477, %v802
        %804 = vmatprep.mubr.f32.mxu0 0.0
        %805 = vmatmul.mubr.f32.gmra.mxu0 %v633
        %v806 = vpop.f32.mrf.mxu0
        %v807 = vadd.f32 %v482, %v806
        %v808 = vpop.f32.mrf.mxu0
        %v809 = vadd.f32 %v482, %v808
        %810 = vmatprep.mubr.f32.mxu0 0.0
        %811 = vmatmul.mubr.f32.gmra.mxu0 %v636
        %v812 = vpop.f32.mrf.mxu0
        %v813 = vadd.f32 %v487, %v812
        %v814 = vpop.f32.mrf.mxu0
        %v815 = vadd.f32 %v487, %v814
        %816 = vmatprep.mubr.f32.mxu0 0.0
        %817 = vmatmul.mubr.f32.gmra.mxu0 %v639
        %v818 = vpop.f32.mrf.mxu0
        %v819 = vadd.f32 %v492, %v818
        %v820 = vpop.f32.mrf.mxu0
        %v821 = vadd.f32 %v492, %v820
        %822 = vmatprep.mubr.f32.mxu0 0.0
        %823 = vmatmul.mubr.f32.gmra.mxu0 %v642
        %v824 = vpop.f32.mrf.mxu0
        %v825 = vadd.f32 %v497, %v824
        %v826 = vpop.f32.mrf.mxu0
        %v827 = vadd.f32 %v497, %v826
        %828 = vmatprep.mubr.f32.mxu0 0.0
        %829 = vmatmul.mubr.f32.gmra.mxu0 %v645
        %v830 = vpop.f32.mrf.mxu0
        %v831 = vadd.f32 %v502, %v830
        %v832 = vpop.f32.mrf.mxu0
        %v833 = vadd.f32 %v502, %v832
        %834 = vmatprep.mubr.f32.mxu0 0.0
        %835 = vmatmul.mubr.f32.gmra.mxu0 %v648
        %v836 = vpop.f32.mrf.mxu0
        %v837 = vadd.f32 %v507, %v836
        %v838 = vpop.f32.mrf.mxu0
        %v839 = vadd.f32 %v507, %v838
        %840 = vmatprep.mubr.f32.mxu0 0.0
        %841 = vmatmul.mubr.f32.gmra.mxu0 %v651
        %v842 = vpop.f32.mrf.mxu0
        %v843 = vadd.f32 %v512, %v842
        %v844 = vpop.f32.mrf.mxu0
        %v845 = vadd.f32 %v512, %v844
        %846 = vmatprep.mubr.f32.mxu0 0.0
        %847 = vmatmul.mubr.f32.gmra.mxu0 %v654
        %v848 = vpop.f32.mrf.mxu0
        %v849 = vadd.f32 %v517, %v848
        %v850 = vpop.f32.mrf.mxu0
        %v851 = vadd.f32 %v517, %v850
        %852 = vmatprep.mubr.f32.mxu0 0.0
        %853 = vmatmul.mubr.f32.gmra.mxu0 %v657
        %v854 = vpop.f32.mrf.mxu0
        %v855 = vadd.f32 %v522, %v854
        %v856 = vpop.f32.mrf.mxu0
        %v857 = vadd.f32 %v522, %v856
        %858 = vmatprep.mubr.f32.mxu0 0.0
        %859 = vmatmul.mubr.f32.gmra.mxu0 %v660
        %v860 = vpop.f32.mrf.mxu0
        %v861 = vadd.f32 %v527, %v860
        %v862 = vpop.f32.mrf.mxu0
        %v863 = vadd.f32 %v527, %v862
        %864 = vmatprep.mubr.f32.mxu0 0.0
        %865 = vmatmul.mubr.f32.gmra.mxu0 %v663
        %v866 = vpop.f32.mrf.mxu0
        %v867 = vadd.f32 %v532, %v866
        %v868 = vpop.f32.mrf.mxu0
        %v869 = vadd.f32 %v532, %v868
        %870 = vmatprep.mubr.f32.mxu0 0.0
        %871 = vmatmul.mubr.f32.gmra.mxu0 %v666
        %v872 = vpop.f32.mrf.mxu0
        %v873 = vadd.f32 %v537, %v872
        %v874 = vpop.f32.mrf.mxu0
        %v875 = vadd.f32 %v537, %v874
        %876 = vmatprep.mubr.f32.mxu0 0.0
        %877 = vmatmul.mubr.f32.gmra.mxu0 %v669
        %v878 = vpop.f32.mrf.mxu0
        %v879 = vadd.f32 %v542, %v878
        %v880 = vpop.f32.mrf.mxu0
        %v881 = vadd.f32 %v542, %v880
        %882 = vmatprep.mubr.f32.mxu0 0.0
        %883 = vmatmul.mubr.f32.gmra.mxu0 %v672
        %v884 = vpop.f32.mrf.mxu0
        %v885 = vadd.f32 %v547, %v884
        %v886 = vpop.f32.mrf.mxu0
        %v887 = vadd.f32 %v547, %v886
        %888 = vmatprep.mubr.f32.mxu0 0.0
        %889 = vmatmul.mubr.f32.gmra.mxu0 %v675
        %v890 = vpop.f32.mrf.mxu0
        %v891 = vadd.f32 %v552, %v890
        %v892 = vpop.f32.mrf.mxu0
        %v893 = vadd.f32 %v552, %v892
        %894 = vmatprep.mubr.f32.mxu0 0.0
        %895 = vmatmul.mubr.f32.gmra.mxu0 %v678
        %v896 = vpop.f32.mrf.mxu0
        %v897 = vadd.f32 %v557, %v896
        %v898 = vpop.f32.mrf.mxu0
        %v899 = vadd.f32 %v557, %v898
        %900 = vmatprep.mubr.f32.mxu0 0.0
        %901 = vmatmul.mubr.f32.gmra.mxu0 %v681
        %v902 = vpop.f32.mrf.mxu0
        %v903 = vadd.f32 %v562, %v902
        %v904 = vpop.f32.mrf.mxu0
        %v905 = vadd.f32 %v562, %v904
        %906 = vmatprep.mubr.f32.mxu0 0.0
        %907 = vmatmul.mubr.f32.gmra.mxu0 %v684
        %v908 = vpop.f32.mrf.mxu0
        %v909 = vadd.f32 %v567, %v908
        %v910 = vpop.f32.mrf.mxu0
        %v911 = vadd.f32 %v567, %v910
        %912 = vmatprep.mubr.f32.mxu0 0.0
        %913 = vmatmul.mubr.f32.gmra.mxu0 %v687
        %v914 = vpop.f32.mrf.mxu0
        %v915 = vadd.f32 %v572, %v914
        %v916 = vpop.f32.mrf.mxu0
        %v917 = vadd.f32 %v572, %v916
        %918 = vmatprep.mubr.f32.mxu0 0.0
        %919 = vmatmul.mubr.f32.gmra.mxu0 %v690
        %v920 = vpop.f32.mrf.mxu0
        %v921 = vadd.f32 %v577, %v920
        %v922 = vpop.f32.mrf.mxu0
        %v923 = vadd.f32 %v577, %v922
        %924 = vmatprep.mubr.f32.mxu0 0.0
        %925 = vmatmul.mubr.f32.gmra.mxu0 %v693
        %v926 = vpop.f32.mrf.mxu0
        %v927 = vadd.f32 %v582, %v926
        %v928 = vpop.f32.mrf.mxu0
        %v929 = vadd.f32 %v582, %v928
        %930 = vmatprep.mubr.f32.mxu0 0.0
        %931 = vmatmul.mubr.f32.gmra.mxu0 %v696
        %v932 = vpop.f32.mrf.mxu0
        %v933 = vadd.f32 %v587, %v932
        %v934 = vpop.f32.mrf.mxu0
        %v935 = vadd.f32 %v587, %v934
        %936 = vmatprep.mubr.f32.mxu0 0.0
        %937 = vmatmul.mubr.f32.gmra.mxu0 %v699
        %v938 = vpop.f32.mrf.mxu0
        %v939 = vadd.f32 %v592, %v938
        %v940 = vpop.f32.mrf.mxu0
        %v941 = vadd.f32 %v592, %v940
        %942 = vmatprep.mubr.f32.mxu0 0.0
        %943 = vmatmul.mubr.f32.gmra.mxu0 %v702
        %v944 = vpop.f32.mrf.mxu0
        %v945 = vadd.f32 %v597, %v944
        %v946 = vpop.f32.mrf.mxu0
        %v947 = vadd.f32 %v597, %v946
        %948 = vmatprep.mubr.f32.mxu0 0.0
        %949 = vmatmul.mubr.f32.gmra.mxu0 %v705
        %v950 = vpop.f32.mrf.mxu0
        %v951 = vadd.f32 %v602, %v950
        %v952 = vpop.f32.mrf.mxu0
        %v953 = vadd.f32 %v602, %v952
        %954 = vmatprep.mubr.f32.mxu0 0.0
        %955 = vmatmul.mubr.f32.gmra.mxu0 %v708
        %v956 = vpop.f32.mrf.mxu0
        %v957 = vadd.f32 %v607, %v956
        %v958 = vpop.f32.mrf.mxu0
        %v959 = vadd.f32 %v607, %v958
        %960 = vmatprep.mubr.f32.mxu0 0.0
        %961 = vmatmul.mubr.f32.gmra.mxu0 %v711
        %v962 = vpop.f32.mrf.mxu0
        %v963 = vadd.f32 %v612, %v962
        %v964 = vpop.f32.mrf.mxu0
        %v965 = vadd.f32 %v612, %v964
        %966 = vmatprep.mubr.f32.mxu0 0.0
        %967 = vmatmul.mubr.f32.gmra.mxu0 %v714
        %v968 = vpop.f32.mrf.mxu0
        %v969 = vadd.f32 %v617, %v968
        %v970 = vpop.f32.mrf.mxu0
        %v971 = vadd.f32 %v617, %v970
        %972 = vdwg.mxu0
        %973 = vmatprep.subr.mxu0 0.0
        %974 = vmatpush1.msra.mxu0 0.0
        %975 = vmatprep.subr.mxu0 0.0
        %976 = vmatpush1.msra.mxu0 0.0
        %977 = vmatprep.subr.mxu0 0.0
        %978 = vmatpush1.msra.mxu0 0.0
        %979 = vmatprep.subr.mxu0 0.0
        %980 = vmatpush1.msra.mxu0 0.0
        %981 = vmatprep.subr.mxu0 0.0
        %982 = vmatpush1.msra.mxu0 0.0
        %983 = vmatprep.subr.mxu0 0.0
        %984 = vmatpush1.msra.mxu0 0.0
        %985 = vmatprep.subr.mxu0 0.0
        %986 = vmatpush1.msra.mxu0 0.0
        %987 = vmatprep.subr.mxu0 0.0
        %988 = vmatpush1.msra.mxu0 0.0
        %989 = vmatprep.subr.mxu0 %v394
        %990 = vmatpush1.msra.mxu0 %v393
        %991 = vmatprep.subr.mxu0 %v390
        %992 = vmatpush1.msra.mxu0 %v389
        %993 = vmatprep.subr.mxu0 %v386
        %994 = vmatpush1.msra.mxu0 %v385
        %995 = vmatprep.subr.mxu0 %v382
        %996 = vmatpush1.msra.mxu0 %v381
        %997 = vmatprep.subr.mxu0 %v378
        %998 = vmatpush1.msra.mxu0 %v377
        %999 = vmatprep.subr.mxu0 %v374
        %1000 = vmatpush1.msra.mxu0 %v373
        %1001 = vmatprep.subr.mxu0 %v370
        %1002 = vmatpush1.msra.mxu0 %v369
        %1003 = vmatprep.subr.mxu0 %v366
        %1004 = vmatpush1.msra.mxu0 %v365
        %1005 = vmatprep.subr.mxu0 0.0
        %1006 = vmatpush2.msra.mxu0 0.0
        %1007 = vmatprep.subr.mxu0 0.0
        %1008 = vmatpush2.msra.mxu0 0.0
        %1009 = vmatprep.subr.mxu0 0.0
        %1010 = vmatpush2.msra.mxu0 0.0
        %1011 = vmatprep.subr.mxu0 0.0
        %1012 = vmatpush2.msra.mxu0 0.0
        %1013 = vmatprep.subr.mxu0 0.0
        %1014 = vmatpush2.msra.mxu0 0.0
        %1015 = vmatprep.subr.mxu0 0.0
        %1016 = vmatpush2.msra.mxu0 0.0
        %1017 = vmatprep.subr.mxu0 0.0
        %1018 = vmatpush2.msra.mxu0 0.0
        %1019 = vmatprep.subr.mxu0 0.0
        %1020 = vmatpush2.msra.mxu0 0.0
        %1021 = vmatprep.subr.mxu0 0.0
        %1022 = vmatpush2.msra.mxu0 0.0
        %1023 = vmatprep.subr.mxu0 0.0
        %1024 = vmatpush2.msra.mxu0 0.0
        %1025 = vmatprep.subr.mxu0 0.0
        %1026 = vmatpush2.msra.mxu0 0.0
        %1027 = vmatprep.subr.mxu0 0.0
        %1028 = vmatpush2.msra.mxu0 0.0
        %1029 = vmatprep.subr.mxu0 0.0
        %1030 = vmatpush2.msra.mxu0 0.0
        %1031 = vmatprep.subr.mxu0 0.0
        %1032 = vmatpush2.msra.mxu0 0.0
        %1033 = vmatprep.subr.mxu0 0.0
        %1034 = vmatpush2.msra.mxu0 0.0
        %1035 = vmatprep.subr.mxu0 0.0
        %1036 = vmatpush2.msra.mxu0 0.0
        %1037 = vmatprep.mubr.f32.mxu0 0.0
        %1038 = vmatmul.mubr.f32.gmra.mxu0 %v621
        %v1039 = vpop.f32.mrf.mxu0
        %v1040 = vadd.f32 %v462, %v1039
        %v1041 = vpop.f32.mrf.mxu0
        %v1042 = vadd.f32 %v462, %v1041
        %1043 = vmatprep.mubr.f32.mxu0 0.0
        %1044 = vmatmul.mubr.f32.gmra.mxu0 %v624
        %v1045 = vpop.f32.mrf.mxu0
        %v1046 = vadd.f32 %v467, %v1045
        %v1047 = vpop.f32.mrf.mxu0
        %v1048 = vadd.f32 %v467, %v1047
        %1049 = vmatprep.mubr.f32.mxu0 0.0
        %1050 = vmatmul.mubr.f32.gmra.mxu0 %v627
        %v1051 = vpop.f32.mrf.mxu0
        %v1052 = vadd.f32 %v472, %v1051
        %v1053 = vpop.f32.mrf.mxu0
        %v1054 = vadd.f32 %v472, %v1053
        %1055 = vmatprep.mubr.f32.mxu0 0.0
        %1056 = vmatmul.mubr.f32.gmra.mxu0 %v630
        %v1057 = vpop.f32.mrf.mxu0
        %v1058 = vadd.f32 %v477, %v1057
        %v1059 = vpop.f32.mrf.mxu0
        %v1060 = vadd.f32 %v477, %v1059
        %1061 = vmatprep.mubr.f32.mxu0 0.0
        %1062 = vmatmul.mubr.f32.gmra.mxu0 %v633
        %v1063 = vpop.f32.mrf.mxu0
        %v1064 = vadd.f32 %v482, %v1063
        %v1065 = vpop.f32.mrf.mxu0
        %v1066 = vadd.f32 %v482, %v1065
        %1067 = vmatprep.mubr.f32.mxu0 0.0
        %1068 = vmatmul.mubr.f32.gmra.mxu0 %v636
        %v1069 = vpop.f32.mrf.mxu0
        %v1070 = vadd.f32 %v487, %v1069
        %v1071 = vpop.f32.mrf.mxu0
        %v1072 = vadd.f32 %v487, %v1071
        %1073 = vmatprep.mubr.f32.mxu0 0.0
        %1074 = vmatmul.mubr.f32.gmra.mxu0 %v639
        %v1075 = vpop.f32.mrf.mxu0
        %v1076 = vadd.f32 %v492, %v1075
        %v1077 = vpop.f32.mrf.mxu0
        %v1078 = vadd.f32 %v492, %v1077
        %1079 = vmatprep.mubr.f32.mxu0 0.0
        %1080 = vmatmul.mubr.f32.gmra.mxu0 %v642
        %v1081 = vpop.f32.mrf.mxu0
        %v1082 = vadd.f32 %v497, %v1081
        %v1083 = vpop.f32.mrf.mxu0
        %v1084 = vadd.f32 %v497, %v1083
        %1085 = vmatprep.mubr.f32.mxu0 0.0
        %1086 = vmatmul.mubr.f32.gmra.mxu0 %v645
        %v1087 = vpop.f32.mrf.mxu0
        %v1088 = vadd.f32 %v502, %v1087
        %v1089 = vpop.f32.mrf.mxu0
        %v1090 = vadd.f32 %v502, %v1089
        %1091 = vmatprep.mubr.f32.mxu0 0.0
        %1092 = vmatmul.mubr.f32.gmra.mxu0 %v648
        %v1093 = vpop.f32.mrf.mxu0
        %v1094 = vadd.f32 %v507, %v1093
        %v1095 = vpop.f32.mrf.mxu0
        %v1096 = vadd.f32 %v507, %v1095
        %1097 = vmatprep.mubr.f32.mxu0 0.0
        %1098 = vmatmul.mubr.f32.gmra.mxu0 %v651
        %v1099 = vpop.f32.mrf.mxu0
        %v1100 = vadd.f32 %v512, %v1099
        %v1101 = vpop.f32.mrf.mxu0
        %v1102 = vadd.f32 %v512, %v1101
        %1103 = vmatprep.mubr.f32.mxu0 0.0
        %1104 = vmatmul.mubr.f32.gmra.mxu0 %v654
        %v1105 = vpop.f32.mrf.mxu0
        %v1106 = vadd.f32 %v517, %v1105
        %v1107 = vpop.f32.mrf.mxu0
        %v1108 = vadd.f32 %v517, %v1107
        %1109 = vmatprep.mubr.f32.mxu0 0.0
        %1110 = vmatmul.mubr.f32.gmra.mxu0 %v657
        %v1111 = vpop.f32.mrf.mxu0
        %v1112 = vadd.f32 %v522, %v1111
        %v1113 = vpop.f32.mrf.mxu0
        %v1114 = vadd.f32 %v522, %v1113
        %1115 = vmatprep.mubr.f32.mxu0 0.0
        %1116 = vmatmul.mubr.f32.gmra.mxu0 %v660
        %v1117 = vpop.f32.mrf.mxu0
        %v1118 = vadd.f32 %v527, %v1117
        %v1119 = vpop.f32.mrf.mxu0
        %v1120 = vadd.f32 %v527, %v1119
        %1121 = vmatprep.mubr.f32.mxu0 0.0
        %1122 = vmatmul.mubr.f32.gmra.mxu0 %v663
        %v1123 = vpop.f32.mrf.mxu0
        %v1124 = vadd.f32 %v532, %v1123
        %v1125 = vpop.f32.mrf.mxu0
        %v1126 = vadd.f32 %v532, %v1125
        %1127 = vmatprep.mubr.f32.mxu0 0.0
        %1128 = vmatmul.mubr.f32.gmra.mxu0 %v666
        %v1129 = vpop.f32.mrf.mxu0
        %v1130 = vadd.f32 %v537, %v1129
        %v1131 = vpop.f32.mrf.mxu0
        %v1132 = vadd.f32 %v537, %v1131
        %1133 = vmatprep.mubr.f32.mxu0 0.0
        %1134 = vmatmul.mubr.f32.gmra.mxu0 %v669
        %v1135 = vpop.f32.mrf.mxu0
        %v1136 = vadd.f32 %v542, %v1135
        %v1137 = vpop.f32.mrf.mxu0
        %v1138 = vadd.f32 %v542, %v1137
        %1139 = vmatprep.mubr.f32.mxu0 0.0
        %1140 = vmatmul.mubr.f32.gmra.mxu0 %v672
        %v1141 = vpop.f32.mrf.mxu0
        %v1142 = vadd.f32 %v547, %v1141
        %v1143 = vpop.f32.mrf.mxu0
        %v1144 = vadd.f32 %v547, %v1143
        %1145 = vmatprep.mubr.f32.mxu0 0.0
        %1146 = vmatmul.mubr.f32.gmra.mxu0 %v675
        %v1147 = vpop.f32.mrf.mxu0
        %v1148 = vadd.f32 %v552, %v1147
        %v1149 = vpop.f32.mrf.mxu0
        %v1150 = vadd.f32 %v552, %v1149
        %1151 = vmatprep.mubr.f32.mxu0 0.0
        %1152 = vmatmul.mubr.f32.gmra.mxu0 %v678
        %v1153 = vpop.f32.mrf.mxu0
        %v1154 = vadd.f32 %v557, %v1153
        %v1155 = vpop.f32.mrf.mxu0
        %v1156 = vadd.f32 %v557, %v1155
        %1157 = vmatprep.mubr.f32.mxu0 0.0
        %1158 = vmatmul.mubr.f32.gmra.mxu0 %v681
        %v1159 = vpop.f32.mrf.mxu0
        %v1160 = vadd.f32 %v562, %v1159
        %v1161 = vpop.f32.mrf.mxu0
        %v1162 = vadd.f32 %v562, %v1161
        %1163 = vmatprep.mubr.f32.mxu0 0.0
        %1164 = vmatmul.mubr.f32.gmra.mxu0 %v684
        %v1165 = vpop.f32.mrf.mxu0
        %v1166 = vadd.f32 %v567, %v1165
        %v1167 = vpop.f32.mrf.mxu0
        %v1168 = vadd.f32 %v567, %v1167
        %1169 = vmatprep.mubr.f32.mxu0 0.0
        %1170 = vmatmul.mubr.f32.gmra.mxu0 %v687
        %v1171 = vpop.f32.mrf.mxu0
        %v1172 = vadd.f32 %v572, %v1171
        %v1173 = vpop.f32.mrf.mxu0
        %v1174 = vadd.f32 %v572, %v1173
        %1175 = vmatprep.mubr.f32.mxu0 0.0
        %1176 = vmatmul.mubr.f32.gmra.mxu0 %v690
        %v1177 = vpop.f32.mrf.mxu0
        %v1178 = vadd.f32 %v577, %v1177
        %v1179 = vpop.f32.mrf.mxu0
        %v1180 = vadd.f32 %v577, %v1179
        %1181 = vmatprep.mubr.f32.mxu0 0.0
        %1182 = vmatmul.mubr.f32.gmra.mxu0 %v693
        %v1183 = vpop.f32.mrf.mxu0
        %v1184 = vadd.f32 %v582, %v1183
        %v1185 = vpop.f32.mrf.mxu0
        %v1186 = vadd.f32 %v582, %v1185
        %1187 = vmatprep.mubr.f32.mxu0 0.0
        %1188 = vmatmul.mubr.f32.gmra.mxu0 %v696
        %v1189 = vpop.f32.mrf.mxu0
        %v1190 = vadd.f32 %v587, %v1189
        %v1191 = vpop.f32.mrf.mxu0
        %v1192 = vadd.f32 %v587, %v1191
        %1193 = vmatprep.mubr.f32.mxu0 0.0
        %1194 = vmatmul.mubr.f32.gmra.mxu0 %v699
        %v1195 = vpop.f32.mrf.mxu0
        %v1196 = vadd.f32 %v592, %v1195
        %v1197 = vpop.f32.mrf.mxu0
        %v1198 = vadd.f32 %v592, %v1197
        %1199 = vmatprep.mubr.f32.mxu0 0.0
        %1200 = vmatmul.mubr.f32.gmra.mxu0 %v702
        %v1201 = vpop.f32.mrf.mxu0
        %v1202 = vadd.f32 %v597, %v1201
        %v1203 = vpop.f32.mrf.mxu0
        %v1204 = vadd.f32 %v597, %v1203
        %1205 = vmatprep.mubr.f32.mxu0 0.0
        %1206 = vmatmul.mubr.f32.gmra.mxu0 %v705
        %v1207 = vpop.f32.mrf.mxu0
        %v1208 = vadd.f32 %v602, %v1207
        %v1209 = vpop.f32.mrf.mxu0
        %v1210 = vadd.f32 %v602, %v1209
        %1211 = vmatprep.mubr.f32.mxu0 0.0
        %1212 = vmatmul.mubr.f32.gmra.mxu0 %v708
        %v1213 = vpop.f32.mrf.mxu0
        %v1214 = vadd.f32 %v607, %v1213
        %v1215 = vpop.f32.mrf.mxu0
        %v1216 = vadd.f32 %v607, %v1215
        %1217 = vmatprep.mubr.f32.mxu0 0.0
        %1218 = vmatmul.mubr.f32.gmra.mxu0 %v711
        %v1219 = vpop.f32.mrf.mxu0
        %v1220 = vadd.f32 %v612, %v1219
        %v1221 = vpop.f32.mrf.mxu0
        %v1222 = vadd.f32 %v612, %v1221
        %1223 = vmatprep.mubr.f32.mxu0 0.0
        %1224 = vmatmul.mubr.f32.gmra.mxu0 %v714
        %v1225 = vpop.f32.mrf.mxu0
        %v1226 = vadd.f32 %v617, %v1225
        %v1227 = vpop.f32.mrf.mxu0
        %v1228 = vadd.f32 %v617, %v1227
        %1229 = vdwg.mxu0
        %v1230 = vmul.f32 %v783, 0.5
        %v1231 = vmul.f32 %v785, 0.5
        %v1232 = vmul.f32 %v1040, 0.5
        %v1233 = vmul.f32 %v1042, 0.5
        %v1234 = vmul.f32 %v789, 0.5
        %v1235 = vmul.f32 %v791, 0.5
        %v1236 = vmul.f32 %v1046, 0.5
        %v1237 = vmul.f32 %v1048, 0.5
        %v1238 = vmul.f32 %v795, 0.5
        %v1239 = vmul.f32 %v797, 0.5
        %v1240 = vmul.f32 %v1052, 0.5
        %v1241 = vmul.f32 %v1054, 0.5
        %v1242 = vmul.f32 %v801, 0.5
        %v1243 = vmul.f32 %v803, 0.5
        %v1244 = vmul.f32 %v1058, 0.5
        %v1245 = vmul.f32 %v1060, 0.5
        %v1246 = vmul.f32 %v807, 0.5
        %v1247 = vmul.f32 %v809, 0.5
        %v1248 = vmul.f32 %v1064, 0.5
        %v1249 = vmul.f32 %v1066, 0.5
        %v1250 = vmul.f32 %v813, 0.5
        %v1251 = vmul.f32 %v815, 0.5
        %v1252 = vmul.f32 %v1070, 0.5
        %v1253 = vmul.f32 %v1072, 0.5
        %v1254 = vmul.f32 %v819, 0.5
        %v1255 = vmul.f32 %v821, 0.5
        %v1256 = vmul.f32 %v1076, 0.5
        %v1257 = vmul.f32 %v1078, 0.5
        %v1258 = vmul.f32 %v825, 0.5
        %v1259 = vmul.f32 %v827, 0.5
        %v1260 = vmul.f32 %v1082, 0.5
        %v1261 = vmul.f32 %v1084, 0.5
        %v1262 = vmul.f32 %v831, 0.5
        %v1263 = vmul.f32 %v833, 0.5
        %v1264 = vmul.f32 %v1088, 0.5
        %v1265 = vmul.f32 %v1090, 0.5
        %v1266 = vmul.f32 %v837, 0.5
        %v1267 = vmul.f32 %v839, 0.5
        %v1268 = vmul.f32 %v1094, 0.5
        %v1269 = vmul.f32 %v1096, 0.5
        %v1270 = vmul.f32 %v843, 0.5
        %v1271 = vmul.f32 %v845, 0.5
        %v1272 = vmul.f32 %v1100, 0.5
        %v1273 = vmul.f32 %v1102, 0.5
        %v1274 = vmul.f32 %v849, 0.5
        %v1275 = vmul.f32 %v851, 0.5
        %v1276 = vmul.f32 %v1106, 0.5
        %v1277 = vmul.f32 %v1108, 0.5
        %v1278 = vmul.f32 %v855, 0.5
        %v1279 = vmul.f32 %v857, 0.5
        %v1280 = vmul.f32 %v1112, 0.5
        %v1281 = vmul.f32 %v1114, 0.5
        %v1282 = vmul.f32 %v861, 0.5
        %v1283 = vmul.f32 %v863, 0.5
        %v1284 = vmul.f32 %v1118, 0.5
        %v1285 = vmul.f32 %v1120, 0.5
        %v1286 = vmul.f32 %v867, 0.5
        %v1287 = vmul.f32 %v869, 0.5
        %v1288 = vmul.f32 %v1124, 0.5
        %v1289 = vmul.f32 %v1126, 0.5
        %v1290 = vmul.f32 %v873, 0.5
        %v1291 = vmul.f32 %v875, 0.5
        %v1292 = vmul.f32 %v1130, 0.5
        %v1293 = vmul.f32 %v1132, 0.5
        %v1294 = vmul.f32 %v879, 0.5
        %v1295 = vmul.f32 %v881, 0.5
        %v1296 = vmul.f32 %v1136, 0.5
        %v1297 = vmul.f32 %v1138, 0.5
        %v1298 = vmul.f32 %v885, 0.5
        %v1299 = vmul.f32 %v887, 0.5
        %v1300 = vmul.f32 %v1142, 0.5
        %v1301 = vmul.f32 %v1144, 0.5
        %v1302 = vmul.f32 %v891, 0.5
        %v1303 = vmul.f32 %v893, 0.5
        %v1304 = vmul.f32 %v1148, 0.5
        %v1305 = vmul.f32 %v1150, 0.5
        %v1306 = vmul.f32 %v897, 0.5
        %v1307 = vmul.f32 %v899, 0.5
        %v1308 = vmul.f32 %v1154, 0.5
        %v1309 = vmul.f32 %v1156, 0.5
        %v1310 = vmul.f32 %v903, 0.5
        %v1311 = vmul.f32 %v905, 0.5
        %v1312 = vmul.f32 %v1160, 0.5
        %v1313 = vmul.f32 %v1162, 0.5
        %v1314 = vmul.f32 %v909, 0.5
        %v1315 = vmul.f32 %v911, 0.5
        %v1316 = vmul.f32 %v1166, 0.5
        %v1317 = vmul.f32 %v1168, 0.5
        %v1318 = vmul.f32 %v915, 0.5
        %v1319 = vmul.f32 %v917, 0.5
        %v1320 = vmul.f32 %v1172, 0.5
        %v1321 = vmul.f32 %v1174, 0.5
        %v1322 = vmul.f32 %v921, 0.5
        %v1323 = vmul.f32 %v923, 0.5
        %v1324 = vmul.f32 %v1178, 0.5
        %v1325 = vmul.f32 %v1180, 0.5
        %v1326 = vmul.f32 %v927, 0.5
        %v1327 = vmul.f32 %v929, 0.5
        %v1328 = vmul.f32 %v1184, 0.5
        %v1329 = vmul.f32 %v1186, 0.5
        %v1330 = vmul.f32 %v933, 0.5
        %v1331 = vmul.f32 %v935, 0.5
        %v1332 = vmul.f32 %v1190, 0.5
        %v1333 = vmul.f32 %v1192, 0.5
        %v1334 = vmul.f32 %v939, 0.5
        %v1335 = vmul.f32 %v941, 0.5
        %v1336 = vmul.f32 %v1196, 0.5
        %v1337 = vmul.f32 %v1198, 0.5
        %v1338 = vmul.f32 %v945, 0.5
        %v1339 = vmul.f32 %v947, 0.5
        %v1340 = vmul.f32 %v1202, 0.5
        %v1341 = vmul.f32 %v1204, 0.5
        %v1342 = vmul.f32 %v951, 0.5
        %v1343 = vmul.f32 %v953, 0.5
        %v1344 = vmul.f32 %v1208, 0.5
        %v1345 = vmul.f32 %v1210, 0.5
        %v1346 = vmul.f32 %v957, 0.5
        %v1347 = vmul.f32 %v959, 0.5
        %v1348 = vmul.f32 %v1214, 0.5
        %v1349 = vmul.f32 %v1216, 0.5
        %v1350 = vmul.f32 %v963, 0.5
        %v1351 = vmul.f32 %v965, 0.5
        %v1352 = vmul.f32 %v1220, 0.5
        %v1353 = vmul.f32 %v1222, 0.5
        %v1354 = vmul.f32 %v969, 0.5
        %v1355 = vmul.f32 %v971, 0.5
        %v1356 = vmul.f32 %v1226, 0.5
        %v1357 = vmul.f32 %v1228, 0.5
        %v1358 = vmul.f32 %v783, 0.70710677
        %v1359 = vmul.f32 %v785, 0.70710677
        %v1360 = vmul.f32 %v1040, 0.70710677
        %v1361 = vmul.f32 %v1042, 0.70710677
        %v1362 = vmul.f32 %v789, 0.70710677
        %v1363 = vmul.f32 %v791, 0.70710677
        %v1364 = vmul.f32 %v1046, 0.70710677
        %v1365 = vmul.f32 %v1048, 0.70710677
        %v1366 = vmul.f32 %v795, 0.70710677
        %v1367 = vmul.f32 %v797, 0.70710677
        %v1368 = vmul.f32 %v1052, 0.70710677
        %v1369 = vmul.f32 %v1054, 0.70710677
        %v1370 = vmul.f32 %v801, 0.70710677
        %v1371 = vmul.f32 %v803, 0.70710677
        %v1372 = vmul.f32 %v1058, 0.70710677
        %v1373 = vmul.f32 %v1060, 0.70710677
        %v1374 = vmul.f32 %v807, 0.70710677
        %v1375 = vmul.f32 %v809, 0.70710677
        %v1376 = vmul.f32 %v1064, 0.70710677
        %v1377 = vmul.f32 %v1066, 0.70710677
        %v1378 = vmul.f32 %v813, 0.70710677
        %v1379 = vmul.f32 %v815, 0.70710677
        %v1380 = vmul.f32 %v1070, 0.70710677
        %v1381 = vmul.f32 %v1072, 0.70710677
        %v1382 = vmul.f32 %v819, 0.70710677
        %v1383 = vmul.f32 %v821, 0.70710677
        %v1384 = vmul.f32 %v1076, 0.70710677
        %v1385 = vmul.f32 %v1078, 0.70710677
        %v1386 = vmul.f32 %v825, 0.70710677
        %v1387 = vmul.f32 %v827, 0.70710677
        %v1388 = vmul.f32 %v1082, 0.70710677
        %v1389 = vmul.f32 %v1084, 0.70710677
        %v1390 = vmul.f32 %v831, 0.70710677
        %v1391 = vmul.f32 %v833, 0.70710677
        %v1392 = vmul.f32 %v1088, 0.70710677
        %v1393 = vmul.f32 %v1090, 0.70710677
        %v1394 = vmul.f32 %v837, 0.70710677
        %v1395 = vmul.f32 %v839, 0.70710677
        %v1396 = vmul.f32 %v1094, 0.70710677
        %v1397 = vmul.f32 %v1096, 0.70710677
        %v1398 = vmul.f32 %v843, 0.70710677
        %v1399 = vmul.f32 %v845, 0.70710677
        %v1400 = vmul.f32 %v1100, 0.70710677
        %v1401 = vmul.f32 %v1102, 0.70710677
        %v1402 = vmul.f32 %v849, 0.70710677
        %v1403 = vmul.f32 %v851, 0.70710677
        %v1404 = vmul.f32 %v1106, 0.70710677
        %v1405 = vmul.f32 %v1108, 0.70710677
        %v1406 = vmul.f32 %v855, 0.70710677
        %v1407 = vmul.f32 %v857, 0.70710677
        %v1408 = vmul.f32 %v1112, 0.70710677
        %v1409 = vmul.f32 %v1114, 0.70710677
        %v1410 = vmul.f32 %v861, 0.70710677
        %v1411 = vmul.f32 %v863, 0.70710677
        %v1412 = vmul.f32 %v1118, 0.70710677
        %v1413 = vmul.f32 %v1120, 0.70710677
        %v1414 = vmul.f32 %v867, 0.70710677
        %v1415 = vmul.f32 %v869, 0.70710677
        %v1416 = vmul.f32 %v1124, 0.70710677
        %v1417 = vmul.f32 %v1126, 0.70710677
        %v1418 = vmul.f32 %v873, 0.70710677
        %v1419 = vmul.f32 %v875, 0.70710677
        %v1420 = vmul.f32 %v1130, 0.70710677
        %v1421 = vmul.f32 %v1132, 0.70710677
        %v1422 = vmul.f32 %v879, 0.70710677
        %v1423 = vmul.f32 %v881, 0.70710677
        %v1424 = vmul.f32 %v1136, 0.70710677
        %v1425 = vmul.f32 %v1138, 0.70710677
        %v1426 = vmul.f32 %v885, 0.70710677
        %v1427 = vmul.f32 %v887, 0.70710677
        %v1428 = vmul.f32 %v1142, 0.70710677
        %v1429 = vmul.f32 %v1144, 0.70710677
        %v1430 = vmul.f32 %v891, 0.70710677
        %v1431 = vmul.f32 %v893, 0.70710677
        %v1432 = vmul.f32 %v1148, 0.70710677
        %v1433 = vmul.f32 %v1150, 0.70710677
        %v1434 = vmul.f32 %v897, 0.70710677
        %v1435 = vmul.f32 %v899, 0.70710677
        %v1436 = vmul.f32 %v1154, 0.70710677
        %v1437 = vmul.f32 %v1156, 0.70710677
        %v1438 = vmul.f32 %v903, 0.70710677
        %v1439 = vmul.f32 %v905, 0.70710677
        %v1440 = vmul.f32 %v1160, 0.70710677
        %v1441 = vmul.f32 %v1162, 0.70710677
        %v1442 = vmul.f32 %v909, 0.70710677
        %v1443 = vmul.f32 %v911, 0.70710677
        %v1444 = vmul.f32 %v1166, 0.70710677
        %v1445 = vmul.f32 %v1168, 0.70710677
        %v1446 = vmul.f32 %v915, 0.70710677
        %v1447 = vmul.f32 %v917, 0.70710677
        %v1448 = vmul.f32 %v1172, 0.70710677
        %v1449 = vmul.f32 %v1174, 0.70710677
        %v1450 = vmul.f32 %v921, 0.70710677
        %v1451 = vmul.f32 %v923, 0.70710677
        %v1452 = vmul.f32 %v1178, 0.70710677
        %v1453 = vmul.f32 %v1180, 0.70710677
        %v1454 = vmul.f32 %v927, 0.70710677
        %v1455 = vmul.f32 %v929, 0.70710677
        %v1456 = vmul.f32 %v1184, 0.70710677
        %v1457 = vmul.f32 %v1186, 0.70710677
        %v1458 = vmul.f32 %v933, 0.70710677
        %v1459 = vmul.f32 %v935, 0.70710677
        %v1460 = vmul.f32 %v1190, 0.70710677
        %v1461 = vmul.f32 %v1192, 0.70710677
        %v1462 = vmul.f32 %v939, 0.70710677
        %v1463 = vmul.f32 %v941, 0.70710677
        %v1464 = vmul.f32 %v1196, 0.70710677
        %v1465 = vmul.f32 %v1198, 0.70710677
        %v1466 = vmul.f32 %v945, 0.70710677
        %v1467 = vmul.f32 %v947, 0.70710677
        %v1468 = vmul.f32 %v1202, 0.70710677
        %v1469 = vmul.f32 %v1204, 0.70710677
        %v1470 = vmul.f32 %v951, 0.70710677
        %v1471 = vmul.f32 %v953, 0.70710677
        %v1472 = vmul.f32 %v1208, 0.70710677
        %v1473 = vmul.f32 %v1210, 0.70710677
        %v1474 = vmul.f32 %v957, 0.70710677
        %v1475 = vmul.f32 %v959, 0.70710677
        %v1476 = vmul.f32 %v1214, 0.70710677
        %v1477 = vmul.f32 %v1216, 0.70710677
        %v1478 = vmul.f32 %v963, 0.70710677
        %v1479 = vmul.f32 %v965, 0.70710677
        %v1480 = vmul.f32 %v1220, 0.70710677
        %v1481 = vmul.f32 %v1222, 0.70710677
        %v1482 = vmul.f32 %v969, 0.70710677
        %v1483 = vmul.f32 %v971, 0.70710677
        %v1484 = vmul.f32 %v1226, 0.70710677
        %v1485 = vmul.f32 %v1228, 0.70710677
        %v1486 = vand.u32 2147483647, %v1358
        %v1487 = vand.u32 2147483647, %v1359
        %v1488 = vand.u32 2147483647, %v1360
        %v1489 = vand.u32 2147483647, %v1361
        %v1490 = vand.u32 2147483647, %v1362
        %v1491 = vand.u32 2147483647, %v1363
        %v1492 = vand.u32 2147483647, %v1364
        %v1493 = vand.u32 2147483647, %v1365
        %v1494 = vand.u32 2147483647, %v1366
        %v1495 = vand.u32 2147483647, %v1367
        %v1496 = vand.u32 2147483647, %v1368
        %v1497 = vand.u32 2147483647, %v1369
        %v1498 = vand.u32 2147483647, %v1370
        %v1499 = vand.u32 2147483647, %v1371
        %v1500 = vand.u32 2147483647, %v1372
        %v1501 = vand.u32 2147483647, %v1373
        %v1502 = vand.u32 2147483647, %v1374
        %v1503 = vand.u32 2147483647, %v1375
        %v1504 = vand.u32 2147483647, %v1376
        %v1505 = vand.u32 2147483647, %v1377
        %v1506 = vand.u32 2147483647, %v1378
        %v1507 = vand.u32 2147483647, %v1379
        %v1508 = vand.u32 2147483647, %v1380
        %v1509 = vand.u32 2147483647, %v1381
        %v1510 = vand.u32 2147483647, %v1382
        %v1511 = vand.u32 2147483647, %v1383
        %v1512 = vand.u32 2147483647, %v1384
        %v1513 = vand.u32 2147483647, %v1385
        %v1514 = vand.u32 2147483647, %v1386
        %v1515 = vand.u32 2147483647, %v1387
        %v1516 = vand.u32 2147483647, %v1388
        %v1517 = vand.u32 2147483647, %v1389
        %v1518 = vand.u32 2147483647, %v1390
        %v1519 = vand.u32 2147483647, %v1391
        %v1520 = vand.u32 2147483647, %v1392
        %v1521 = vand.u32 2147483647, %v1393
        %v1522 = vand.u32 2147483647, %v1394
        %v1523 = vand.u32 2147483647, %v1395
        %v1524 = vand.u32 2147483647, %v1396
        %v1525 = vand.u32 2147483647, %v1397
        %v1526 = vand.u32 2147483647, %v1398
        %v1527 = vand.u32 2147483647, %v1399
        %v1528 = vand.u32 2147483647, %v1400
        %v1529 = vand.u32 2147483647, %v1401
        %v1530 = vand.u32 2147483647, %v1402
        %v1531 = vand.u32 2147483647, %v1403
        %v1532 = vand.u32 2147483647, %v1404
        %v1533 = vand.u32 2147483647, %v1405
        %v1534 = vand.u32 2147483647, %v1406
        %v1535 = vand.u32 2147483647, %v1407
        %v1536 = vand.u32 2147483647, %v1408
        %v1537 = vand.u32 2147483647, %v1409
        %v1538 = vand.u32 2147483647, %v1410
        %v1539 = vand.u32 2147483647, %v1411
        %v1540 = vand.u32 2147483647, %v1412
        %v1541 = vand.u32 2147483647, %v1413
        %v1542 = vand.u32 2147483647, %v1414
        %v1543 = vand.u32 2147483647, %v1415
        %v1544 = vand.u32 2147483647, %v1416
        %v1545 = vand.u32 2147483647, %v1417
        %v1546 = vand.u32 2147483647, %v1418
        %v1547 = vand.u32 2147483647, %v1419
        %v1548 = vand.u32 2147483647, %v1420
        %v1549 = vand.u32 2147483647, %v1421
        %v1550 = vand.u32 2147483647, %v1422
        %v1551 = vand.u32 2147483647, %v1423
        %v1552 = vand.u32 2147483647, %v1424
        %v1553 = vand.u32 2147483647, %v1425
        %v1554 = vand.u32 2147483647, %v1426
        %v1555 = vand.u32 2147483647, %v1427
        %v1556 = vand.u32 2147483647, %v1428
        %v1557 = vand.u32 2147483647, %v1429
        %v1558 = vand.u32 2147483647, %v1430
        %v1559 = vand.u32 2147483647, %v1431
        %v1560 = vand.u32 2147483647, %v1432
        %v1561 = vand.u32 2147483647, %v1433
        %v1562 = vand.u32 2147483647, %v1434
        %v1563 = vand.u32 2147483647, %v1435
        %v1564 = vand.u32 2147483647, %v1436
        %v1565 = vand.u32 2147483647, %v1437
        %v1566 = vand.u32 2147483647, %v1438
        %v1567 = vand.u32 2147483647, %v1439
        %v1568 = vand.u32 2147483647, %v1440
        %v1569 = vand.u32 2147483647, %v1441
        %v1570 = vand.u32 2147483647, %v1442
        %v1571 = vand.u32 2147483647, %v1443
        %v1572 = vand.u32 2147483647, %v1444
        %v1573 = vand.u32 2147483647, %v1445
        %v1574 = vand.u32 2147483647, %v1446
        %v1575 = vand.u32 2147483647, %v1447
        %v1576 = vand.u32 2147483647, %v1448
        %v1577 = vand.u32 2147483647, %v1449
        %v1578 = vand.u32 2147483647, %v1450
        %v1579 = vand.u32 2147483647, %v1451
        %v1580 = vand.u32 2147483647, %v1452
        %v1581 = vand.u32 2147483647, %v1453
        %v1582 = vand.u32 2147483647, %v1454
        %v1583 = vand.u32 2147483647, %v1455
        %v1584 = vand.u32 2147483647, %v1456
        %v1585 = vand.u32 2147483647, %v1457
        %v1586 = vand.u32 2147483647, %v1458
        %v1587 = vand.u32 2147483647, %v1459
        %v1588 = vand.u32 2147483647, %v1460
        %v1589 = vand.u32 2147483647, %v1461
        %v1590 = vand.u32 2147483647, %v1462
        %v1591 = vand.u32 2147483647, %v1463
        %v1592 = vand.u32 2147483647, %v1464
        %v1593 = vand.u32 2147483647, %v1465
        %v1594 = vand.u32 2147483647, %v1466
        %v1595 = vand.u32 2147483647, %v1467
        %v1596 = vand.u32 2147483647, %v1468
        %v1597 = vand.u32 2147483647, %v1469
        %v1598 = vand.u32 2147483647, %v1470
        %v1599 = vand.u32 2147483647, %v1471
        %v1600 = vand.u32 2147483647, %v1472
        %v1601 = vand.u32 2147483647, %v1473
        %v1602 = vand.u32 2147483647, %v1474
        %v1603 = vand.u32 2147483647, %v1475
        %v1604 = vand.u32 2147483647, %v1476
        %v1605 = vand.u32 2147483647, %v1477
        %v1606 = vand.u32 2147483647, %v1478
        %v1607 = vand.u32 2147483647, %v1479
        %v1608 = vand.u32 2147483647, %v1480
        %v1609 = vand.u32 2147483647, %v1481
        %v1610 = vand.u32 2147483647, %v1482
        %v1611 = vand.u32 2147483647, %v1483
        %v1612 = vand.u32 2147483647, %v1484
        %v1613 = vand.u32 2147483647, %v1485
        %v1614 = vmul.f32 %v1486, 0.3275911
        %v1615 = vmul.f32 %v1487, 0.3275911
        %v1616 = vmul.f32 %v1488, 0.3275911
        %v1617 = vmul.f32 %v1489, 0.3275911
        %v1618 = vmul.f32 %v1490, 0.3275911
        %v1619 = vmul.f32 %v1491, 0.3275911
        %v1620 = vmul.f32 %v1492, 0.3275911
        %v1621 = vmul.f32 %v1493, 0.3275911
        %v1622 = vmul.f32 %v1494, 0.3275911
        %v1623 = vmul.f32 %v1495, 0.3275911
        %v1624 = vmul.f32 %v1496, 0.3275911
        %v1625 = vmul.f32 %v1497, 0.3275911
        %v1626 = vmul.f32 %v1498, 0.3275911
        %v1627 = vmul.f32 %v1499, 0.3275911
        %v1628 = vmul.f32 %v1500, 0.3275911
        %v1629 = vmul.f32 %v1501, 0.3275911
        %v1630 = vmul.f32 %v1502, 0.3275911
        %v1631 = vmul.f32 %v1503, 0.3275911
        %v1632 = vmul.f32 %v1504, 0.3275911
        %v1633 = vmul.f32 %v1505, 0.3275911
        %v1634 = vmul.f32 %v1506, 0.3275911
        %v1635 = vmul.f32 %v1507, 0.3275911
        %v1636 = vmul.f32 %v1508, 0.3275911
        %v1637 = vmul.f32 %v1509, 0.3275911
        %v1638 = vmul.f32 %v1510, 0.3275911
        %v1639 = vmul.f32 %v1511, 0.3275911
        %v1640 = vmul.f32 %v1512, 0.3275911
        %v1641 = vmul.f32 %v1513, 0.3275911
        %v1642 = vmul.f32 %v1514, 0.3275911
        %v1643 = vmul.f32 %v1515, 0.3275911
        %v1644 = vmul.f32 %v1516, 0.3275911
        %v1645 = vmul.f32 %v1517, 0.3275911
        %v1646 = vmul.f32 %v1518, 0.3275911
        %v1647 = vmul.f32 %v1519, 0.3275911
        %v1648 = vmul.f32 %v1520, 0.3275911
        %v1649 = vmul.f32 %v1521, 0.3275911
        %v1650 = vmul.f32 %v1522, 0.3275911
        %v1651 = vmul.f32 %v1523, 0.3275911
        %v1652 = vmul.f32 %v1524, 0.3275911
        %v1653 = vmul.f32 %v1525, 0.3275911
        %v1654 = vmul.f32 %v1526, 0.3275911
        %v1655 = vmul.f32 %v1527, 0.3275911
        %v1656 = vmul.f32 %v1528, 0.3275911
        %v1657 = vmul.f32 %v1529, 0.3275911
        %v1658 = vmul.f32 %v1530, 0.3275911
        %v1659 = vmul.f32 %v1531, 0.3275911
        %v1660 = vmul.f32 %v1532, 0.3275911
        %v1661 = vmul.f32 %v1533, 0.3275911
        %v1662 = vmul.f32 %v1534, 0.3275911
        %v1663 = vmul.f32 %v1535, 0.3275911
        %v1664 = vmul.f32 %v1536, 0.3275911
        %v1665 = vmul.f32 %v1537, 0.3275911
        %v1666 = vmul.f32 %v1538, 0.3275911
        %v1667 = vmul.f32 %v1539, 0.3275911
        %v1668 = vmul.f32 %v1540, 0.3275911
        %v1669 = vmul.f32 %v1541, 0.3275911
        %v1670 = vmul.f32 %v1542, 0.3275911
        %v1671 = vmul.f32 %v1543, 0.3275911
        %v1672 = vmul.f32 %v1544, 0.3275911
        %v1673 = vmul.f32 %v1545, 0.3275911
        %v1674 = vmul.f32 %v1546, 0.3275911
        %v1675 = vmul.f32 %v1547, 0.3275911
        %v1676 = vmul.f32 %v1548, 0.3275911
        %v1677 = vmul.f32 %v1549, 0.3275911
        %v1678 = vmul.f32 %v1550, 0.3275911
        %v1679 = vmul.f32 %v1551, 0.3275911
        %v1680 = vmul.f32 %v1552, 0.3275911
        %v1681 = vmul.f32 %v1553, 0.3275911
        %v1682 = vmul.f32 %v1554, 0.3275911
        %v1683 = vmul.f32 %v1555, 0.3275911
        %v1684 = vmul.f32 %v1556, 0.3275911
        %v1685 = vmul.f32 %v1557, 0.3275911
        %v1686 = vmul.f32 %v1558, 0.3275911
        %v1687 = vmul.f32 %v1559, 0.3275911
        %v1688 = vmul.f32 %v1560, 0.3275911
        %v1689 = vmul.f32 %v1561, 0.3275911
        %v1690 = vmul.f32 %v1562, 0.3275911
        %v1691 = vmul.f32 %v1563, 0.3275911
        %v1692 = vmul.f32 %v1564, 0.3275911
        %v1693 = vmul.f32 %v1565, 0.3275911
        %v1694 = vmul.f32 %v1566, 0.3275911
        %v1695 = vmul.f32 %v1567, 0.3275911
        %v1696 = vmul.f32 %v1568, 0.3275911
        %v1697 = vmul.f32 %v1569, 0.3275911
        %v1698 = vmul.f32 %v1570, 0.3275911
        %v1699 = vmul.f32 %v1571, 0.3275911
        %v1700 = vmul.f32 %v1572, 0.3275911
        %v1701 = vmul.f32 %v1573, 0.3275911
        %v1702 = vmul.f32 %v1574, 0.3275911
        %v1703 = vmul.f32 %v1575, 0.3275911
        %v1704 = vmul.f32 %v1576, 0.3275911
        %v1705 = vmul.f32 %v1577, 0.3275911
        %v1706 = vmul.f32 %v1578, 0.3275911
        %v1707 = vmul.f32 %v1579, 0.3275911
        %v1708 = vmul.f32 %v1580, 0.3275911
        %v1709 = vmul.f32 %v1581, 0.3275911
        %v1710 = vmul.f32 %v1582, 0.3275911
        %v1711 = vmul.f32 %v1583, 0.3275911
        %v1712 = vmul.f32 %v1584, 0.3275911
        %v1713 = vmul.f32 %v1585, 0.3275911
        %v1714 = vmul.f32 %v1586, 0.3275911
        %v1715 = vmul.f32 %v1587, 0.3275911
        %v1716 = vmul.f32 %v1588, 0.3275911
        %v1717 = vmul.f32 %v1589, 0.3275911
        %v1718 = vmul.f32 %v1590, 0.3275911
        %v1719 = vmul.f32 %v1591, 0.3275911
        %v1720 = vmul.f32 %v1592, 0.3275911
        %v1721 = vmul.f32 %v1593, 0.3275911
        %v1722 = vmul.f32 %v1594, 0.3275911
        %v1723 = vmul.f32 %v1595, 0.3275911
        %v1724 = vmul.f32 %v1596, 0.3275911
        %v1725 = vmul.f32 %v1597, 0.3275911
        %v1726 = vmul.f32 %v1598, 0.3275911
        %v1727 = vmul.f32 %v1599, 0.3275911
        %v1728 = vmul.f32 %v1600, 0.3275911
        %v1729 = vmul.f32 %v1601, 0.3275911
        %v1730 = vmul.f32 %v1602, 0.3275911
        %v1731 = vmul.f32 %v1603, 0.3275911
        %v1732 = vmul.f32 %v1604, 0.3275911
        %v1733 = vmul.f32 %v1605, 0.3275911
        %v1734 = vmul.f32 %v1606, 0.3275911
        %v1735 = vmul.f32 %v1607, 0.3275911
        %v1736 = vmul.f32 %v1608, 0.3275911
        %v1737 = vmul.f32 %v1609, 0.3275911
        %v1738 = vmul.f32 %v1610, 0.3275911
        %v1739 = vmul.f32 %v1611, 0.3275911
        %v1740 = vmul.f32 %v1612, 0.3275911
        %v1741 = vmul.f32 %v1613, 0.3275911
        %v1742 = vadd.f32 %v1614, 1.0
        %v1743 = vadd.f32 %v1615, 1.0
        %v1744 = vadd.f32 %v1616, 1.0
        %v1745 = vadd.f32 %v1617, 1.0
        %v1746 = vadd.f32 %v1618, 1.0
        %v1747 = vadd.f32 %v1619, 1.0
        %v1748 = vadd.f32 %v1620, 1.0
        %v1749 = vadd.f32 %v1621, 1.0
        %v1750 = vadd.f32 %v1622, 1.0
        %v1751 = vadd.f32 %v1623, 1.0
        %v1752 = vadd.f32 %v1624, 1.0
        %v1753 = vadd.f32 %v1625, 1.0
        %v1754 = vadd.f32 %v1626, 1.0
        %v1755 = vadd.f32 %v1627, 1.0
        %v1756 = vadd.f32 %v1628, 1.0
        %v1757 = vadd.f32 %v1629, 1.0
        %v1758 = vadd.f32 %v1630, 1.0
        %v1759 = vadd.f32 %v1631, 1.0
        %v1760 = vadd.f32 %v1632, 1.0
        %v1761 = vadd.f32 %v1633, 1.0
        %v1762 = vadd.f32 %v1634, 1.0
        %v1763 = vadd.f32 %v1635, 1.0
        %v1764 = vadd.f32 %v1636, 1.0
        %v1765 = vadd.f32 %v1637, 1.0
        %v1766 = vadd.f32 %v1638, 1.0
        %v1767 = vadd.f32 %v1639, 1.0
        %v1768 = vadd.f32 %v1640, 1.0
        %v1769 = vadd.f32 %v1641, 1.0
        %v1770 = vadd.f32 %v1642, 1.0
        %v1771 = vadd.f32 %v1643, 1.0
        %v1772 = vadd.f32 %v1644, 1.0
        %v1773 = vadd.f32 %v1645, 1.0
        %v1774 = vadd.f32 %v1646, 1.0
        %v1775 = vadd.f32 %v1647, 1.0
        %v1776 = vadd.f32 %v1648, 1.0
        %v1777 = vadd.f32 %v1649, 1.0
        %v1778 = vadd.f32 %v1650, 1.0
        %v1779 = vadd.f32 %v1651, 1.0
        %v1780 = vadd.f32 %v1652, 1.0
        %v1781 = vadd.f32 %v1653, 1.0
        %v1782 = vadd.f32 %v1654, 1.0
        %v1783 = vadd.f32 %v1655, 1.0
        %v1784 = vadd.f32 %v1656, 1.0
        %v1785 = vadd.f32 %v1657, 1.0
        %v1786 = vadd.f32 %v1658, 1.0
        %v1787 = vadd.f32 %v1659, 1.0
        %v1788 = vadd.f32 %v1660, 1.0
        %v1789 = vadd.f32 %v1661, 1.0
        %v1790 = vadd.f32 %v1662, 1.0
        %v1791 = vadd.f32 %v1663, 1.0
        %v1792 = vadd.f32 %v1664, 1.0
        %v1793 = vadd.f32 %v1665, 1.0
        %v1794 = vadd.f32 %v1666, 1.0
        %v1795 = vadd.f32 %v1667, 1.0
        %v1796 = vadd.f32 %v1668, 1.0
        %v1797 = vadd.f32 %v1669, 1.0
        %v1798 = vadd.f32 %v1670, 1.0
        %v1799 = vadd.f32 %v1671, 1.0
        %v1800 = vadd.f32 %v1672, 1.0
        %v1801 = vadd.f32 %v1673, 1.0
        %v1802 = vadd.f32 %v1674, 1.0
        %v1803 = vadd.f32 %v1675, 1.0
        %v1804 = vadd.f32 %v1676, 1.0
        %v1805 = vadd.f32 %v1677, 1.0
        %v1806 = vadd.f32 %v1678, 1.0
        %v1807 = vadd.f32 %v1679, 1.0
        %v1808 = vadd.f32 %v1680, 1.0
        %v1809 = vadd.f32 %v1681, 1.0
        %v1810 = vadd.f32 %v1682, 1.0
        %v1811 = vadd.f32 %v1683, 1.0
        %v1812 = vadd.f32 %v1684, 1.0
        %v1813 = vadd.f32 %v1685, 1.0
        %v1814 = vadd.f32 %v1686, 1.0
        %v1815 = vadd.f32 %v1687, 1.0
        %v1816 = vadd.f32 %v1688, 1.0
        %v1817 = vadd.f32 %v1689, 1.0
        %v1818 = vadd.f32 %v1690, 1.0
        %v1819 = vadd.f32 %v1691, 1.0
        %v1820 = vadd.f32 %v1692, 1.0
        %v1821 = vadd.f32 %v1693, 1.0
        %v1822 = vadd.f32 %v1694, 1.0
        %v1823 = vadd.f32 %v1695, 1.0
        %v1824 = vadd.f32 %v1696, 1.0
        %v1825 = vadd.f32 %v1697, 1.0
        %v1826 = vadd.f32 %v1698, 1.0
        %v1827 = vadd.f32 %v1699, 1.0
        %v1828 = vadd.f32 %v1700, 1.0
        %v1829 = vadd.f32 %v1701, 1.0
        %v1830 = vadd.f32 %v1702, 1.0
        %v1831 = vadd.f32 %v1703, 1.0
        %v1832 = vadd.f32 %v1704, 1.0
        %v1833 = vadd.f32 %v1705, 1.0
        %v1834 = vadd.f32 %v1706, 1.0
        %v1835 = vadd.f32 %v1707, 1.0
        %v1836 = vadd.f32 %v1708, 1.0
        %v1837 = vadd.f32 %v1709, 1.0
        %v1838 = vadd.f32 %v1710, 1.0
        %v1839 = vadd.f32 %v1711, 1.0
        %v1840 = vadd.f32 %v1712, 1.0
        %v1841 = vadd.f32 %v1713, 1.0
        %v1842 = vadd.f32 %v1714, 1.0
        %v1843 = vadd.f32 %v1715, 1.0
        %v1844 = vadd.f32 %v1716, 1.0
        %v1845 = vadd.f32 %v1717, 1.0
        %v1846 = vadd.f32 %v1718, 1.0
        %v1847 = vadd.f32 %v1719, 1.0
        %v1848 = vadd.f32 %v1720, 1.0
        %v1849 = vadd.f32 %v1721, 1.0
        %v1850 = vadd.f32 %v1722, 1.0
        %v1851 = vadd.f32 %v1723, 1.0
        %v1852 = vadd.f32 %v1724, 1.0
        %v1853 = vadd.f32 %v1725, 1.0
        %v1854 = vadd.f32 %v1726, 1.0
        %v1855 = vadd.f32 %v1727, 1.0
        %v1856 = vadd.f32 %v1728, 1.0
        %v1857 = vadd.f32 %v1729, 1.0
        %v1858 = vadd.f32 %v1730, 1.0
        %v1859 = vadd.f32 %v1731, 1.0
        %v1860 = vadd.f32 %v1732, 1.0
        %v1861 = vadd.f32 %v1733, 1.0
        %v1862 = vadd.f32 %v1734, 1.0
        %v1863 = vadd.f32 %v1735, 1.0
        %v1864 = vadd.f32 %v1736, 1.0
        %v1865 = vadd.f32 %v1737, 1.0
        %v1866 = vadd.f32 %v1738, 1.0
        %v1867 = vadd.f32 %v1739, 1.0
        %v1868 = vadd.f32 %v1740, 1.0
        %v1869 = vadd.f32 %v1741, 1.0
        %v1870 = vrcp.pop %v1742
        %v1871 = vmul.f32 1.0, %v1870
        %v1872 = vrcp.pop %v1743
        %v1873 = vmul.f32 1.0, %v1872
        %v1874 = vrcp.pop %v1744
        %v1875 = vmul.f32 1.0, %v1874
        %v1876 = vrcp.pop %v1745
        %v1877 = vmul.f32 1.0, %v1876
        %v1878 = vrcp.pop %v1746
        %v1879 = vmul.f32 1.0, %v1878
        %v1880 = vrcp.pop %v1747
        %v1881 = vmul.f32 1.0, %v1880
        %v1882 = vrcp.pop %v1748
        %v1883 = vmul.f32 1.0, %v1882
        %v1884 = vrcp.pop %v1749
        %v1885 = vmul.f32 1.0, %v1884
        %v1886 = vrcp.pop %v1750
        %v1887 = vmul.f32 1.0, %v1886
        %v1888 = vrcp.pop %v1751
        %v1889 = vmul.f32 1.0, %v1888
        %v1890 = vrcp.pop %v1752
        %v1891 = vmul.f32 1.0, %v1890
        %v1892 = vrcp.pop %v1753
        %v1893 = vmul.f32 1.0, %v1892
        %v1894 = vrcp.pop %v1754
        %v1895 = vmul.f32 1.0, %v1894
        %v1896 = vrcp.pop %v1755
        %v1897 = vmul.f32 1.0, %v1896
        %v1898 = vrcp.pop %v1756
        %v1899 = vmul.f32 1.0, %v1898
        %v1900 = vrcp.pop %v1757
        %v1901 = vmul.f32 1.0, %v1900
        %v1902 = vrcp.pop %v1758
        %v1903 = vmul.f32 1.0, %v1902
        %v1904 = vrcp.pop %v1759
        %v1905 = vmul.f32 1.0, %v1904
        %v1906 = vrcp.pop %v1760
        %v1907 = vmul.f32 1.0, %v1906
        %v1908 = vrcp.pop %v1761
        %v1909 = vmul.f32 1.0, %v1908
        %v1910 = vrcp.pop %v1762
        %v1911 = vmul.f32 1.0, %v1910
        %v1912 = vrcp.pop %v1763
        %v1913 = vmul.f32 1.0, %v1912
        %v1914 = vrcp.pop %v1764
        %v1915 = vmul.f32 1.0, %v1914
        %v1916 = vrcp.pop %v1765
        %v1917 = vmul.f32 1.0, %v1916
        %v1918 = vrcp.pop %v1766
        %v1919 = vmul.f32 1.0, %v1918
        %v1920 = vrcp.pop %v1767
        %v1921 = vmul.f32 1.0, %v1920
        %v1922 = vrcp.pop %v1768
        %v1923 = vmul.f32 1.0, %v1922
        %v1924 = vrcp.pop %v1769
        %v1925 = vmul.f32 1.0, %v1924
        %v1926 = vrcp.pop %v1770
        %v1927 = vmul.f32 1.0, %v1926
        %v1928 = vrcp.pop %v1771
        %v1929 = vmul.f32 1.0, %v1928
        %v1930 = vrcp.pop %v1772
        %v1931 = vmul.f32 1.0, %v1930
        %v1932 = vrcp.pop %v1773
        %v1933 = vmul.f32 1.0, %v1932
        %v1934 = vrcp.pop %v1774
        %v1935 = vmul.f32 1.0, %v1934
        %v1936 = vrcp.pop %v1775
        %v1937 = vmul.f32 1.0, %v1936
        %v1938 = vrcp.pop %v1776
        %v1939 = vmul.f32 1.0, %v1938
        %v1940 = vrcp.pop %v1777
        %v1941 = vmul.f32 1.0, %v1940
        %v1942 = vrcp.pop %v1778
        %v1943 = vmul.f32 1.0, %v1942
        %v1944 = vrcp.pop %v1779
        %v1945 = vmul.f32 1.0, %v1944
        %v1946 = vrcp.pop %v1780
        %v1947 = vmul.f32 1.0, %v1946
        %v1948 = vrcp.pop %v1781
        %v1949 = vmul.f32 1.0, %v1948
        %v1950 = vrcp.pop %v1782
        %v1951 = vmul.f32 1.0, %v1950
        %v1952 = vrcp.pop %v1783
        %v1953 = vmul.f32 1.0, %v1952
        %v1954 = vrcp.pop %v1784
        %v1955 = vmul.f32 1.0, %v1954
        %v1956 = vrcp.pop %v1785
        %v1957 = vmul.f32 1.0, %v1956
        %v1958 = vrcp.pop %v1786
        %v1959 = vmul.f32 1.0, %v1958
        %v1960 = vrcp.pop %v1787
        %v1961 = vmul.f32 1.0, %v1960
        %v1962 = vrcp.pop %v1788
        %v1963 = vmul.f32 1.0, %v1962
        %v1964 = vrcp.pop %v1789
        %v1965 = vmul.f32 1.0, %v1964
        %v1966 = vrcp.pop %v1790
        %v1967 = vmul.f32 1.0, %v1966
        %v1968 = vrcp.pop %v1791
        %v1969 = vmul.f32 1.0, %v1968
        %v1970 = vrcp.pop %v1792
        %v1971 = vmul.f32 1.0, %v1970
        %v1972 = vrcp.pop %v1793
        %v1973 = vmul.f32 1.0, %v1972
        %v1974 = vrcp.pop %v1794
        %v1975 = vmul.f32 1.0, %v1974
        %v1976 = vrcp.pop %v1795
        %v1977 = vmul.f32 1.0, %v1976
        %v1978 = vrcp.pop %v1796
        %v1979 = vmul.f32 1.0, %v1978
        %v1980 = vrcp.pop %v1797
        %v1981 = vmul.f32 1.0, %v1980
        %v1982 = vrcp.pop %v1798
        %v1983 = vmul.f32 1.0, %v1982
        %v1984 = vrcp.pop %v1799
        %v1985 = vmul.f32 1.0, %v1984
        %v1986 = vrcp.pop %v1800
        %v1987 = vmul.f32 1.0, %v1986
        %v1988 = vrcp.pop %v1801
        %v1989 = vmul.f32 1.0, %v1988
        %v1990 = vrcp.pop %v1802
        %v1991 = vmul.f32 1.0, %v1990
        %v1992 = vrcp.pop %v1803
        %v1993 = vmul.f32 1.0, %v1992
        %v1994 = vrcp.pop %v1804
        %v1995 = vmul.f32 1.0, %v1994
        %v1996 = vrcp.pop %v1805
        %v1997 = vmul.f32 1.0, %v1996
        %v1998 = vrcp.pop %v1806
        %v1999 = vmul.f32 1.0, %v1998
        %v2000 = vrcp.pop %v1807
        %v2001 = vmul.f32 1.0, %v2000
        %v2002 = vrcp.pop %v1808
        %v2003 = vmul.f32 1.0, %v2002
        %v2004 = vrcp.pop %v1809
        %v2005 = vmul.f32 1.0, %v2004
        %v2006 = vrcp.pop %v1810
        %v2007 = vmul.f32 1.0, %v2006
        %v2008 = vrcp.pop %v1811
        %v2009 = vmul.f32 1.0, %v2008
        %v2010 = vrcp.pop %v1812
        %v2011 = vmul.f32 1.0, %v2010
        %v2012 = vrcp.pop %v1813
        %v2013 = vmul.f32 1.0, %v2012
        %v2014 = vrcp.pop %v1814
        %v2015 = vmul.f32 1.0, %v2014
        %v2016 = vrcp.pop %v1815
        %v2017 = vmul.f32 1.0, %v2016
        %v2018 = vrcp.pop %v1816
        %v2019 = vmul.f32 1.0, %v2018
        %v2020 = vrcp.pop %v1817
        %v2021 = vmul.f32 1.0, %v2020
        %v2022 = vrcp.pop %v1818
        %v2023 = vmul.f32 1.0, %v2022
        %v2024 = vrcp.pop %v1819
        %v2025 = vmul.f32 1.0, %v2024
        %v2026 = vrcp.pop %v1820
        %v2027 = vmul.f32 1.0, %v2026
        %v2028 = vrcp.pop %v1821
        %v2029 = vmul.f32 1.0, %v2028
        %v2030 = vrcp.pop %v1822
        %v2031 = vmul.f32 1.0, %v2030
        %v2032 = vrcp.pop %v1823
        %v2033 = vmul.f32 1.0, %v2032
        %v2034 = vrcp.pop %v1824
        %v2035 = vmul.f32 1.0, %v2034
        %v2036 = vrcp.pop %v1825
        %v2037 = vmul.f32 1.0, %v2036
        %v2038 = vrcp.pop %v1826
        %v2039 = vmul.f32 1.0, %v2038
        %v2040 = vrcp.pop %v1827
        %v2041 = vmul.f32 1.0, %v2040
        %v2042 = vrcp.pop %v1828
        %v2043 = vmul.f32 1.0, %v2042
        %v2044 = vrcp.pop %v1829
        %v2045 = vmul.f32 1.0, %v2044
        %v2046 = vrcp.pop %v1830
        %v2047 = vmul.f32 1.0, %v2046
        %v2048 = vrcp.pop %v1831
        %v2049 = vmul.f32 1.0, %v2048
        %v2050 = vrcp.pop %v1832
        %v2051 = vmul.f32 1.0, %v2050
        %v2052 = vrcp.pop %v1833
        %v2053 = vmul.f32 1.0, %v2052
        %v2054 = vrcp.pop %v1834
        %v2055 = vmul.f32 1.0, %v2054
        %v2056 = vrcp.pop %v1835
        %v2057 = vmul.f32 1.0, %v2056
        %v2058 = vrcp.pop %v1836
        %v2059 = vmul.f32 1.0, %v2058
        %v2060 = vrcp.pop %v1837
        %v2061 = vmul.f32 1.0, %v2060
        %v2062 = vrcp.pop %v1838
        %v2063 = vmul.f32 1.0, %v2062
        %v2064 = vrcp.pop %v1839
        %v2065 = vmul.f32 1.0, %v2064
        %v2066 = vrcp.pop %v1840
        %v2067 = vmul.f32 1.0, %v2066
        %v2068 = vrcp.pop %v1841
        %v2069 = vmul.f32 1.0, %v2068
        %v2070 = vrcp.pop %v1842
        %v2071 = vmul.f32 1.0, %v2070
        %v2072 = vrcp.pop %v1843
        %v2073 = vmul.f32 1.0, %v2072
        %v2074 = vrcp.pop %v1844
        %v2075 = vmul.f32 1.0, %v2074
        %v2076 = vrcp.pop %v1845
        %v2077 = vmul.f32 1.0, %v2076
        %v2078 = vrcp.pop %v1846
        %v2079 = vmul.f32 1.0, %v2078
        %v2080 = vrcp.pop %v1847
        %v2081 = vmul.f32 1.0, %v2080
        %v2082 = vrcp.pop %v1848
        %v2083 = vmul.f32 1.0, %v2082
        %v2084 = vrcp.pop %v1849
        %v2085 = vmul.f32 1.0, %v2084
        %v2086 = vrcp.pop %v1850
        %v2087 = vmul.f32 1.0, %v2086
        %v2088 = vrcp.pop %v1851
        %v2089 = vmul.f32 1.0, %v2088
        %v2090 = vrcp.pop %v1852
        %v2091 = vmul.f32 1.0, %v2090
        %v2092 = vrcp.pop %v1853
        %v2093 = vmul.f32 1.0, %v2092
        %v2094 = vrcp.pop %v1854
        %v2095 = vmul.f32 1.0, %v2094
        %v2096 = vrcp.pop %v1855
        %v2097 = vmul.f32 1.0, %v2096
        %v2098 = vrcp.pop %v1856
        %v2099 = vmul.f32 1.0, %v2098
        %v2100 = vrcp.pop %v1857
        %v2101 = vmul.f32 1.0, %v2100
        %v2102 = vrcp.pop %v1858
        %v2103 = vmul.f32 1.0, %v2102
        %v2104 = vrcp.pop %v1859
        %v2105 = vmul.f32 1.0, %v2104
        %v2106 = vrcp.pop %v1860
        %v2107 = vmul.f32 1.0, %v2106
        %v2108 = vrcp.pop %v1861
        %v2109 = vmul.f32 1.0, %v2108
        %v2110 = vrcp.pop %v1862
        %v2111 = vmul.f32 1.0, %v2110
        %v2112 = vrcp.pop %v1863
        %v2113 = vmul.f32 1.0, %v2112
        %v2114 = vrcp.pop %v1864
        %v2115 = vmul.f32 1.0, %v2114
        %v2116 = vrcp.pop %v1865
        %v2117 = vmul.f32 1.0, %v2116
        %v2118 = vrcp.pop %v1866
        %v2119 = vmul.f32 1.0, %v2118
        %v2120 = vrcp.pop %v1867
        %v2121 = vmul.f32 1.0, %v2120
        %v2122 = vrcp.pop %v1868
        %v2123 = vmul.f32 1.0, %v2122
        %v2124 = vrcp.pop %v1869
        %v2125 = vmul.f32 1.0, %v2124
        %v2126 = vmul.f32 %v1871, 1.0614054
        %v2127 = vmul.f32 %v1873, 1.0614054
        %v2128 = vmul.f32 %v1875, 1.0614054
        %v2129 = vmul.f32 %v1877, 1.0614054
        %v2130 = vmul.f32 %v1879, 1.0614054
        %v2131 = vmul.f32 %v1881, 1.0614054
        %v2132 = vmul.f32 %v1883, 1.0614054
        %v2133 = vmul.f32 %v1885, 1.0614054
        %v2134 = vmul.f32 %v1887, 1.0614054
        %v2135 = vmul.f32 %v1889, 1.0614054
        %v2136 = vmul.f32 %v1891, 1.0614054
        %v2137 = vmul.f32 %v1893, 1.0614054
        %v2138 = vmul.f32 %v1895, 1.0614054
        %v2139 = vmul.f32 %v1897, 1.0614054
        %v2140 = vmul.f32 %v1899, 1.0614054
        %v2141 = vmul.f32 %v1901, 1.0614054
        %v2142 = vmul.f32 %v1903, 1.0614054
        %v2143 = vmul.f32 %v1905, 1.0614054
        %v2144 = vmul.f32 %v1907, 1.0614054
        %v2145 = vmul.f32 %v1909, 1.0614054
        %v2146 = vmul.f32 %v1911, 1.0614054
        %v2147 = vmul.f32 %v1913, 1.0614054
        %v2148 = vmul.f32 %v1915, 1.0614054
        %v2149 = vmul.f32 %v1917, 1.0614054
        %v2150 = vmul.f32 %v1919, 1.0614054
        %v2151 = vmul.f32 %v1921, 1.0614054
        %v2152 = vmul.f32 %v1923, 1.0614054
        %v2153 = vmul.f32 %v1925, 1.0614054
        %v2154 = vmul.f32 %v1927, 1.0614054
        %v2155 = vmul.f32 %v1929, 1.0614054
        %v2156 = vmul.f32 %v1931, 1.0614054
        %v2157 = vmul.f32 %v1933, 1.0614054
        %v2158 = vmul.f32 %v1935, 1.0614054
        %v2159 = vmul.f32 %v1937, 1.0614054
        %v2160 = vmul.f32 %v1939, 1.0614054
        %v2161 = vmul.f32 %v1941, 1.0614054
        %v2162 = vmul.f32 %v1943, 1.0614054
        %v2163 = vmul.f32 %v1945, 1.0614054
        %v2164 = vmul.f32 %v1947, 1.0614054
        %v2165 = vmul.f32 %v1949, 1.0614054
        %v2166 = vmul.f32 %v1951, 1.0614054
        %v2167 = vmul.f32 %v1953, 1.0614054
        %v2168 = vmul.f32 %v1955, 1.0614054
        %v2169 = vmul.f32 %v1957, 1.0614054
        %v2170 = vmul.f32 %v1959, 1.0614054
        %v2171 = vmul.f32 %v1961, 1.0614054
        %v2172 = vmul.f32 %v1963, 1.0614054
        %v2173 = vmul.f32 %v1965, 1.0614054
        %v2174 = vmul.f32 %v1967, 1.0614054
        %v2175 = vmul.f32 %v1969, 1.0614054
        %v2176 = vmul.f32 %v1971, 1.0614054
        %v2177 = vmul.f32 %v1973, 1.0614054
        %v2178 = vmul.f32 %v1975, 1.0614054
        %v2179 = vmul.f32 %v1977, 1.0614054
        %v2180 = vmul.f32 %v1979, 1.0614054
        %v2181 = vmul.f32 %v1981, 1.0614054
        %v2182 = vmul.f32 %v1983, 1.0614054
        %v2183 = vmul.f32 %v1985, 1.0614054
        %v2184 = vmul.f32 %v1987, 1.0614054
        %v2185 = vmul.f32 %v1989, 1.0614054
        %v2186 = vmul.f32 %v1991, 1.0614054
        %v2187 = vmul.f32 %v1993, 1.0614054
        %v2188 = vmul.f32 %v1995, 1.0614054
        %v2189 = vmul.f32 %v1997, 1.0614054
        %v2190 = vmul.f32 %v1999, 1.0614054
        %v2191 = vmul.f32 %v2001, 1.0614054
        %v2192 = vmul.f32 %v2003, 1.0614054
        %v2193 = vmul.f32 %v2005, 1.0614054
        %v2194 = vmul.f32 %v2007, 1.0614054
        %v2195 = vmul.f32 %v2009, 1.0614054
        %v2196 = vmul.f32 %v2011, 1.0614054
        %v2197 = vmul.f32 %v2013, 1.0614054
        %v2198 = vmul.f32 %v2015, 1.0614054
        %v2199 = vmul.f32 %v2017, 1.0614054
        %v2200 = vmul.f32 %v2019, 1.0614054
        %v2201 = vmul.f32 %v2021, 1.0614054
        %v2202 = vmul.f32 %v2023, 1.0614054
        %v2203 = vmul.f32 %v2025, 1.0614054
        %v2204 = vmul.f32 %v2027, 1.0614054
        %v2205 = vmul.f32 %v2029, 1.0614054
        %v2206 = vmul.f32 %v2031, 1.0614054
        %v2207 = vmul.f32 %v2033, 1.0614054
        %v2208 = vmul.f32 %v2035, 1.0614054
        %v2209 = vmul.f32 %v2037, 1.0614054
        %v2210 = vmul.f32 %v2039, 1.0614054
        %v2211 = vmul.f32 %v2041, 1.0614054
        %v2212 = vmul.f32 %v2043, 1.0614054
        %v2213 = vmul.f32 %v2045, 1.0614054
        %v2214 = vmul.f32 %v2047, 1.0614054
        %v2215 = vmul.f32 %v2049, 1.0614054
        %v2216 = vmul.f32 %v2051, 1.0614054
        %v2217 = vmul.f32 %v2053, 1.0614054
        %v2218 = vmul.f32 %v2055, 1.0614054
        %v2219 = vmul.f32 %v2057, 1.0614054
        %v2220 = vmul.f32 %v2059, 1.0614054
        %v2221 = vmul.f32 %v2061, 1.0614054
        %v2222 = vmul.f32 %v2063, 1.0614054
        %v2223 = vmul.f32 %v2065, 1.0614054
        %v2224 = vmul.f32 %v2067, 1.0614054
        %v2225 = vmul.f32 %v2069, 1.0614054
        %v2226 = vmul.f32 %v2071, 1.0614054
        %v2227 = vmul.f32 %v2073, 1.0614054
        %v2228 = vmul.f32 %v2075, 1.0614054
        %v2229 = vmul.f32 %v2077, 1.0614054
        %v2230 = vmul.f32 %v2079, 1.0614054
        %v2231 = vmul.f32 %v2081, 1.0614054
        %v2232 = vmul.f32 %v2083, 1.0614054
        %v2233 = vmul.f32 %v2085, 1.0614054
        %v2234 = vmul.f32 %v2087, 1.0614054
        %v2235 = vmul.f32 %v2089, 1.0614054
        %v2236 = vmul.f32 %v2091, 1.0614054
        %v2237 = vmul.f32 %v2093, 1.0614054
        %v2238 = vmul.f32 %v2095, 1.0614054
        %v2239 = vmul.f32 %v2097, 1.0614054
        %v2240 = vmul.f32 %v2099, 1.0614054
        %v2241 = vmul.f32 %v2101, 1.0614054
        %v2242 = vmul.f32 %v2103, 1.0614054
        %v2243 = vmul.f32 %v2105, 1.0614054
        %v2244 = vmul.f32 %v2107, 1.0614054
        %v2245 = vmul.f32 %v2109, 1.0614054
        %v2246 = vmul.f32 %v2111, 1.0614054
        %v2247 = vmul.f32 %v2113, 1.0614054
        %v2248 = vmul.f32 %v2115, 1.0614054
        %v2249 = vmul.f32 %v2117, 1.0614054
        %v2250 = vmul.f32 %v2119, 1.0614054
        %v2251 = vmul.f32 %v2121, 1.0614054
        %v2252 = vmul.f32 %v2123, 1.0614054
        %v2253 = vmul.f32 %v2125, 1.0614054
        %v2254 = vadd.f32 %v2126, -1.4531521
        %v2255 = vadd.f32 %v2127, -1.4531521
        %v2256 = vadd.f32 %v2128, -1.4531521
        %v2257 = vadd.f32 %v2129, -1.4531521
        %v2258 = vadd.f32 %v2130, -1.4531521
        %v2259 = vadd.f32 %v2131, -1.4531521
        %v2260 = vadd.f32 %v2132, -1.4531521
        %v2261 = vadd.f32 %v2133, -1.4531521
        %v2262 = vadd.f32 %v2134, -1.4531521
        %v2263 = vadd.f32 %v2135, -1.4531521
        %v2264 = vadd.f32 %v2136, -1.4531521
        %v2265 = vadd.f32 %v2137, -1.4531521
        %v2266 = vadd.f32 %v2138, -1.4531521
        %v2267 = vadd.f32 %v2139, -1.4531521
        %v2268 = vadd.f32 %v2140, -1.4531521
        %v2269 = vadd.f32 %v2141, -1.4531521
        %v2270 = vadd.f32 %v2142, -1.4531521
        %v2271 = vadd.f32 %v2143, -1.4531521
        %v2272 = vadd.f32 %v2144, -1.4531521
        %v2273 = vadd.f32 %v2145, -1.4531521
        %v2274 = vadd.f32 %v2146, -1.4531521
        %v2275 = vadd.f32 %v2147, -1.4531521
        %v2276 = vadd.f32 %v2148, -1.4531521
        %v2277 = vadd.f32 %v2149, -1.4531521
        %v2278 = vadd.f32 %v2150, -1.4531521
        %v2279 = vadd.f32 %v2151, -1.4531521
        %v2280 = vadd.f32 %v2152, -1.4531521
        %v2281 = vadd.f32 %v2153, -1.4531521
        %v2282 = vadd.f32 %v2154, -1.4531521
        %v2283 = vadd.f32 %v2155, -1.4531521
        %v2284 = vadd.f32 %v2156, -1.4531521
        %v2285 = vadd.f32 %v2157, -1.4531521
        %v2286 = vadd.f32 %v2158, -1.4531521
        %v2287 = vadd.f32 %v2159, -1.4531521
        %v2288 = vadd.f32 %v2160, -1.4531521
        %v2289 = vadd.f32 %v2161, -1.4531521
        %v2290 = vadd.f32 %v2162, -1.4531521
        %v2291 = vadd.f32 %v2163, -1.4531521
        %v2292 = vadd.f32 %v2164, -1.4531521
        %v2293 = vadd.f32 %v2165, -1.4531521
        %v2294 = vadd.f32 %v2166, -1.4531521
        %v2295 = vadd.f32 %v2167, -1.4531521
        %v2296 = vadd.f32 %v2168, -1.4531521
        %v2297 = vadd.f32 %v2169, -1.4531521
        %v2298 = vadd.f32 %v2170, -1.4531521
        %v2299 = vadd.f32 %v2171, -1.4531521
        %v2300 = vadd.f32 %v2172, -1.4531521
        %v2301 = vadd.f32 %v2173, -1.4531521
        %v2302 = vadd.f32 %v2174, -1.4531521
        %v2303 = vadd.f32 %v2175, -1.4531521
        %v2304 = vadd.f32 %v2176, -1.4531521
        %v2305 = vadd.f32 %v2177, -1.4531521
        %v2306 = vadd.f32 %v2178, -1.4531521
        %v2307 = vadd.f32 %v2179, -1.4531521
        %v2308 = vadd.f32 %v2180, -1.4531521
        %v2309 = vadd.f32 %v2181, -1.4531521
        %v2310 = vadd.f32 %v2182, -1.4531521
        %v2311 = vadd.f32 %v2183, -1.4531521
        %v2312 = vadd.f32 %v2184, -1.4531521
        %v2313 = vadd.f32 %v2185, -1.4531521
        %v2314 = vadd.f32 %v2186, -1.4531521
        %v2315 = vadd.f32 %v2187, -1.4531521
        %v2316 = vadd.f32 %v2188, -1.4531521
        %v2317 = vadd.f32 %v2189, -1.4531521
        %v2318 = vadd.f32 %v2190, -1.4531521
        %v2319 = vadd.f32 %v2191, -1.4531521
        %v2320 = vadd.f32 %v2192, -1.4531521
        %v2321 = vadd.f32 %v2193, -1.4531521
        %v2322 = vadd.f32 %v2194, -1.4531521
        %v2323 = vadd.f32 %v2195, -1.4531521
        %v2324 = vadd.f32 %v2196, -1.4531521
        %v2325 = vadd.f32 %v2197, -1.4531521
        %v2326 = vadd.f32 %v2198, -1.4531521
        %v2327 = vadd.f32 %v2199, -1.4531521
        %v2328 = vadd.f32 %v2200, -1.4531521
        %v2329 = vadd.f32 %v2201, -1.4531521
        %v2330 = vadd.f32 %v2202, -1.4531521
        %v2331 = vadd.f32 %v2203, -1.4531521
        %v2332 = vadd.f32 %v2204, -1.4531521
        %v2333 = vadd.f32 %v2205, -1.4531521
        %v2334 = vadd.f32 %v2206, -1.4531521
        %v2335 = vadd.f32 %v2207, -1.4531521
        %v2336 = vadd.f32 %v2208, -1.4531521
        %v2337 = vadd.f32 %v2209, -1.4531521
        %v2338 = vadd.f32 %v2210, -1.4531521
        %v2339 = vadd.f32 %v2211, -1.4531521
        %v2340 = vadd.f32 %v2212, -1.4531521
        %v2341 = vadd.f32 %v2213, -1.4531521
        %v2342 = vadd.f32 %v2214, -1.4531521
        %v2343 = vadd.f32 %v2215, -1.4531521
        %v2344 = vadd.f32 %v2216, -1.4531521
        %v2345 = vadd.f32 %v2217, -1.4531521
        %v2346 = vadd.f32 %v2218, -1.4531521
        %v2347 = vadd.f32 %v2219, -1.4531521
        %v2348 = vadd.f32 %v2220, -1.4531521
        %v2349 = vadd.f32 %v2221, -1.4531521
        %v2350 = vadd.f32 %v2222, -1.4531521
        %v2351 = vadd.f32 %v2223, -1.4531521
        %v2352 = vadd.f32 %v2224, -1.4531521
        %v2353 = vadd.f32 %v2225, -1.4531521
        %v2354 = vadd.f32 %v2226, -1.4531521
        %v2355 = vadd.f32 %v2227, -1.4531521
        %v2356 = vadd.f32 %v2228, -1.4531521
        %v2357 = vadd.f32 %v2229, -1.4531521
        %v2358 = vadd.f32 %v2230, -1.4531521
        %v2359 = vadd.f32 %v2231, -1.4531521
        %v2360 = vadd.f32 %v2232, -1.4531521
        %v2361 = vadd.f32 %v2233, -1.4531521
        %v2362 = vadd.f32 %v2234, -1.4531521
        %v2363 = vadd.f32 %v2235, -1.4531521
        %v2364 = vadd.f32 %v2236, -1.4531521
        %v2365 = vadd.f32 %v2237, -1.4531521
        %v2366 = vadd.f32 %v2238, -1.4531521
        %v2367 = vadd.f32 %v2239, -1.4531521
        %v2368 = vadd.f32 %v2240, -1.4531521
        %v2369 = vadd.f32 %v2241, -1.4531521
        %v2370 = vadd.f32 %v2242, -1.4531521
        %v2371 = vadd.f32 %v2243, -1.4531521
        %v2372 = vadd.f32 %v2244, -1.4531521
        %v2373 = vadd.f32 %v2245, -1.4531521
        %v2374 = vadd.f32 %v2246, -1.4531521
        %v2375 = vadd.f32 %v2247, -1.4531521
        %v2376 = vadd.f32 %v2248, -1.4531521
        %v2377 = vadd.f32 %v2249, -1.4531521
        %v2378 = vadd.f32 %v2250, -1.4531521
        %v2379 = vadd.f32 %v2251, -1.4531521
        %v2380 = vadd.f32 %v2252, -1.4531521
        %v2381 = vadd.f32 %v2253, -1.4531521
        %v2382 = vmul.f32 %v2254, %v1871
        %v2383 = vmul.f32 %v2255, %v1873
        %v2384 = vmul.f32 %v2256, %v1875
        %v2385 = vmul.f32 %v2257, %v1877
        %v2386 = vmul.f32 %v2258, %v1879
        %v2387 = vmul.f32 %v2259, %v1881
        %v2388 = vmul.f32 %v2260, %v1883
        %v2389 = vmul.f32 %v2261, %v1885
        %v2390 = vmul.f32 %v2262, %v1887
        %v2391 = vmul.f32 %v2263, %v1889
        %v2392 = vmul.f32 %v2264, %v1891
        %v2393 = vmul.f32 %v2265, %v1893
        %v2394 = vmul.f32 %v2266, %v1895
        %v2395 = vmul.f32 %v2267, %v1897
        %v2396 = vmul.f32 %v2268, %v1899
        %v2397 = vmul.f32 %v2269, %v1901
        %v2398 = vmul.f32 %v2270, %v1903
        %v2399 = vmul.f32 %v2271, %v1905
        %v2400 = vmul.f32 %v2272, %v1907
        %v2401 = vmul.f32 %v2273, %v1909
        %v2402 = vmul.f32 %v2274, %v1911
        %v2403 = vmul.f32 %v2275, %v1913
        %v2404 = vmul.f32 %v2276, %v1915
        %v2405 = vmul.f32 %v2277, %v1917
        %v2406 = vmul.f32 %v2278, %v1919
        %v2407 = vmul.f32 %v2279, %v1921
        %v2408 = vmul.f32 %v2280, %v1923
        %v2409 = vmul.f32 %v2281, %v1925
        %v2410 = vmul.f32 %v2282, %v1927
        %v2411 = vmul.f32 %v2283, %v1929
        %v2412 = vmul.f32 %v2284, %v1931
        %v2413 = vmul.f32 %v2285, %v1933
        %v2414 = vmul.f32 %v2286, %v1935
        %v2415 = vmul.f32 %v2287, %v1937
        %v2416 = vmul.f32 %v2288, %v1939
        %v2417 = vmul.f32 %v2289, %v1941
        %v2418 = vmul.f32 %v2290, %v1943
        %v2419 = vmul.f32 %v2291, %v1945
        %v2420 = vmul.f32 %v2292, %v1947
        %v2421 = vmul.f32 %v2293, %v1949
        %v2422 = vmul.f32 %v2294, %v1951
        %v2423 = vmul.f32 %v2295, %v1953
        %v2424 = vmul.f32 %v2296, %v1955
        %v2425 = vmul.f32 %v2297, %v1957
        %v2426 = vmul.f32 %v2298, %v1959
        %v2427 = vmul.f32 %v2299, %v1961
        %v2428 = vmul.f32 %v2300, %v1963
        %v2429 = vmul.f32 %v2301, %v1965
        %v2430 = vmul.f32 %v2302, %v1967
        %v2431 = vmul.f32 %v2303, %v1969
        %v2432 = vmul.f32 %v2304, %v1971
        %v2433 = vmul.f32 %v2305, %v1973
        %v2434 = vmul.f32 %v2306, %v1975
        %v2435 = vmul.f32 %v2307, %v1977
        %v2436 = vmul.f32 %v2308, %v1979
        %v2437 = vmul.f32 %v2309, %v1981
        %v2438 = vmul.f32 %v2310, %v1983
        %v2439 = vmul.f32 %v2311, %v1985
        %v2440 = vmul.f32 %v2312, %v1987
        %v2441 = vmul.f32 %v2313, %v1989
        %v2442 = vmul.f32 %v2314, %v1991
        %v2443 = vmul.f32 %v2315, %v1993
        %v2444 = vmul.f32 %v2316, %v1995
        %v2445 = vmul.f32 %v2317, %v1997
        %v2446 = vmul.f32 %v2318, %v1999
        %v2447 = vmul.f32 %v2319, %v2001
        %v2448 = vmul.f32 %v2320, %v2003
        %v2449 = vmul.f32 %v2321, %v2005
        %v2450 = vmul.f32 %v2322, %v2007
        %v2451 = vmul.f32 %v2323, %v2009
        %v2452 = vmul.f32 %v2324, %v2011
        %v2453 = vmul.f32 %v2325, %v2013
        %v2454 = vmul.f32 %v2326, %v2015
        %v2455 = vmul.f32 %v2327, %v2017
        %v2456 = vmul.f32 %v2328, %v2019
        %v2457 = vmul.f32 %v2329, %v2021
        %v2458 = vmul.f32 %v2330, %v2023
        %v2459 = vmul.f32 %v2331, %v2025
        %v2460 = vmul.f32 %v2332, %v2027
        %v2461 = vmul.f32 %v2333, %v2029
        %v2462 = vmul.f32 %v2334, %v2031
        %v2463 = vmul.f32 %v2335, %v2033
        %v2464 = vmul.f32 %v2336, %v2035
        %v2465 = vmul.f32 %v2337, %v2037
        %v2466 = vmul.f32 %v2338, %v2039
        %v2467 = vmul.f32 %v2339, %v2041
        %v2468 = vmul.f32 %v2340, %v2043
        %v2469 = vmul.f32 %v2341, %v2045
        %v2470 = vmul.f32 %v2342, %v2047
        %v2471 = vmul.f32 %v2343, %v2049
        %v2472 = vmul.f32 %v2344, %v2051
        %v2473 = vmul.f32 %v2345, %v2053
        %v2474 = vmul.f32 %v2346, %v2055
        %v2475 = vmul.f32 %v2347, %v2057
        %v2476 = vmul.f32 %v2348, %v2059
        %v2477 = vmul.f32 %v2349, %v2061
        %v2478 = vmul.f32 %v2350, %v2063
        %v2479 = vmul.f32 %v2351, %v2065
        %v2480 = vmul.f32 %v2352, %v2067
        %v2481 = vmul.f32 %v2353, %v2069
        %v2482 = vmul.f32 %v2354, %v2071
        %v2483 = vmul.f32 %v2355, %v2073
        %v2484 = vmul.f32 %v2356, %v2075
        %v2485 = vmul.f32 %v2357, %v2077
        %v2486 = vmul.f32 %v2358, %v2079
        %v2487 = vmul.f32 %v2359, %v2081
        %v2488 = vmul.f32 %v2360, %v2083
        %v2489 = vmul.f32 %v2361, %v2085
        %v2490 = vmul.f32 %v2362, %v2087
        %v2491 = vmul.f32 %v2363, %v2089
        %v2492 = vmul.f32 %v2364, %v2091
        %v2493 = vmul.f32 %v2365, %v2093
        %v2494 = vmul.f32 %v2366, %v2095
        %v2495 = vmul.f32 %v2367, %v2097
        %v2496 = vmul.f32 %v2368, %v2099
        %v2497 = vmul.f32 %v2369, %v2101
        %v2498 = vmul.f32 %v2370, %v2103
        %v2499 = vmul.f32 %v2371, %v2105
        %v2500 = vmul.f32 %v2372, %v2107
        %v2501 = vmul.f32 %v2373, %v2109
        %v2502 = vmul.f32 %v2374, %v2111
        %v2503 = vmul.f32 %v2375, %v2113
        %v2504 = vmul.f32 %v2376, %v2115
        %v2505 = vmul.f32 %v2377, %v2117
        %v2506 = vmul.f32 %v2378, %v2119
        %v2507 = vmul.f32 %v2379, %v2121
        %v2508 = vmul.f32 %v2380, %v2123
        %v2509 = vmul.f32 %v2381, %v2125
        %v2510 = vadd.f32 %v2382, 1.4214138
        %v2511 = vadd.f32 %v2383, 1.4214138
        %v2512 = vadd.f32 %v2384, 1.4214138
        %v2513 = vadd.f32 %v2385, 1.4214138
        %v2514 = vadd.f32 %v2386, 1.4214138
        %v2515 = vadd.f32 %v2387, 1.4214138
        %v2516 = vadd.f32 %v2388, 1.4214138
        %v2517 = vadd.f32 %v2389, 1.4214138
        %v2518 = vadd.f32 %v2390, 1.4214138
        %v2519 = vadd.f32 %v2391, 1.4214138
        %v2520 = vadd.f32 %v2392, 1.4214138
        %v2521 = vadd.f32 %v2393, 1.4214138
        %v2522 = vadd.f32 %v2394, 1.4214138
        %v2523 = vadd.f32 %v2395, 1.4214138
        %v2524 = vadd.f32 %v2396, 1.4214138
        %v2525 = vadd.f32 %v2397, 1.4214138
        %v2526 = vadd.f32 %v2398, 1.4214138
        %v2527 = vadd.f32 %v2399, 1.4214138
        %v2528 = vadd.f32 %v2400, 1.4214138
        %v2529 = vadd.f32 %v2401, 1.4214138
        %v2530 = vadd.f32 %v2402, 1.4214138
        %v2531 = vadd.f32 %v2403, 1.4214138
        %v2532 = vadd.f32 %v2404, 1.4214138
        %v2533 = vadd.f32 %v2405, 1.4214138
        %v2534 = vadd.f32 %v2406, 1.4214138
        %v2535 = vadd.f32 %v2407, 1.4214138
        %v2536 = vadd.f32 %v2408, 1.4214138
        %v2537 = vadd.f32 %v2409, 1.4214138
        %v2538 = vadd.f32 %v2410, 1.4214138
        %v2539 = vadd.f32 %v2411, 1.4214138
        %v2540 = vadd.f32 %v2412, 1.4214138
        %v2541 = vadd.f32 %v2413, 1.4214138
        %v2542 = vadd.f32 %v2414, 1.4214138
        %v2543 = vadd.f32 %v2415, 1.4214138
        %v2544 = vadd.f32 %v2416, 1.4214138
        %v2545 = vadd.f32 %v2417, 1.4214138
        %v2546 = vadd.f32 %v2418, 1.4214138
        %v2547 = vadd.f32 %v2419, 1.4214138
        %v2548 = vadd.f32 %v2420, 1.4214138
        %v2549 = vadd.f32 %v2421, 1.4214138
        %v2550 = vadd.f32 %v2422, 1.4214138
        %v2551 = vadd.f32 %v2423, 1.4214138
        %v2552 = vadd.f32 %v2424, 1.4214138
        %v2553 = vadd.f32 %v2425, 1.4214138
        %v2554 = vadd.f32 %v2426, 1.4214138
        %v2555 = vadd.f32 %v2427, 1.4214138
        %v2556 = vadd.f32 %v2428, 1.4214138
        %v2557 = vadd.f32 %v2429, 1.4214138
        %v2558 = vadd.f32 %v2430, 1.4214138
        %v2559 = vadd.f32 %v2431, 1.4214138
        %v2560 = vadd.f32 %v2432, 1.4214138
        %v2561 = vadd.f32 %v2433, 1.4214138
        %v2562 = vadd.f32 %v2434, 1.4214138
        %v2563 = vadd.f32 %v2435, 1.4214138
        %v2564 = vadd.f32 %v2436, 1.4214138
        %v2565 = vadd.f32 %v2437, 1.4214138
        %v2566 = vadd.f32 %v2438, 1.4214138
        %v2567 = vadd.f32 %v2439, 1.4214138
        %v2568 = vadd.f32 %v2440, 1.4214138
        %v2569 = vadd.f32 %v2441, 1.4214138
        %v2570 = vadd.f32 %v2442, 1.4214138
        %v2571 = vadd.f32 %v2443, 1.4214138
        %v2572 = vadd.f32 %v2444, 1.4214138
        %v2573 = vadd.f32 %v2445, 1.4214138
        %v2574 = vadd.f32 %v2446, 1.4214138
        %v2575 = vadd.f32 %v2447, 1.4214138
        %v2576 = vadd.f32 %v2448, 1.4214138
        %v2577 = vadd.f32 %v2449, 1.4214138
        %v2578 = vadd.f32 %v2450, 1.4214138
        %v2579 = vadd.f32 %v2451, 1.4214138
        %v2580 = vadd.f32 %v2452, 1.4214138
        %v2581 = vadd.f32 %v2453, 1.4214138
        %v2582 = vadd.f32 %v2454, 1.4214138
        %v2583 = vadd.f32 %v2455, 1.4214138
        %v2584 = vadd.f32 %v2456, 1.4214138
        %v2585 = vadd.f32 %v2457, 1.4214138
        %v2586 = vadd.f32 %v2458, 1.4214138
        %v2587 = vadd.f32 %v2459, 1.4214138
        %v2588 = vadd.f32 %v2460, 1.4214138
        %v2589 = vadd.f32 %v2461, 1.4214138
        %v2590 = vadd.f32 %v2462, 1.4214138
        %v2591 = vadd.f32 %v2463, 1.4214138
        %v2592 = vadd.f32 %v2464, 1.4214138
        %v2593 = vadd.f32 %v2465, 1.4214138
        %v2594 = vadd.f32 %v2466, 1.4214138
        %v2595 = vadd.f32 %v2467, 1.4214138
        %v2596 = vadd.f32 %v2468, 1.4214138
        %v2597 = vadd.f32 %v2469, 1.4214138
        %v2598 = vadd.f32 %v2470, 1.4214138
        %v2599 = vadd.f32 %v2471, 1.4214138
        %v2600 = vadd.f32 %v2472, 1.4214138
        %v2601 = vadd.f32 %v2473, 1.4214138
        %v2602 = vadd.f32 %v2474, 1.4214138
        %v2603 = vadd.f32 %v2475, 1.4214138
        %v2604 = vadd.f32 %v2476, 1.4214138
        %v2605 = vadd.f32 %v2477, 1.4214138
        %v2606 = vadd.f32 %v2478, 1.4214138
        %v2607 = vadd.f32 %v2479, 1.4214138
        %v2608 = vadd.f32 %v2480, 1.4214138
        %v2609 = vadd.f32 %v2481, 1.4214138
        %v2610 = vadd.f32 %v2482, 1.4214138
        %v2611 = vadd.f32 %v2483, 1.4214138
        %v2612 = vadd.f32 %v2484, 1.4214138
        %v2613 = vadd.f32 %v2485, 1.4214138
        %v2614 = vadd.f32 %v2486, 1.4214138
        %v2615 = vadd.f32 %v2487, 1.4214138
        %v2616 = vadd.f32 %v2488, 1.4214138
        %v2617 = vadd.f32 %v2489, 1.4214138
        %v2618 = vadd.f32 %v2490, 1.4214138
        %v2619 = vadd.f32 %v2491, 1.4214138
        %v2620 = vadd.f32 %v2492, 1.4214138
        %v2621 = vadd.f32 %v2493, 1.4214138
        %v2622 = vadd.f32 %v2494, 1.4214138
        %v2623 = vadd.f32 %v2495, 1.4214138
        %v2624 = vadd.f32 %v2496, 1.4214138
        %v2625 = vadd.f32 %v2497, 1.4214138
        %v2626 = vadd.f32 %v2498, 1.4214138
        %v2627 = vadd.f32 %v2499, 1.4214138
        %v2628 = vadd.f32 %v2500, 1.4214138
        %v2629 = vadd.f32 %v2501, 1.4214138
        %v2630 = vadd.f32 %v2502, 1.4214138
        %v2631 = vadd.f32 %v2503, 1.4214138
        %v2632 = vadd.f32 %v2504, 1.4214138
        %v2633 = vadd.f32 %v2505, 1.4214138
        %v2634 = vadd.f32 %v2506, 1.4214138
        %v2635 = vadd.f32 %v2507, 1.4214138
        %v2636 = vadd.f32 %v2508, 1.4214138
        %v2637 = vadd.f32 %v2509, 1.4214138
        %v2638 = vmul.f32 %v2510, %v1871
        %v2639 = vmul.f32 %v2511, %v1873
        %v2640 = vmul.f32 %v2512, %v1875
        %v2641 = vmul.f32 %v2513, %v1877
        %v2642 = vmul.f32 %v2514, %v1879
        %v2643 = vmul.f32 %v2515, %v1881
        %v2644 = vmul.f32 %v2516, %v1883
        %v2645 = vmul.f32 %v2517, %v1885
        %v2646 = vmul.f32 %v2518, %v1887
        %v2647 = vmul.f32 %v2519, %v1889
        %v2648 = vmul.f32 %v2520, %v1891
        %v2649 = vmul.f32 %v2521, %v1893
        %v2650 = vmul.f32 %v2522, %v1895
        %v2651 = vmul.f32 %v2523, %v1897
        %v2652 = vmul.f32 %v2524, %v1899
        %v2653 = vmul.f32 %v2525, %v1901
        %v2654 = vmul.f32 %v2526, %v1903
        %v2655 = vmul.f32 %v2527, %v1905
        %v2656 = vmul.f32 %v2528, %v1907
        %v2657 = vmul.f32 %v2529, %v1909
        %v2658 = vmul.f32 %v2530, %v1911
        %v2659 = vmul.f32 %v2531, %v1913
        %v2660 = vmul.f32 %v2532, %v1915
        %v2661 = vmul.f32 %v2533, %v1917
        %v2662 = vmul.f32 %v2534, %v1919
        %v2663 = vmul.f32 %v2535, %v1921
        %v2664 = vmul.f32 %v2536, %v1923
        %v2665 = vmul.f32 %v2537, %v1925
        %v2666 = vmul.f32 %v2538, %v1927
        %v2667 = vmul.f32 %v2539, %v1929
        %v2668 = vmul.f32 %v2540, %v1931
        %v2669 = vmul.f32 %v2541, %v1933
        %v2670 = vmul.f32 %v2542, %v1935
        %v2671 = vmul.f32 %v2543, %v1937
        %v2672 = vmul.f32 %v2544, %v1939
        %v2673 = vmul.f32 %v2545, %v1941
        %v2674 = vmul.f32 %v2546, %v1943
        %v2675 = vmul.f32 %v2547, %v1945
        %v2676 = vmul.f32 %v2548, %v1947
        %v2677 = vmul.f32 %v2549, %v1949
        %v2678 = vmul.f32 %v2550, %v1951
        %v2679 = vmul.f32 %v2551, %v1953
        %v2680 = vmul.f32 %v2552, %v1955
        %v2681 = vmul.f32 %v2553, %v1957
        %v2682 = vmul.f32 %v2554, %v1959
        %v2683 = vmul.f32 %v2555, %v1961
        %v2684 = vmul.f32 %v2556, %v1963
        %v2685 = vmul.f32 %v2557, %v1965
        %v2686 = vmul.f32 %v2558, %v1967
        %v2687 = vmul.f32 %v2559, %v1969
        %v2688 = vmul.f32 %v2560, %v1971
        %v2689 = vmul.f32 %v2561, %v1973
        %v2690 = vmul.f32 %v2562, %v1975
        %v2691 = vmul.f32 %v2563, %v1977
        %v2692 = vmul.f32 %v2564, %v1979
        %v2693 = vmul.f32 %v2565, %v1981
        %v2694 = vmul.f32 %v2566, %v1983
        %v2695 = vmul.f32 %v2567, %v1985
        %v2696 = vmul.f32 %v2568, %v1987
        %v2697 = vmul.f32 %v2569, %v1989
        %v2698 = vmul.f32 %v2570, %v1991
        %v2699 = vmul.f32 %v2571, %v1993
        %v2700 = vmul.f32 %v2572, %v1995
        %v2701 = vmul.f32 %v2573, %v1997
        %v2702 = vmul.f32 %v2574, %v1999
        %v2703 = vmul.f32 %v2575, %v2001
        %v2704 = vmul.f32 %v2576, %v2003
        %v2705 = vmul.f32 %v2577, %v2005
        %v2706 = vmul.f32 %v2578, %v2007
        %v2707 = vmul.f32 %v2579, %v2009
        %v2708 = vmul.f32 %v2580, %v2011
        %v2709 = vmul.f32 %v2581, %v2013
        %v2710 = vmul.f32 %v2582, %v2015
        %v2711 = vmul.f32 %v2583, %v2017
        %v2712 = vmul.f32 %v2584, %v2019
        %v2713 = vmul.f32 %v2585, %v2021
        %v2714 = vmul.f32 %v2586, %v2023
        %v2715 = vmul.f32 %v2587, %v2025
        %v2716 = vmul.f32 %v2588, %v2027
        %v2717 = vmul.f32 %v2589, %v2029
        %v2718 = vmul.f32 %v2590, %v2031
        %v2719 = vmul.f32 %v2591, %v2033
        %v2720 = vmul.f32 %v2592, %v2035
        %v2721 = vmul.f32 %v2593, %v2037
        %v2722 = vmul.f32 %v2594, %v2039
        %v2723 = vmul.f32 %v2595, %v2041
        %v2724 = vmul.f32 %v2596, %v2043
        %v2725 = vmul.f32 %v2597, %v2045
        %v2726 = vmul.f32 %v2598, %v2047
        %v2727 = vmul.f32 %v2599, %v2049
        %v2728 = vmul.f32 %v2600, %v2051
        %v2729 = vmul.f32 %v2601, %v2053
        %v2730 = vmul.f32 %v2602, %v2055
        %v2731 = vmul.f32 %v2603, %v2057
        %v2732 = vmul.f32 %v2604, %v2059
        %v2733 = vmul.f32 %v2605, %v2061
        %v2734 = vmul.f32 %v2606, %v2063
        %v2735 = vmul.f32 %v2607, %v2065
        %v2736 = vmul.f32 %v2608, %v2067
        %v2737 = vmul.f32 %v2609, %v2069
        %v2738 = vmul.f32 %v2610, %v2071
        %v2739 = vmul.f32 %v2611, %v2073
        %v2740 = vmul.f32 %v2612, %v2075
        %v2741 = vmul.f32 %v2613, %v2077
        %v2742 = vmul.f32 %v2614, %v2079
        %v2743 = vmul.f32 %v2615, %v2081
        %v2744 = vmul.f32 %v2616, %v2083
        %v2745 = vmul.f32 %v2617, %v2085
        %v2746 = vmul.f32 %v2618, %v2087
        %v2747 = vmul.f32 %v2619, %v2089
        %v2748 = vmul.f32 %v2620, %v2091
        %v2749 = vmul.f32 %v2621, %v2093
        %v2750 = vmul.f32 %v2622, %v2095
        %v2751 = vmul.f32 %v2623, %v2097
        %v2752 = vmul.f32 %v2624, %v2099
        %v2753 = vmul.f32 %v2625, %v2101
        %v2754 = vmul.f32 %v2626, %v2103
        %v2755 = vmul.f32 %v2627, %v2105
        %v2756 = vmul.f32 %v2628, %v2107
        %v2757 = vmul.f32 %v2629, %v2109
        %v2758 = vmul.f32 %v2630, %v2111
        %v2759 = vmul.f32 %v2631, %v2113
        %v2760 = vmul.f32 %v2632, %v2115
        %v2761 = vmul.f32 %v2633, %v2117
        %v2762 = vmul.f32 %v2634, %v2119
        %v2763 = vmul.f32 %v2635, %v2121
        %v2764 = vmul.f32 %v2636, %v2123
        %v2765 = vmul.f32 %v2637, %v2125
        %v2766 = vadd.f32 %v2638, -0.28449672
        %v2767 = vadd.f32 %v2639, -0.28449672
        %v2768 = vadd.f32 %v2640, -0.28449672
        %v2769 = vadd.f32 %v2641, -0.28449672
        %v2770 = vadd.f32 %v2642, -0.28449672
        %v2771 = vadd.f32 %v2643, -0.28449672
        %v2772 = vadd.f32 %v2644, -0.28449672
        %v2773 = vadd.f32 %v2645, -0.28449672
        %v2774 = vadd.f32 %v2646, -0.28449672
        %v2775 = vadd.f32 %v2647, -0.28449672
        %v2776 = vadd.f32 %v2648, -0.28449672
        %v2777 = vadd.f32 %v2649, -0.28449672
        %v2778 = vadd.f32 %v2650, -0.28449672
        %v2779 = vadd.f32 %v2651, -0.28449672
        %v2780 = vadd.f32 %v2652, -0.28449672
        %v2781 = vadd.f32 %v2653, -0.28449672
        %v2782 = vadd.f32 %v2654, -0.28449672
        %v2783 = vadd.f32 %v2655, -0.28449672
        %v2784 = vadd.f32 %v2656, -0.28449672
        %v2785 = vadd.f32 %v2657, -0.28449672
        %v2786 = vadd.f32 %v2658, -0.28449672
        %v2787 = vadd.f32 %v2659, -0.28449672
        %v2788 = vadd.f32 %v2660, -0.28449672
        %v2789 = vadd.f32 %v2661, -0.28449672
        %v2790 = vadd.f32 %v2662, -0.28449672
        %v2791 = vadd.f32 %v2663, -0.28449672
        %v2792 = vadd.f32 %v2664, -0.28449672
        %v2793 = vadd.f32 %v2665, -0.28449672
        %v2794 = vadd.f32 %v2666, -0.28449672
        %v2795 = vadd.f32 %v2667, -0.28449672
        %v2796 = vadd.f32 %v2668, -0.28449672
        %v2797 = vadd.f32 %v2669, -0.28449672
        %v2798 = vadd.f32 %v2670, -0.28449672
        %v2799 = vadd.f32 %v2671, -0.28449672
        %v2800 = vadd.f32 %v2672, -0.28449672
        %v2801 = vadd.f32 %v2673, -0.28449672
        %v2802 = vadd.f32 %v2674, -0.28449672
        %v2803 = vadd.f32 %v2675, -0.28449672
        %v2804 = vadd.f32 %v2676, -0.28449672
        %v2805 = vadd.f32 %v2677, -0.28449672
        %v2806 = vadd.f32 %v2678, -0.28449672
        %v2807 = vadd.f32 %v2679, -0.28449672
        %v2808 = vadd.f32 %v2680, -0.28449672
        %v2809 = vadd.f32 %v2681, -0.28449672
        %v2810 = vadd.f32 %v2682, -0.28449672
        %v2811 = vadd.f32 %v2683, -0.28449672
        %v2812 = vadd.f32 %v2684, -0.28449672
        %v2813 = vadd.f32 %v2685, -0.28449672
        %v2814 = vadd.f32 %v2686, -0.28449672
        %v2815 = vadd.f32 %v2687, -0.28449672
        %v2816 = vadd.f32 %v2688, -0.28449672
        %v2817 = vadd.f32 %v2689, -0.28449672
        %v2818 = vadd.f32 %v2690, -0.28449672
        %v2819 = vadd.f32 %v2691, -0.28449672
        %v2820 = vadd.f32 %v2692, -0.28449672
        %v2821 = vadd.f32 %v2693, -0.28449672
        %v2822 = vadd.f32 %v2694, -0.28449672
        %v2823 = vadd.f32 %v2695, -0.28449672
        %v2824 = vadd.f32 %v2696, -0.28449672
        %v2825 = vadd.f32 %v2697, -0.28449672
        %v2826 = vadd.f32 %v2698, -0.28449672
        %v2827 = vadd.f32 %v2699, -0.28449672
        %v2828 = vadd.f32 %v2700, -0.28449672
        %v2829 = vadd.f32 %v2701, -0.28449672
        %v2830 = vadd.f32 %v2702, -0.28449672
        %v2831 = vadd.f32 %v2703, -0.28449672
        %v2832 = vadd.f32 %v2704, -0.28449672
        %v2833 = vadd.f32 %v2705, -0.28449672
        %v2834 = vadd.f32 %v2706, -0.28449672
        %v2835 = vadd.f32 %v2707, -0.28449672
        %v2836 = vadd.f32 %v2708, -0.28449672
        %v2837 = vadd.f32 %v2709, -0.28449672
        %v2838 = vadd.f32 %v2710, -0.28449672
        %v2839 = vadd.f32 %v2711, -0.28449672
        %v2840 = vadd.f32 %v2712, -0.28449672
        %v2841 = vadd.f32 %v2713, -0.28449672
        %v2842 = vadd.f32 %v2714, -0.28449672
        %v2843 = vadd.f32 %v2715, -0.28449672
        %v2844 = vadd.f32 %v2716, -0.28449672
        %v2845 = vadd.f32 %v2717, -0.28449672
        %v2846 = vadd.f32 %v2718, -0.28449672
        %v2847 = vadd.f32 %v2719, -0.28449672
        %v2848 = vadd.f32 %v2720, -0.28449672
        %v2849 = vadd.f32 %v2721, -0.28449672
        %v2850 = vadd.f32 %v2722, -0.28449672
        %v2851 = vadd.f32 %v2723, -0.28449672
        %v2852 = vadd.f32 %v2724, -0.28449672
        %v2853 = vadd.f32 %v2725, -0.28449672
        %v2854 = vadd.f32 %v2726, -0.28449672
        %v2855 = vadd.f32 %v2727, -0.28449672
        %v2856 = vadd.f32 %v2728, -0.28449672
        %v2857 = vadd.f32 %v2729, -0.28449672
        %v2858 = vadd.f32 %v2730, -0.28449672
        %v2859 = vadd.f32 %v2731, -0.28449672
        %v2860 = vadd.f32 %v2732, -0.28449672
        %v2861 = vadd.f32 %v2733, -0.28449672
        %v2862 = vadd.f32 %v2734, -0.28449672
        %v2863 = vadd.f32 %v2735, -0.28449672
        %v2864 = vadd.f32 %v2736, -0.28449672
        %v2865 = vadd.f32 %v2737, -0.28449672
        %v2866 = vadd.f32 %v2738, -0.28449672
        %v2867 = vadd.f32 %v2739, -0.28449672
        %v2868 = vadd.f32 %v2740, -0.28449672
        %v2869 = vadd.f32 %v2741, -0.28449672
        %v2870 = vadd.f32 %v2742, -0.28449672
        %v2871 = vadd.f32 %v2743, -0.28449672
        %v2872 = vadd.f32 %v2744, -0.28449672
        %v2873 = vadd.f32 %v2745, -0.28449672
        %v2874 = vadd.f32 %v2746, -0.28449672
        %v2875 = vadd.f32 %v2747, -0.28449672
        %v2876 = vadd.f32 %v2748, -0.28449672
        %v2877 = vadd.f32 %v2749, -0.28449672
        %v2878 = vadd.f32 %v2750, -0.28449672
        %v2879 = vadd.f32 %v2751, -0.28449672
        %v2880 = vadd.f32 %v2752, -0.28449672
        %v2881 = vadd.f32 %v2753, -0.28449672
        %v2882 = vadd.f32 %v2754, -0.28449672
        %v2883 = vadd.f32 %v2755, -0.28449672
        %v2884 = vadd.f32 %v2756, -0.28449672
        %v2885 = vadd.f32 %v2757, -0.28449672
        %v2886 = vadd.f32 %v2758, -0.28449672
        %v2887 = vadd.f32 %v2759, -0.28449672
        %v2888 = vadd.f32 %v2760, -0.28449672
        %v2889 = vadd.f32 %v2761, -0.28449672
        %v2890 = vadd.f32 %v2762, -0.28449672
        %v2891 = vadd.f32 %v2763, -0.28449672
        %v2892 = vadd.f32 %v2764, -0.28449672
        %v2893 = vadd.f32 %v2765, -0.28449672
        %v2894 = vmul.f32 %v2766, %v1871
        %v2895 = vmul.f32 %v2767, %v1873
        %v2896 = vmul.f32 %v2768, %v1875
        %v2897 = vmul.f32 %v2769, %v1877
        %v2898 = vmul.f32 %v2770, %v1879
        %v2899 = vmul.f32 %v2771, %v1881
        %v2900 = vmul.f32 %v2772, %v1883
        %v2901 = vmul.f32 %v2773, %v1885
        %v2902 = vmul.f32 %v2774, %v1887
        %v2903 = vmul.f32 %v2775, %v1889
        %v2904 = vmul.f32 %v2776, %v1891
        %v2905 = vmul.f32 %v2777, %v1893
        %v2906 = vmul.f32 %v2778, %v1895
        %v2907 = vmul.f32 %v2779, %v1897
        %v2908 = vmul.f32 %v2780, %v1899
        %v2909 = vmul.f32 %v2781, %v1901
        %v2910 = vmul.f32 %v2782, %v1903
        %v2911 = vmul.f32 %v2783, %v1905
        %v2912 = vmul.f32 %v2784, %v1907
        %v2913 = vmul.f32 %v2785, %v1909
        %v2914 = vmul.f32 %v2786, %v1911
        %v2915 = vmul.f32 %v2787, %v1913
        %v2916 = vmul.f32 %v2788, %v1915
        %v2917 = vmul.f32 %v2789, %v1917
        %v2918 = vmul.f32 %v2790, %v1919
        %v2919 = vmul.f32 %v2791, %v1921
        %v2920 = vmul.f32 %v2792, %v1923
        %v2921 = vmul.f32 %v2793, %v1925
        %v2922 = vmul.f32 %v2794, %v1927
        %v2923 = vmul.f32 %v2795, %v1929
        %v2924 = vmul.f32 %v2796, %v1931
        %v2925 = vmul.f32 %v2797, %v1933
        %v2926 = vmul.f32 %v2798, %v1935
        %v2927 = vmul.f32 %v2799, %v1937
        %v2928 = vmul.f32 %v2800, %v1939
        %v2929 = vmul.f32 %v2801, %v1941
        %v2930 = vmul.f32 %v2802, %v1943
        %v2931 = vmul.f32 %v2803, %v1945
        %v2932 = vmul.f32 %v2804, %v1947
        %v2933 = vmul.f32 %v2805, %v1949
        %v2934 = vmul.f32 %v2806, %v1951
        %v2935 = vmul.f32 %v2807, %v1953
        %v2936 = vmul.f32 %v2808, %v1955
        %v2937 = vmul.f32 %v2809, %v1957
        %v2938 = vmul.f32 %v2810, %v1959
        %v2939 = vmul.f32 %v2811, %v1961
        %v2940 = vmul.f32 %v2812, %v1963
        %v2941 = vmul.f32 %v2813, %v1965
        %v2942 = vmul.f32 %v2814, %v1967
        %v2943 = vmul.f32 %v2815, %v1969
        %v2944 = vmul.f32 %v2816, %v1971
        %v2945 = vmul.f32 %v2817, %v1973
        %v2946 = vmul.f32 %v2818, %v1975
        %v2947 = vmul.f32 %v2819, %v1977
        %v2948 = vmul.f32 %v2820, %v1979
        %v2949 = vmul.f32 %v2821, %v1981
        %v2950 = vmul.f32 %v2822, %v1983
        %v2951 = vmul.f32 %v2823, %v1985
        %v2952 = vmul.f32 %v2824, %v1987
        %v2953 = vmul.f32 %v2825, %v1989
        %v2954 = vmul.f32 %v2826, %v1991
        %v2955 = vmul.f32 %v2827, %v1993
        %v2956 = vmul.f32 %v2828, %v1995
        %v2957 = vmul.f32 %v2829, %v1997
        %v2958 = vmul.f32 %v2830, %v1999
        %v2959 = vmul.f32 %v2831, %v2001
        %v2960 = vmul.f32 %v2832, %v2003
        %v2961 = vmul.f32 %v2833, %v2005
        %v2962 = vmul.f32 %v2834, %v2007
        %v2963 = vmul.f32 %v2835, %v2009
        %v2964 = vmul.f32 %v2836, %v2011
        %v2965 = vmul.f32 %v2837, %v2013
        %v2966 = vmul.f32 %v2838, %v2015
        %v2967 = vmul.f32 %v2839, %v2017
        %v2968 = vmul.f32 %v2840, %v2019
        %v2969 = vmul.f32 %v2841, %v2021
        %v2970 = vmul.f32 %v2842, %v2023
        %v2971 = vmul.f32 %v2843, %v2025
        %v2972 = vmul.f32 %v2844, %v2027
        %v2973 = vmul.f32 %v2845, %v2029
        %v2974 = vmul.f32 %v2846, %v2031
        %v2975 = vmul.f32 %v2847, %v2033
        %v2976 = vmul.f32 %v2848, %v2035
        %v2977 = vmul.f32 %v2849, %v2037
        %v2978 = vmul.f32 %v2850, %v2039
        %v2979 = vmul.f32 %v2851, %v2041
        %v2980 = vmul.f32 %v2852, %v2043
        %v2981 = vmul.f32 %v2853, %v2045
        %v2982 = vmul.f32 %v2854, %v2047
        %v2983 = vmul.f32 %v2855, %v2049
        %v2984 = vmul.f32 %v2856, %v2051
        %v2985 = vmul.f32 %v2857, %v2053
        %v2986 = vmul.f32 %v2858, %v2055
        %v2987 = vmul.f32 %v2859, %v2057
        %v2988 = vmul.f32 %v2860, %v2059
        %v2989 = vmul.f32 %v2861, %v2061
        %v2990 = vmul.f32 %v2862, %v2063
        %v2991 = vmul.f32 %v2863, %v2065
        %v2992 = vmul.f32 %v2864, %v2067
        %v2993 = vmul.f32 %v2865, %v2069
        %v2994 = vmul.f32 %v2866, %v2071
        %v2995 = vmul.f32 %v2867, %v2073
        %v2996 = vmul.f32 %v2868, %v2075
        %v2997 = vmul.f32 %v2869, %v2077
        %v2998 = vmul.f32 %v2870, %v2079
        %v2999 = vmul.f32 %v2871, %v2081
        %v3000 = vmul.f32 %v2872, %v2083
        %v3001 = vmul.f32 %v2873, %v2085
        %v3002 = vmul.f32 %v2874, %v2087
        %v3003 = vmul.f32 %v2875, %v2089
        %v3004 = vmul.f32 %v2876, %v2091
        %v3005 = vmul.f32 %v2877, %v2093
        %v3006 = vmul.f32 %v2878, %v2095
        %v3007 = vmul.f32 %v2879, %v2097
        %v3008 = vmul.f32 %v2880, %v2099
        %v3009 = vmul.f32 %v2881, %v2101
        %v3010 = vmul.f32 %v2882, %v2103
        %v3011 = vmul.f32 %v2883, %v2105
        %v3012 = vmul.f32 %v2884, %v2107
        %v3013 = vmul.f32 %v2885, %v2109
        %v3014 = vmul.f32 %v2886, %v2111
        %v3015 = vmul.f32 %v2887, %v2113
        %v3016 = vmul.f32 %v2888, %v2115
        %v3017 = vmul.f32 %v2889, %v2117
        %v3018 = vmul.f32 %v2890, %v2119
        %v3019 = vmul.f32 %v2891, %v2121
        %v3020 = vmul.f32 %v2892, %v2123
        %v3021 = vmul.f32 %v2893, %v2125
        %v3022 = vadd.f32 %v2894, 0.2548296
        %v3023 = vadd.f32 %v2895, 0.2548296
        %v3024 = vadd.f32 %v2896, 0.2548296
        %v3025 = vadd.f32 %v2897, 0.2548296
        %v3026 = vadd.f32 %v2898, 0.2548296
        %v3027 = vadd.f32 %v2899, 0.2548296
        %v3028 = vadd.f32 %v2900, 0.2548296
        %v3029 = vadd.f32 %v2901, 0.2548296
        %v3030 = vadd.f32 %v2902, 0.2548296
        %v3031 = vadd.f32 %v2903, 0.2548296
        %v3032 = vadd.f32 %v2904, 0.2548296
        %v3033 = vadd.f32 %v2905, 0.2548296
        %v3034 = vadd.f32 %v2906, 0.2548296
        %v3035 = vadd.f32 %v2907, 0.2548296
        %v3036 = vadd.f32 %v2908, 0.2548296
        %v3037 = vadd.f32 %v2909, 0.2548296
        %v3038 = vadd.f32 %v2910, 0.2548296
        %v3039 = vadd.f32 %v2911, 0.2548296
        %v3040 = vadd.f32 %v2912, 0.2548296
        %v3041 = vadd.f32 %v2913, 0.2548296
        %v3042 = vadd.f32 %v2914, 0.2548296
        %v3043 = vadd.f32 %v2915, 0.2548296
        %v3044 = vadd.f32 %v2916, 0.2548296
        %v3045 = vadd.f32 %v2917, 0.2548296
        %v3046 = vadd.f32 %v2918, 0.2548296
        %v3047 = vadd.f32 %v2919, 0.2548296
        %v3048 = vadd.f32 %v2920, 0.2548296
        %v3049 = vadd.f32 %v2921, 0.2548296
        %v3050 = vadd.f32 %v2922, 0.2548296
        %v3051 = vadd.f32 %v2923, 0.2548296
        %v3052 = vadd.f32 %v2924, 0.2548296
        %v3053 = vadd.f32 %v2925, 0.2548296
        %v3054 = vadd.f32 %v2926, 0.2548296
        %v3055 = vadd.f32 %v2927, 0.2548296
        %v3056 = vadd.f32 %v2928, 0.2548296
        %v3057 = vadd.f32 %v2929, 0.2548296
        %v3058 = vadd.f32 %v2930, 0.2548296
        %v3059 = vadd.f32 %v2931, 0.2548296
        %v3060 = vadd.f32 %v2932, 0.2548296
        %v3061 = vadd.f32 %v2933, 0.2548296
        %v3062 = vadd.f32 %v2934, 0.2548296
        %v3063 = vadd.f32 %v2935, 0.2548296
        %v3064 = vadd.f32 %v2936, 0.2548296
        %v3065 = vadd.f32 %v2937, 0.2548296
        %v3066 = vadd.f32 %v2938, 0.2548296
        %v3067 = vadd.f32 %v2939, 0.2548296
        %v3068 = vadd.f32 %v2940, 0.2548296
        %v3069 = vadd.f32 %v2941, 0.2548296
        %v3070 = vadd.f32 %v2942, 0.2548296
        %v3071 = vadd.f32 %v2943, 0.2548296
        %v3072 = vadd.f32 %v2944, 0.2548296
        %v3073 = vadd.f32 %v2945, 0.2548296
        %v3074 = vadd.f32 %v2946, 0.2548296
        %v3075 = vadd.f32 %v2947, 0.2548296
        %v3076 = vadd.f32 %v2948, 0.2548296
        %v3077 = vadd.f32 %v2949, 0.2548296
        %v3078 = vadd.f32 %v2950, 0.2548296
        %v3079 = vadd.f32 %v2951, 0.2548296
        %v3080 = vadd.f32 %v2952, 0.2548296
        %v3081 = vadd.f32 %v2953, 0.2548296
        %v3082 = vadd.f32 %v2954, 0.2548296
        %v3083 = vadd.f32 %v2955, 0.2548296
        %v3084 = vadd.f32 %v2956, 0.2548296
        %v3085 = vadd.f32 %v2957, 0.2548296
        %v3086 = vadd.f32 %v2958, 0.2548296
        %v3087 = vadd.f32 %v2959, 0.2548296
        %v3088 = vadd.f32 %v2960, 0.2548296
        %v3089 = vadd.f32 %v2961, 0.2548296
        %v3090 = vadd.f32 %v2962, 0.2548296
        %v3091 = vadd.f32 %v2963, 0.2548296
        %v3092 = vadd.f32 %v2964, 0.2548296
        %v3093 = vadd.f32 %v2965, 0.2548296
        %v3094 = vadd.f32 %v2966, 0.2548296
        %v3095 = vadd.f32 %v2967, 0.2548296
        %v3096 = vadd.f32 %v2968, 0.2548296
        %v3097 = vadd.f32 %v2969, 0.2548296
        %v3098 = vadd.f32 %v2970, 0.2548296
        %v3099 = vadd.f32 %v2971, 0.2548296
        %v3100 = vadd.f32 %v2972, 0.2548296
        %v3101 = vadd.f32 %v2973, 0.2548296
        %v3102 = vadd.f32 %v2974, 0.2548296
        %v3103 = vadd.f32 %v2975, 0.2548296
        %v3104 = vadd.f32 %v2976, 0.2548296
        %v3105 = vadd.f32 %v2977, 0.2548296
        %v3106 = vadd.f32 %v2978, 0.2548296
        %v3107 = vadd.f32 %v2979, 0.2548296
        %v3108 = vadd.f32 %v2980, 0.2548296
        %v3109 = vadd.f32 %v2981, 0.2548296
        %v3110 = vadd.f32 %v2982, 0.2548296
        %v3111 = vadd.f32 %v2983, 0.2548296
        %v3112 = vadd.f32 %v2984, 0.2548296
        %v3113 = vadd.f32 %v2985, 0.2548296
        %v3114 = vadd.f32 %v2986, 0.2548296
        %v3115 = vadd.f32 %v2987, 0.2548296
        %v3116 = vadd.f32 %v2988, 0.2548296
        %v3117 = vadd.f32 %v2989, 0.2548296
        %v3118 = vadd.f32 %v2990, 0.2548296
        %v3119 = vadd.f32 %v2991, 0.2548296
        %v3120 = vadd.f32 %v2992, 0.2548296
        %v3121 = vadd.f32 %v2993, 0.2548296
        %v3122 = vadd.f32 %v2994, 0.2548296
        %v3123 = vadd.f32 %v2995, 0.2548296
        %v3124 = vadd.f32 %v2996, 0.2548296
        %v3125 = vadd.f32 %v2997, 0.2548296
        %v3126 = vadd.f32 %v2998, 0.2548296
        %v3127 = vadd.f32 %v2999, 0.2548296
        %v3128 = vadd.f32 %v3000, 0.2548296
        %v3129 = vadd.f32 %v3001, 0.2548296
        %v3130 = vadd.f32 %v3002, 0.2548296
        %v3131 = vadd.f32 %v3003, 0.2548296
        %v3132 = vadd.f32 %v3004, 0.2548296
        %v3133 = vadd.f32 %v3005, 0.2548296
        %v3134 = vadd.f32 %v3006, 0.2548296
        %v3135 = vadd.f32 %v3007, 0.2548296
        %v3136 = vadd.f32 %v3008, 0.2548296
        %v3137 = vadd.f32 %v3009, 0.2548296
        %v3138 = vadd.f32 %v3010, 0.2548296
        %v3139 = vadd.f32 %v3011, 0.2548296
        %v3140 = vadd.f32 %v3012, 0.2548296
        %v3141 = vadd.f32 %v3013, 0.2548296
        %v3142 = vadd.f32 %v3014, 0.2548296
        %v3143 = vadd.f32 %v3015, 0.2548296
        %v3144 = vadd.f32 %v3016, 0.2548296
        %v3145 = vadd.f32 %v3017, 0.2548296
        %v3146 = vadd.f32 %v3018, 0.2548296
        %v3147 = vadd.f32 %v3019, 0.2548296
        %v3148 = vadd.f32 %v3020, 0.2548296
        %v3149 = vadd.f32 %v3021, 0.2548296
        %v3150 = vmul.f32 %v3022, %v1871
        %v3151 = vmul.f32 %v3023, %v1873
        %v3152 = vmul.f32 %v3024, %v1875
        %v3153 = vmul.f32 %v3025, %v1877
        %v3154 = vmul.f32 %v3026, %v1879
        %v3155 = vmul.f32 %v3027, %v1881
        %v3156 = vmul.f32 %v3028, %v1883
        %v3157 = vmul.f32 %v3029, %v1885
        %v3158 = vmul.f32 %v3030, %v1887
        %v3159 = vmul.f32 %v3031, %v1889
        %v3160 = vmul.f32 %v3032, %v1891
        %v3161 = vmul.f32 %v3033, %v1893
        %v3162 = vmul.f32 %v3034, %v1895
        %v3163 = vmul.f32 %v3035, %v1897
        %v3164 = vmul.f32 %v3036, %v1899
        %v3165 = vmul.f32 %v3037, %v1901
        %v3166 = vmul.f32 %v3038, %v1903
        %v3167 = vmul.f32 %v3039, %v1905
        %v3168 = vmul.f32 %v3040, %v1907
        %v3169 = vmul.f32 %v3041, %v1909
        %v3170 = vmul.f32 %v3042, %v1911
        %v3171 = vmul.f32 %v3043, %v1913
        %v3172 = vmul.f32 %v3044, %v1915
        %v3173 = vmul.f32 %v3045, %v1917
        %v3174 = vmul.f32 %v3046, %v1919
        %v3175 = vmul.f32 %v3047, %v1921
        %v3176 = vmul.f32 %v3048, %v1923
        %v3177 = vmul.f32 %v3049, %v1925
        %v3178 = vmul.f32 %v3050, %v1927
        %v3179 = vmul.f32 %v3051, %v1929
        %v3180 = vmul.f32 %v3052, %v1931
        %v3181 = vmul.f32 %v3053, %v1933
        %v3182 = vmul.f32 %v3054, %v1935
        %v3183 = vmul.f32 %v3055, %v1937
        %v3184 = vmul.f32 %v3056, %v1939
        %v3185 = vmul.f32 %v3057, %v1941
        %v3186 = vmul.f32 %v3058, %v1943
        %v3187 = vmul.f32 %v3059, %v1945
        %v3188 = vmul.f32 %v3060, %v1947
        %v3189 = vmul.f32 %v3061, %v1949
        %v3190 = vmul.f32 %v3062, %v1951
        %v3191 = vmul.f32 %v3063, %v1953
        %v3192 = vmul.f32 %v3064, %v1955
        %v3193 = vmul.f32 %v3065, %v1957
        %v3194 = vmul.f32 %v3066, %v1959
        %v3195 = vmul.f32 %v3067, %v1961
        %v3196 = vmul.f32 %v3068, %v1963
        %v3197 = vmul.f32 %v3069, %v1965
        %v3198 = vmul.f32 %v3070, %v1967
        %v3199 = vmul.f32 %v3071, %v1969
        %v3200 = vmul.f32 %v3072, %v1971
        %v3201 = vmul.f32 %v3073, %v1973
        %v3202 = vmul.f32 %v3074, %v1975
        %v3203 = vmul.f32 %v3075, %v1977
        %v3204 = vmul.f32 %v3076, %v1979
        %v3205 = vmul.f32 %v3077, %v1981
        %v3206 = vmul.f32 %v3078, %v1983
        %v3207 = vmul.f32 %v3079, %v1985
        %v3208 = vmul.f32 %v3080, %v1987
        %v3209 = vmul.f32 %v3081, %v1989
        %v3210 = vmul.f32 %v3082, %v1991
        %v3211 = vmul.f32 %v3083, %v1993
        %v3212 = vmul.f32 %v3084, %v1995
        %v3213 = vmul.f32 %v3085, %v1997
        %v3214 = vmul.f32 %v3086, %v1999
        %v3215 = vmul.f32 %v3087, %v2001
        %v3216 = vmul.f32 %v3088, %v2003
        %v3217 = vmul.f32 %v3089, %v2005
        %v3218 = vmul.f32 %v3090, %v2007
        %v3219 = vmul.f32 %v3091, %v2009
        %v3220 = vmul.f32 %v3092, %v2011
        %v3221 = vmul.f32 %v3093, %v2013
        %v3222 = vmul.f32 %v3094, %v2015
        %v3223 = vmul.f32 %v3095, %v2017
        %v3224 = vmul.f32 %v3096, %v2019
        %v3225 = vmul.f32 %v3097, %v2021
        %v3226 = vmul.f32 %v3098, %v2023
        %v3227 = vmul.f32 %v3099, %v2025
        %v3228 = vmul.f32 %v3100, %v2027
        %v3229 = vmul.f32 %v3101, %v2029
        %v3230 = vmul.f32 %v3102, %v2031
        %v3231 = vmul.f32 %v3103, %v2033
        %v3232 = vmul.f32 %v3104, %v2035
        %v3233 = vmul.f32 %v3105, %v2037
        %v3234 = vmul.f32 %v3106, %v2039
        %v3235 = vmul.f32 %v3107, %v2041
        %v3236 = vmul.f32 %v3108, %v2043
        %v3237 = vmul.f32 %v3109, %v2045
        %v3238 = vmul.f32 %v3110, %v2047
        %v3239 = vmul.f32 %v3111, %v2049
        %v3240 = vmul.f32 %v3112, %v2051
        %v3241 = vmul.f32 %v3113, %v2053
        %v3242 = vmul.f32 %v3114, %v2055
        %v3243 = vmul.f32 %v3115, %v2057
        %v3244 = vmul.f32 %v3116, %v2059
        %v3245 = vmul.f32 %v3117, %v2061
        %v3246 = vmul.f32 %v3118, %v2063
        %v3247 = vmul.f32 %v3119, %v2065
        %v3248 = vmul.f32 %v3120, %v2067
        %v3249 = vmul.f32 %v3121, %v2069
        %v3250 = vmul.f32 %v3122, %v2071
        %v3251 = vmul.f32 %v3123, %v2073
        %v3252 = vmul.f32 %v3124, %v2075
        %v3253 = vmul.f32 %v3125, %v2077
        %v3254 = vmul.f32 %v3126, %v2079
        %v3255 = vmul.f32 %v3127, %v2081
        %v3256 = vmul.f32 %v3128, %v2083
        %v3257 = vmul.f32 %v3129, %v2085
        %v3258 = vmul.f32 %v3130, %v2087
        %v3259 = vmul.f32 %v3131, %v2089
        %v3260 = vmul.f32 %v3132, %v2091
        %v3261 = vmul.f32 %v3133, %v2093
        %v3262 = vmul.f32 %v3134, %v2095
        %v3263 = vmul.f32 %v3135, %v2097
        %v3264 = vmul.f32 %v3136, %v2099
        %v3265 = vmul.f32 %v3137, %v2101
        %v3266 = vmul.f32 %v3138, %v2103
        %v3267 = vmul.f32 %v3139, %v2105
        %v3268 = vmul.f32 %v3140, %v2107
        %v3269 = vmul.f32 %v3141, %v2109
        %v3270 = vmul.f32 %v3142, %v2111
        %v3271 = vmul.f32 %v3143, %v2113
        %v3272 = vmul.f32 %v3144, %v2115
        %v3273 = vmul.f32 %v3145, %v2117
        %v3274 = vmul.f32 %v3146, %v2119
        %v3275 = vmul.f32 %v3147, %v2121
        %v3276 = vmul.f32 %v3148, %v2123
        %v3277 = vmul.f32 %v3149, %v2125
        %v3278 = vsub.f32 0.0, %v1486
        %v3279 = vsub.f32 0.0, %v1487
        %v3280 = vsub.f32 0.0, %v1488
        %v3281 = vsub.f32 0.0, %v1489
        %v3282 = vsub.f32 0.0, %v1490
        %v3283 = vsub.f32 0.0, %v1491
        %v3284 = vsub.f32 0.0, %v1492
        %v3285 = vsub.f32 0.0, %v1493
        %v3286 = vsub.f32 0.0, %v1494
        %v3287 = vsub.f32 0.0, %v1495
        %v3288 = vsub.f32 0.0, %v1496
        %v3289 = vsub.f32 0.0, %v1497
        %v3290 = vsub.f32 0.0, %v1498
        %v3291 = vsub.f32 0.0, %v1499
        %v3292 = vsub.f32 0.0, %v1500
        %v3293 = vsub.f32 0.0, %v1501
        %v3294 = vsub.f32 0.0, %v1502
        %v3295 = vsub.f32 0.0, %v1503
        %v3296 = vsub.f32 0.0, %v1504
        %v3297 = vsub.f32 0.0, %v1505
        %v3298 = vsub.f32 0.0, %v1506
        %v3299 = vsub.f32 0.0, %v1507
        %v3300 = vsub.f32 0.0, %v1508
        %v3301 = vsub.f32 0.0, %v1509
        %v3302 = vsub.f32 0.0, %v1510
        %v3303 = vsub.f32 0.0, %v1511
        %v3304 = vsub.f32 0.0, %v1512
        %v3305 = vsub.f32 0.0, %v1513
        %v3306 = vsub.f32 0.0, %v1514
        %v3307 = vsub.f32 0.0, %v1515
        %v3308 = vsub.f32 0.0, %v1516
        %v3309 = vsub.f32 0.0, %v1517
        %v3310 = vsub.f32 0.0, %v1518
        %v3311 = vsub.f32 0.0, %v1519
        %v3312 = vsub.f32 0.0, %v1520
        %v3313 = vsub.f32 0.0, %v1521
        %v3314 = vsub.f32 0.0, %v1522
        %v3315 = vsub.f32 0.0, %v1523
        %v3316 = vsub.f32 0.0, %v1524
        %v3317 = vsub.f32 0.0, %v1525
        %v3318 = vsub.f32 0.0, %v1526
        %v3319 = vsub.f32 0.0, %v1527
        %v3320 = vsub.f32 0.0, %v1528
        %v3321 = vsub.f32 0.0, %v1529
        %v3322 = vsub.f32 0.0, %v1530
        %v3323 = vsub.f32 0.0, %v1531
        %v3324 = vsub.f32 0.0, %v1532
        %v3325 = vsub.f32 0.0, %v1533
        %v3326 = vsub.f32 0.0, %v1534
        %v3327 = vsub.f32 0.0, %v1535
        %v3328 = vsub.f32 0.0, %v1536
        %v3329 = vsub.f32 0.0, %v1537
        %v3330 = vsub.f32 0.0, %v1538
        %v3331 = vsub.f32 0.0, %v1539
        %v3332 = vsub.f32 0.0, %v1540
        %v3333 = vsub.f32 0.0, %v1541
        %v3334 = vsub.f32 0.0, %v1542
        %v3335 = vsub.f32 0.0, %v1543
        %v3336 = vsub.f32 0.0, %v1544
        %v3337 = vsub.f32 0.0, %v1545
        %v3338 = vsub.f32 0.0, %v1546
        %v3339 = vsub.f32 0.0, %v1547
        %v3340 = vsub.f32 0.0, %v1548
        %v3341 = vsub.f32 0.0, %v1549
        %v3342 = vsub.f32 0.0, %v1550
        %v3343 = vsub.f32 0.0, %v1551
        %v3344 = vsub.f32 0.0, %v1552
        %v3345 = vsub.f32 0.0, %v1553
        %v3346 = vsub.f32 0.0, %v1554
        %v3347 = vsub.f32 0.0, %v1555
        %v3348 = vsub.f32 0.0, %v1556
        %v3349 = vsub.f32 0.0, %v1557
        %v3350 = vsub.f32 0.0, %v1558
        %v3351 = vsub.f32 0.0, %v1559
        %v3352 = vsub.f32 0.0, %v1560
        %v3353 = vsub.f32 0.0, %v1561
        %v3354 = vsub.f32 0.0, %v1562
        %v3355 = vsub.f32 0.0, %v1563
        %v3356 = vsub.f32 0.0, %v1564
        %v3357 = vsub.f32 0.0, %v1565
        %v3358 = vsub.f32 0.0, %v1566
        %v3359 = vsub.f32 0.0, %v1567
        %v3360 = vsub.f32 0.0, %v1568
        %v3361 = vsub.f32 0.0, %v1569
        %v3362 = vsub.f32 0.0, %v1570
        %v3363 = vsub.f32 0.0, %v1571
        %v3364 = vsub.f32 0.0, %v1572
        %v3365 = vsub.f32 0.0, %v1573
        %v3366 = vsub.f32 0.0, %v1574
        %v3367 = vsub.f32 0.0, %v1575
        %v3368 = vsub.f32 0.0, %v1576
        %v3369 = vsub.f32 0.0, %v1577
        %v3370 = vsub.f32 0.0, %v1578
        %v3371 = vsub.f32 0.0, %v1579
        %v3372 = vsub.f32 0.0, %v1580
        %v3373 = vsub.f32 0.0, %v1581
        %v3374 = vsub.f32 0.0, %v1582
        %v3375 = vsub.f32 0.0, %v1583
        %v3376 = vsub.f32 0.0, %v1584
        %v3377 = vsub.f32 0.0, %v1585
        %v3378 = vsub.f32 0.0, %v1586
        %v3379 = vsub.f32 0.0, %v1587
        %v3380 = vsub.f32 0.0, %v1588
        %v3381 = vsub.f32 0.0, %v1589
        %v3382 = vsub.f32 0.0, %v1590
        %v3383 = vsub.f32 0.0, %v1591
        %v3384 = vsub.f32 0.0, %v1592
        %v3385 = vsub.f32 0.0, %v1593
        %v3386 = vsub.f32 0.0, %v1594
        %v3387 = vsub.f32 0.0, %v1595
        %v3388 = vsub.f32 0.0, %v1596
        %v3389 = vsub.f32 0.0, %v1597
        %v3390 = vsub.f32 0.0, %v1598
        %v3391 = vsub.f32 0.0, %v1599
        %v3392 = vsub.f32 0.0, %v1600
        %v3393 = vsub.f32 0.0, %v1601
        %v3394 = vsub.f32 0.0, %v1602
        %v3395 = vsub.f32 0.0, %v1603
        %v3396 = vsub.f32 0.0, %v1604
        %v3397 = vsub.f32 0.0, %v1605
        %v3398 = vsub.f32 0.0, %v1606
        %v3399 = vsub.f32 0.0, %v1607
        %v3400 = vsub.f32 0.0, %v1608
        %v3401 = vsub.f32 0.0, %v1609
        %v3402 = vsub.f32 0.0, %v1610
        %v3403 = vsub.f32 0.0, %v1611
        %v3404 = vsub.f32 0.0, %v1612
        %v3405 = vsub.f32 0.0, %v1613
        %v3406 = vmul.f32 %v3278, %v1486
        %v3407 = vmul.f32 %v3279, %v1487
        %v3408 = vmul.f32 %v3280, %v1488
        %v3409 = vmul.f32 %v3281, %v1489
        %v3410 = vmul.f32 %v3282, %v1490
        %v3411 = vmul.f32 %v3283, %v1491
        %v3412 = vmul.f32 %v3284, %v1492
        %v3413 = vmul.f32 %v3285, %v1493
        %v3414 = vmul.f32 %v3286, %v1494
        %v3415 = vmul.f32 %v3287, %v1495
        %v3416 = vmul.f32 %v3288, %v1496
        %v3417 = vmul.f32 %v3289, %v1497
        %v3418 = vmul.f32 %v3290, %v1498
        %v3419 = vmul.f32 %v3291, %v1499
        %v3420 = vmul.f32 %v3292, %v1500
        %v3421 = vmul.f32 %v3293, %v1501
        %v3422 = vmul.f32 %v3294, %v1502
        %v3423 = vmul.f32 %v3295, %v1503
        %v3424 = vmul.f32 %v3296, %v1504
        %v3425 = vmul.f32 %v3297, %v1505
        %v3426 = vmul.f32 %v3298, %v1506
        %v3427 = vmul.f32 %v3299, %v1507
        %v3428 = vmul.f32 %v3300, %v1508
        %v3429 = vmul.f32 %v3301, %v1509
        %v3430 = vmul.f32 %v3302, %v1510
        %v3431 = vmul.f32 %v3303, %v1511
        %v3432 = vmul.f32 %v3304, %v1512
        %v3433 = vmul.f32 %v3305, %v1513
        %v3434 = vmul.f32 %v3306, %v1514
        %v3435 = vmul.f32 %v3307, %v1515
        %v3436 = vmul.f32 %v3308, %v1516
        %v3437 = vmul.f32 %v3309, %v1517
        %v3438 = vmul.f32 %v3310, %v1518
        %v3439 = vmul.f32 %v3311, %v1519
        %v3440 = vmul.f32 %v3312, %v1520
        %v3441 = vmul.f32 %v3313, %v1521
        %v3442 = vmul.f32 %v3314, %v1522
        %v3443 = vmul.f32 %v3315, %v1523
        %v3444 = vmul.f32 %v3316, %v1524
        %v3445 = vmul.f32 %v3317, %v1525
        %v3446 = vmul.f32 %v3318, %v1526
        %v3447 = vmul.f32 %v3319, %v1527
        %v3448 = vmul.f32 %v3320, %v1528
        %v3449 = vmul.f32 %v3321, %v1529
        %v3450 = vmul.f32 %v3322, %v1530
        %v3451 = vmul.f32 %v3323, %v1531
        %v3452 = vmul.f32 %v3324, %v1532
        %v3453 = vmul.f32 %v3325, %v1533
        %v3454 = vmul.f32 %v3326, %v1534
        %v3455 = vmul.f32 %v3327, %v1535
        %v3456 = vmul.f32 %v3328, %v1536
        %v3457 = vmul.f32 %v3329, %v1537
        %v3458 = vmul.f32 %v3330, %v1538
        %v3459 = vmul.f32 %v3331, %v1539
        %v3460 = vmul.f32 %v3332, %v1540
        %v3461 = vmul.f32 %v3333, %v1541
        %v3462 = vmul.f32 %v3334, %v1542
        %v3463 = vmul.f32 %v3335, %v1543
        %v3464 = vmul.f32 %v3336, %v1544
        %v3465 = vmul.f32 %v3337, %v1545
        %v3466 = vmul.f32 %v3338, %v1546
        %v3467 = vmul.f32 %v3339, %v1547
        %v3468 = vmul.f32 %v3340, %v1548
        %v3469 = vmul.f32 %v3341, %v1549
        %v3470 = vmul.f32 %v3342, %v1550
        %v3471 = vmul.f32 %v3343, %v1551
        %v3472 = vmul.f32 %v3344, %v1552
        %v3473 = vmul.f32 %v3345, %v1553
        %v3474 = vmul.f32 %v3346, %v1554
        %v3475 = vmul.f32 %v3347, %v1555
        %v3476 = vmul.f32 %v3348, %v1556
        %v3477 = vmul.f32 %v3349, %v1557
        %v3478 = vmul.f32 %v3350, %v1558
        %v3479 = vmul.f32 %v3351, %v1559
        %v3480 = vmul.f32 %v3352, %v1560
        %v3481 = vmul.f32 %v3353, %v1561
        %v3482 = vmul.f32 %v3354, %v1562
        %v3483 = vmul.f32 %v3355, %v1563
        %v3484 = vmul.f32 %v3356, %v1564
        %v3485 = vmul.f32 %v3357, %v1565
        %v3486 = vmul.f32 %v3358, %v1566
        %v3487 = vmul.f32 %v3359, %v1567
        %v3488 = vmul.f32 %v3360, %v1568
        %v3489 = vmul.f32 %v3361, %v1569
        %v3490 = vmul.f32 %v3362, %v1570
        %v3491 = vmul.f32 %v3363, %v1571
        %v3492 = vmul.f32 %v3364, %v1572
        %v3493 = vmul.f32 %v3365, %v1573
        %v3494 = vmul.f32 %v3366, %v1574
        %v3495 = vmul.f32 %v3367, %v1575
        %v3496 = vmul.f32 %v3368, %v1576
        %v3497 = vmul.f32 %v3369, %v1577
        %v3498 = vmul.f32 %v3370, %v1578
        %v3499 = vmul.f32 %v3371, %v1579
        %v3500 = vmul.f32 %v3372, %v1580
        %v3501 = vmul.f32 %v3373, %v1581
        %v3502 = vmul.f32 %v3374, %v1582
        %v3503 = vmul.f32 %v3375, %v1583
        %v3504 = vmul.f32 %v3376, %v1584
        %v3505 = vmul.f32 %v3377, %v1585
        %v3506 = vmul.f32 %v3378, %v1586
        %v3507 = vmul.f32 %v3379, %v1587
        %v3508 = vmul.f32 %v3380, %v1588
        %v3509 = vmul.f32 %v3381, %v1589
        %v3510 = vmul.f32 %v3382, %v1590
        %v3511 = vmul.f32 %v3383, %v1591
        %v3512 = vmul.f32 %v3384, %v1592
        %v3513 = vmul.f32 %v3385, %v1593
        %v3514 = vmul.f32 %v3386, %v1594
        %v3515 = vmul.f32 %v3387, %v1595
        %v3516 = vmul.f32 %v3388, %v1596
        %v3517 = vmul.f32 %v3389, %v1597
        %v3518 = vmul.f32 %v3390, %v1598
        %v3519 = vmul.f32 %v3391, %v1599
        %v3520 = vmul.f32 %v3392, %v1600
        %v3521 = vmul.f32 %v3393, %v1601
        %v3522 = vmul.f32 %v3394, %v1602
        %v3523 = vmul.f32 %v3395, %v1603
        %v3524 = vmul.f32 %v3396, %v1604
        %v3525 = vmul.f32 %v3397, %v1605
        %v3526 = vmul.f32 %v3398, %v1606
        %v3527 = vmul.f32 %v3399, %v1607
        %v3528 = vmul.f32 %v3400, %v1608
        %v3529 = vmul.f32 %v3401, %v1609
        %v3530 = vmul.f32 %v3402, %v1610
        %v3531 = vmul.f32 %v3403, %v1611
        %v3532 = vmul.f32 %v3404, %v1612
        %v3533 = vmul.f32 %v3405, %v1613
        %v3534 = vmul.f32 %v3406, 1.442695
        %v3535 = vpow.pop %v3534
        %v3536 = vmul.f32 %v3407, 1.442695
        %v3537 = vpow.pop %v3536
        %v3538 = vmul.f32 %v3408, 1.442695
        %v3539 = vpow.pop %v3538
        %v3540 = vmul.f32 %v3409, 1.442695
        %v3541 = vpow.pop %v3540
        %v3542 = vmul.f32 %v3410, 1.442695
        %v3543 = vpow.pop %v3542
        %v3544 = vmul.f32 %v3411, 1.442695
        %v3545 = vpow.pop %v3544
        %v3546 = vmul.f32 %v3412, 1.442695
        %v3547 = vpow.pop %v3546
        %v3548 = vmul.f32 %v3413, 1.442695
        %v3549 = vpow.pop %v3548
        %v3550 = vmul.f32 %v3414, 1.442695
        %v3551 = vpow.pop %v3550
        %v3552 = vmul.f32 %v3415, 1.442695
        %v3553 = vpow.pop %v3552
        %v3554 = vmul.f32 %v3416, 1.442695
        %v3555 = vpow.pop %v3554
        %v3556 = vmul.f32 %v3417, 1.442695
        %v3557 = vpow.pop %v3556
        %v3558 = vmul.f32 %v3418, 1.442695
        %v3559 = vpow.pop %v3558
        %v3560 = vmul.f32 %v3419, 1.442695
        %v3561 = vpow.pop %v3560
        %v3562 = vmul.f32 %v3420, 1.442695
        %v3563 = vpow.pop %v3562
        %v3564 = vmul.f32 %v3421, 1.442695
        %v3565 = vpow.pop %v3564
        %v3566 = vmul.f32 %v3422, 1.442695
        %v3567 = vpow.pop %v3566
        %v3568 = vmul.f32 %v3423, 1.442695
        %v3569 = vpow.pop %v3568
        %v3570 = vmul.f32 %v3424, 1.442695
        %v3571 = vpow.pop %v3570
        %v3572 = vmul.f32 %v3425, 1.442695
        %v3573 = vpow.pop %v3572
        %v3574 = vmul.f32 %v3426, 1.442695
        %v3575 = vpow.pop %v3574
        %v3576 = vmul.f32 %v3427, 1.442695
        %v3577 = vpow.pop %v3576
        %v3578 = vmul.f32 %v3428, 1.442695
        %v3579 = vpow.pop %v3578
        %v3580 = vmul.f32 %v3429, 1.442695
        %v3581 = vpow.pop %v3580
        %v3582 = vmul.f32 %v3430, 1.442695
        %v3583 = vpow.pop %v3582
        %v3584 = vmul.f32 %v3431, 1.442695
        %v3585 = vpow.pop %v3584
        %v3586 = vmul.f32 %v3432, 1.442695
        %v3587 = vpow.pop %v3586
        %v3588 = vmul.f32 %v3433, 1.442695
        %v3589 = vpow.pop %v3588
        %v3590 = vmul.f32 %v3434, 1.442695
        %v3591 = vpow.pop %v3590
        %v3592 = vmul.f32 %v3435, 1.442695
        %v3593 = vpow.pop %v3592
        %v3594 = vmul.f32 %v3436, 1.442695
        %v3595 = vpow.pop %v3594
        %v3596 = vmul.f32 %v3437, 1.442695
        %v3597 = vpow.pop %v3596
        %v3598 = vmul.f32 %v3438, 1.442695
        %v3599 = vpow.pop %v3598
        %v3600 = vmul.f32 %v3439, 1.442695
        %v3601 = vpow.pop %v3600
        %v3602 = vmul.f32 %v3440, 1.442695
        %v3603 = vpow.pop %v3602
        %v3604 = vmul.f32 %v3441, 1.442695
        %v3605 = vpow.pop %v3604
        %v3606 = vmul.f32 %v3442, 1.442695
        %v3607 = vpow.pop %v3606
        %v3608 = vmul.f32 %v3443, 1.442695
        %v3609 = vpow.pop %v3608
        %v3610 = vmul.f32 %v3444, 1.442695
        %v3611 = vpow.pop %v3610
        %v3612 = vmul.f32 %v3445, 1.442695
        %v3613 = vpow.pop %v3612
        %v3614 = vmul.f32 %v3446, 1.442695
        %v3615 = vpow.pop %v3614
        %v3616 = vmul.f32 %v3447, 1.442695
        %v3617 = vpow.pop %v3616
        %v3618 = vmul.f32 %v3448, 1.442695
        %v3619 = vpow.pop %v3618
        %v3620 = vmul.f32 %v3449, 1.442695
        %v3621 = vpow.pop %v3620
        %v3622 = vmul.f32 %v3450, 1.442695
        %v3623 = vpow.pop %v3622
        %v3624 = vmul.f32 %v3451, 1.442695
        %v3625 = vpow.pop %v3624
        %v3626 = vmul.f32 %v3452, 1.442695
        %v3627 = vpow.pop %v3626
        %v3628 = vmul.f32 %v3453, 1.442695
        %v3629 = vpow.pop %v3628
        %v3630 = vmul.f32 %v3454, 1.442695
        %v3631 = vpow.pop %v3630
        %v3632 = vmul.f32 %v3455, 1.442695
        %v3633 = vpow.pop %v3632
        %v3634 = vmul.f32 %v3456, 1.442695
        %v3635 = vpow.pop %v3634
        %v3636 = vmul.f32 %v3457, 1.442695
        %v3637 = vpow.pop %v3636
        %v3638 = vmul.f32 %v3458, 1.442695
        %v3639 = vpow.pop %v3638
        %v3640 = vmul.f32 %v3459, 1.442695
        %v3641 = vpow.pop %v3640
        %v3642 = vmul.f32 %v3460, 1.442695
        %v3643 = vpow.pop %v3642
        %v3644 = vmul.f32 %v3461, 1.442695
        %v3645 = vpow.pop %v3644
        %v3646 = vmul.f32 %v3462, 1.442695
        %v3647 = vpow.pop %v3646
        %v3648 = vmul.f32 %v3463, 1.442695
        %v3649 = vpow.pop %v3648
        %v3650 = vmul.f32 %v3464, 1.442695
        %v3651 = vpow.pop %v3650
        %v3652 = vmul.f32 %v3465, 1.442695
        %v3653 = vpow.pop %v3652
        %v3654 = vmul.f32 %v3466, 1.442695
        %v3655 = vpow.pop %v3654
        %v3656 = vmul.f32 %v3467, 1.442695
        %v3657 = vpow.pop %v3656
        %v3658 = vmul.f32 %v3468, 1.442695
        %v3659 = vpow.pop %v3658
        %v3660 = vmul.f32 %v3469, 1.442695
        %v3661 = vpow.pop %v3660
        %v3662 = vmul.f32 %v3470, 1.442695
        %v3663 = vpow.pop %v3662
        %v3664 = vmul.f32 %v3471, 1.442695
        %v3665 = vpow.pop %v3664
        %v3666 = vmul.f32 %v3472, 1.442695
        %v3667 = vpow.pop %v3666
        %v3668 = vmul.f32 %v3473, 1.442695
        %v3669 = vpow.pop %v3668
        %v3670 = vmul.f32 %v3474, 1.442695
        %v3671 = vpow.pop %v3670
        %v3672 = vmul.f32 %v3475, 1.442695
        %v3673 = vpow.pop %v3672
        %v3674 = vmul.f32 %v3476, 1.442695
        %v3675 = vpow.pop %v3674
        %v3676 = vmul.f32 %v3477, 1.442695
        %v3677 = vpow.pop %v3676
        %v3678 = vmul.f32 %v3478, 1.442695
        %v3679 = vpow.pop %v3678
        %v3680 = vmul.f32 %v3479, 1.442695
        %v3681 = vpow.pop %v3680
        %v3682 = vmul.f32 %v3480, 1.442695
        %v3683 = vpow.pop %v3682
        %v3684 = vmul.f32 %v3481, 1.442695
        %v3685 = vpow.pop %v3684
        %v3686 = vmul.f32 %v3482, 1.442695
        %v3687 = vpow.pop %v3686
        %v3688 = vmul.f32 %v3483, 1.442695
        %v3689 = vpow.pop %v3688
        %v3690 = vmul.f32 %v3484, 1.442695
        %v3691 = vpow.pop %v3690
        %v3692 = vmul.f32 %v3485, 1.442695
        %v3693 = vpow.pop %v3692
        %v3694 = vmul.f32 %v3486, 1.442695
        %v3695 = vpow.pop %v3694
        %v3696 = vmul.f32 %v3487, 1.442695
        %v3697 = vpow.pop %v3696
        %v3698 = vmul.f32 %v3488, 1.442695
        %v3699 = vpow.pop %v3698
        %v3700 = vmul.f32 %v3489, 1.442695
        %v3701 = vpow.pop %v3700
        %v3702 = vmul.f32 %v3490, 1.442695
        %v3703 = vpow.pop %v3702
        %v3704 = vmul.f32 %v3491, 1.442695
        %v3705 = vpow.pop %v3704
        %v3706 = vmul.f32 %v3492, 1.442695
        %v3707 = vpow.pop %v3706
        %v3708 = vmul.f32 %v3493, 1.442695
        %v3709 = vpow.pop %v3708
        %v3710 = vmul.f32 %v3494, 1.442695
        %v3711 = vpow.pop %v3710
        %v3712 = vmul.f32 %v3495, 1.442695
        %v3713 = vpow.pop %v3712
        %v3714 = vmul.f32 %v3496, 1.442695
        %v3715 = vpow.pop %v3714
        %v3716 = vmul.f32 %v3497, 1.442695
        %v3717 = vpow.pop %v3716
        %v3718 = vmul.f32 %v3498, 1.442695
        %v3719 = vpow.pop %v3718
        %v3720 = vmul.f32 %v3499, 1.442695
        %v3721 = vpow.pop %v3720
        %v3722 = vmul.f32 %v3500, 1.442695
        %v3723 = vpow.pop %v3722
        %v3724 = vmul.f32 %v3501, 1.442695
        %v3725 = vpow.pop %v3724
        %v3726 = vmul.f32 %v3502, 1.442695
        %v3727 = vpow.pop %v3726
        %v3728 = vmul.f32 %v3503, 1.442695
        %v3729 = vpow.pop %v3728
        %v3730 = vmul.f32 %v3504, 1.442695
        %v3731 = vpow.pop %v3730
        %v3732 = vmul.f32 %v3505, 1.442695
        %v3733 = vpow.pop %v3732
        %v3734 = vmul.f32 %v3506, 1.442695
        %v3735 = vpow.pop %v3734
        %v3736 = vmul.f32 %v3507, 1.442695
        %v3737 = vpow.pop %v3736
        %v3738 = vmul.f32 %v3508, 1.442695
        %v3739 = vpow.pop %v3738
        %v3740 = vmul.f32 %v3509, 1.442695
        %v3741 = vpow.pop %v3740
        %v3742 = vmul.f32 %v3510, 1.442695
        %v3743 = vpow.pop %v3742
        %v3744 = vmul.f32 %v3511, 1.442695
        %v3745 = vpow.pop %v3744
        %v3746 = vmul.f32 %v3512, 1.442695
        %v3747 = vpow.pop %v3746
        %v3748 = vmul.f32 %v3513, 1.442695
        %v3749 = vpow.pop %v3748
        %v3750 = vmul.f32 %v3514, 1.442695
        %v3751 = vpow.pop %v3750
        %v3752 = vmul.f32 %v3515, 1.442695
        %v3753 = vpow.pop %v3752
        %v3754 = vmul.f32 %v3516, 1.442695
        %v3755 = vpow.pop %v3754
        %v3756 = vmul.f32 %v3517, 1.442695
        %v3757 = vpow.pop %v3756
        %v3758 = vmul.f32 %v3518, 1.442695
        %v3759 = vpow.pop %v3758
        %v3760 = vmul.f32 %v3519, 1.442695
        %v3761 = vpow.pop %v3760
        %v3762 = vmul.f32 %v3520, 1.442695
        %v3763 = vpow.pop %v3762
        %v3764 = vmul.f32 %v3521, 1.442695
        %v3765 = vpow.pop %v3764
        %v3766 = vmul.f32 %v3522, 1.442695
        %v3767 = vpow.pop %v3766
        %v3768 = vmul.f32 %v3523, 1.442695
        %v3769 = vpow.pop %v3768
        %v3770 = vmul.f32 %v3524, 1.442695
        %v3771 = vpow.pop %v3770
        %v3772 = vmul.f32 %v3525, 1.442695
        %v3773 = vpow.pop %v3772
        %v3774 = vmul.f32 %v3526, 1.442695
        %v3775 = vpow.pop %v3774
        %v3776 = vmul.f32 %v3527, 1.442695
        %v3777 = vpow.pop %v3776
        %v3778 = vmul.f32 %v3528, 1.442695
        %v3779 = vpow.pop %v3778
        %v3780 = vmul.f32 %v3529, 1.442695
        %v3781 = vpow.pop %v3780
        %v3782 = vmul.f32 %v3530, 1.442695
        %v3783 = vpow.pop %v3782
        %v3784 = vmul.f32 %v3531, 1.442695
        %v3785 = vpow.pop %v3784
        %v3786 = vmul.f32 %v3532, 1.442695
        %v3787 = vpow.pop %v3786
        %v3788 = vmul.f32 %v3533, 1.442695
        %v3789 = vpow.pop %v3788
        %v3790 = vmul.f32 %v3150, %v3535
        %v3791 = vmul.f32 %v3151, %v3537
        %v3792 = vmul.f32 %v3152, %v3539
        %v3793 = vmul.f32 %v3153, %v3541
        %v3794 = vmul.f32 %v3154, %v3543
        %v3795 = vmul.f32 %v3155, %v3545
        %v3796 = vmul.f32 %v3156, %v3547
        %v3797 = vmul.f32 %v3157, %v3549
        %v3798 = vmul.f32 %v3158, %v3551
        %v3799 = vmul.f32 %v3159, %v3553
        %v3800 = vmul.f32 %v3160, %v3555
        %v3801 = vmul.f32 %v3161, %v3557
        %v3802 = vmul.f32 %v3162, %v3559
        %v3803 = vmul.f32 %v3163, %v3561
        %v3804 = vmul.f32 %v3164, %v3563
        %v3805 = vmul.f32 %v3165, %v3565
        %v3806 = vmul.f32 %v3166, %v3567
        %v3807 = vmul.f32 %v3167, %v3569
        %v3808 = vmul.f32 %v3168, %v3571
        %v3809 = vmul.f32 %v3169, %v3573
        %v3810 = vmul.f32 %v3170, %v3575
        %v3811 = vmul.f32 %v3171, %v3577
        %v3812 = vmul.f32 %v3172, %v3579
        %v3813 = vmul.f32 %v3173, %v3581
        %v3814 = vmul.f32 %v3174, %v3583
        %v3815 = vmul.f32 %v3175, %v3585
        %v3816 = vmul.f32 %v3176, %v3587
        %v3817 = vmul.f32 %v3177, %v3589
        %v3818 = vmul.f32 %v3178, %v3591
        %v3819 = vmul.f32 %v3179, %v3593
        %v3820 = vmul.f32 %v3180, %v3595
        %v3821 = vmul.f32 %v3181, %v3597
        %v3822 = vmul.f32 %v3182, %v3599
        %v3823 = vmul.f32 %v3183, %v3601
        %v3824 = vmul.f32 %v3184, %v3603
        %v3825 = vmul.f32 %v3185, %v3605
        %v3826 = vmul.f32 %v3186, %v3607
        %v3827 = vmul.f32 %v3187, %v3609
        %v3828 = vmul.f32 %v3188, %v3611
        %v3829 = vmul.f32 %v3189, %v3613
        %v3830 = vmul.f32 %v3190, %v3615
        %v3831 = vmul.f32 %v3191, %v3617
        %v3832 = vmul.f32 %v3192, %v3619
        %v3833 = vmul.f32 %v3193, %v3621
        %v3834 = vmul.f32 %v3194, %v3623
        %v3835 = vmul.f32 %v3195, %v3625
        %v3836 = vmul.f32 %v3196, %v3627
        %v3837 = vmul.f32 %v3197, %v3629
        %v3838 = vmul.f32 %v3198, %v3631
        %v3839 = vmul.f32 %v3199, %v3633
        %v3840 = vmul.f32 %v3200, %v3635
        %v3841 = vmul.f32 %v3201, %v3637
        %v3842 = vmul.f32 %v3202, %v3639
        %v3843 = vmul.f32 %v3203, %v3641
        %v3844 = vmul.f32 %v3204, %v3643
        %v3845 = vmul.f32 %v3205, %v3645
        %v3846 = vmul.f32 %v3206, %v3647
        %v3847 = vmul.f32 %v3207, %v3649
        %v3848 = vmul.f32 %v3208, %v3651
        %v3849 = vmul.f32 %v3209, %v3653
        %v3850 = vmul.f32 %v3210, %v3655
        %v3851 = vmul.f32 %v3211, %v3657
        %v3852 = vmul.f32 %v3212, %v3659
        %v3853 = vmul.f32 %v3213, %v3661
        %v3854 = vmul.f32 %v3214, %v3663
        %v3855 = vmul.f32 %v3215, %v3665
        %v3856 = vmul.f32 %v3216, %v3667
        %v3857 = vmul.f32 %v3217, %v3669
        %v3858 = vmul.f32 %v3218, %v3671
        %v3859 = vmul.f32 %v3219, %v3673
        %v3860 = vmul.f32 %v3220, %v3675
        %v3861 = vmul.f32 %v3221, %v3677
        %v3862 = vmul.f32 %v3222, %v3679
        %v3863 = vmul.f32 %v3223, %v3681
        %v3864 = vmul.f32 %v3224, %v3683
        %v3865 = vmul.f32 %v3225, %v3685
        %v3866 = vmul.f32 %v3226, %v3687
        %v3867 = vmul.f32 %v3227, %v3689
        %v3868 = vmul.f32 %v3228, %v3691
        %v3869 = vmul.f32 %v3229, %v3693
        %v3870 = vmul.f32 %v3230, %v3695
        %v3871 = vmul.f32 %v3231, %v3697
        %v3872 = vmul.f32 %v3232, %v3699
        %v3873 = vmul.f32 %v3233, %v3701
        %v3874 = vmul.f32 %v3234, %v3703
        %v3875 = vmul.f32 %v3235, %v3705
        %v3876 = vmul.f32 %v3236, %v3707
        %v3877 = vmul.f32 %v3237, %v3709
        %v3878 = vmul.f32 %v3238, %v3711
        %v3879 = vmul.f32 %v3239, %v3713
        %v3880 = vmul.f32 %v3240, %v3715
        %v3881 = vmul.f32 %v3241, %v3717
        %v3882 = vmul.f32 %v3242, %v3719
        %v3883 = vmul.f32 %v3243, %v3721
        %v3884 = vmul.f32 %v3244, %v3723
        %v3885 = vmul.f32 %v3245, %v3725
        %v3886 = vmul.f32 %v3246, %v3727
        %v3887 = vmul.f32 %v3247, %v3729
        %v3888 = vmul.f32 %v3248, %v3731
        %v3889 = vmul.f32 %v3249, %v3733
        %v3890 = vmul.f32 %v3250, %v3735
        %v3891 = vmul.f32 %v3251, %v3737
        %v3892 = vmul.f32 %v3252, %v3739
        %v3893 = vmul.f32 %v3253, %v3741
        %v3894 = vmul.f32 %v3254, %v3743
        %v3895 = vmul.f32 %v3255, %v3745
        %v3896 = vmul.f32 %v3256, %v3747
        %v3897 = vmul.f32 %v3257, %v3749
        %v3898 = vmul.f32 %v3258, %v3751
        %v3899 = vmul.f32 %v3259, %v3753
        %v3900 = vmul.f32 %v3260, %v3755
        %v3901 = vmul.f32 %v3261, %v3757
        %v3902 = vmul.f32 %v3262, %v3759
        %v3903 = vmul.f32 %v3263, %v3761
        %v3904 = vmul.f32 %v3264, %v3763
        %v3905 = vmul.f32 %v3265, %v3765
        %v3906 = vmul.f32 %v3266, %v3767
        %v3907 = vmul.f32 %v3267, %v3769
        %v3908 = vmul.f32 %v3268, %v3771
        %v3909 = vmul.f32 %v3269, %v3773
        %v3910 = vmul.f32 %v3270, %v3775
        %v3911 = vmul.f32 %v3271, %v3777
        %v3912 = vmul.f32 %v3272, %v3779
        %v3913 = vmul.f32 %v3273, %v3781
        %v3914 = vmul.f32 %v3274, %v3783
        %v3915 = vmul.f32 %v3275, %v3785
        %v3916 = vmul.f32 %v3276, %v3787
        %v3917 = vmul.f32 %v3277, %v3789
        %v3918 = vsub.f32 1.0, %v3790
        %v3919 = vsub.f32 1.0, %v3791
        %v3920 = vsub.f32 1.0, %v3792
        %v3921 = vsub.f32 1.0, %v3793
        %v3922 = vsub.f32 1.0, %v3794
        %v3923 = vsub.f32 1.0, %v3795
        %v3924 = vsub.f32 1.0, %v3796
        %v3925 = vsub.f32 1.0, %v3797
        %v3926 = vsub.f32 1.0, %v3798
        %v3927 = vsub.f32 1.0, %v3799
        %v3928 = vsub.f32 1.0, %v3800
        %v3929 = vsub.f32 1.0, %v3801
        %v3930 = vsub.f32 1.0, %v3802
        %v3931 = vsub.f32 1.0, %v3803
        %v3932 = vsub.f32 1.0, %v3804
        %v3933 = vsub.f32 1.0, %v3805
        %v3934 = vsub.f32 1.0, %v3806
        %v3935 = vsub.f32 1.0, %v3807
        %v3936 = vsub.f32 1.0, %v3808
        %v3937 = vsub.f32 1.0, %v3809
        %v3938 = vsub.f32 1.0, %v3810
        %v3939 = vsub.f32 1.0, %v3811
        %v3940 = vsub.f32 1.0, %v3812
        %v3941 = vsub.f32 1.0, %v3813
        %v3942 = vsub.f32 1.0, %v3814
        %v3943 = vsub.f32 1.0, %v3815
        %v3944 = vsub.f32 1.0, %v3816
        %v3945 = vsub.f32 1.0, %v3817
        %v3946 = vsub.f32 1.0, %v3818
        %v3947 = vsub.f32 1.0, %v3819
        %v3948 = vsub.f32 1.0, %v3820
        %v3949 = vsub.f32 1.0, %v3821
        %v3950 = vsub.f32 1.0, %v3822
        %v3951 = vsub.f32 1.0, %v3823
        %v3952 = vsub.f32 1.0, %v3824
        %v3953 = vsub.f32 1.0, %v3825
        %v3954 = vsub.f32 1.0, %v3826
        %v3955 = vsub.f32 1.0, %v3827
        %v3956 = vsub.f32 1.0, %v3828
        %v3957 = vsub.f32 1.0, %v3829
        %v3958 = vsub.f32 1.0, %v3830
        %v3959 = vsub.f32 1.0, %v3831
        %v3960 = vsub.f32 1.0, %v3832
        %v3961 = vsub.f32 1.0, %v3833
        %v3962 = vsub.f32 1.0, %v3834
        %v3963 = vsub.f32 1.0, %v3835
        %v3964 = vsub.f32 1.0, %v3836
        %v3965 = vsub.f32 1.0, %v3837
        %v3966 = vsub.f32 1.0, %v3838
        %v3967 = vsub.f32 1.0, %v3839
        %v3968 = vsub.f32 1.0, %v3840
        %v3969 = vsub.f32 1.0, %v3841
        %v3970 = vsub.f32 1.0, %v3842
        %v3971 = vsub.f32 1.0, %v3843
        %v3972 = vsub.f32 1.0, %v3844
        %v3973 = vsub.f32 1.0, %v3845
        %v3974 = vsub.f32 1.0, %v3846
        %v3975 = vsub.f32 1.0, %v3847
        %v3976 = vsub.f32 1.0, %v3848
        %v3977 = vsub.f32 1.0, %v3849
        %v3978 = vsub.f32 1.0, %v3850
        %v3979 = vsub.f32 1.0, %v3851
        %v3980 = vsub.f32 1.0, %v3852
        %v3981 = vsub.f32 1.0, %v3853
        %v3982 = vsub.f32 1.0, %v3854
        %v3983 = vsub.f32 1.0, %v3855
        %v3984 = vsub.f32 1.0, %v3856
        %v3985 = vsub.f32 1.0, %v3857
        %v3986 = vsub.f32 1.0, %v3858
        %v3987 = vsub.f32 1.0, %v3859
        %v3988 = vsub.f32 1.0, %v3860
        %v3989 = vsub.f32 1.0, %v3861
        %v3990 = vsub.f32 1.0, %v3862
        %v3991 = vsub.f32 1.0, %v3863
        %v3992 = vsub.f32 1.0, %v3864
        %v3993 = vsub.f32 1.0, %v3865
        %v3994 = vsub.f32 1.0, %v3866
        %v3995 = vsub.f32 1.0, %v3867
        %v3996 = vsub.f32 1.0, %v3868
        %v3997 = vsub.f32 1.0, %v3869
        %v3998 = vsub.f32 1.0, %v3870
        %v3999 = vsub.f32 1.0, %v3871
        %v4000 = vsub.f32 1.0, %v3872
        %v4001 = vsub.f32 1.0, %v3873
        %v4002 = vsub.f32 1.0, %v3874
        %v4003 = vsub.f32 1.0, %v3875
        %v4004 = vsub.f32 1.0, %v3876
        %v4005 = vsub.f32 1.0, %v3877
        %v4006 = vsub.f32 1.0, %v3878
        %v4007 = vsub.f32 1.0, %v3879
        %v4008 = vsub.f32 1.0, %v3880
        %v4009 = vsub.f32 1.0, %v3881
        %v4010 = vsub.f32 1.0, %v3882
        %v4011 = vsub.f32 1.0, %v3883
        %v4012 = vsub.f32 1.0, %v3884
        %v4013 = vsub.f32 1.0, %v3885
        %v4014 = vsub.f32 1.0, %v3886
        %v4015 = vsub.f32 1.0, %v3887
        %v4016 = vsub.f32 1.0, %v3888
        %v4017 = vsub.f32 1.0, %v3889
        %v4018 = vsub.f32 1.0, %v3890
        %v4019 = vsub.f32 1.0, %v3891
        %v4020 = vsub.f32 1.0, %v3892
        %v4021 = vsub.f32 1.0, %v3893
        %v4022 = vsub.f32 1.0, %v3894
        %v4023 = vsub.f32 1.0, %v3895
        %v4024 = vsub.f32 1.0, %v3896
        %v4025 = vsub.f32 1.0, %v3897
        %v4026 = vsub.f32 1.0, %v3898
        %v4027 = vsub.f32 1.0, %v3899
        %v4028 = vsub.f32 1.0, %v3900
        %v4029 = vsub.f32 1.0, %v3901
        %v4030 = vsub.f32 1.0, %v3902
        %v4031 = vsub.f32 1.0, %v3903
        %v4032 = vsub.f32 1.0, %v3904
        %v4033 = vsub.f32 1.0, %v3905
        %v4034 = vsub.f32 1.0, %v3906
        %v4035 = vsub.f32 1.0, %v3907
        %v4036 = vsub.f32 1.0, %v3908
        %v4037 = vsub.f32 1.0, %v3909
        %v4038 = vsub.f32 1.0, %v3910
        %v4039 = vsub.f32 1.0, %v3911
        %v4040 = vsub.f32 1.0, %v3912
        %v4041 = vsub.f32 1.0, %v3913
        %v4042 = vsub.f32 1.0, %v3914
        %v4043 = vsub.f32 1.0, %v3915
        %v4044 = vsub.f32 1.0, %v3916
        %v4045 = vsub.f32 1.0, %v3917
        %vm4046 = vcmp.ge.f32.partialorder %v1358, 0.0
        %vm4047 = vcmp.ge.f32.partialorder %v1359, 0.0
        %vm4048 = vcmp.ge.f32.partialorder %v1360, 0.0
        %vm4049 = vcmp.ge.f32.partialorder %v1361, 0.0
        %vm4050 = vcmp.ge.f32.partialorder %v1362, 0.0
        %vm4051 = vcmp.ge.f32.partialorder %v1363, 0.0
        %vm4052 = vcmp.ge.f32.partialorder %v1364, 0.0
        %vm4053 = vcmp.ge.f32.partialorder %v1365, 0.0
        %vm4054 = vcmp.ge.f32.partialorder %v1366, 0.0
        %vm4055 = vcmp.ge.f32.partialorder %v1367, 0.0
        %vm4056 = vcmp.ge.f32.partialorder %v1368, 0.0
        %vm4057 = vcmp.ge.f32.partialorder %v1369, 0.0
        %vm4058 = vcmp.ge.f32.partialorder %v1370, 0.0
        %vm4059 = vcmp.ge.f32.partialorder %v1371, 0.0
        %vm4060 = vcmp.ge.f32.partialorder %v1372, 0.0
        %vm4061 = vcmp.ge.f32.partialorder %v1373, 0.0
        %vm4062 = vcmp.ge.f32.partialorder %v1374, 0.0
        %vm4063 = vcmp.ge.f32.partialorder %v1375, 0.0
        %vm4064 = vcmp.ge.f32.partialorder %v1376, 0.0
        %vm4065 = vcmp.ge.f32.partialorder %v1377, 0.0
        %vm4066 = vcmp.ge.f32.partialorder %v1378, 0.0
        %vm4067 = vcmp.ge.f32.partialorder %v1379, 0.0
        %vm4068 = vcmp.ge.f32.partialorder %v1380, 0.0
        %vm4069 = vcmp.ge.f32.partialorder %v1381, 0.0
        %vm4070 = vcmp.ge.f32.partialorder %v1382, 0.0
        %vm4071 = vcmp.ge.f32.partialorder %v1383, 0.0
        %vm4072 = vcmp.ge.f32.partialorder %v1384, 0.0
        %vm4073 = vcmp.ge.f32.partialorder %v1385, 0.0
        %vm4074 = vcmp.ge.f32.partialorder %v1386, 0.0
        %vm4075 = vcmp.ge.f32.partialorder %v1387, 0.0
        %vm4076 = vcmp.ge.f32.partialorder %v1388, 0.0
        %vm4077 = vcmp.ge.f32.partialorder %v1389, 0.0
        %vm4078 = vcmp.ge.f32.partialorder %v1390, 0.0
        %vm4079 = vcmp.ge.f32.partialorder %v1391, 0.0
        %vm4080 = vcmp.ge.f32.partialorder %v1392, 0.0
        %vm4081 = vcmp.ge.f32.partialorder %v1393, 0.0
        %vm4082 = vcmp.ge.f32.partialorder %v1394, 0.0
        %vm4083 = vcmp.ge.f32.partialorder %v1395, 0.0
        %vm4084 = vcmp.ge.f32.partialorder %v1396, 0.0
        %vm4085 = vcmp.ge.f32.partialorder %v1397, 0.0
        %vm4086 = vcmp.ge.f32.partialorder %v1398, 0.0
        %vm4087 = vcmp.ge.f32.partialorder %v1399, 0.0
        %vm4088 = vcmp.ge.f32.partialorder %v1400, 0.0
        %vm4089 = vcmp.ge.f32.partialorder %v1401, 0.0
        %vm4090 = vcmp.ge.f32.partialorder %v1402, 0.0
        %vm4091 = vcmp.ge.f32.partialorder %v1403, 0.0
        %vm4092 = vcmp.ge.f32.partialorder %v1404, 0.0
        %vm4093 = vcmp.ge.f32.partialorder %v1405, 0.0
        %vm4094 = vcmp.ge.f32.partialorder %v1406, 0.0
        %vm4095 = vcmp.ge.f32.partialorder %v1407, 0.0
        %vm4096 = vcmp.ge.f32.partialorder %v1408, 0.0
        %vm4097 = vcmp.ge.f32.partialorder %v1409, 0.0
        %vm4098 = vcmp.ge.f32.partialorder %v1410, 0.0
        %vm4099 = vcmp.ge.f32.partialorder %v1411, 0.0
        %vm4100 = vcmp.ge.f32.partialorder %v1412, 0.0
        %vm4101 = vcmp.ge.f32.partialorder %v1413, 0.0
        %vm4102 = vcmp.ge.f32.partialorder %v1414, 0.0
        %vm4103 = vcmp.ge.f32.partialorder %v1415, 0.0
        %vm4104 = vcmp.ge.f32.partialorder %v1416, 0.0
        %vm4105 = vcmp.ge.f32.partialorder %v1417, 0.0
        %vm4106 = vcmp.ge.f32.partialorder %v1418, 0.0
        %vm4107 = vcmp.ge.f32.partialorder %v1419, 0.0
        %vm4108 = vcmp.ge.f32.partialorder %v1420, 0.0
        %vm4109 = vcmp.ge.f32.partialorder %v1421, 0.0
        %vm4110 = vcmp.ge.f32.partialorder %v1422, 0.0
        %vm4111 = vcmp.ge.f32.partialorder %v1423, 0.0
        %vm4112 = vcmp.ge.f32.partialorder %v1424, 0.0
        %vm4113 = vcmp.ge.f32.partialorder %v1425, 0.0
        %vm4114 = vcmp.ge.f32.partialorder %v1426, 0.0
        %vm4115 = vcmp.ge.f32.partialorder %v1427, 0.0
        %vm4116 = vcmp.ge.f32.partialorder %v1428, 0.0
        %vm4117 = vcmp.ge.f32.partialorder %v1429, 0.0
        %vm4118 = vcmp.ge.f32.partialorder %v1430, 0.0
        %vm4119 = vcmp.ge.f32.partialorder %v1431, 0.0
        %vm4120 = vcmp.ge.f32.partialorder %v1432, 0.0
        %vm4121 = vcmp.ge.f32.partialorder %v1433, 0.0
        %vm4122 = vcmp.ge.f32.partialorder %v1434, 0.0
        %vm4123 = vcmp.ge.f32.partialorder %v1435, 0.0
        %vm4124 = vcmp.ge.f32.partialorder %v1436, 0.0
        %vm4125 = vcmp.ge.f32.partialorder %v1437, 0.0
        %vm4126 = vcmp.ge.f32.partialorder %v1438, 0.0
        %vm4127 = vcmp.ge.f32.partialorder %v1439, 0.0
        %vm4128 = vcmp.ge.f32.partialorder %v1440, 0.0
        %vm4129 = vcmp.ge.f32.partialorder %v1441, 0.0
        %vm4130 = vcmp.ge.f32.partialorder %v1442, 0.0
        %vm4131 = vcmp.ge.f32.partialorder %v1443, 0.0
        %vm4132 = vcmp.ge.f32.partialorder %v1444, 0.0
        %vm4133 = vcmp.ge.f32.partialorder %v1445, 0.0
        %vm4134 = vcmp.ge.f32.partialorder %v1446, 0.0
        %vm4135 = vcmp.ge.f32.partialorder %v1447, 0.0
        %vm4136 = vcmp.ge.f32.partialorder %v1448, 0.0
        %vm4137 = vcmp.ge.f32.partialorder %v1449, 0.0
        %vm4138 = vcmp.ge.f32.partialorder %v1450, 0.0
        %vm4139 = vcmp.ge.f32.partialorder %v1451, 0.0
        %vm4140 = vcmp.ge.f32.partialorder %v1452, 0.0
        %vm4141 = vcmp.ge.f32.partialorder %v1453, 0.0
        %vm4142 = vcmp.ge.f32.partialorder %v1454, 0.0
        %vm4143 = vcmp.ge.f32.partialorder %v1455, 0.0
        %vm4144 = vcmp.ge.f32.partialorder %v1456, 0.0
        %vm4145 = vcmp.ge.f32.partialorder %v1457, 0.0
        %vm4146 = vcmp.ge.f32.partialorder %v1458, 0.0
        %vm4147 = vcmp.ge.f32.partialorder %v1459, 0.0
        %vm4148 = vcmp.ge.f32.partialorder %v1460, 0.0
        %vm4149 = vcmp.ge.f32.partialorder %v1461, 0.0
        %vm4150 = vcmp.ge.f32.partialorder %v1462, 0.0
        %vm4151 = vcmp.ge.f32.partialorder %v1463, 0.0
        %vm4152 = vcmp.ge.f32.partialorder %v1464, 0.0
        %vm4153 = vcmp.ge.f32.partialorder %v1465, 0.0
        %vm4154 = vcmp.ge.f32.partialorder %v1466, 0.0
        %vm4155 = vcmp.ge.f32.partialorder %v1467, 0.0
        %vm4156 = vcmp.ge.f32.partialorder %v1468, 0.0
        %vm4157 = vcmp.ge.f32.partialorder %v1469, 0.0
        %vm4158 = vcmp.ge.f32.partialorder %v1470, 0.0
        %vm4159 = vcmp.ge.f32.partialorder %v1471, 0.0
        %vm4160 = vcmp.ge.f32.partialorder %v1472, 0.0
        %vm4161 = vcmp.ge.f32.partialorder %v1473, 0.0
        %vm4162 = vcmp.ge.f32.partialorder %v1474, 0.0
        %vm4163 = vcmp.ge.f32.partialorder %v1475, 0.0
        %vm4164 = vcmp.ge.f32.partialorder %v1476, 0.0
        %vm4165 = vcmp.ge.f32.partialorder %v1477, 0.0
        %vm4166 = vcmp.ge.f32.partialorder %v1478, 0.0
        %vm4167 = vcmp.ge.f32.partialorder %v1479, 0.0
        %vm4168 = vcmp.ge.f32.partialorder %v1480, 0.0
        %vm4169 = vcmp.ge.f32.partialorder %v1481, 0.0
        %vm4170 = vcmp.ge.f32.partialorder %v1482, 0.0
        %vm4171 = vcmp.ge.f32.partialorder %v1483, 0.0
        %vm4172 = vcmp.ge.f32.partialorder %v1484, 0.0
        %vm4173 = vcmp.ge.f32.partialorder %v1485, 0.0
        %v4174 = vsub.f32 0.0, %v3918
        %v4175 = vsub.f32 0.0, %v3919
        %v4176 = vsub.f32 0.0, %v3920
        %v4177 = vsub.f32 0.0, %v3921
        %v4178 = vsub.f32 0.0, %v3922
        %v4179 = vsub.f32 0.0, %v3923
        %v4180 = vsub.f32 0.0, %v3924
        %v4181 = vsub.f32 0.0, %v3925
        %v4182 = vsub.f32 0.0, %v3926
        %v4183 = vsub.f32 0.0, %v3927
        %v4184 = vsub.f32 0.0, %v3928
        %v4185 = vsub.f32 0.0, %v3929
        %v4186 = vsub.f32 0.0, %v3930
        %v4187 = vsub.f32 0.0, %v3931
        %v4188 = vsub.f32 0.0, %v3932
        %v4189 = vsub.f32 0.0, %v3933
        %v4190 = vsub.f32 0.0, %v3934
        %v4191 = vsub.f32 0.0, %v3935
        %v4192 = vsub.f32 0.0, %v3936
        %v4193 = vsub.f32 0.0, %v3937
        %v4194 = vsub.f32 0.0, %v3938
        %v4195 = vsub.f32 0.0, %v3939
        %v4196 = vsub.f32 0.0, %v3940
        %v4197 = vsub.f32 0.0, %v3941
        %v4198 = vsub.f32 0.0, %v3942
        %v4199 = vsub.f32 0.0, %v3943
        %v4200 = vsub.f32 0.0, %v3944
        %v4201 = vsub.f32 0.0, %v3945
        %v4202 = vsub.f32 0.0, %v3946
        %v4203 = vsub.f32 0.0, %v3947
        %v4204 = vsub.f32 0.0, %v3948
        %v4205 = vsub.f32 0.0, %v3949
        %v4206 = vsub.f32 0.0, %v3950
        %v4207 = vsub.f32 0.0, %v3951
        %v4208 = vsub.f32 0.0, %v3952
        %v4209 = vsub.f32 0.0, %v3953
        %v4210 = vsub.f32 0.0, %v3954
        %v4211 = vsub.f32 0.0, %v3955
        %v4212 = vsub.f32 0.0, %v3956
        %v4213 = vsub.f32 0.0, %v3957
        %v4214 = vsub.f32 0.0, %v3958
        %v4215 = vsub.f32 0.0, %v3959
        %v4216 = vsub.f32 0.0, %v3960
        %v4217 = vsub.f32 0.0, %v3961
        %v4218 = vsub.f32 0.0, %v3962
        %v4219 = vsub.f32 0.0, %v3963
        %v4220 = vsub.f32 0.0, %v3964
        %v4221 = vsub.f32 0.0, %v3965
        %v4222 = vsub.f32 0.0, %v3966
        %v4223 = vsub.f32 0.0, %v3967
        %v4224 = vsub.f32 0.0, %v3968
        %v4225 = vsub.f32 0.0, %v3969
        %v4226 = vsub.f32 0.0, %v3970
        %v4227 = vsub.f32 0.0, %v3971
        %v4228 = vsub.f32 0.0, %v3972
        %v4229 = vsub.f32 0.0, %v3973
        %v4230 = vsub.f32 0.0, %v3974
        %v4231 = vsub.f32 0.0, %v3975
        %v4232 = vsub.f32 0.0, %v3976
        %v4233 = vsub.f32 0.0, %v3977
        %v4234 = vsub.f32 0.0, %v3978
        %v4235 = vsub.f32 0.0, %v3979
        %v4236 = vsub.f32 0.0, %v3980
        %v4237 = vsub.f32 0.0, %v3981
        %v4238 = vsub.f32 0.0, %v3982
        %v4239 = vsub.f32 0.0, %v3983
        %v4240 = vsub.f32 0.0, %v3984
        %v4241 = vsub.f32 0.0, %v3985
        %v4242 = vsub.f32 0.0, %v3986
        %v4243 = vsub.f32 0.0, %v3987
        %v4244 = vsub.f32 0.0, %v3988
        %v4245 = vsub.f32 0.0, %v3989
        %v4246 = vsub.f32 0.0, %v3990
        %v4247 = vsub.f32 0.0, %v3991
        %v4248 = vsub.f32 0.0, %v3992
        %v4249 = vsub.f32 0.0, %v3993
        %v4250 = vsub.f32 0.0, %v3994
        %v4251 = vsub.f32 0.0, %v3995
        %v4252 = vsub.f32 0.0, %v3996
        %v4253 = vsub.f32 0.0, %v3997
        %v4254 = vsub.f32 0.0, %v3998
        %v4255 = vsub.f32 0.0, %v3999
        %v4256 = vsub.f32 0.0, %v4000
        %v4257 = vsub.f32 0.0, %v4001
        %v4258 = vsub.f32 0.0, %v4002
        %v4259 = vsub.f32 0.0, %v4003
        %v4260 = vsub.f32 0.0, %v4004
        %v4261 = vsub.f32 0.0, %v4005
        %v4262 = vsub.f32 0.0, %v4006
        %v4263 = vsub.f32 0.0, %v4007
        %v4264 = vsub.f32 0.0, %v4008
        %v4265 = vsub.f32 0.0, %v4009
        %v4266 = vsub.f32 0.0, %v4010
        %v4267 = vsub.f32 0.0, %v4011
        %v4268 = vsub.f32 0.0, %v4012
        %v4269 = vsub.f32 0.0, %v4013
        %v4270 = vsub.f32 0.0, %v4014
        %v4271 = vsub.f32 0.0, %v4015
        %v4272 = vsub.f32 0.0, %v4016
        %v4273 = vsub.f32 0.0, %v4017
        %v4274 = vsub.f32 0.0, %v4018
        %v4275 = vsub.f32 0.0, %v4019
        %v4276 = vsub.f32 0.0, %v4020
        %v4277 = vsub.f32 0.0, %v4021
        %v4278 = vsub.f32 0.0, %v4022
        %v4279 = vsub.f32 0.0, %v4023
        %v4280 = vsub.f32 0.0, %v4024
        %v4281 = vsub.f32 0.0, %v4025
        %v4282 = vsub.f32 0.0, %v4026
        %v4283 = vsub.f32 0.0, %v4027
        %v4284 = vsub.f32 0.0, %v4028
        %v4285 = vsub.f32 0.0, %v4029
        %v4286 = vsub.f32 0.0, %v4030
        %v4287 = vsub.f32 0.0, %v4031
        %v4288 = vsub.f32 0.0, %v4032
        %v4289 = vsub.f32 0.0, %v4033
        %v4290 = vsub.f32 0.0, %v4034
        %v4291 = vsub.f32 0.0, %v4035
        %v4292 = vsub.f32 0.0, %v4036
        %v4293 = vsub.f32 0.0, %v4037
        %v4294 = vsub.f32 0.0, %v4038
        %v4295 = vsub.f32 0.0, %v4039
        %v4296 = vsub.f32 0.0, %v4040
        %v4297 = vsub.f32 0.0, %v4041
        %v4298 = vsub.f32 0.0, %v4042
        %v4299 = vsub.f32 0.0, %v4043
        %v4300 = vsub.f32 0.0, %v4044
        %v4301 = vsub.f32 0.0, %v4045
        %v4302 = vsel %vm4046, %v3918, %v4174
        %v4303 = vsel %vm4047, %v3919, %v4175
        %v4304 = vsel %vm4048, %v3920, %v4176
        %v4305 = vsel %vm4049, %v3921, %v4177
        %v4306 = vsel %vm4050, %v3922, %v4178
        %v4307 = vsel %vm4051, %v3923, %v4179
        %v4308 = vsel %vm4052, %v3924, %v4180
        %v4309 = vsel %vm4053, %v3925, %v4181
        %v4310 = vsel %vm4054, %v3926, %v4182
        %v4311 = vsel %vm4055, %v3927, %v4183
        %v4312 = vsel %vm4056, %v3928, %v4184
        %v4313 = vsel %vm4057, %v3929, %v4185
        %v4314 = vsel %vm4058, %v3930, %v4186
        %v4315 = vsel %vm4059, %v3931, %v4187
        %v4316 = vsel %vm4060, %v3932, %v4188
        %v4317 = vsel %vm4061, %v3933, %v4189
        %v4318 = vsel %vm4062, %v3934, %v4190
        %v4319 = vsel %vm4063, %v3935, %v4191
        %v4320 = vsel %vm4064, %v3936, %v4192
        %v4321 = vsel %vm4065, %v3937, %v4193
        %v4322 = vsel %vm4066, %v3938, %v4194
        %v4323 = vsel %vm4067, %v3939, %v4195
        %v4324 = vsel %vm4068, %v3940, %v4196
        %v4325 = vsel %vm4069, %v3941, %v4197
        %v4326 = vsel %vm4070, %v3942, %v4198
        %v4327 = vsel %vm4071, %v3943, %v4199
        %v4328 = vsel %vm4072, %v3944, %v4200
        %v4329 = vsel %vm4073, %v3945, %v4201
        %v4330 = vsel %vm4074, %v3946, %v4202
        %v4331 = vsel %vm4075, %v3947, %v4203
        %v4332 = vsel %vm4076, %v3948, %v4204
        %v4333 = vsel %vm4077, %v3949, %v4205
        %v4334 = vsel %vm4078, %v3950, %v4206
        %v4335 = vsel %vm4079, %v3951, %v4207
        %v4336 = vsel %vm4080, %v3952, %v4208
        %v4337 = vsel %vm4081, %v3953, %v4209
        %v4338 = vsel %vm4082, %v3954, %v4210
        %v4339 = vsel %vm4083, %v3955, %v4211
        %v4340 = vsel %vm4084, %v3956, %v4212
        %v4341 = vsel %vm4085, %v3957, %v4213
        %v4342 = vsel %vm4086, %v3958, %v4214
        %v4343 = vsel %vm4087, %v3959, %v4215
        %v4344 = vsel %vm4088, %v3960, %v4216
        %v4345 = vsel %vm4089, %v3961, %v4217
        %v4346 = vsel %vm4090, %v3962, %v4218
        %v4347 = vsel %vm4091, %v3963, %v4219
        %v4348 = vsel %vm4092, %v3964, %v4220
        %v4349 = vsel %vm4093, %v3965, %v4221
        %v4350 = vsel %vm4094, %v3966, %v4222
        %v4351 = vsel %vm4095, %v3967, %v4223
        %v4352 = vsel %vm4096, %v3968, %v4224
        %v4353 = vsel %vm4097, %v3969, %v4225
        %v4354 = vsel %vm4098, %v3970, %v4226
        %v4355 = vsel %vm4099, %v3971, %v4227
        %v4356 = vsel %vm4100, %v3972, %v4228
        %v4357 = vsel %vm4101, %v3973, %v4229
        %v4358 = vsel %vm4102, %v3974, %v4230
        %v4359 = vsel %vm4103, %v3975, %v4231
        %v4360 = vsel %vm4104, %v3976, %v4232
        %v4361 = vsel %vm4105, %v3977, %v4233
        %v4362 = vsel %vm4106, %v3978, %v4234
        %v4363 = vsel %vm4107, %v3979, %v4235
        %v4364 = vsel %vm4108, %v3980, %v4236
        %v4365 = vsel %vm4109, %v3981, %v4237
        %v4366 = vsel %vm4110, %v3982, %v4238
        %v4367 = vsel %vm4111, %v3983, %v4239
        %v4368 = vsel %vm4112, %v3984, %v4240
        %v4369 = vsel %vm4113, %v3985, %v4241
        %v4370 = vsel %vm4114, %v3986, %v4242
        %v4371 = vsel %vm4115, %v3987, %v4243
        %v4372 = vsel %vm4116, %v3988, %v4244
        %v4373 = vsel %vm4117, %v3989, %v4245
        %v4374 = vsel %vm4118, %v3990, %v4246
        %v4375 = vsel %vm4119, %v3991, %v4247
        %v4376 = vsel %vm4120, %v3992, %v4248
        %v4377 = vsel %vm4121, %v3993, %v4249
        %v4378 = vsel %vm4122, %v3994, %v4250
        %v4379 = vsel %vm4123, %v3995, %v4251
        %v4380 = vsel %vm4124, %v3996, %v4252
        %v4381 = vsel %vm4125, %v3997, %v4253
        %v4382 = vsel %vm4126, %v3998, %v4254
        %v4383 = vsel %vm4127, %v3999, %v4255
        %v4384 = vsel %vm4128, %v4000, %v4256
        %v4385 = vsel %vm4129, %v4001, %v4257
        %v4386 = vsel %vm4130, %v4002, %v4258
        %v4387 = vsel %vm4131, %v4003, %v4259
        %v4388 = vsel %vm4132, %v4004, %v4260
        %v4389 = vsel %vm4133, %v4005, %v4261
        %v4390 = vsel %vm4134, %v4006, %v4262
        %v4391 = vsel %vm4135, %v4007, %v4263
        %v4392 = vsel %vm4136, %v4008, %v4264
        %v4393 = vsel %vm4137, %v4009, %v4265
        %v4394 = vsel %vm4138, %v4010, %v4266
        %v4395 = vsel %vm4139, %v4011, %v4267
        %v4396 = vsel %vm4140, %v4012, %v4268
        %v4397 = vsel %vm4141, %v4013, %v4269
        %v4398 = vsel %vm4142, %v4014, %v4270
        %v4399 = vsel %vm4143, %v4015, %v4271
        %v4400 = vsel %vm4144, %v4016, %v4272
        %v4401 = vsel %vm4145, %v4017, %v4273
        %v4402 = vsel %vm4146, %v4018, %v4274
        %v4403 = vsel %vm4147, %v4019, %v4275
        %v4404 = vsel %vm4148, %v4020, %v4276
        %v4405 = vsel %vm4149, %v4021, %v4277
        %v4406 = vsel %vm4150, %v4022, %v4278
        %v4407 = vsel %vm4151, %v4023, %v4279
        %v4408 = vsel %vm4152, %v4024, %v4280
        %v4409 = vsel %vm4153, %v4025, %v4281
        %v4410 = vsel %vm4154, %v4026, %v4282
        %v4411 = vsel %vm4155, %v4027, %v4283
        %v4412 = vsel %vm4156, %v4028, %v4284
        %v4413 = vsel %vm4157, %v4029, %v4285
        %v4414 = vsel %vm4158, %v4030, %v4286
        %v4415 = vsel %vm4159, %v4031, %v4287
        %v4416 = vsel %vm4160, %v4032, %v4288
        %v4417 = vsel %vm4161, %v4033, %v4289
        %v4418 = vsel %vm4162, %v4034, %v4290
        %v4419 = vsel %vm4163, %v4035, %v4291
        %v4420 = vsel %vm4164, %v4036, %v4292
        %v4421 = vsel %vm4165, %v4037, %v4293
        %v4422 = vsel %vm4166, %v4038, %v4294
        %v4423 = vsel %vm4167, %v4039, %v4295
        %v4424 = vsel %vm4168, %v4040, %v4296
        %v4425 = vsel %vm4169, %v4041, %v4297
        %v4426 = vsel %vm4170, %v4042, %v4298
        %v4427 = vsel %vm4171, %v4043, %v4299
        %v4428 = vsel %vm4172, %v4044, %v4300
        %v4429 = vsel %vm4173, %v4045, %v4301
        %v4430 = vadd.f32 %v4302, 1.0
        %v4431 = vadd.f32 %v4303, 1.0
        %v4432 = vadd.f32 %v4304, 1.0
        %v4433 = vadd.f32 %v4305, 1.0
        %v4434 = vadd.f32 %v4306, 1.0
        %v4435 = vadd.f32 %v4307, 1.0
        %v4436 = vadd.f32 %v4308, 1.0
        %v4437 = vadd.f32 %v4309, 1.0
        %v4438 = vadd.f32 %v4310, 1.0
        %v4439 = vadd.f32 %v4311, 1.0
        %v4440 = vadd.f32 %v4312, 1.0
        %v4441 = vadd.f32 %v4313, 1.0
        %v4442 = vadd.f32 %v4314, 1.0
        %v4443 = vadd.f32 %v4315, 1.0
        %v4444 = vadd.f32 %v4316, 1.0
        %v4445 = vadd.f32 %v4317, 1.0
        %v4446 = vadd.f32 %v4318, 1.0
        %v4447 = vadd.f32 %v4319, 1.0
        %v4448 = vadd.f32 %v4320, 1.0
        %v4449 = vadd.f32 %v4321, 1.0
        %v4450 = vadd.f32 %v4322, 1.0
        %v4451 = vadd.f32 %v4323, 1.0
        %v4452 = vadd.f32 %v4324, 1.0
        %v4453 = vadd.f32 %v4325, 1.0
        %v4454 = vadd.f32 %v4326, 1.0
        %v4455 = vadd.f32 %v4327, 1.0
        %v4456 = vadd.f32 %v4328, 1.0
        %v4457 = vadd.f32 %v4329, 1.0
        %v4458 = vadd.f32 %v4330, 1.0
        %v4459 = vadd.f32 %v4331, 1.0
        %v4460 = vadd.f32 %v4332, 1.0
        %v4461 = vadd.f32 %v4333, 1.0
        %v4462 = vadd.f32 %v4334, 1.0
        %v4463 = vadd.f32 %v4335, 1.0
        %v4464 = vadd.f32 %v4336, 1.0
        %v4465 = vadd.f32 %v4337, 1.0
        %v4466 = vadd.f32 %v4338, 1.0
        %v4467 = vadd.f32 %v4339, 1.0
        %v4468 = vadd.f32 %v4340, 1.0
        %v4469 = vadd.f32 %v4341, 1.0
        %v4470 = vadd.f32 %v4342, 1.0
        %v4471 = vadd.f32 %v4343, 1.0
        %v4472 = vadd.f32 %v4344, 1.0
        %v4473 = vadd.f32 %v4345, 1.0
        %v4474 = vadd.f32 %v4346, 1.0
        %v4475 = vadd.f32 %v4347, 1.0
        %v4476 = vadd.f32 %v4348, 1.0
        %v4477 = vadd.f32 %v4349, 1.0
        %v4478 = vadd.f32 %v4350, 1.0
        %v4479 = vadd.f32 %v4351, 1.0
        %v4480 = vadd.f32 %v4352, 1.0
        %v4481 = vadd.f32 %v4353, 1.0
        %v4482 = vadd.f32 %v4354, 1.0
        %v4483 = vadd.f32 %v4355, 1.0
        %v4484 = vadd.f32 %v4356, 1.0
        %v4485 = vadd.f32 %v4357, 1.0
        %v4486 = vadd.f32 %v4358, 1.0
        %v4487 = vadd.f32 %v4359, 1.0
        %v4488 = vadd.f32 %v4360, 1.0
        %v4489 = vadd.f32 %v4361, 1.0
        %v4490 = vadd.f32 %v4362, 1.0
        %v4491 = vadd.f32 %v4363, 1.0
        %v4492 = vadd.f32 %v4364, 1.0
        %v4493 = vadd.f32 %v4365, 1.0
        %v4494 = vadd.f32 %v4366, 1.0
        %v4495 = vadd.f32 %v4367, 1.0
        %v4496 = vadd.f32 %v4368, 1.0
        %v4497 = vadd.f32 %v4369, 1.0
        %v4498 = vadd.f32 %v4370, 1.0
        %v4499 = vadd.f32 %v4371, 1.0
        %v4500 = vadd.f32 %v4372, 1.0
        %v4501 = vadd.f32 %v4373, 1.0
        %v4502 = vadd.f32 %v4374, 1.0
        %v4503 = vadd.f32 %v4375, 1.0
        %v4504 = vadd.f32 %v4376, 1.0
        %v4505 = vadd.f32 %v4377, 1.0
        %v4506 = vadd.f32 %v4378, 1.0
        %v4507 = vadd.f32 %v4379, 1.0
        %v4508 = vadd.f32 %v4380, 1.0
        %v4509 = vadd.f32 %v4381, 1.0
        %v4510 = vadd.f32 %v4382, 1.0
        %v4511 = vadd.f32 %v4383, 1.0
        %v4512 = vadd.f32 %v4384, 1.0
        %v4513 = vadd.f32 %v4385, 1.0
        %v4514 = vadd.f32 %v4386, 1.0
        %v4515 = vadd.f32 %v4387, 1.0
        %v4516 = vadd.f32 %v4388, 1.0
        %v4517 = vadd.f32 %v4389, 1.0
        %v4518 = vadd.f32 %v4390, 1.0
        %v4519 = vadd.f32 %v4391, 1.0
        %v4520 = vadd.f32 %v4392, 1.0
        %v4521 = vadd.f32 %v4393, 1.0
        %v4522 = vadd.f32 %v4394, 1.0
        %v4523 = vadd.f32 %v4395, 1.0
        %v4524 = vadd.f32 %v4396, 1.0
        %v4525 = vadd.f32 %v4397, 1.0
        %v4526 = vadd.f32 %v4398, 1.0
        %v4527 = vadd.f32 %v4399, 1.0
        %v4528 = vadd.f32 %v4400, 1.0
        %v4529 = vadd.f32 %v4401, 1.0
        %v4530 = vadd.f32 %v4402, 1.0
        %v4531 = vadd.f32 %v4403, 1.0
        %v4532 = vadd.f32 %v4404, 1.0
        %v4533 = vadd.f32 %v4405, 1.0
        %v4534 = vadd.f32 %v4406, 1.0
        %v4535 = vadd.f32 %v4407, 1.0
        %v4536 = vadd.f32 %v4408, 1.0
        %v4537 = vadd.f32 %v4409, 1.0
        %v4538 = vadd.f32 %v4410, 1.0
        %v4539 = vadd.f32 %v4411, 1.0
        %v4540 = vadd.f32 %v4412, 1.0
        %v4541 = vadd.f32 %v4413, 1.0
        %v4542 = vadd.f32 %v4414, 1.0
        %v4543 = vadd.f32 %v4415, 1.0
        %v4544 = vadd.f32 %v4416, 1.0
        %v4545 = vadd.f32 %v4417, 1.0
        %v4546 = vadd.f32 %v4418, 1.0
        %v4547 = vadd.f32 %v4419, 1.0
        %v4548 = vadd.f32 %v4420, 1.0
        %v4549 = vadd.f32 %v4421, 1.0
        %v4550 = vadd.f32 %v4422, 1.0
        %v4551 = vadd.f32 %v4423, 1.0
        %v4552 = vadd.f32 %v4424, 1.0
        %v4553 = vadd.f32 %v4425, 1.0
        %v4554 = vadd.f32 %v4426, 1.0
        %v4555 = vadd.f32 %v4427, 1.0
        %v4556 = vadd.f32 %v4428, 1.0
        %v4557 = vadd.f32 %v4429, 1.0
        %v4558 = vmul.f32 %v1230, %v4430
        %v4559 = vmul.f32 %v1231, %v4431
        %v4560 = vmul.f32 %v1232, %v4432
        %v4561 = vmul.f32 %v1233, %v4433
        %v4562 = vmul.f32 %v1234, %v4434
        %v4563 = vmul.f32 %v1235, %v4435
        %v4564 = vmul.f32 %v1236, %v4436
        %v4565 = vmul.f32 %v1237, %v4437
        %v4566 = vmul.f32 %v1238, %v4438
        %v4567 = vmul.f32 %v1239, %v4439
        %v4568 = vmul.f32 %v1240, %v4440
        %v4569 = vmul.f32 %v1241, %v4441
        %v4570 = vmul.f32 %v1242, %v4442
        %v4571 = vmul.f32 %v1243, %v4443
        %v4572 = vmul.f32 %v1244, %v4444
        %v4573 = vmul.f32 %v1245, %v4445
        %v4574 = vmul.f32 %v1246, %v4446
        %v4575 = vmul.f32 %v1247, %v4447
        %v4576 = vmul.f32 %v1248, %v4448
        %v4577 = vmul.f32 %v1249, %v4449
        %v4578 = vmul.f32 %v1250, %v4450
        %v4579 = vmul.f32 %v1251, %v4451
        %v4580 = vmul.f32 %v1252, %v4452
        %v4581 = vmul.f32 %v1253, %v4453
        %v4582 = vmul.f32 %v1254, %v4454
        %v4583 = vmul.f32 %v1255, %v4455
        %v4584 = vmul.f32 %v1256, %v4456
        %v4585 = vmul.f32 %v1257, %v4457
        %v4586 = vmul.f32 %v1258, %v4458
        %v4587 = vmul.f32 %v1259, %v4459
        %v4588 = vmul.f32 %v1260, %v4460
        %v4589 = vmul.f32 %v1261, %v4461
        %v4590 = vmul.f32 %v1262, %v4462
        %v4591 = vmul.f32 %v1263, %v4463
        %v4592 = vmul.f32 %v1264, %v4464
        %v4593 = vmul.f32 %v1265, %v4465
        %v4594 = vmul.f32 %v1266, %v4466
        %v4595 = vmul.f32 %v1267, %v4467
        %v4596 = vmul.f32 %v1268, %v4468
        %v4597 = vmul.f32 %v1269, %v4469
        %v4598 = vmul.f32 %v1270, %v4470
        %v4599 = vmul.f32 %v1271, %v4471
        %v4600 = vmul.f32 %v1272, %v4472
        %v4601 = vmul.f32 %v1273, %v4473
        %v4602 = vmul.f32 %v1274, %v4474
        %v4603 = vmul.f32 %v1275, %v4475
        %v4604 = vmul.f32 %v1276, %v4476
        %v4605 = vmul.f32 %v1277, %v4477
        %v4606 = vmul.f32 %v1278, %v4478
        %v4607 = vmul.f32 %v1279, %v4479
        %v4608 = vmul.f32 %v1280, %v4480
        %v4609 = vmul.f32 %v1281, %v4481
        %v4610 = vmul.f32 %v1282, %v4482
        %v4611 = vmul.f32 %v1283, %v4483
        %v4612 = vmul.f32 %v1284, %v4484
        %v4613 = vmul.f32 %v1285, %v4485
        %v4614 = vmul.f32 %v1286, %v4486
        %v4615 = vmul.f32 %v1287, %v4487
        %v4616 = vmul.f32 %v1288, %v4488
        %v4617 = vmul.f32 %v1289, %v4489
        %v4618 = vmul.f32 %v1290, %v4490
        %v4619 = vmul.f32 %v1291, %v4491
        %v4620 = vmul.f32 %v1292, %v4492
        %v4621 = vmul.f32 %v1293, %v4493
        %v4622 = vmul.f32 %v1294, %v4494
        %v4623 = vmul.f32 %v1295, %v4495
        %v4624 = vmul.f32 %v1296, %v4496
        %v4625 = vmul.f32 %v1297, %v4497
        %v4626 = vmul.f32 %v1298, %v4498
        %v4627 = vmul.f32 %v1299, %v4499
        %v4628 = vmul.f32 %v1300, %v4500
        %v4629 = vmul.f32 %v1301, %v4501
        %v4630 = vmul.f32 %v1302, %v4502
        %v4631 = vmul.f32 %v1303, %v4503
        %v4632 = vmul.f32 %v1304, %v4504
        %v4633 = vmul.f32 %v1305, %v4505
        %v4634 = vmul.f32 %v1306, %v4506
        %v4635 = vmul.f32 %v1307, %v4507
        %v4636 = vmul.f32 %v1308, %v4508
        %v4637 = vmul.f32 %v1309, %v4509
        %v4638 = vmul.f32 %v1310, %v4510
        %v4639 = vmul.f32 %v1311, %v4511
        %v4640 = vmul.f32 %v1312, %v4512
        %v4641 = vmul.f32 %v1313, %v4513
        %v4642 = vmul.f32 %v1314, %v4514
        %v4643 = vmul.f32 %v1315, %v4515
        %v4644 = vmul.f32 %v1316, %v4516
        %v4645 = vmul.f32 %v1317, %v4517
        %v4646 = vmul.f32 %v1318, %v4518
        %v4647 = vmul.f32 %v1319, %v4519
        %v4648 = vmul.f32 %v1320, %v4520
        %v4649 = vmul.f32 %v1321, %v4521
        %v4650 = vmul.f32 %v1322, %v4522
        %v4651 = vmul.f32 %v1323, %v4523
        %v4652 = vmul.f32 %v1324, %v4524
        %v4653 = vmul.f32 %v1325, %v4525
        %v4654 = vmul.f32 %v1326, %v4526
        %v4655 = vmul.f32 %v1327, %v4527
        %v4656 = vmul.f32 %v1328, %v4528
        %v4657 = vmul.f32 %v1329, %v4529
        %v4658 = vmul.f32 %v1330, %v4530
        %v4659 = vmul.f32 %v1331, %v4531
        %v4660 = vmul.f32 %v1332, %v4532
        %v4661 = vmul.f32 %v1333, %v4533
        %v4662 = vmul.f32 %v1334, %v4534
        %v4663 = vmul.f32 %v1335, %v4535
        %v4664 = vmul.f32 %v1336, %v4536
        %v4665 = vmul.f32 %v1337, %v4537
        %v4666 = vmul.f32 %v1338, %v4538
        %v4667 = vmul.f32 %v1339, %v4539
        %v4668 = vmul.f32 %v1340, %v4540
        %v4669 = vmul.f32 %v1341, %v4541
        %v4670 = vmul.f32 %v1342, %v4542
        %v4671 = vmul.f32 %v1343, %v4543
        %v4672 = vmul.f32 %v1344, %v4544
        %v4673 = vmul.f32 %v1345, %v4545
        %v4674 = vmul.f32 %v1346, %v4546
        %v4675 = vmul.f32 %v1347, %v4547
        %v4676 = vmul.f32 %v1348, %v4548
        %v4677 = vmul.f32 %v1349, %v4549
        %v4678 = vmul.f32 %v1350, %v4550
        %v4679 = vmul.f32 %v1351, %v4551
        %v4680 = vmul.f32 %v1352, %v4552
        %v4681 = vmul.f32 %v1353, %v4553
        %v4682 = vmul.f32 %v1354, %v4554
        %v4683 = vmul.f32 %v1355, %v4555
        %v4684 = vmul.f32 %v1356, %v4556
        %v4685 = vmul.f32 %v1357, %v4557
        %v4686 = vld [vmem:[%s3] sm:$0xff]
        %v4687 = vld [vmem:[%s3 + $0x8] sm:$0xff]
        %v4688 = vld [vmem:[%s3 + $0x10] sm:$0xff]
        %v4689 = vld [vmem:[%s3 + $0x18] sm:$0xff]
        %v4690 = vld [vmem:[%s3 + $0x20] sm:$0xff]
        %v4691 = vld [vmem:[%s3 + $0x28] sm:$0xff]
        %v4692 = vld [vmem:[%s3 + $0x30] sm:$0xff]
        %v4693 = vld [vmem:[%s3 + $0x38] sm:$0xff]
        %v4694 = vld [vmem:[%s3 + $0x40] sm:$0xff]
        %v4695 = vld [vmem:[%s3 + $0x48] sm:$0xff]
        %v4696 = vld [vmem:[%s3 + $0x50] sm:$0xff]
        %v4697 = vld [vmem:[%s3 + $0x58] sm:$0xff]
        %v4698 = vld [vmem:[%s3 + $0x60] sm:$0xff]
        %v4699 = vld [vmem:[%s3 + $0x68] sm:$0xff]
        %v4700 = vld [vmem:[%s3 + $0x70] sm:$0xff]
        %v4701 = vld [vmem:[%s3 + $0x78] sm:$0xff]
        %v4702 = vld [vmem:[%s3 + $0x80] sm:$0xff]
        %v4703 = vld [vmem:[%s3 + $0x88] sm:$0xff]
        %v4704 = vld [vmem:[%s3 + $0x90] sm:$0xff]
        %v4705 = vld [vmem:[%s3 + $0x98] sm:$0xff]
        %v4706 = vld [vmem:[%s3 + $0xa0] sm:$0xff]
        %v4707 = vld [vmem:[%s3 + $0xa8] sm:$0xff]
        %v4708 = vld [vmem:[%s3 + $0xb0] sm:$0xff]
        %v4709 = vld [vmem:[%s3 + $0xb8] sm:$0xff]
        %v4710 = vld [vmem:[%s3 + $0xc0] sm:$0xff]
        %v4711 = vld [vmem:[%s3 + $0xc8] sm:$0xff]
        %v4712 = vld [vmem:[%s3 + $0xd0] sm:$0xff]
        %v4713 = vld [vmem:[%s3 + $0xd8] sm:$0xff]
        %v4714 = vld [vmem:[%s3 + $0xe0] sm:$0xff]
        %v4715 = vld [vmem:[%s3 + $0xe8] sm:$0xff]
        %v4716 = vld [vmem:[%s3 + $0xf0] sm:$0xff]
        %v4717 = vld [vmem:[%s3 + $0xf8] sm:$0xff]
        %v4718 = vld [vmem:[%s3 + $0x100] sm:$0xff]
        %v4719 = vld [vmem:[%s3 + $0x108] sm:$0xff]
        %v4720 = vld [vmem:[%s3 + $0x110] sm:$0xff]
        %v4721 = vld [vmem:[%s3 + $0x118] sm:$0xff]
        %v4722 = vld [vmem:[%s3 + $0x120] sm:$0xff]
        %v4723 = vld [vmem:[%s3 + $0x128] sm:$0xff]
        %v4724 = vld [vmem:[%s3 + $0x130] sm:$0xff]
        %v4725 = vld [vmem:[%s3 + $0x138] sm:$0xff]
        %v4726 = vld [vmem:[%s3 + $0x140] sm:$0xff]
        %v4727 = vld [vmem:[%s3 + $0x148] sm:$0xff]
        %v4728 = vld [vmem:[%s3 + $0x150] sm:$0xff]
        %v4729 = vld [vmem:[%s3 + $0x158] sm:$0xff]
        %v4730 = vld [vmem:[%s3 + $0x160] sm:$0xff]
        %v4731 = vld [vmem:[%s3 + $0x168] sm:$0xff]
        %v4732 = vld [vmem:[%s3 + $0x170] sm:$0xff]
        %v4733 = vld [vmem:[%s3 + $0x178] sm:$0xff]
        %v4734 = vld [vmem:[%s3 + $0x180] sm:$0xff]
        %v4735 = vld [vmem:[%s3 + $0x188] sm:$0xff]
        %v4736 = vld [vmem:[%s3 + $0x190] sm:$0xff]
        %v4737 = vld [vmem:[%s3 + $0x198] sm:$0xff]
        %v4738 = vld [vmem:[%s3 + $0x1a0] sm:$0xff]
        %v4739 = vld [vmem:[%s3 + $0x1a8] sm:$0xff]
        %v4740 = vld [vmem:[%s3 + $0x1b0] sm:$0xff]
        %v4741 = vld [vmem:[%s3 + $0x1b8] sm:$0xff]
        %v4742 = vld [vmem:[%s3 + $0x1c0] sm:$0xff]
        %v4743 = vld [vmem:[%s3 + $0x1c8] sm:$0xff]
        %v4744 = vld [vmem:[%s3 + $0x1d0] sm:$0xff]
        %v4745 = vld [vmem:[%s3 + $0x1d8] sm:$0xff]
        %v4746 = vld [vmem:[%s3 + $0x1e0] sm:$0xff]
        %v4747 = vld [vmem:[%s3 + $0x1e8] sm:$0xff]
        %v4748 = vld [vmem:[%s3 + $0x1f0] sm:$0xff]
        %v4749 = vld [vmem:[%s3 + $0x1f8] sm:$0xff]
        %v4750 = vld [vmem:[%s4] sm:$0xff]
        %v4751 = vld [vmem:[%s4 + $0x8] sm:$0xff]
        %v4752 = vld [vmem:[%s4 + $0x10] sm:$0xff]
        %v4753 = vld [vmem:[%s4 + $0x18] sm:$0xff]
        %v4754 = vld [vmem:[%s4 + $0x20] sm:$0xff]
        %v4755 = vld [vmem:[%s4 + $0x28] sm:$0xff]
        %v4756 = vld [vmem:[%s4 + $0x30] sm:$0xff]
        %v4757 = vld [vmem:[%s4 + $0x38] sm:$0xff]
        %v4758 = vld [vmem:[%s4 + $0x40] sm:$0xff]
        %v4759 = vld [vmem:[%s4 + $0x48] sm:$0xff]
        %v4760 = vld [vmem:[%s4 + $0x50] sm:$0xff]
        %v4761 = vld [vmem:[%s4 + $0x58] sm:$0xff]
        %v4762 = vld [vmem:[%s4 + $0x60] sm:$0xff]
        %v4763 = vld [vmem:[%s4 + $0x68] sm:$0xff]
        %v4764 = vld [vmem:[%s4 + $0x70] sm:$0xff]
        %v4765 = vld [vmem:[%s4 + $0x78] sm:$0xff]
        %v4766 = vld [vmem:[%s4 + $0x80] sm:$0xff]
        %v4767 = vld [vmem:[%s4 + $0x88] sm:$0xff]
        %v4768 = vld [vmem:[%s4 + $0x90] sm:$0xff]
        %v4769 = vld [vmem:[%s4 + $0x98] sm:$0xff]
        %v4770 = vld [vmem:[%s4 + $0xa0] sm:$0xff]
        %v4771 = vld [vmem:[%s4 + $0xa8] sm:$0xff]
        %v4772 = vld [vmem:[%s4 + $0xb0] sm:$0xff]
        %v4773 = vld [vmem:[%s4 + $0xb8] sm:$0xff]
        %v4774 = vld [vmem:[%s4 + $0xc0] sm:$0xff]
        %v4775 = vld [vmem:[%s4 + $0xc8] sm:$0xff]
        %v4776 = vld [vmem:[%s4 + $0xd0] sm:$0xff]
        %v4777 = vld [vmem:[%s4 + $0xd8] sm:$0xff]
        %v4778 = vld [vmem:[%s4 + $0xe0] sm:$0xff]
        %v4779 = vld [vmem:[%s4 + $0xe8] sm:$0xff]
        %v4780 = vld [vmem:[%s4 + $0xf0] sm:$0xff]
        %v4781 = vld [vmem:[%s4 + $0xf8] sm:$0xff]
        %4783 = vset.pattern.permute.xlu0 0
        %4784 = vperm.xlu0 %4783, %v4750
        %v4785 = vpop.permute.xlu0 %4784
        %4788 = vset.pattern.permute.xlu0 0
        %4789 = vperm.xlu0 %4788, %v4751
        %v4790 = vpop.permute.xlu0 %4789
        %4793 = vset.pattern.permute.xlu0 0
        %4794 = vperm.xlu0 %4793, %v4752
        %v4795 = vpop.permute.xlu0 %4794
        %4798 = vset.pattern.permute.xlu0 0
        %4799 = vperm.xlu0 %4798, %v4753
        %v4800 = vpop.permute.xlu0 %4799
        %4803 = vset.pattern.permute.xlu0 0
        %4804 = vperm.xlu0 %4803, %v4754
        %v4805 = vpop.permute.xlu0 %4804
        %4808 = vset.pattern.permute.xlu0 0
        %4809 = vperm.xlu0 %4808, %v4755
        %v4810 = vpop.permute.xlu0 %4809
        %4813 = vset.pattern.permute.xlu0 0
        %4814 = vperm.xlu0 %4813, %v4756
        %v4815 = vpop.permute.xlu0 %4814
        %4818 = vset.pattern.permute.xlu0 0
        %4819 = vperm.xlu0 %4818, %v4757
        %v4820 = vpop.permute.xlu0 %4819
        %4823 = vset.pattern.permute.xlu0 0
        %4824 = vperm.xlu0 %4823, %v4758
        %v4825 = vpop.permute.xlu0 %4824
        %4828 = vset.pattern.permute.xlu0 0
        %4829 = vperm.xlu0 %4828, %v4759
        %v4830 = vpop.permute.xlu0 %4829
        %4833 = vset.pattern.permute.xlu0 0
        %4834 = vperm.xlu0 %4833, %v4760
        %v4835 = vpop.permute.xlu0 %4834
        %4838 = vset.pattern.permute.xlu0 0
        %4839 = vperm.xlu0 %4838, %v4761
        %v4840 = vpop.permute.xlu0 %4839
        %4843 = vset.pattern.permute.xlu0 0
        %4844 = vperm.xlu0 %4843, %v4762
        %v4845 = vpop.permute.xlu0 %4844
        %4848 = vset.pattern.permute.xlu0 0
        %4849 = vperm.xlu0 %4848, %v4763
        %v4850 = vpop.permute.xlu0 %4849
        %4853 = vset.pattern.permute.xlu0 0
        %4854 = vperm.xlu0 %4853, %v4764
        %v4855 = vpop.permute.xlu0 %4854
        %4858 = vset.pattern.permute.xlu0 0
        %4859 = vperm.xlu0 %4858, %v4765
        %v4860 = vpop.permute.xlu0 %4859
        %4863 = vset.pattern.permute.xlu0 0
        %4864 = vperm.xlu0 %4863, %v4766
        %v4865 = vpop.permute.xlu0 %4864
        %4868 = vset.pattern.permute.xlu0 0
        %4869 = vperm.xlu0 %4868, %v4767
        %v4870 = vpop.permute.xlu0 %4869
        %4873 = vset.pattern.permute.xlu0 0
        %4874 = vperm.xlu0 %4873, %v4768
        %v4875 = vpop.permute.xlu0 %4874
        %4878 = vset.pattern.permute.xlu0 0
        %4879 = vperm.xlu0 %4878, %v4769
        %v4880 = vpop.permute.xlu0 %4879
        %4883 = vset.pattern.permute.xlu0 0
        %4884 = vperm.xlu0 %4883, %v4770
        %v4885 = vpop.permute.xlu0 %4884
        %4888 = vset.pattern.permute.xlu0 0
        %4889 = vperm.xlu0 %4888, %v4771
        %v4890 = vpop.permute.xlu0 %4889
        %4893 = vset.pattern.permute.xlu0 0
        %4894 = vperm.xlu0 %4893, %v4772
        %v4895 = vpop.permute.xlu0 %4894
        %4898 = vset.pattern.permute.xlu0 0
        %4899 = vperm.xlu0 %4898, %v4773
        %v4900 = vpop.permute.xlu0 %4899
        %4903 = vset.pattern.permute.xlu0 0
        %4904 = vperm.xlu0 %4903, %v4774
        %v4905 = vpop.permute.xlu0 %4904
        %4908 = vset.pattern.permute.xlu0 0
        %4909 = vperm.xlu0 %4908, %v4775
        %v4910 = vpop.permute.xlu0 %4909
        %4913 = vset.pattern.permute.xlu0 0
        %4914 = vperm.xlu0 %4913, %v4776
        %v4915 = vpop.permute.xlu0 %4914
        %4918 = vset.pattern.permute.xlu0 0
        %4919 = vperm.xlu0 %4918, %v4777
        %v4920 = vpop.permute.xlu0 %4919
        %4923 = vset.pattern.permute.xlu0 0
        %4924 = vperm.xlu0 %4923, %v4778
        %v4925 = vpop.permute.xlu0 %4924
        %4928 = vset.pattern.permute.xlu0 0
        %4929 = vperm.xlu0 %4928, %v4779
        %v4930 = vpop.permute.xlu0 %4929
        %4933 = vset.pattern.permute.xlu0 0
        %4934 = vperm.xlu0 %4933, %v4780
        %v4935 = vpop.permute.xlu0 %4934
        %4938 = vset.pattern.permute.xlu0 0
        %4939 = vperm.xlu0 %4938, %v4781
        %v4940 = vpop.permute.xlu0 %4939
        %4942 = vmatprep.subr.mxu0 %v4619
        %4943 = vmatpush1.msra.mxu0 %v4618
        %4944 = vmatprep.subr.mxu0 %v4615
        %4945 = vmatpush1.msra.mxu0 %v4614
        %4946 = vmatprep.subr.mxu0 %v4611
        %4947 = vmatpush1.msra.mxu0 %v4610
        %4948 = vmatprep.subr.mxu0 %v4607
        %4949 = vmatpush1.msra.mxu0 %v4606
        %4950 = vmatprep.subr.mxu0 %v4603
        %4951 = vmatpush1.msra.mxu0 %v4602
        %4952 = vmatprep.subr.mxu0 %v4599
        %4953 = vmatpush1.msra.mxu0 %v4598
        %4954 = vmatprep.subr.mxu0 %v4595
        %4955 = vmatpush1.msra.mxu0 %v4594
        %4956 = vmatprep.subr.mxu0 %v4591
        %4957 = vmatpush1.msra.mxu0 %v4590
        %4958 = vmatprep.subr.mxu0 %v4587
        %4959 = vmatpush1.msra.mxu0 %v4586
        %4960 = vmatprep.subr.mxu0 %v4583
        %4961 = vmatpush1.msra.mxu0 %v4582
        %4962 = vmatprep.subr.mxu0 %v4579
        %4963 = vmatpush1.msra.mxu0 %v4578
        %4964 = vmatprep.subr.mxu0 %v4575
        %4965 = vmatpush1.msra.mxu0 %v4574
        %4966 = vmatprep.subr.mxu0 %v4571
        %4967 = vmatpush1.msra.mxu0 %v4570
        %4968 = vmatprep.subr.mxu0 %v4567
        %4969 = vmatpush1.msra.mxu0 %v4566
        %4970 = vmatprep.subr.mxu0 %v4563
        %4971 = vmatpush1.msra.mxu0 %v4562
        %4972 = vmatprep.subr.mxu0 %v4559
        %4973 = vmatpush1.msra.mxu0 %v4558
        %4974 = vmatprep.subr.mxu0 %v4683
        %4975 = vmatpush2.msra.mxu0 %v4682
        %4976 = vmatprep.subr.mxu0 %v4679
        %4977 = vmatpush2.msra.mxu0 %v4678
        %4978 = vmatprep.subr.mxu0 %v4675
        %4979 = vmatpush2.msra.mxu0 %v4674
        %4980 = vmatprep.subr.mxu0 %v4671
        %4981 = vmatpush2.msra.mxu0 %v4670
        %4982 = vmatprep.subr.mxu0 %v4667
        %4983 = vmatpush2.msra.mxu0 %v4666
        %4984 = vmatprep.subr.mxu0 %v4663
        %4985 = vmatpush2.msra.mxu0 %v4662
        %4986 = vmatprep.subr.mxu0 %v4659
        %4987 = vmatpush2.msra.mxu0 %v4658
        %4988 = vmatprep.subr.mxu0 %v4655
        %4989 = vmatpush2.msra.mxu0 %v4654
        %4990 = vmatprep.subr.mxu0 %v4651
        %4991 = vmatpush2.msra.mxu0 %v4650
        %4992 = vmatprep.subr.mxu0 %v4647
        %4993 = vmatpush2.msra.mxu0 %v4646
        %4994 = vmatprep.subr.mxu0 %v4643
        %4995 = vmatpush2.msra.mxu0 %v4642
        %4996 = vmatprep.subr.mxu0 %v4639
        %4997 = vmatpush2.msra.mxu0 %v4638
        %4998 = vmatprep.subr.mxu0 %v4635
        %4999 = vmatpush2.msra.mxu0 %v4634
        %5000 = vmatprep.subr.mxu0 %v4631
        %5001 = vmatpush2.msra.mxu0 %v4630
        %5002 = vmatprep.subr.mxu0 %v4627
        %5003 = vmatpush2.msra.mxu0 %v4626
        %5004 = vmatprep.subr.mxu0 %v4623
        %5005 = vmatpush2.msra.mxu0 %v4622
        %5006 = vmatprep.mubr.f32.mxu0 %v4687
        %5007 = vmatmul.mubr.f32.gmra.mxu0 %v4686
        %v5008 = vpop.f32.mrf.mxu0
        %v5009 = vadd.f32 %v4785, %v5008
        %v5010 = vpop.f32.mrf.mxu0
        %v5011 = vadd.f32 %v4785, %v5010
        %5012 = vmatprep.mubr.f32.mxu0 %v4689
        %5013 = vmatmul.mubr.f32.gmra.mxu0 %v4688
        %v5014 = vpop.f32.mrf.mxu0
        %v5015 = vadd.f32 %v4790, %v5014
        %v5016 = vpop.f32.mrf.mxu0
        %v5017 = vadd.f32 %v4790, %v5016
        %5018 = vmatprep.mubr.f32.mxu0 %v4691
        %5019 = vmatmul.mubr.f32.gmra.mxu0 %v4690
        %v5020 = vpop.f32.mrf.mxu0
        %v5021 = vadd.f32 %v4795, %v5020
        %v5022 = vpop.f32.mrf.mxu0
        %v5023 = vadd.f32 %v4795, %v5022
        %5024 = vmatprep.mubr.f32.mxu0 %v4693
        %5025 = vmatmul.mubr.f32.gmra.mxu0 %v4692
        %v5026 = vpop.f32.mrf.mxu0
        %v5027 = vadd.f32 %v4800, %v5026
        %v5028 = vpop.f32.mrf.mxu0
        %v5029 = vadd.f32 %v4800, %v5028
        %5030 = vmatprep.mubr.f32.mxu0 %v4695
        %5031 = vmatmul.mubr.f32.gmra.mxu0 %v4694
        %v5032 = vpop.f32.mrf.mxu0
        %v5033 = vadd.f32 %v4805, %v5032
        %v5034 = vpop.f32.mrf.mxu0
        %v5035 = vadd.f32 %v4805, %v5034
        %5036 = vmatprep.mubr.f32.mxu0 %v4697
        %5037 = vmatmul.mubr.f32.gmra.mxu0 %v4696
        %v5038 = vpop.f32.mrf.mxu0
        %v5039 = vadd.f32 %v4810, %v5038
        %v5040 = vpop.f32.mrf.mxu0
        %v5041 = vadd.f32 %v4810, %v5040
        %5042 = vmatprep.mubr.f32.mxu0 %v4699
        %5043 = vmatmul.mubr.f32.gmra.mxu0 %v4698
        %v5044 = vpop.f32.mrf.mxu0
        %v5045 = vadd.f32 %v4815, %v5044
        %v5046 = vpop.f32.mrf.mxu0
        %v5047 = vadd.f32 %v4815, %v5046
        %5048 = vmatprep.mubr.f32.mxu0 %v4701
        %5049 = vmatmul.mubr.f32.gmra.mxu0 %v4700
        %v5050 = vpop.f32.mrf.mxu0
        %v5051 = vadd.f32 %v4820, %v5050
        %v5052 = vpop.f32.mrf.mxu0
        %v5053 = vadd.f32 %v4820, %v5052
        %5054 = vmatprep.mubr.f32.mxu0 %v4703
        %5055 = vmatmul.mubr.f32.gmra.mxu0 %v4702
        %v5056 = vpop.f32.mrf.mxu0
        %v5057 = vadd.f32 %v4825, %v5056
        %v5058 = vpop.f32.mrf.mxu0
        %v5059 = vadd.f32 %v4825, %v5058
        %5060 = vmatprep.mubr.f32.mxu0 %v4705
        %5061 = vmatmul.mubr.f32.gmra.mxu0 %v4704
        %v5062 = vpop.f32.mrf.mxu0
        %v5063 = vadd.f32 %v4830, %v5062
        %v5064 = vpop.f32.mrf.mxu0
        %v5065 = vadd.f32 %v4830, %v5064
        %5066 = vmatprep.mubr.f32.mxu0 %v4707
        %5067 = vmatmul.mubr.f32.gmra.mxu0 %v4706
        %v5068 = vpop.f32.mrf.mxu0
        %v5069 = vadd.f32 %v4835, %v5068
        %v5070 = vpop.f32.mrf.mxu0
        %v5071 = vadd.f32 %v4835, %v5070
        %5072 = vmatprep.mubr.f32.mxu0 %v4709
        %5073 = vmatmul.mubr.f32.gmra.mxu0 %v4708
        %v5074 = vpop.f32.mrf.mxu0
        %v5075 = vadd.f32 %v4840, %v5074
        %v5076 = vpop.f32.mrf.mxu0
        %v5077 = vadd.f32 %v4840, %v5076
        %5078 = vmatprep.mubr.f32.mxu0 %v4711
        %5079 = vmatmul.mubr.f32.gmra.mxu0 %v4710
        %v5080 = vpop.f32.mrf.mxu0
        %v5081 = vadd.f32 %v4845, %v5080
        %v5082 = vpop.f32.mrf.mxu0
        %v5083 = vadd.f32 %v4845, %v5082
        %5084 = vmatprep.mubr.f32.mxu0 %v4713
        %5085 = vmatmul.mubr.f32.gmra.mxu0 %v4712
        %v5086 = vpop.f32.mrf.mxu0
        %v5087 = vadd.f32 %v4850, %v5086
        %v5088 = vpop.f32.mrf.mxu0
        %v5089 = vadd.f32 %v4850, %v5088
        %5090 = vmatprep.mubr.f32.mxu0 %v4715
        %5091 = vmatmul.mubr.f32.gmra.mxu0 %v4714
        %v5092 = vpop.f32.mrf.mxu0
        %v5093 = vadd.f32 %v4855, %v5092
        %v5094 = vpop.f32.mrf.mxu0
        %v5095 = vadd.f32 %v4855, %v5094
        %5096 = vmatprep.mubr.f32.mxu0 %v4717
        %5097 = vmatmul.mubr.f32.gmra.mxu0 %v4716
        %v5098 = vpop.f32.mrf.mxu0
        %v5099 = vadd.f32 %v4860, %v5098
        %v5100 = vpop.f32.mrf.mxu0
        %v5101 = vadd.f32 %v4860, %v5100
        %5102 = vmatprep.mubr.f32.mxu0 %v4719
        %5103 = vmatmul.mubr.f32.gmra.mxu0 %v4718
        %v5104 = vpop.f32.mrf.mxu0
        %v5105 = vadd.f32 %v4865, %v5104
        %v5106 = vpop.f32.mrf.mxu0
        %v5107 = vadd.f32 %v4865, %v5106
        %5108 = vmatprep.mubr.f32.mxu0 %v4721
        %5109 = vmatmul.mubr.f32.gmra.mxu0 %v4720
        %v5110 = vpop.f32.mrf.mxu0
        %v5111 = vadd.f32 %v4870, %v5110
        %v5112 = vpop.f32.mrf.mxu0
        %v5113 = vadd.f32 %v4870, %v5112
        %5114 = vmatprep.mubr.f32.mxu0 %v4723
        %5115 = vmatmul.mubr.f32.gmra.mxu0 %v4722
        %v5116 = vpop.f32.mrf.mxu0
        %v5117 = vadd.f32 %v4875, %v5116
        %v5118 = vpop.f32.mrf.mxu0
        %v5119 = vadd.f32 %v4875, %v5118
        %5120 = vmatprep.mubr.f32.mxu0 %v4725
        %5121 = vmatmul.mubr.f32.gmra.mxu0 %v4724
        %v5122 = vpop.f32.mrf.mxu0
        %v5123 = vadd.f32 %v4880, %v5122
        %v5124 = vpop.f32.mrf.mxu0
        %v5125 = vadd.f32 %v4880, %v5124
        %5126 = vmatprep.mubr.f32.mxu0 %v4727
        %5127 = vmatmul.mubr.f32.gmra.mxu0 %v4726
        %v5128 = vpop.f32.mrf.mxu0
        %v5129 = vadd.f32 %v4885, %v5128
        %v5130 = vpop.f32.mrf.mxu0
        %v5131 = vadd.f32 %v4885, %v5130
        %5132 = vmatprep.mubr.f32.mxu0 %v4729
        %5133 = vmatmul.mubr.f32.gmra.mxu0 %v4728
        %v5134 = vpop.f32.mrf.mxu0
        %v5135 = vadd.f32 %v4890, %v5134
        %v5136 = vpop.f32.mrf.mxu0
        %v5137 = vadd.f32 %v4890, %v5136
        %5138 = vmatprep.mubr.f32.mxu0 %v4731
        %5139 = vmatmul.mubr.f32.gmra.mxu0 %v4730
        %v5140 = vpop.f32.mrf.mxu0
        %v5141 = vadd.f32 %v4895, %v5140
        %v5142 = vpop.f32.mrf.mxu0
        %v5143 = vadd.f32 %v4895, %v5142
        %5144 = vmatprep.mubr.f32.mxu0 %v4733
        %5145 = vmatmul.mubr.f32.gmra.mxu0 %v4732
        %v5146 = vpop.f32.mrf.mxu0
        %v5147 = vadd.f32 %v4900, %v5146
        %v5148 = vpop.f32.mrf.mxu0
        %v5149 = vadd.f32 %v4900, %v5148
        %5150 = vmatprep.mubr.f32.mxu0 %v4735
        %5151 = vmatmul.mubr.f32.gmra.mxu0 %v4734
        %v5152 = vpop.f32.mrf.mxu0
        %v5153 = vadd.f32 %v4905, %v5152
        %v5154 = vpop.f32.mrf.mxu0
        %v5155 = vadd.f32 %v4905, %v5154
        %5156 = vmatprep.mubr.f32.mxu0 %v4737
        %5157 = vmatmul.mubr.f32.gmra.mxu0 %v4736
        %v5158 = vpop.f32.mrf.mxu0
        %v5159 = vadd.f32 %v4910, %v5158
        %v5160 = vpop.f32.mrf.mxu0
        %v5161 = vadd.f32 %v4910, %v5160
        %5162 = vmatprep.mubr.f32.mxu0 %v4739
        %5163 = vmatmul.mubr.f32.gmra.mxu0 %v4738
        %v5164 = vpop.f32.mrf.mxu0
        %v5165 = vadd.f32 %v4915, %v5164
        %v5166 = vpop.f32.mrf.mxu0
        %v5167 = vadd.f32 %v4915, %v5166
        %5168 = vmatprep.mubr.f32.mxu0 %v4741
        %5169 = vmatmul.mubr.f32.gmra.mxu0 %v4740
        %v5170 = vpop.f32.mrf.mxu0
        %v5171 = vadd.f32 %v4920, %v5170
        %v5172 = vpop.f32.mrf.mxu0
        %v5173 = vadd.f32 %v4920, %v5172
        %5174 = vmatprep.mubr.f32.mxu0 %v4743
        %5175 = vmatmul.mubr.f32.gmra.mxu0 %v4742
        %v5176 = vpop.f32.mrf.mxu0
        %v5177 = vadd.f32 %v4925, %v5176
        %v5178 = vpop.f32.mrf.mxu0
        %v5179 = vadd.f32 %v4925, %v5178
        %5180 = vmatprep.mubr.f32.mxu0 %v4745
        %5181 = vmatmul.mubr.f32.gmra.mxu0 %v4744
        %v5182 = vpop.f32.mrf.mxu0
        %v5183 = vadd.f32 %v4930, %v5182
        %v5184 = vpop.f32.mrf.mxu0
        %v5185 = vadd.f32 %v4930, %v5184
        %5186 = vmatprep.mubr.f32.mxu0 %v4747
        %5187 = vmatmul.mubr.f32.gmra.mxu0 %v4746
        %v5188 = vpop.f32.mrf.mxu0
        %v5189 = vadd.f32 %v4935, %v5188
        %v5190 = vpop.f32.mrf.mxu0
        %v5191 = vadd.f32 %v4935, %v5190
        %5192 = vmatprep.mubr.f32.mxu0 %v4749
        %5193 = vmatmul.mubr.f32.gmra.mxu0 %v4748
        %v5194 = vpop.f32.mrf.mxu0
        %v5195 = vadd.f32 %v4940, %v5194
        %v5196 = vpop.f32.mrf.mxu0
        %v5197 = vadd.f32 %v4940, %v5196
        %5198 = vdwg.mxu0
        %5199 = vmatprep.subr.mxu0 %v4621
        %5200 = vmatpush1.msra.mxu0 %v4620
        %5201 = vmatprep.subr.mxu0 %v4617
        %5202 = vmatpush1.msra.mxu0 %v4616
        %5203 = vmatprep.subr.mxu0 %v4613
        %5204 = vmatpush1.msra.mxu0 %v4612
        %5205 = vmatprep.subr.mxu0 %v4609
        %5206 = vmatpush1.msra.mxu0 %v4608
        %5207 = vmatprep.subr.mxu0 %v4605
        %5208 = vmatpush1.msra.mxu0 %v4604
        %5209 = vmatprep.subr.mxu0 %v4601
        %5210 = vmatpush1.msra.mxu0 %v4600
        %5211 = vmatprep.subr.mxu0 %v4597
        %5212 = vmatpush1.msra.mxu0 %v4596
        %5213 = vmatprep.subr.mxu0 %v4593
        %5214 = vmatpush1.msra.mxu0 %v4592
        %5215 = vmatprep.subr.mxu0 %v4589
        %5216 = vmatpush1.msra.mxu0 %v4588
        %5217 = vmatprep.subr.mxu0 %v4585
        %5218 = vmatpush1.msra.mxu0 %v4584
        %5219 = vmatprep.subr.mxu0 %v4581
        %5220 = vmatpush1.msra.mxu0 %v4580
        %5221 = vmatprep.subr.mxu0 %v4577
        %5222 = vmatpush1.msra.mxu0 %v4576
        %5223 = vmatprep.subr.mxu0 %v4573
        %5224 = vmatpush1.msra.mxu0 %v4572
        %5225 = vmatprep.subr.mxu0 %v4569
        %5226 = vmatpush1.msra.mxu0 %v4568
        %5227 = vmatprep.subr.mxu0 %v4565
        %5228 = vmatpush1.msra.mxu0 %v4564
        %5229 = vmatprep.subr.mxu0 %v4561
        %5230 = vmatpush1.msra.mxu0 %v4560
        %5231 = vmatprep.subr.mxu0 %v4685
        %5232 = vmatpush2.msra.mxu0 %v4684
        %5233 = vmatprep.subr.mxu0 %v4681
        %5234 = vmatpush2.msra.mxu0 %v4680
        %5235 = vmatprep.subr.mxu0 %v4677
        %5236 = vmatpush2.msra.mxu0 %v4676
        %5237 = vmatprep.subr.mxu0 %v4673
        %5238 = vmatpush2.msra.mxu0 %v4672
        %5239 = vmatprep.subr.mxu0 %v4669
        %5240 = vmatpush2.msra.mxu0 %v4668
        %5241 = vmatprep.subr.mxu0 %v4665
        %5242 = vmatpush2.msra.mxu0 %v4664
        %5243 = vmatprep.subr.mxu0 %v4661
        %5244 = vmatpush2.msra.mxu0 %v4660
        %5245 = vmatprep.subr.mxu0 %v4657
        %5246 = vmatpush2.msra.mxu0 %v4656
        %5247 = vmatprep.subr.mxu0 %v4653
        %5248 = vmatpush2.msra.mxu0 %v4652
        %5249 = vmatprep.subr.mxu0 %v4649
        %5250 = vmatpush2.msra.mxu0 %v4648
        %5251 = vmatprep.subr.mxu0 %v4645
        %5252 = vmatpush2.msra.mxu0 %v4644
        %5253 = vmatprep.subr.mxu0 %v4641
        %5254 = vmatpush2.msra.mxu0 %v4640
        %5255 = vmatprep.subr.mxu0 %v4637
        %5256 = vmatpush2.msra.mxu0 %v4636
        %5257 = vmatprep.subr.mxu0 %v4633
        %5258 = vmatpush2.msra.mxu0 %v4632
        %5259 = vmatprep.subr.mxu0 %v4629
        %5260 = vmatpush2.msra.mxu0 %v4628
        %5261 = vmatprep.subr.mxu0 %v4625
        %5262 = vmatpush2.msra.mxu0 %v4624
        %5263 = vmatprep.mubr.f32.mxu0 %v4687
        %5264 = vmatmul.mubr.f32.gmra.mxu0 %v4686
        %v5265 = vpop.f32.mrf.mxu0
        %v5266 = vadd.f32 %v4785, %v5265
        %v5267 = vpop.f32.mrf.mxu0
        %v5268 = vadd.f32 %v4785, %v5267
        %5269 = vmatprep.mubr.f32.mxu0 %v4689
        %5270 = vmatmul.mubr.f32.gmra.mxu0 %v4688
        %v5271 = vpop.f32.mrf.mxu0
        %v5272 = vadd.f32 %v4790, %v5271
        %v5273 = vpop.f32.mrf.mxu0
        %v5274 = vadd.f32 %v4790, %v5273
        %5275 = vmatprep.mubr.f32.mxu0 %v4691
        %5276 = vmatmul.mubr.f32.gmra.mxu0 %v4690
        %v5277 = vpop.f32.mrf.mxu0
        %v5278 = vadd.f32 %v4795, %v5277
        %v5279 = vpop.f32.mrf.mxu0
        %v5280 = vadd.f32 %v4795, %v5279
        %5281 = vmatprep.mubr.f32.mxu0 %v4693
        %5282 = vmatmul.mubr.f32.gmra.mxu0 %v4692
        %v5283 = vpop.f32.mrf.mxu0
        %v5284 = vadd.f32 %v4800, %v5283
        %v5285 = vpop.f32.mrf.mxu0
        %v5286 = vadd.f32 %v4800, %v5285
        %5287 = vmatprep.mubr.f32.mxu0 %v4695
        %5288 = vmatmul.mubr.f32.gmra.mxu0 %v4694
        %v5289 = vpop.f32.mrf.mxu0
        %v5290 = vadd.f32 %v4805, %v5289
        %v5291 = vpop.f32.mrf.mxu0
        %v5292 = vadd.f32 %v4805, %v5291
        %5293 = vmatprep.mubr.f32.mxu0 %v4697
        %5294 = vmatmul.mubr.f32.gmra.mxu0 %v4696
        %v5295 = vpop.f32.mrf.mxu0
        %v5296 = vadd.f32 %v4810, %v5295
        %v5297 = vpop.f32.mrf.mxu0
        %v5298 = vadd.f32 %v4810, %v5297
        %5299 = vmatprep.mubr.f32.mxu0 %v4699
        %5300 = vmatmul.mubr.f32.gmra.mxu0 %v4698
        %v5301 = vpop.f32.mrf.mxu0
        %v5302 = vadd.f32 %v4815, %v5301
        %v5303 = vpop.f32.mrf.mxu0
        %v5304 = vadd.f32 %v4815, %v5303
        %5305 = vmatprep.mubr.f32.mxu0 %v4701
        %5306 = vmatmul.mubr.f32.gmra.mxu0 %v4700
        %v5307 = vpop.f32.mrf.mxu0
        %v5308 = vadd.f32 %v4820, %v5307
        %v5309 = vpop.f32.mrf.mxu0
        %v5310 = vadd.f32 %v4820, %v5309
        %5311 = vmatprep.mubr.f32.mxu0 %v4703
        %5312 = vmatmul.mubr.f32.gmra.mxu0 %v4702
        %v5313 = vpop.f32.mrf.mxu0
        %v5314 = vadd.f32 %v4825, %v5313
        %v5315 = vpop.f32.mrf.mxu0
        %v5316 = vadd.f32 %v4825, %v5315
        %5317 = vmatprep.mubr.f32.mxu0 %v4705
        %5318 = vmatmul.mubr.f32.gmra.mxu0 %v4704
        %v5319 = vpop.f32.mrf.mxu0
        %v5320 = vadd.f32 %v4830, %v5319
        %v5321 = vpop.f32.mrf.mxu0
        %v5322 = vadd.f32 %v4830, %v5321
        %5323 = vmatprep.mubr.f32.mxu0 %v4707
        %5324 = vmatmul.mubr.f32.gmra.mxu0 %v4706
        %v5325 = vpop.f32.mrf.mxu0
        %v5326 = vadd.f32 %v4835, %v5325
        %v5327 = vpop.f32.mrf.mxu0
        %v5328 = vadd.f32 %v4835, %v5327
        %5329 = vmatprep.mubr.f32.mxu0 %v4709
        %5330 = vmatmul.mubr.f32.gmra.mxu0 %v4708
        %v5331 = vpop.f32.mrf.mxu0
        %v5332 = vadd.f32 %v4840, %v5331
        %v5333 = vpop.f32.mrf.mxu0
        %v5334 = vadd.f32 %v4840, %v5333
        %5335 = vmatprep.mubr.f32.mxu0 %v4711
        %5336 = vmatmul.mubr.f32.gmra.mxu0 %v4710
        %v5337 = vpop.f32.mrf.mxu0
        %v5338 = vadd.f32 %v4845, %v5337
        %v5339 = vpop.f32.mrf.mxu0
        %v5340 = vadd.f32 %v4845, %v5339
        %5341 = vmatprep.mubr.f32.mxu0 %v4713
        %5342 = vmatmul.mubr.f32.gmra.mxu0 %v4712
        %v5343 = vpop.f32.mrf.mxu0
        %v5344 = vadd.f32 %v4850, %v5343
        %v5345 = vpop.f32.mrf.mxu0
        %v5346 = vadd.f32 %v4850, %v5345
        %5347 = vmatprep.mubr.f32.mxu0 %v4715
        %5348 = vmatmul.mubr.f32.gmra.mxu0 %v4714
        %v5349 = vpop.f32.mrf.mxu0
        %v5350 = vadd.f32 %v4855, %v5349
        %v5351 = vpop.f32.mrf.mxu0
        %v5352 = vadd.f32 %v4855, %v5351
        %5353 = vmatprep.mubr.f32.mxu0 %v4717
        %5354 = vmatmul.mubr.f32.gmra.mxu0 %v4716
        %v5355 = vpop.f32.mrf.mxu0
        %v5356 = vadd.f32 %v4860, %v5355
        %v5357 = vpop.f32.mrf.mxu0
        %v5358 = vadd.f32 %v4860, %v5357
        %5359 = vmatprep.mubr.f32.mxu0 %v4719
        %5360 = vmatmul.mubr.f32.gmra.mxu0 %v4718
        %v5361 = vpop.f32.mrf.mxu0
        %v5362 = vadd.f32 %v4865, %v5361
        %v5363 = vpop.f32.mrf.mxu0
        %v5364 = vadd.f32 %v4865, %v5363
        %5365 = vmatprep.mubr.f32.mxu0 %v4721
        %5366 = vmatmul.mubr.f32.gmra.mxu0 %v4720
        %v5367 = vpop.f32.mrf.mxu0
        %v5368 = vadd.f32 %v4870, %v5367
        %v5369 = vpop.f32.mrf.mxu0
        %v5370 = vadd.f32 %v4870, %v5369
        %5371 = vmatprep.mubr.f32.mxu0 %v4723
        %5372 = vmatmul.mubr.f32.gmra.mxu0 %v4722
        %v5373 = vpop.f32.mrf.mxu0
        %v5374 = vadd.f32 %v4875, %v5373
        %v5375 = vpop.f32.mrf.mxu0
        %v5376 = vadd.f32 %v4875, %v5375
        %5377 = vmatprep.mubr.f32.mxu0 %v4725
        %5378 = vmatmul.mubr.f32.gmra.mxu0 %v4724
        %v5379 = vpop.f32.mrf.mxu0
        %v5380 = vadd.f32 %v4880, %v5379
        %v5381 = vpop.f32.mrf.mxu0
        %v5382 = vadd.f32 %v4880, %v5381
        %5383 = vmatprep.mubr.f32.mxu0 %v4727
        %5384 = vmatmul.mubr.f32.gmra.mxu0 %v4726
        %v5385 = vpop.f32.mrf.mxu0
        %v5386 = vadd.f32 %v4885, %v5385
        %v5387 = vpop.f32.mrf.mxu0
        %v5388 = vadd.f32 %v4885, %v5387
        %5389 = vmatprep.mubr.f32.mxu0 %v4729
        %5390 = vmatmul.mubr.f32.gmra.mxu0 %v4728
        %v5391 = vpop.f32.mrf.mxu0
        %v5392 = vadd.f32 %v4890, %v5391
        %v5393 = vpop.f32.mrf.mxu0
        %v5394 = vadd.f32 %v4890, %v5393
        %5395 = vmatprep.mubr.f32.mxu0 %v4731
        %5396 = vmatmul.mubr.f32.gmra.mxu0 %v4730
        %v5397 = vpop.f32.mrf.mxu0
        %v5398 = vadd.f32 %v4895, %v5397
        %v5399 = vpop.f32.mrf.mxu0
        %v5400 = vadd.f32 %v4895, %v5399
        %5401 = vmatprep.mubr.f32.mxu0 %v4733
        %5402 = vmatmul.mubr.f32.gmra.mxu0 %v4732
        %v5403 = vpop.f32.mrf.mxu0
        %v5404 = vadd.f32 %v4900, %v5403
        %v5405 = vpop.f32.mrf.mxu0
        %v5406 = vadd.f32 %v4900, %v5405
        %5407 = vmatprep.mubr.f32.mxu0 %v4735
        %5408 = vmatmul.mubr.f32.gmra.mxu0 %v4734
        %v5409 = vpop.f32.mrf.mxu0
        %v5410 = vadd.f32 %v4905, %v5409
        %v5411 = vpop.f32.mrf.mxu0
        %v5412 = vadd.f32 %v4905, %v5411
        %5413 = vmatprep.mubr.f32.mxu0 %v4737
        %5414 = vmatmul.mubr.f32.gmra.mxu0 %v4736
        %v5415 = vpop.f32.mrf.mxu0
        %v5416 = vadd.f32 %v4910, %v5415
        %v5417 = vpop.f32.mrf.mxu0
        %v5418 = vadd.f32 %v4910, %v5417
        %5419 = vmatprep.mubr.f32.mxu0 %v4739
        %5420 = vmatmul.mubr.f32.gmra.mxu0 %v4738
        %v5421 = vpop.f32.mrf.mxu0
        %v5422 = vadd.f32 %v4915, %v5421
        %v5423 = vpop.f32.mrf.mxu0
        %v5424 = vadd.f32 %v4915, %v5423
        %5425 = vmatprep.mubr.f32.mxu0 %v4741
        %5426 = vmatmul.mubr.f32.gmra.mxu0 %v4740
        %v5427 = vpop.f32.mrf.mxu0
        %v5428 = vadd.f32 %v4920, %v5427
        %v5429 = vpop.f32.mrf.mxu0
        %v5430 = vadd.f32 %v4920, %v5429
        %5431 = vmatprep.mubr.f32.mxu0 %v4743
        %5432 = vmatmul.mubr.f32.gmra.mxu0 %v4742
        %v5433 = vpop.f32.mrf.mxu0
        %v5434 = vadd.f32 %v4925, %v5433
        %v5435 = vpop.f32.mrf.mxu0
        %v5436 = vadd.f32 %v4925, %v5435
        %5437 = vmatprep.mubr.f32.mxu0 %v4745
        %5438 = vmatmul.mubr.f32.gmra.mxu0 %v4744
        %v5439 = vpop.f32.mrf.mxu0
        %v5440 = vadd.f32 %v4930, %v5439
        %v5441 = vpop.f32.mrf.mxu0
        %v5442 = vadd.f32 %v4930, %v5441
        %5443 = vmatprep.mubr.f32.mxu0 %v4747
        %5444 = vmatmul.mubr.f32.gmra.mxu0 %v4746
        %v5445 = vpop.f32.mrf.mxu0
        %v5446 = vadd.f32 %v4935, %v5445
        %v5447 = vpop.f32.mrf.mxu0
        %v5448 = vadd.f32 %v4935, %v5447
        %5449 = vmatprep.mubr.f32.mxu0 %v4749
        %5450 = vmatmul.mubr.f32.gmra.mxu0 %v4748
        %v5451 = vpop.f32.mrf.mxu0
        %v5452 = vadd.f32 %v4940, %v5451
        %v5453 = vpop.f32.mrf.mxu0
        %v5454 = vadd.f32 %v4940, %v5453
        %5455 = vdwg.mxu0
        %v5456 = vmul.f32 %v5009, 0.5
        %v5457 = vmul.f32 %v5011, 0.5
        %v5458 = vmul.f32 %v5266, 0.5
        %v5459 = vmul.f32 %v5268, 0.5
        %v5460 = vmul.f32 %v5015, 0.5
        %v5461 = vmul.f32 %v5017, 0.5
        %v5462 = vmul.f32 %v5272, 0.5
        %v5463 = vmul.f32 %v5274, 0.5
        %v5464 = vmul.f32 %v5021, 0.5
        %v5465 = vmul.f32 %v5023, 0.5
        %v5466 = vmul.f32 %v5278, 0.5
        %v5467 = vmul.f32 %v5280, 0.5
        %v5468 = vmul.f32 %v5027, 0.5
        %v5469 = vmul.f32 %v5029, 0.5
        %v5470 = vmul.f32 %v5284, 0.5
        %v5471 = vmul.f32 %v5286, 0.5
        %v5472 = vmul.f32 %v5033, 0.5
        %v5473 = vmul.f32 %v5035, 0.5
        %v5474 = vmul.f32 %v5290, 0.5
        %v5475 = vmul.f32 %v5292, 0.5
        %v5476 = vmul.f32 %v5039, 0.5
        %v5477 = vmul.f32 %v5041, 0.5
        %v5478 = vmul.f32 %v5296, 0.5
        %v5479 = vmul.f32 %v5298, 0.5
        %v5480 = vmul.f32 %v5045, 0.5
        %v5481 = vmul.f32 %v5047, 0.5
        %v5482 = vmul.f32 %v5302, 0.5
        %v5483 = vmul.f32 %v5304, 0.5
        %v5484 = vmul.f32 %v5051, 0.5
        %v5485 = vmul.f32 %v5053, 0.5
        %v5486 = vmul.f32 %v5308, 0.5
        %v5487 = vmul.f32 %v5310, 0.5
        %v5488 = vmul.f32 %v5057, 0.5
        %v5489 = vmul.f32 %v5059, 0.5
        %v5490 = vmul.f32 %v5314, 0.5
        %v5491 = vmul.f32 %v5316, 0.5
        %v5492 = vmul.f32 %v5063, 0.5
        %v5493 = vmul.f32 %v5065, 0.5
        %v5494 = vmul.f32 %v5320, 0.5
        %v5495 = vmul.f32 %v5322, 0.5
        %v5496 = vmul.f32 %v5069, 0.5
        %v5497 = vmul.f32 %v5071, 0.5
        %v5498 = vmul.f32 %v5326, 0.5
        %v5499 = vmul.f32 %v5328, 0.5
        %v5500 = vmul.f32 %v5075, 0.5
        %v5501 = vmul.f32 %v5077, 0.5
        %v5502 = vmul.f32 %v5332, 0.5
        %v5503 = vmul.f32 %v5334, 0.5
        %v5504 = vmul.f32 %v5081, 0.5
        %v5505 = vmul.f32 %v5083, 0.5
        %v5506 = vmul.f32 %v5338, 0.5
        %v5507 = vmul.f32 %v5340, 0.5
        %v5508 = vmul.f32 %v5087, 0.5
        %v5509 = vmul.f32 %v5089, 0.5
        %v5510 = vmul.f32 %v5344, 0.5
        %v5511 = vmul.f32 %v5346, 0.5
        %v5512 = vmul.f32 %v5093, 0.5
        %v5513 = vmul.f32 %v5095, 0.5
        %v5514 = vmul.f32 %v5350, 0.5
        %v5515 = vmul.f32 %v5352, 0.5
        %v5516 = vmul.f32 %v5099, 0.5
        %v5517 = vmul.f32 %v5101, 0.5
        %v5518 = vmul.f32 %v5356, 0.5
        %v5519 = vmul.f32 %v5358, 0.5
        %v5520 = vmul.f32 %v5105, 0.5
        %v5521 = vmul.f32 %v5107, 0.5
        %v5522 = vmul.f32 %v5362, 0.5
        %v5523 = vmul.f32 %v5364, 0.5
        %v5524 = vmul.f32 %v5111, 0.5
        %v5525 = vmul.f32 %v5113, 0.5
        %v5526 = vmul.f32 %v5368, 0.5
        %v5527 = vmul.f32 %v5370, 0.5
        %v5528 = vmul.f32 %v5117, 0.5
        %v5529 = vmul.f32 %v5119, 0.5
        %v5530 = vmul.f32 %v5374, 0.5
        %v5531 = vmul.f32 %v5376, 0.5
        %v5532 = vmul.f32 %v5123, 0.5
        %v5533 = vmul.f32 %v5125, 0.5
        %v5534 = vmul.f32 %v5380, 0.5
        %v5535 = vmul.f32 %v5382, 0.5
        %v5536 = vmul.f32 %v5129, 0.5
        %v5537 = vmul.f32 %v5131, 0.5
        %v5538 = vmul.f32 %v5386, 0.5
        %v5539 = vmul.f32 %v5388, 0.5
        %v5540 = vmul.f32 %v5135, 0.5
        %v5541 = vmul.f32 %v5137, 0.5
        %v5542 = vmul.f32 %v5392, 0.5
        %v5543 = vmul.f32 %v5394, 0.5
        %v5544 = vmul.f32 %v5141, 0.5
        %v5545 = vmul.f32 %v5143, 0.5
        %v5546 = vmul.f32 %v5398, 0.5
        %v5547 = vmul.f32 %v5400, 0.5
        %v5548 = vmul.f32 %v5147, 0.5
        %v5549 = vmul.f32 %v5149, 0.5
        %v5550 = vmul.f32 %v5404, 0.5
        %v5551 = vmul.f32 %v5406, 0.5
        %v5552 = vmul.f32 %v5153, 0.5
        %v5553 = vmul.f32 %v5155, 0.5
        %v5554 = vmul.f32 %v5410, 0.5
        %v5555 = vmul.f32 %v5412, 0.5
        %v5556 = vmul.f32 %v5159, 0.5
        %v5557 = vmul.f32 %v5161, 0.5
        %v5558 = vmul.f32 %v5416, 0.5
        %v5559 = vmul.f32 %v5418, 0.5
        %v5560 = vmul.f32 %v5165, 0.5
        %v5561 = vmul.f32 %v5167, 0.5
        %v5562 = vmul.f32 %v5422, 0.5
        %v5563 = vmul.f32 %v5424, 0.5
        %v5564 = vmul.f32 %v5171, 0.5
        %v5565 = vmul.f32 %v5173, 0.5
        %v5566 = vmul.f32 %v5428, 0.5
        %v5567 = vmul.f32 %v5430, 0.5
        %v5568 = vmul.f32 %v5177, 0.5
        %v5569 = vmul.f32 %v5179, 0.5
        %v5570 = vmul.f32 %v5434, 0.5
        %v5571 = vmul.f32 %v5436, 0.5
        %v5572 = vmul.f32 %v5183, 0.5
        %v5573 = vmul.f32 %v5185, 0.5
        %v5574 = vmul.f32 %v5440, 0.5
        %v5575 = vmul.f32 %v5442, 0.5
        %v5576 = vmul.f32 %v5189, 0.5
        %v5577 = vmul.f32 %v5191, 0.5
        %v5578 = vmul.f32 %v5446, 0.5
        %v5579 = vmul.f32 %v5448, 0.5
        %v5580 = vmul.f32 %v5195, 0.5
        %v5581 = vmul.f32 %v5197, 0.5
        %v5582 = vmul.f32 %v5452, 0.5
        %v5583 = vmul.f32 %v5454, 0.5
        %v5584 = vmul.f32 %v5009, 0.70710677
        %v5585 = vmul.f32 %v5011, 0.70710677
        %v5586 = vmul.f32 %v5266, 0.70710677
        %v5587 = vmul.f32 %v5268, 0.70710677
        %v5588 = vmul.f32 %v5015, 0.70710677
        %v5589 = vmul.f32 %v5017, 0.70710677
        %v5590 = vmul.f32 %v5272, 0.70710677
        %v5591 = vmul.f32 %v5274, 0.70710677
        %v5592 = vmul.f32 %v5021, 0.70710677
        %v5593 = vmul.f32 %v5023, 0.70710677
        %v5594 = vmul.f32 %v5278, 0.70710677
        %v5595 = vmul.f32 %v5280, 0.70710677
        %v5596 = vmul.f32 %v5027, 0.70710677
        %v5597 = vmul.f32 %v5029, 0.70710677
        %v5598 = vmul.f32 %v5284, 0.70710677
        %v5599 = vmul.f32 %v5286, 0.70710677
        %v5600 = vmul.f32 %v5033, 0.70710677
        %v5601 = vmul.f32 %v5035, 0.70710677
        %v5602 = vmul.f32 %v5290, 0.70710677
        %v5603 = vmul.f32 %v5292, 0.70710677
        %v5604 = vmul.f32 %v5039, 0.70710677
        %v5605 = vmul.f32 %v5041, 0.70710677
        %v5606 = vmul.f32 %v5296, 0.70710677
        %v5607 = vmul.f32 %v5298, 0.70710677
        %v5608 = vmul.f32 %v5045, 0.70710677
        %v5609 = vmul.f32 %v5047, 0.70710677
        %v5610 = vmul.f32 %v5302, 0.70710677
        %v5611 = vmul.f32 %v5304, 0.70710677
        %v5612 = vmul.f32 %v5051, 0.70710677
        %v5613 = vmul.f32 %v5053, 0.70710677
        %v5614 = vmul.f32 %v5308, 0.70710677
        %v5615 = vmul.f32 %v5310, 0.70710677
        %v5616 = vmul.f32 %v5057, 0.70710677
        %v5617 = vmul.f32 %v5059, 0.70710677
        %v5618 = vmul.f32 %v5314, 0.70710677
        %v5619 = vmul.f32 %v5316, 0.70710677
        %v5620 = vmul.f32 %v5063, 0.70710677
        %v5621 = vmul.f32 %v5065, 0.70710677
        %v5622 = vmul.f32 %v5320, 0.70710677
        %v5623 = vmul.f32 %v5322, 0.70710677
        %v5624 = vmul.f32 %v5069, 0.70710677
        %v5625 = vmul.f32 %v5071, 0.70710677
        %v5626 = vmul.f32 %v5326, 0.70710677
        %v5627 = vmul.f32 %v5328, 0.70710677
        %v5628 = vmul.f32 %v5075, 0.70710677
        %v5629 = vmul.f32 %v5077, 0.70710677
        %v5630 = vmul.f32 %v5332, 0.70710677
        %v5631 = vmul.f32 %v5334, 0.70710677
        %v5632 = vmul.f32 %v5081, 0.70710677
        %v5633 = vmul.f32 %v5083, 0.70710677
        %v5634 = vmul.f32 %v5338, 0.70710677
        %v5635 = vmul.f32 %v5340, 0.70710677
        %v5636 = vmul.f32 %v5087, 0.70710677
        %v5637 = vmul.f32 %v5089, 0.70710677
        %v5638 = vmul.f32 %v5344, 0.70710677
        %v5639 = vmul.f32 %v5346, 0.70710677
        %v5640 = vmul.f32 %v5093, 0.70710677
        %v5641 = vmul.f32 %v5095, 0.70710677
        %v5642 = vmul.f32 %v5350, 0.70710677
        %v5643 = vmul.f32 %v5352, 0.70710677
        %v5644 = vmul.f32 %v5099, 0.70710677
        %v5645 = vmul.f32 %v5101, 0.70710677
        %v5646 = vmul.f32 %v5356, 0.70710677
        %v5647 = vmul.f32 %v5358, 0.70710677
        %v5648 = vmul.f32 %v5105, 0.70710677
        %v5649 = vmul.f32 %v5107, 0.70710677
        %v5650 = vmul.f32 %v5362, 0.70710677
        %v5651 = vmul.f32 %v5364, 0.70710677
        %v5652 = vmul.f32 %v5111, 0.70710677
        %v5653 = vmul.f32 %v5113, 0.70710677
        %v5654 = vmul.f32 %v5368, 0.70710677
        %v5655 = vmul.f32 %v5370, 0.70710677
        %v5656 = vmul.f32 %v5117, 0.70710677
        %v5657 = vmul.f32 %v5119, 0.70710677
        %v5658 = vmul.f32 %v5374, 0.70710677
        %v5659 = vmul.f32 %v5376, 0.70710677
        %v5660 = vmul.f32 %v5123, 0.70710677
        %v5661 = vmul.f32 %v5125, 0.70710677
        %v5662 = vmul.f32 %v5380, 0.70710677
        %v5663 = vmul.f32 %v5382, 0.70710677
        %v5664 = vmul.f32 %v5129, 0.70710677
        %v5665 = vmul.f32 %v5131, 0.70710677
        %v5666 = vmul.f32 %v5386, 0.70710677
        %v5667 = vmul.f32 %v5388, 0.70710677
        %v5668 = vmul.f32 %v5135, 0.70710677
        %v5669 = vmul.f32 %v5137, 0.70710677
        %v5670 = vmul.f32 %v5392, 0.70710677
        %v5671 = vmul.f32 %v5394, 0.70710677
        %v5672 = vmul.f32 %v5141, 0.70710677
        %v5673 = vmul.f32 %v5143, 0.70710677
        %v5674 = vmul.f32 %v5398, 0.70710677
        %v5675 = vmul.f32 %v5400, 0.70710677
        %v5676 = vmul.f32 %v5147, 0.70710677
        %v5677 = vmul.f32 %v5149, 0.70710677
        %v5678 = vmul.f32 %v5404, 0.70710677
        %v5679 = vmul.f32 %v5406, 0.70710677
        %v5680 = vmul.f32 %v5153, 0.70710677
        %v5681 = vmul.f32 %v5155, 0.70710677
        %v5682 = vmul.f32 %v5410, 0.70710677
        %v5683 = vmul.f32 %v5412, 0.70710677
        %v5684 = vmul.f32 %v5159, 0.70710677
        %v5685 = vmul.f32 %v5161, 0.70710677
        %v5686 = vmul.f32 %v5416, 0.70710677
        %v5687 = vmul.f32 %v5418, 0.70710677
        %v5688 = vmul.f32 %v5165, 0.70710677
        %v5689 = vmul.f32 %v5167, 0.70710677
        %v5690 = vmul.f32 %v5422, 0.70710677
        %v5691 = vmul.f32 %v5424, 0.70710677
        %v5692 = vmul.f32 %v5171, 0.70710677
        %v5693 = vmul.f32 %v5173, 0.70710677
        %v5694 = vmul.f32 %v5428, 0.70710677
        %v5695 = vmul.f32 %v5430, 0.70710677
        %v5696 = vmul.f32 %v5177, 0.70710677
        %v5697 = vmul.f32 %v5179, 0.70710677
        %v5698 = vmul.f32 %v5434, 0.70710677
        %v5699 = vmul.f32 %v5436, 0.70710677
        %v5700 = vmul.f32 %v5183, 0.70710677
        %v5701 = vmul.f32 %v5185, 0.70710677
        %v5702 = vmul.f32 %v5440, 0.70710677
        %v5703 = vmul.f32 %v5442, 0.70710677
        %v5704 = vmul.f32 %v5189, 0.70710677
        %v5705 = vmul.f32 %v5191, 0.70710677
        %v5706 = vmul.f32 %v5446, 0.70710677
        %v5707 = vmul.f32 %v5448, 0.70710677
        %v5708 = vmul.f32 %v5195, 0.70710677
        %v5709 = vmul.f32 %v5197, 0.70710677
        %v5710 = vmul.f32 %v5452, 0.70710677
        %v5711 = vmul.f32 %v5454, 0.70710677
        %v5712 = vand.u32 2147483647, %v5584
        %v5713 = vand.u32 2147483647, %v5585
        %v5714 = vand.u32 2147483647, %v5586
        %v5715 = vand.u32 2147483647, %v5587
        %v5716 = vand.u32 2147483647, %v5588
        %v5717 = vand.u32 2147483647, %v5589
        %v5718 = vand.u32 2147483647, %v5590
        %v5719 = vand.u32 2147483647, %v5591
        %v5720 = vand.u32 2147483647, %v5592
        %v5721 = vand.u32 2147483647, %v5593
        %v5722 = vand.u32 2147483647, %v5594
        %v5723 = vand.u32 2147483647, %v5595
        %v5724 = vand.u32 2147483647, %v5596
        %v5725 = vand.u32 2147483647, %v5597
        %v5726 = vand.u32 2147483647, %v5598
        %v5727 = vand.u32 2147483647, %v5599
        %v5728 = vand.u32 2147483647, %v5600
        %v5729 = vand.u32 2147483647, %v5601
        %v5730 = vand.u32 2147483647, %v5602
        %v5731 = vand.u32 2147483647, %v5603
        %v5732 = vand.u32 2147483647, %v5604
        %v5733 = vand.u32 2147483647, %v5605
        %v5734 = vand.u32 2147483647, %v5606
        %v5735 = vand.u32 2147483647, %v5607
        %v5736 = vand.u32 2147483647, %v5608
        %v5737 = vand.u32 2147483647, %v5609
        %v5738 = vand.u32 2147483647, %v5610
        %v5739 = vand.u32 2147483647, %v5611
        %v5740 = vand.u32 2147483647, %v5612
        %v5741 = vand.u32 2147483647, %v5613
        %v5742 = vand.u32 2147483647, %v5614
        %v5743 = vand.u32 2147483647, %v5615
        %v5744 = vand.u32 2147483647, %v5616
        %v5745 = vand.u32 2147483647, %v5617
        %v5746 = vand.u32 2147483647, %v5618
        %v5747 = vand.u32 2147483647, %v5619
        %v5748 = vand.u32 2147483647, %v5620
        %v5749 = vand.u32 2147483647, %v5621
        %v5750 = vand.u32 2147483647, %v5622
        %v5751 = vand.u32 2147483647, %v5623
        %v5752 = vand.u32 2147483647, %v5624
        %v5753 = vand.u32 2147483647, %v5625
        %v5754 = vand.u32 2147483647, %v5626
        %v5755 = vand.u32 2147483647, %v5627
        %v5756 = vand.u32 2147483647, %v5628
        %v5757 = vand.u32 2147483647, %v5629
        %v5758 = vand.u32 2147483647, %v5630
        %v5759 = vand.u32 2147483647, %v5631
        %v5760 = vand.u32 2147483647, %v5632
        %v5761 = vand.u32 2147483647, %v5633
        %v5762 = vand.u32 2147483647, %v5634
        %v5763 = vand.u32 2147483647, %v5635
        %v5764 = vand.u32 2147483647, %v5636
        %v5765 = vand.u32 2147483647, %v5637
        %v5766 = vand.u32 2147483647, %v5638
        %v5767 = vand.u32 2147483647, %v5639
        %v5768 = vand.u32 2147483647, %v5640
        %v5769 = vand.u32 2147483647, %v5641
        %v5770 = vand.u32 2147483647, %v5642
        %v5771 = vand.u32 2147483647, %v5643
        %v5772 = vand.u32 2147483647, %v5644
        %v5773 = vand.u32 2147483647, %v5645
        %v5774 = vand.u32 2147483647, %v5646
        %v5775 = vand.u32 2147483647, %v5647
        %v5776 = vand.u32 2147483647, %v5648
        %v5777 = vand.u32 2147483647, %v5649
        %v5778 = vand.u32 2147483647, %v5650
        %v5779 = vand.u32 2147483647, %v5651
        %v5780 = vand.u32 2147483647, %v5652
        %v5781 = vand.u32 2147483647, %v5653
        %v5782 = vand.u32 2147483647, %v5654
        %v5783 = vand.u32 2147483647, %v5655
        %v5784 = vand.u32 2147483647, %v5656
        %v5785 = vand.u32 2147483647, %v5657
        %v5786 = vand.u32 2147483647, %v5658
        %v5787 = vand.u32 2147483647, %v5659
        %v5788 = vand.u32 2147483647, %v5660
        %v5789 = vand.u32 2147483647, %v5661
        %v5790 = vand.u32 2147483647, %v5662
        %v5791 = vand.u32 2147483647, %v5663
        %v5792 = vand.u32 2147483647, %v5664
        %v5793 = vand.u32 2147483647, %v5665
        %v5794 = vand.u32 2147483647, %v5666
        %v5795 = vand.u32 2147483647, %v5667
        %v5796 = vand.u32 2147483647, %v5668
        %v5797 = vand.u32 2147483647, %v5669
        %v5798 = vand.u32 2147483647, %v5670
        %v5799 = vand.u32 2147483647, %v5671
        %v5800 = vand.u32 2147483647, %v5672
        %v5801 = vand.u32 2147483647, %v5673
        %v5802 = vand.u32 2147483647, %v5674
        %v5803 = vand.u32 2147483647, %v5675
        %v5804 = vand.u32 2147483647, %v5676
        %v5805 = vand.u32 2147483647, %v5677
        %v5806 = vand.u32 2147483647, %v5678
        %v5807 = vand.u32 2147483647, %v5679
        %v5808 = vand.u32 2147483647, %v5680
        %v5809 = vand.u32 2147483647, %v5681
        %v5810 = vand.u32 2147483647, %v5682
        %v5811 = vand.u32 2147483647, %v5683
        %v5812 = vand.u32 2147483647, %v5684
        %v5813 = vand.u32 2147483647, %v5685
        %v5814 = vand.u32 2147483647, %v5686
        %v5815 = vand.u32 2147483647, %v5687
        %v5816 = vand.u32 2147483647, %v5688
        %v5817 = vand.u32 2147483647, %v5689
        %v5818 = vand.u32 2147483647, %v5690
        %v5819 = vand.u32 2147483647, %v5691
        %v5820 = vand.u32 2147483647, %v5692
        %v5821 = vand.u32 2147483647, %v5693
        %v5822 = vand.u32 2147483647, %v5694
        %v5823 = vand.u32 2147483647, %v5695
        %v5824 = vand.u32 2147483647, %v5696
        %v5825 = vand.u32 2147483647, %v5697
        %v5826 = vand.u32 2147483647, %v5698
        %v5827 = vand.u32 2147483647, %v5699
        %v5828 = vand.u32 2147483647, %v5700
        %v5829 = vand.u32 2147483647, %v5701
        %v5830 = vand.u32 2147483647, %v5702
        %v5831 = vand.u32 2147483647, %v5703
        %v5832 = vand.u32 2147483647, %v5704
        %v5833 = vand.u32 2147483647, %v5705
        %v5834 = vand.u32 2147483647, %v5706
        %v5835 = vand.u32 2147483647, %v5707
        %v5836 = vand.u32 2147483647, %v5708
        %v5837 = vand.u32 2147483647, %v5709
        %v5838 = vand.u32 2147483647, %v5710
        %v5839 = vand.u32 2147483647, %v5711
        %v5840 = vmul.f32 %v5712, 0.3275911
        %v5841 = vmul.f32 %v5713, 0.3275911
        %v5842 = vmul.f32 %v5714, 0.3275911
        %v5843 = vmul.f32 %v5715, 0.3275911
        %v5844 = vmul.f32 %v5716, 0.3275911
        %v5845 = vmul.f32 %v5717, 0.3275911
        %v5846 = vmul.f32 %v5718, 0.3275911
        %v5847 = vmul.f32 %v5719, 0.3275911
        %v5848 = vmul.f32 %v5720, 0.3275911
        %v5849 = vmul.f32 %v5721, 0.3275911
        %v5850 = vmul.f32 %v5722, 0.3275911
        %v5851 = vmul.f32 %v5723, 0.3275911
        %v5852 = vmul.f32 %v5724, 0.3275911
        %v5853 = vmul.f32 %v5725, 0.3275911
        %v5854 = vmul.f32 %v5726, 0.3275911
        %v5855 = vmul.f32 %v5727, 0.3275911
        %v5856 = vmul.f32 %v5728, 0.3275911
        %v5857 = vmul.f32 %v5729, 0.3275911
        %v5858 = vmul.f32 %v5730, 0.3275911
        %v5859 = vmul.f32 %v5731, 0.3275911
        %v5860 = vmul.f32 %v5732, 0.3275911
        %v5861 = vmul.f32 %v5733, 0.3275911
        %v5862 = vmul.f32 %v5734, 0.3275911
        %v5863 = vmul.f32 %v5735, 0.3275911
        %v5864 = vmul.f32 %v5736, 0.3275911
        %v5865 = vmul.f32 %v5737, 0.3275911
        %v5866 = vmul.f32 %v5738, 0.3275911
        %v5867 = vmul.f32 %v5739, 0.3275911
        %v5868 = vmul.f32 %v5740, 0.3275911
        %v5869 = vmul.f32 %v5741, 0.3275911
        %v5870 = vmul.f32 %v5742, 0.3275911
        %v5871 = vmul.f32 %v5743, 0.3275911
        %v5872 = vmul.f32 %v5744, 0.3275911
        %v5873 = vmul.f32 %v5745, 0.3275911
        %v5874 = vmul.f32 %v5746, 0.3275911
        %v5875 = vmul.f32 %v5747, 0.3275911
        %v5876 = vmul.f32 %v5748, 0.3275911
        %v5877 = vmul.f32 %v5749, 0.3275911
        %v5878 = vmul.f32 %v5750, 0.3275911
        %v5879 = vmul.f32 %v5751, 0.3275911
        %v5880 = vmul.f32 %v5752, 0.3275911
        %v5881 = vmul.f32 %v5753, 0.3275911
        %v5882 = vmul.f32 %v5754, 0.3275911
        %v5883 = vmul.f32 %v5755, 0.3275911
        %v5884 = vmul.f32 %v5756, 0.3275911
        %v5885 = vmul.f32 %v5757, 0.3275911
        %v5886 = vmul.f32 %v5758, 0.3275911
        %v5887 = vmul.f32 %v5759, 0.3275911
        %v5888 = vmul.f32 %v5760, 0.3275911
        %v5889 = vmul.f32 %v5761, 0.3275911
        %v5890 = vmul.f32 %v5762, 0.3275911
        %v5891 = vmul.f32 %v5763, 0.3275911
        %v5892 = vmul.f32 %v5764, 0.3275911
        %v5893 = vmul.f32 %v5765, 0.3275911
        %v5894 = vmul.f32 %v5766, 0.3275911
        %v5895 = vmul.f32 %v5767, 0.3275911
        %v5896 = vmul.f32 %v5768, 0.3275911
        %v5897 = vmul.f32 %v5769, 0.3275911
        %v5898 = vmul.f32 %v5770, 0.3275911
        %v5899 = vmul.f32 %v5771, 0.3275911
        %v5900 = vmul.f32 %v5772, 0.3275911
        %v5901 = vmul.f32 %v5773, 0.3275911
        %v5902 = vmul.f32 %v5774, 0.3275911
        %v5903 = vmul.f32 %v5775, 0.3275911
        %v5904 = vmul.f32 %v5776, 0.3275911
        %v5905 = vmul.f32 %v5777, 0.3275911
        %v5906 = vmul.f32 %v5778, 0.3275911
        %v5907 = vmul.f32 %v5779, 0.3275911
        %v5908 = vmul.f32 %v5780, 0.3275911
        %v5909 = vmul.f32 %v5781, 0.3275911
        %v5910 = vmul.f32 %v5782, 0.3275911
        %v5911 = vmul.f32 %v5783, 0.3275911
        %v5912 = vmul.f32 %v5784, 0.3275911
        %v5913 = vmul.f32 %v5785, 0.3275911
        %v5914 = vmul.f32 %v5786, 0.3275911
        %v5915 = vmul.f32 %v5787, 0.3275911
        %v5916 = vmul.f32 %v5788, 0.3275911
        %v5917 = vmul.f32 %v5789, 0.3275911
        %v5918 = vmul.f32 %v5790, 0.3275911
        %v5919 = vmul.f32 %v5791, 0.3275911
        %v5920 = vmul.f32 %v5792, 0.3275911
        %v5921 = vmul.f32 %v5793, 0.3275911
        %v5922 = vmul.f32 %v5794, 0.3275911
        %v5923 = vmul.f32 %v5795, 0.3275911
        %v5924 = vmul.f32 %v5796, 0.3275911
        %v5925 = vmul.f32 %v5797, 0.3275911
        %v5926 = vmul.f32 %v5798, 0.3275911
        %v5927 = vmul.f32 %v5799, 0.3275911
        %v5928 = vmul.f32 %v5800, 0.3275911
        %v5929 = vmul.f32 %v5801, 0.3275911
        %v5930 = vmul.f32 %v5802, 0.3275911
        %v5931 = vmul.f32 %v5803, 0.3275911
        %v5932 = vmul.f32 %v5804, 0.3275911
        %v5933 = vmul.f32 %v5805, 0.3275911
        %v5934 = vmul.f32 %v5806, 0.3275911
        %v5935 = vmul.f32 %v5807, 0.3275911
        %v5936 = vmul.f32 %v5808, 0.3275911
        %v5937 = vmul.f32 %v5809, 0.3275911
        %v5938 = vmul.f32 %v5810, 0.3275911
        %v5939 = vmul.f32 %v5811, 0.3275911
        %v5940 = vmul.f32 %v5812, 0.3275911
        %v5941 = vmul.f32 %v5813, 0.3275911
        %v5942 = vmul.f32 %v5814, 0.3275911
        %v5943 = vmul.f32 %v5815, 0.3275911
        %v5944 = vmul.f32 %v5816, 0.3275911
        %v5945 = vmul.f32 %v5817, 0.3275911
        %v5946 = vmul.f32 %v5818, 0.3275911
        %v5947 = vmul.f32 %v5819, 0.3275911
        %v5948 = vmul.f32 %v5820, 0.3275911
        %v5949 = vmul.f32 %v5821, 0.3275911
        %v5950 = vmul.f32 %v5822, 0.3275911
        %v5951 = vmul.f32 %v5823, 0.3275911
        %v5952 = vmul.f32 %v5824, 0.3275911
        %v5953 = vmul.f32 %v5825, 0.3275911
        %v5954 = vmul.f32 %v5826, 0.3275911
        %v5955 = vmul.f32 %v5827, 0.3275911
        %v5956 = vmul.f32 %v5828, 0.3275911
        %v5957 = vmul.f32 %v5829, 0.3275911
        %v5958 = vmul.f32 %v5830, 0.3275911
        %v5959 = vmul.f32 %v5831, 0.3275911
        %v5960 = vmul.f32 %v5832, 0.3275911
        %v5961 = vmul.f32 %v5833, 0.3275911
        %v5962 = vmul.f32 %v5834, 0.3275911
        %v5963 = vmul.f32 %v5835, 0.3275911
        %v5964 = vmul.f32 %v5836, 0.3275911
        %v5965 = vmul.f32 %v5837, 0.3275911
        %v5966 = vmul.f32 %v5838, 0.3275911
        %v5967 = vmul.f32 %v5839, 0.3275911
        %v5968 = vadd.f32 %v5840, 1.0
        %v5969 = vadd.f32 %v5841, 1.0
        %v5970 = vadd.f32 %v5842, 1.0
        %v5971 = vadd.f32 %v5843, 1.0
        %v5972 = vadd.f32 %v5844, 1.0
        %v5973 = vadd.f32 %v5845, 1.0
        %v5974 = vadd.f32 %v5846, 1.0
        %v5975 = vadd.f32 %v5847, 1.0
        %v5976 = vadd.f32 %v5848, 1.0
        %v5977 = vadd.f32 %v5849, 1.0
        %v5978 = vadd.f32 %v5850, 1.0
        %v5979 = vadd.f32 %v5851, 1.0
        %v5980 = vadd.f32 %v5852, 1.0
        %v5981 = vadd.f32 %v5853, 1.0
        %v5982 = vadd.f32 %v5854, 1.0
        %v5983 = vadd.f32 %v5855, 1.0
        %v5984 = vadd.f32 %v5856, 1.0
        %v5985 = vadd.f32 %v5857, 1.0
        %v5986 = vadd.f32 %v5858, 1.0
        %v5987 = vadd.f32 %v5859, 1.0
        %v5988 = vadd.f32 %v5860, 1.0
        %v5989 = vadd.f32 %v5861, 1.0
        %v5990 = vadd.f32 %v5862, 1.0
        %v5991 = vadd.f32 %v5863, 1.0
        %v5992 = vadd.f32 %v5864, 1.0
        %v5993 = vadd.f32 %v5865, 1.0
        %v5994 = vadd.f32 %v5866, 1.0
        %v5995 = vadd.f32 %v5867, 1.0
        %v5996 = vadd.f32 %v5868, 1.0
        %v5997 = vadd.f32 %v5869, 1.0
        %v5998 = vadd.f32 %v5870, 1.0
        %v5999 = vadd.f32 %v5871, 1.0
        %v6000 = vadd.f32 %v5872, 1.0
        %v6001 = vadd.f32 %v5873, 1.0
        %v6002 = vadd.f32 %v5874, 1.0
        %v6003 = vadd.f32 %v5875, 1.0
        %v6004 = vadd.f32 %v5876, 1.0
        %v6005 = vadd.f32 %v5877, 1.0
        %v6006 = vadd.f32 %v5878, 1.0
        %v6007 = vadd.f32 %v5879, 1.0
        %v6008 = vadd.f32 %v5880, 1.0
        %v6009 = vadd.f32 %v5881, 1.0
        %v6010 = vadd.f32 %v5882, 1.0
        %v6011 = vadd.f32 %v5883, 1.0
        %v6012 = vadd.f32 %v5884, 1.0
        %v6013 = vadd.f32 %v5885, 1.0
        %v6014 = vadd.f32 %v5886, 1.0
        %v6015 = vadd.f32 %v5887, 1.0
        %v6016 = vadd.f32 %v5888, 1.0
        %v6017 = vadd.f32 %v5889, 1.0
        %v6018 = vadd.f32 %v5890, 1.0
        %v6019 = vadd.f32 %v5891, 1.0
        %v6020 = vadd.f32 %v5892, 1.0
        %v6021 = vadd.f32 %v5893, 1.0
        %v6022 = vadd.f32 %v5894, 1.0
        %v6023 = vadd.f32 %v5895, 1.0
        %v6024 = vadd.f32 %v5896, 1.0
        %v6025 = vadd.f32 %v5897, 1.0
        %v6026 = vadd.f32 %v5898, 1.0
        %v6027 = vadd.f32 %v5899, 1.0
        %v6028 = vadd.f32 %v5900, 1.0
        %v6029 = vadd.f32 %v5901, 1.0
        %v6030 = vadd.f32 %v5902, 1.0
        %v6031 = vadd.f32 %v5903, 1.0
        %v6032 = vadd.f32 %v5904, 1.0
        %v6033 = vadd.f32 %v5905, 1.0
        %v6034 = vadd.f32 %v5906, 1.0
        %v6035 = vadd.f32 %v5907, 1.0
        %v6036 = vadd.f32 %v5908, 1.0
        %v6037 = vadd.f32 %v5909, 1.0
        %v6038 = vadd.f32 %v5910, 1.0
        %v6039 = vadd.f32 %v5911, 1.0
        %v6040 = vadd.f32 %v5912, 1.0
        %v6041 = vadd.f32 %v5913, 1.0
        %v6042 = vadd.f32 %v5914, 1.0
        %v6043 = vadd.f32 %v5915, 1.0
        %v6044 = vadd.f32 %v5916, 1.0
        %v6045 = vadd.f32 %v5917, 1.0
        %v6046 = vadd.f32 %v5918, 1.0
        %v6047 = vadd.f32 %v5919, 1.0
        %v6048 = vadd.f32 %v5920, 1.0
        %v6049 = vadd.f32 %v5921, 1.0
        %v6050 = vadd.f32 %v5922, 1.0
        %v6051 = vadd.f32 %v5923, 1.0
        %v6052 = vadd.f32 %v5924, 1.0
        %v6053 = vadd.f32 %v5925, 1.0
        %v6054 = vadd.f32 %v5926, 1.0
        %v6055 = vadd.f32 %v5927, 1.0
        %v6056 = vadd.f32 %v5928, 1.0
        %v6057 = vadd.f32 %v5929, 1.0
        %v6058 = vadd.f32 %v5930, 1.0
        %v6059 = vadd.f32 %v5931, 1.0
        %v6060 = vadd.f32 %v5932, 1.0
        %v6061 = vadd.f32 %v5933, 1.0
        %v6062 = vadd.f32 %v5934, 1.0
        %v6063 = vadd.f32 %v5935, 1.0
        %v6064 = vadd.f32 %v5936, 1.0
        %v6065 = vadd.f32 %v5937, 1.0
        %v6066 = vadd.f32 %v5938, 1.0
        %v6067 = vadd.f32 %v5939, 1.0
        %v6068 = vadd.f32 %v5940, 1.0
        %v6069 = vadd.f32 %v5941, 1.0
        %v6070 = vadd.f32 %v5942, 1.0
        %v6071 = vadd.f32 %v5943, 1.0
        %v6072 = vadd.f32 %v5944, 1.0
        %v6073 = vadd.f32 %v5945, 1.0
        %v6074 = vadd.f32 %v5946, 1.0
        %v6075 = vadd.f32 %v5947, 1.0
        %v6076 = vadd.f32 %v5948, 1.0
        %v6077 = vadd.f32 %v5949, 1.0
        %v6078 = vadd.f32 %v5950, 1.0
        %v6079 = vadd.f32 %v5951, 1.0
        %v6080 = vadd.f32 %v5952, 1.0
        %v6081 = vadd.f32 %v5953, 1.0
        %v6082 = vadd.f32 %v5954, 1.0
        %v6083 = vadd.f32 %v5955, 1.0
        %v6084 = vadd.f32 %v5956, 1.0
        %v6085 = vadd.f32 %v5957, 1.0
        %v6086 = vadd.f32 %v5958, 1.0
        %v6087 = vadd.f32 %v5959, 1.0
        %v6088 = vadd.f32 %v5960, 1.0
        %v6089 = vadd.f32 %v5961, 1.0
        %v6090 = vadd.f32 %v5962, 1.0
        %v6091 = vadd.f32 %v5963, 1.0
        %v6092 = vadd.f32 %v5964, 1.0
        %v6093 = vadd.f32 %v5965, 1.0
        %v6094 = vadd.f32 %v5966, 1.0
        %v6095 = vadd.f32 %v5967, 1.0
        %v6096 = vrcp.pop %v5968
        %v6097 = vmul.f32 1.0, %v6096
        %v6098 = vrcp.pop %v5969
        %v6099 = vmul.f32 1.0, %v6098
        %v6100 = vrcp.pop %v5970
        %v6101 = vmul.f32 1.0, %v6100
        %v6102 = vrcp.pop %v5971
        %v6103 = vmul.f32 1.0, %v6102
        %v6104 = vrcp.pop %v5972
        %v6105 = vmul.f32 1.0, %v6104
        %v6106 = vrcp.pop %v5973
        %v6107 = vmul.f32 1.0, %v6106
        %v6108 = vrcp.pop %v5974
        %v6109 = vmul.f32 1.0, %v6108
        %v6110 = vrcp.pop %v5975
        %v6111 = vmul.f32 1.0, %v6110
        %v6112 = vrcp.pop %v5976
        %v6113 = vmul.f32 1.0, %v6112
        %v6114 = vrcp.pop %v5977
        %v6115 = vmul.f32 1.0, %v6114
        %v6116 = vrcp.pop %v5978
        %v6117 = vmul.f32 1.0, %v6116
        %v6118 = vrcp.pop %v5979
        %v6119 = vmul.f32 1.0, %v6118
        %v6120 = vrcp.pop %v5980
        %v6121 = vmul.f32 1.0, %v6120
        %v6122 = vrcp.pop %v5981
        %v6123 = vmul.f32 1.0, %v6122
        %v6124 = vrcp.pop %v5982
        %v6125 = vmul.f32 1.0, %v6124
        %v6126 = vrcp.pop %v5983
        %v6127 = vmul.f32 1.0, %v6126
        %v6128 = vrcp.pop %v5984
        %v6129 = vmul.f32 1.0, %v6128
        %v6130 = vrcp.pop %v5985
        %v6131 = vmul.f32 1.0, %v6130
        %v6132 = vrcp.pop %v5986
        %v6133 = vmul.f32 1.0, %v6132
        %v6134 = vrcp.pop %v5987
        %v6135 = vmul.f32 1.0, %v6134
        %v6136 = vrcp.pop %v5988
        %v6137 = vmul.f32 1.0, %v6136
        %v6138 = vrcp.pop %v5989
        %v6139 = vmul.f32 1.0, %v6138
        %v6140 = vrcp.pop %v5990
        %v6141 = vmul.f32 1.0, %v6140
        %v6142 = vrcp.pop %v5991
        %v6143 = vmul.f32 1.0, %v6142
        %v6144 = vrcp.pop %v5992
        %v6145 = vmul.f32 1.0, %v6144
        %v6146 = vrcp.pop %v5993
        %v6147 = vmul.f32 1.0, %v6146
        %v6148 = vrcp.pop %v5994
        %v6149 = vmul.f32 1.0, %v6148
        %v6150 = vrcp.pop %v5995
        %v6151 = vmul.f32 1.0, %v6150
        %v6152 = vrcp.pop %v5996
        %v6153 = vmul.f32 1.0, %v6152
        %v6154 = vrcp.pop %v5997
        %v6155 = vmul.f32 1.0, %v6154
        %v6156 = vrcp.pop %v5998
        %v6157 = vmul.f32 1.0, %v6156
        %v6158 = vrcp.pop %v5999
        %v6159 = vmul.f32 1.0, %v6158
        %v6160 = vrcp.pop %v6000
        %v6161 = vmul.f32 1.0, %v6160
        %v6162 = vrcp.pop %v6001
        %v6163 = vmul.f32 1.0, %v6162
        %v6164 = vrcp.pop %v6002
        %v6165 = vmul.f32 1.0, %v6164
        %v6166 = vrcp.pop %v6003
        %v6167 = vmul.f32 1.0, %v6166
        %v6168 = vrcp.pop %v6004
        %v6169 = vmul.f32 1.0, %v6168
        %v6170 = vrcp.pop %v6005
        %v6171 = vmul.f32 1.0, %v6170
        %v6172 = vrcp.pop %v6006
        %v6173 = vmul.f32 1.0, %v6172
        %v6174 = vrcp.pop %v6007
        %v6175 = vmul.f32 1.0, %v6174
        %v6176 = vrcp.pop %v6008
        %v6177 = vmul.f32 1.0, %v6176
        %v6178 = vrcp.pop %v6009
        %v6179 = vmul.f32 1.0, %v6178
        %v6180 = vrcp.pop %v6010
        %v6181 = vmul.f32 1.0, %v6180
        %v6182 = vrcp.pop %v6011
        %v6183 = vmul.f32 1.0, %v6182
        %v6184 = vrcp.pop %v6012
        %v6185 = vmul.f32 1.0, %v6184
        %v6186 = vrcp.pop %v6013
        %v6187 = vmul.f32 1.0, %v6186
        %v6188 = vrcp.pop %v6014
        %v6189 = vmul.f32 1.0, %v6188
        %v6190 = vrcp.pop %v6015
        %v6191 = vmul.f32 1.0, %v6190
        %v6192 = vrcp.pop %v6016
        %v6193 = vmul.f32 1.0, %v6192
        %v6194 = vrcp.pop %v6017
        %v6195 = vmul.f32 1.0, %v6194
        %v6196 = vrcp.pop %v6018
        %v6197 = vmul.f32 1.0, %v6196
        %v6198 = vrcp.pop %v6019
        %v6199 = vmul.f32 1.0, %v6198
        %v6200 = vrcp.pop %v6020
        %v6201 = vmul.f32 1.0, %v6200
        %v6202 = vrcp.pop %v6021
        %v6203 = vmul.f32 1.0, %v6202
        %v6204 = vrcp.pop %v6022
        %v6205 = vmul.f32 1.0, %v6204
        %v6206 = vrcp.pop %v6023
        %v6207 = vmul.f32 1.0, %v6206
        %v6208 = vrcp.pop %v6024
        %v6209 = vmul.f32 1.0, %v6208
        %v6210 = vrcp.pop %v6025
        %v6211 = vmul.f32 1.0, %v6210
        %v6212 = vrcp.pop %v6026
        %v6213 = vmul.f32 1.0, %v6212
        %v6214 = vrcp.pop %v6027
        %v6215 = vmul.f32 1.0, %v6214
        %v6216 = vrcp.pop %v6028
        %v6217 = vmul.f32 1.0, %v6216
        %v6218 = vrcp.pop %v6029
        %v6219 = vmul.f32 1.0, %v6218
        %v6220 = vrcp.pop %v6030
        %v6221 = vmul.f32 1.0, %v6220
        %v6222 = vrcp.pop %v6031
        %v6223 = vmul.f32 1.0, %v6222
        %v6224 = vrcp.pop %v6032
        %v6225 = vmul.f32 1.0, %v6224
        %v6226 = vrcp.pop %v6033
        %v6227 = vmul.f32 1.0, %v6226
        %v6228 = vrcp.pop %v6034
        %v6229 = vmul.f32 1.0, %v6228
        %v6230 = vrcp.pop %v6035
        %v6231 = vmul.f32 1.0, %v6230
        %v6232 = vrcp.pop %v6036
        %v6233 = vmul.f32 1.0, %v6232
        %v6234 = vrcp.pop %v6037
        %v6235 = vmul.f32 1.0, %v6234
        %v6236 = vrcp.pop %v6038
        %v6237 = vmul.f32 1.0, %v6236
        %v6238 = vrcp.pop %v6039
        %v6239 = vmul.f32 1.0, %v6238
        %v6240 = vrcp.pop %v6040
        %v6241 = vmul.f32 1.0, %v6240
        %v6242 = vrcp.pop %v6041
        %v6243 = vmul.f32 1.0, %v6242
        %v6244 = vrcp.pop %v6042
        %v6245 = vmul.f32 1.0, %v6244
        %v6246 = vrcp.pop %v6043
        %v6247 = vmul.f32 1.0, %v6246
        %v6248 = vrcp.pop %v6044
        %v6249 = vmul.f32 1.0, %v6248
        %v6250 = vrcp.pop %v6045
        %v6251 = vmul.f32 1.0, %v6250
        %v6252 = vrcp.pop %v6046
        %v6253 = vmul.f32 1.0, %v6252
        %v6254 = vrcp.pop %v6047
        %v6255 = vmul.f32 1.0, %v6254
        %v6256 = vrcp.pop %v6048
        %v6257 = vmul.f32 1.0, %v6256
        %v6258 = vrcp.pop %v6049
        %v6259 = vmul.f32 1.0, %v6258
        %v6260 = vrcp.pop %v6050
        %v6261 = vmul.f32 1.0, %v6260
        %v6262 = vrcp.pop %v6051
        %v6263 = vmul.f32 1.0, %v6262
        %v6264 = vrcp.pop %v6052
        %v6265 = vmul.f32 1.0, %v6264
        %v6266 = vrcp.pop %v6053
        %v6267 = vmul.f32 1.0, %v6266
        %v6268 = vrcp.pop %v6054
        %v6269 = vmul.f32 1.0, %v6268
        %v6270 = vrcp.pop %v6055
        %v6271 = vmul.f32 1.0, %v6270
        %v6272 = vrcp.pop %v6056
        %v6273 = vmul.f32 1.0, %v6272
        %v6274 = vrcp.pop %v6057
        %v6275 = vmul.f32 1.0, %v6274
        %v6276 = vrcp.pop %v6058
        %v6277 = vmul.f32 1.0, %v6276
        %v6278 = vrcp.pop %v6059
        %v6279 = vmul.f32 1.0, %v6278
        %v6280 = vrcp.pop %v6060
        %v6281 = vmul.f32 1.0, %v6280
        %v6282 = vrcp.pop %v6061
        %v6283 = vmul.f32 1.0, %v6282
        %v6284 = vrcp.pop %v6062
        %v6285 = vmul.f32 1.0, %v6284
        %v6286 = vrcp.pop %v6063
        %v6287 = vmul.f32 1.0, %v6286
        %v6288 = vrcp.pop %v6064
        %v6289 = vmul.f32 1.0, %v6288
        %v6290 = vrcp.pop %v6065
        %v6291 = vmul.f32 1.0, %v6290
        %v6292 = vrcp.pop %v6066
        %v6293 = vmul.f32 1.0, %v6292
        %v6294 = vrcp.pop %v6067
        %v6295 = vmul.f32 1.0, %v6294
        %v6296 = vrcp.pop %v6068
        %v6297 = vmul.f32 1.0, %v6296
        %v6298 = vrcp.pop %v6069
        %v6299 = vmul.f32 1.0, %v6298
        %v6300 = vrcp.pop %v6070
        %v6301 = vmul.f32 1.0, %v6300
        %v6302 = vrcp.pop %v6071
        %v6303 = vmul.f32 1.0, %v6302
        %v6304 = vrcp.pop %v6072
        %v6305 = vmul.f32 1.0, %v6304
        %v6306 = vrcp.pop %v6073
        %v6307 = vmul.f32 1.0, %v6306
        %v6308 = vrcp.pop %v6074
        %v6309 = vmul.f32 1.0, %v6308
        %v6310 = vrcp.pop %v6075
        %v6311 = vmul.f32 1.0, %v6310
        %v6312 = vrcp.pop %v6076
        %v6313 = vmul.f32 1.0, %v6312
        %v6314 = vrcp.pop %v6077
        %v6315 = vmul.f32 1.0, %v6314
        %v6316 = vrcp.pop %v6078
        %v6317 = vmul.f32 1.0, %v6316
        %v6318 = vrcp.pop %v6079
        %v6319 = vmul.f32 1.0, %v6318
        %v6320 = vrcp.pop %v6080
        %v6321 = vmul.f32 1.0, %v6320
        %v6322 = vrcp.pop %v6081
        %v6323 = vmul.f32 1.0, %v6322
        %v6324 = vrcp.pop %v6082
        %v6325 = vmul.f32 1.0, %v6324
        %v6326 = vrcp.pop %v6083
        %v6327 = vmul.f32 1.0, %v6326
        %v6328 = vrcp.pop %v6084
        %v6329 = vmul.f32 1.0, %v6328
        %v6330 = vrcp.pop %v6085
        %v6331 = vmul.f32 1.0, %v6330
        %v6332 = vrcp.pop %v6086
        %v6333 = vmul.f32 1.0, %v6332
        %v6334 = vrcp.pop %v6087
        %v6335 = vmul.f32 1.0, %v6334
        %v6336 = vrcp.pop %v6088
        %v6337 = vmul.f32 1.0, %v6336
        %v6338 = vrcp.pop %v6089
        %v6339 = vmul.f32 1.0, %v6338
        %v6340 = vrcp.pop %v6090
        %v6341 = vmul.f32 1.0, %v6340
        %v6342 = vrcp.pop %v6091
        %v6343 = vmul.f32 1.0, %v6342
        %v6344 = vrcp.pop %v6092
        %v6345 = vmul.f32 1.0, %v6344
        %v6346 = vrcp.pop %v6093
        %v6347 = vmul.f32 1.0, %v6346
        %v6348 = vrcp.pop %v6094
        %v6349 = vmul.f32 1.0, %v6348
        %v6350 = vrcp.pop %v6095
        %v6351 = vmul.f32 1.0, %v6350
        %v6352 = vmul.f32 %v6097, 1.0614054
        %v6353 = vmul.f32 %v6099, 1.0614054
        %v6354 = vmul.f32 %v6101, 1.0614054
        %v6355 = vmul.f32 %v6103, 1.0614054
        %v6356 = vmul.f32 %v6105, 1.0614054
        %v6357 = vmul.f32 %v6107, 1.0614054
        %v6358 = vmul.f32 %v6109, 1.0614054
        %v6359 = vmul.f32 %v6111, 1.0614054
        %v6360 = vmul.f32 %v6113, 1.0614054
        %v6361 = vmul.f32 %v6115, 1.0614054
        %v6362 = vmul.f32 %v6117, 1.0614054
        %v6363 = vmul.f32 %v6119, 1.0614054
        %v6364 = vmul.f32 %v6121, 1.0614054
        %v6365 = vmul.f32 %v6123, 1.0614054
        %v6366 = vmul.f32 %v6125, 1.0614054
        %v6367 = vmul.f32 %v6127, 1.0614054
        %v6368 = vmul.f32 %v6129, 1.0614054
        %v6369 = vmul.f32 %v6131, 1.0614054
        %v6370 = vmul.f32 %v6133, 1.0614054
        %v6371 = vmul.f32 %v6135, 1.0614054
        %v6372 = vmul.f32 %v6137, 1.0614054
        %v6373 = vmul.f32 %v6139, 1.0614054
        %v6374 = vmul.f32 %v6141, 1.0614054
        %v6375 = vmul.f32 %v6143, 1.0614054
        %v6376 = vmul.f32 %v6145, 1.0614054
        %v6377 = vmul.f32 %v6147, 1.0614054
        %v6378 = vmul.f32 %v6149, 1.0614054
        %v6379 = vmul.f32 %v6151, 1.0614054
        %v6380 = vmul.f32 %v6153, 1.0614054
        %v6381 = vmul.f32 %v6155, 1.0614054
        %v6382 = vmul.f32 %v6157, 1.0614054
        %v6383 = vmul.f32 %v6159, 1.0614054
        %v6384 = vmul.f32 %v6161, 1.0614054
        %v6385 = vmul.f32 %v6163, 1.0614054
        %v6386 = vmul.f32 %v6165, 1.0614054
        %v6387 = vmul.f32 %v6167, 1.0614054
        %v6388 = vmul.f32 %v6169, 1.0614054
        %v6389 = vmul.f32 %v6171, 1.0614054
        %v6390 = vmul.f32 %v6173, 1.0614054
        %v6391 = vmul.f32 %v6175, 1.0614054
        %v6392 = vmul.f32 %v6177, 1.0614054
        %v6393 = vmul.f32 %v6179, 1.0614054
        %v6394 = vmul.f32 %v6181, 1.0614054
        %v6395 = vmul.f32 %v6183, 1.0614054
        %v6396 = vmul.f32 %v6185, 1.0614054
        %v6397 = vmul.f32 %v6187, 1.0614054
        %v6398 = vmul.f32 %v6189, 1.0614054
        %v6399 = vmul.f32 %v6191, 1.0614054
        %v6400 = vmul.f32 %v6193, 1.0614054
        %v6401 = vmul.f32 %v6195, 1.0614054
        %v6402 = vmul.f32 %v6197, 1.0614054
        %v6403 = vmul.f32 %v6199, 1.0614054
        %v6404 = vmul.f32 %v6201, 1.0614054
        %v6405 = vmul.f32 %v6203, 1.0614054
        %v6406 = vmul.f32 %v6205, 1.0614054
        %v6407 = vmul.f32 %v6207, 1.0614054
        %v6408 = vmul.f32 %v6209, 1.0614054
        %v6409 = vmul.f32 %v6211, 1.0614054
        %v6410 = vmul.f32 %v6213, 1.0614054
        %v6411 = vmul.f32 %v6215, 1.0614054
        %v6412 = vmul.f32 %v6217, 1.0614054
        %v6413 = vmul.f32 %v6219, 1.0614054
        %v6414 = vmul.f32 %v6221, 1.0614054
        %v6415 = vmul.f32 %v6223, 1.0614054
        %v6416 = vmul.f32 %v6225, 1.0614054
        %v6417 = vmul.f32 %v6227, 1.0614054
        %v6418 = vmul.f32 %v6229, 1.0614054
        %v6419 = vmul.f32 %v6231, 1.0614054
        %v6420 = vmul.f32 %v6233, 1.0614054
        %v6421 = vmul.f32 %v6235, 1.0614054
        %v6422 = vmul.f32 %v6237, 1.0614054
        %v6423 = vmul.f32 %v6239, 1.0614054
        %v6424 = vmul.f32 %v6241, 1.0614054
        %v6425 = vmul.f32 %v6243, 1.0614054
        %v6426 = vmul.f32 %v6245, 1.0614054
        %v6427 = vmul.f32 %v6247, 1.0614054
        %v6428 = vmul.f32 %v6249, 1.0614054
        %v6429 = vmul.f32 %v6251, 1.0614054
        %v6430 = vmul.f32 %v6253, 1.0614054
        %v6431 = vmul.f32 %v6255, 1.0614054
        %v6432 = vmul.f32 %v6257, 1.0614054
        %v6433 = vmul.f32 %v6259, 1.0614054
        %v6434 = vmul.f32 %v6261, 1.0614054
        %v6435 = vmul.f32 %v6263, 1.0614054
        %v6436 = vmul.f32 %v6265, 1.0614054
        %v6437 = vmul.f32 %v6267, 1.0614054
        %v6438 = vmul.f32 %v6269, 1.0614054
        %v6439 = vmul.f32 %v6271, 1.0614054
        %v6440 = vmul.f32 %v6273, 1.0614054
        %v6441 = vmul.f32 %v6275, 1.0614054
        %v6442 = vmul.f32 %v6277, 1.0614054
        %v6443 = vmul.f32 %v6279, 1.0614054
        %v6444 = vmul.f32 %v6281, 1.0614054
        %v6445 = vmul.f32 %v6283, 1.0614054
        %v6446 = vmul.f32 %v6285, 1.0614054
        %v6447 = vmul.f32 %v6287, 1.0614054
        %v6448 = vmul.f32 %v6289, 1.0614054
        %v6449 = vmul.f32 %v6291, 1.0614054
        %v6450 = vmul.f32 %v6293, 1.0614054
        %v6451 = vmul.f32 %v6295, 1.0614054
        %v6452 = vmul.f32 %v6297, 1.0614054
        %v6453 = vmul.f32 %v6299, 1.0614054
        %v6454 = vmul.f32 %v6301, 1.0614054
        %v6455 = vmul.f32 %v6303, 1.0614054
        %v6456 = vmul.f32 %v6305, 1.0614054
        %v6457 = vmul.f32 %v6307, 1.0614054
        %v6458 = vmul.f32 %v6309, 1.0614054
        %v6459 = vmul.f32 %v6311, 1.0614054
        %v6460 = vmul.f32 %v6313, 1.0614054
        %v6461 = vmul.f32 %v6315, 1.0614054
        %v6462 = vmul.f32 %v6317, 1.0614054
        %v6463 = vmul.f32 %v6319, 1.0614054
        %v6464 = vmul.f32 %v6321, 1.0614054
        %v6465 = vmul.f32 %v6323, 1.0614054
        %v6466 = vmul.f32 %v6325, 1.0614054
        %v6467 = vmul.f32 %v6327, 1.0614054
        %v6468 = vmul.f32 %v6329, 1.0614054
        %v6469 = vmul.f32 %v6331, 1.0614054
        %v6470 = vmul.f32 %v6333, 1.0614054
        %v6471 = vmul.f32 %v6335, 1.0614054
        %v6472 = vmul.f32 %v6337, 1.0614054
        %v6473 = vmul.f32 %v6339, 1.0614054
        %v6474 = vmul.f32 %v6341, 1.0614054
        %v6475 = vmul.f32 %v6343, 1.0614054
        %v6476 = vmul.f32 %v6345, 1.0614054
        %v6477 = vmul.f32 %v6347, 1.0614054
        %v6478 = vmul.f32 %v6349, 1.0614054
        %v6479 = vmul.f32 %v6351, 1.0614054
        %v6480 = vadd.f32 %v6352, -1.4531521
        %v6481 = vadd.f32 %v6353, -1.4531521
        %v6482 = vadd.f32 %v6354, -1.4531521
        %v6483 = vadd.f32 %v6355, -1.4531521
        %v6484 = vadd.f32 %v6356, -1.4531521
        %v6485 = vadd.f32 %v6357, -1.4531521
        %v6486 = vadd.f32 %v6358, -1.4531521
        %v6487 = vadd.f32 %v6359, -1.4531521
        %v6488 = vadd.f32 %v6360, -1.4531521
        %v6489 = vadd.f32 %v6361, -1.4531521
        %v6490 = vadd.f32 %v6362, -1.4531521
        %v6491 = vadd.f32 %v6363, -1.4531521
        %v6492 = vadd.f32 %v6364, -1.4531521
        %v6493 = vadd.f32 %v6365, -1.4531521
        %v6494 = vadd.f32 %v6366, -1.4531521
        %v6495 = vadd.f32 %v6367, -1.4531521
        %v6496 = vadd.f32 %v6368, -1.4531521
        %v6497 = vadd.f32 %v6369, -1.4531521
        %v6498 = vadd.f32 %v6370, -1.4531521
        %v6499 = vadd.f32 %v6371, -1.4531521
        %v6500 = vadd.f32 %v6372, -1.4531521
        %v6501 = vadd.f32 %v6373, -1.4531521
        %v6502 = vadd.f32 %v6374, -1.4531521
        %v6503 = vadd.f32 %v6375, -1.4531521
        %v6504 = vadd.f32 %v6376, -1.4531521
        %v6505 = vadd.f32 %v6377, -1.4531521
        %v6506 = vadd.f32 %v6378, -1.4531521
        %v6507 = vadd.f32 %v6379, -1.4531521
        %v6508 = vadd.f32 %v6380, -1.4531521
        %v6509 = vadd.f32 %v6381, -1.4531521
        %v6510 = vadd.f32 %v6382, -1.4531521
        %v6511 = vadd.f32 %v6383, -1.4531521
        %v6512 = vadd.f32 %v6384, -1.4531521
        %v6513 = vadd.f32 %v6385, -1.4531521
        %v6514 = vadd.f32 %v6386, -1.4531521
        %v6515 = vadd.f32 %v6387, -1.4531521
        %v6516 = vadd.f32 %v6388, -1.4531521
        %v6517 = vadd.f32 %v6389, -1.4531521
        %v6518 = vadd.f32 %v6390, -1.4531521
        %v6519 = vadd.f32 %v6391, -1.4531521
        %v6520 = vadd.f32 %v6392, -1.4531521
        %v6521 = vadd.f32 %v6393, -1.4531521
        %v6522 = vadd.f32 %v6394, -1.4531521
        %v6523 = vadd.f32 %v6395, -1.4531521
        %v6524 = vadd.f32 %v6396, -1.4531521
        %v6525 = vadd.f32 %v6397, -1.4531521
        %v6526 = vadd.f32 %v6398, -1.4531521
        %v6527 = vadd.f32 %v6399, -1.4531521
        %v6528 = vadd.f32 %v6400, -1.4531521
        %v6529 = vadd.f32 %v6401, -1.4531521
        %v6530 = vadd.f32 %v6402, -1.4531521
        %v6531 = vadd.f32 %v6403, -1.4531521
        %v6532 = vadd.f32 %v6404, -1.4531521
        %v6533 = vadd.f32 %v6405, -1.4531521
        %v6534 = vadd.f32 %v6406, -1.4531521
        %v6535 = vadd.f32 %v6407, -1.4531521
        %v6536 = vadd.f32 %v6408, -1.4531521
        %v6537 = vadd.f32 %v6409, -1.4531521
        %v6538 = vadd.f32 %v6410, -1.4531521
        %v6539 = vadd.f32 %v6411, -1.4531521
        %v6540 = vadd.f32 %v6412, -1.4531521
        %v6541 = vadd.f32 %v6413, -1.4531521
        %v6542 = vadd.f32 %v6414, -1.4531521
        %v6543 = vadd.f32 %v6415, -1.4531521
        %v6544 = vadd.f32 %v6416, -1.4531521
        %v6545 = vadd.f32 %v6417, -1.4531521
        %v6546 = vadd.f32 %v6418, -1.4531521
        %v6547 = vadd.f32 %v6419, -1.4531521
        %v6548 = vadd.f32 %v6420, -1.4531521
        %v6549 = vadd.f32 %v6421, -1.4531521
        %v6550 = vadd.f32 %v6422, -1.4531521
        %v6551 = vadd.f32 %v6423, -1.4531521
        %v6552 = vadd.f32 %v6424, -1.4531521
        %v6553 = vadd.f32 %v6425, -1.4531521
        %v6554 = vadd.f32 %v6426, -1.4531521
        %v6555 = vadd.f32 %v6427, -1.4531521
        %v6556 = vadd.f32 %v6428, -1.4531521
        %v6557 = vadd.f32 %v6429, -1.4531521
        %v6558 = vadd.f32 %v6430, -1.4531521
        %v6559 = vadd.f32 %v6431, -1.4531521
        %v6560 = vadd.f32 %v6432, -1.4531521
        %v6561 = vadd.f32 %v6433, -1.4531521
        %v6562 = vadd.f32 %v6434, -1.4531521
        %v6563 = vadd.f32 %v6435, -1.4531521
        %v6564 = vadd.f32 %v6436, -1.4531521
        %v6565 = vadd.f32 %v6437, -1.4531521
        %v6566 = vadd.f32 %v6438, -1.4531521
        %v6567 = vadd.f32 %v6439, -1.4531521
        %v6568 = vadd.f32 %v6440, -1.4531521
        %v6569 = vadd.f32 %v6441, -1.4531521
        %v6570 = vadd.f32 %v6442, -1.4531521
        %v6571 = vadd.f32 %v6443, -1.4531521
        %v6572 = vadd.f32 %v6444, -1.4531521
        %v6573 = vadd.f32 %v6445, -1.4531521
        %v6574 = vadd.f32 %v6446, -1.4531521
        %v6575 = vadd.f32 %v6447, -1.4531521
        %v6576 = vadd.f32 %v6448, -1.4531521
        %v6577 = vadd.f32 %v6449, -1.4531521
        %v6578 = vadd.f32 %v6450, -1.4531521
        %v6579 = vadd.f32 %v6451, -1.4531521
        %v6580 = vadd.f32 %v6452, -1.4531521
        %v6581 = vadd.f32 %v6453, -1.4531521
        %v6582 = vadd.f32 %v6454, -1.4531521
        %v6583 = vadd.f32 %v6455, -1.4531521
        %v6584 = vadd.f32 %v6456, -1.4531521
        %v6585 = vadd.f32 %v6457, -1.4531521
        %v6586 = vadd.f32 %v6458, -1.4531521
        %v6587 = vadd.f32 %v6459, -1.4531521
        %v6588 = vadd.f32 %v6460, -1.4531521
        %v6589 = vadd.f32 %v6461, -1.4531521
        %v6590 = vadd.f32 %v6462, -1.4531521
        %v6591 = vadd.f32 %v6463, -1.4531521
        %v6592 = vadd.f32 %v6464, -1.4531521
        %v6593 = vadd.f32 %v6465, -1.4531521
        %v6594 = vadd.f32 %v6466, -1.4531521
        %v6595 = vadd.f32 %v6467, -1.4531521
        %v6596 = vadd.f32 %v6468, -1.4531521
        %v6597 = vadd.f32 %v6469, -1.4531521
        %v6598 = vadd.f32 %v6470, -1.4531521
        %v6599 = vadd.f32 %v6471, -1.4531521
        %v6600 = vadd.f32 %v6472, -1.4531521
        %v6601 = vadd.f32 %v6473, -1.4531521
        %v6602 = vadd.f32 %v6474, -1.4531521
        %v6603 = vadd.f32 %v6475, -1.4531521
        %v6604 = vadd.f32 %v6476, -1.4531521
        %v6605 = vadd.f32 %v6477, -1.4531521
        %v6606 = vadd.f32 %v6478, -1.4531521
        %v6607 = vadd.f32 %v6479, -1.4531521
        %v6608 = vmul.f32 %v6480, %v6097
        %v6609 = vmul.f32 %v6481, %v6099
        %v6610 = vmul.f32 %v6482, %v6101
        %v6611 = vmul.f32 %v6483, %v6103
        %v6612 = vmul.f32 %v6484, %v6105
        %v6613 = vmul.f32 %v6485, %v6107
        %v6614 = vmul.f32 %v6486, %v6109
        %v6615 = vmul.f32 %v6487, %v6111
        %v6616 = vmul.f32 %v6488, %v6113
        %v6617 = vmul.f32 %v6489, %v6115
        %v6618 = vmul.f32 %v6490, %v6117
        %v6619 = vmul.f32 %v6491, %v6119
        %v6620 = vmul.f32 %v6492, %v6121
        %v6621 = vmul.f32 %v6493, %v6123
        %v6622 = vmul.f32 %v6494, %v6125
        %v6623 = vmul.f32 %v6495, %v6127
        %v6624 = vmul.f32 %v6496, %v6129
        %v6625 = vmul.f32 %v6497, %v6131
        %v6626 = vmul.f32 %v6498, %v6133
        %v6627 = vmul.f32 %v6499, %v6135
        %v6628 = vmul.f32 %v6500, %v6137
        %v6629 = vmul.f32 %v6501, %v6139
        %v6630 = vmul.f32 %v6502, %v6141
        %v6631 = vmul.f32 %v6503, %v6143
        %v6632 = vmul.f32 %v6504, %v6145
        %v6633 = vmul.f32 %v6505, %v6147
        %v6634 = vmul.f32 %v6506, %v6149
        %v6635 = vmul.f32 %v6507, %v6151
        %v6636 = vmul.f32 %v6508, %v6153
        %v6637 = vmul.f32 %v6509, %v6155
        %v6638 = vmul.f32 %v6510, %v6157
        %v6639 = vmul.f32 %v6511, %v6159
        %v6640 = vmul.f32 %v6512, %v6161
        %v6641 = vmul.f32 %v6513, %v6163
        %v6642 = vmul.f32 %v6514, %v6165
        %v6643 = vmul.f32 %v6515, %v6167
        %v6644 = vmul.f32 %v6516, %v6169
        %v6645 = vmul.f32 %v6517, %v6171
        %v6646 = vmul.f32 %v6518, %v6173
        %v6647 = vmul.f32 %v6519, %v6175
        %v6648 = vmul.f32 %v6520, %v6177
        %v6649 = vmul.f32 %v6521, %v6179
        %v6650 = vmul.f32 %v6522, %v6181
        %v6651 = vmul.f32 %v6523, %v6183
        %v6652 = vmul.f32 %v6524, %v6185
        %v6653 = vmul.f32 %v6525, %v6187
        %v6654 = vmul.f32 %v6526, %v6189
        %v6655 = vmul.f32 %v6527, %v6191
        %v6656 = vmul.f32 %v6528, %v6193
        %v6657 = vmul.f32 %v6529, %v6195
        %v6658 = vmul.f32 %v6530, %v6197
        %v6659 = vmul.f32 %v6531, %v6199
        %v6660 = vmul.f32 %v6532, %v6201
        %v6661 = vmul.f32 %v6533, %v6203
        %v6662 = vmul.f32 %v6534, %v6205
        %v6663 = vmul.f32 %v6535, %v6207
        %v6664 = vmul.f32 %v6536, %v6209
        %v6665 = vmul.f32 %v6537, %v6211
        %v6666 = vmul.f32 %v6538, %v6213
        %v6667 = vmul.f32 %v6539, %v6215
        %v6668 = vmul.f32 %v6540, %v6217
        %v6669 = vmul.f32 %v6541, %v6219
        %v6670 = vmul.f32 %v6542, %v6221
        %v6671 = vmul.f32 %v6543, %v6223
        %v6672 = vmul.f32 %v6544, %v6225
        %v6673 = vmul.f32 %v6545, %v6227
        %v6674 = vmul.f32 %v6546, %v6229
        %v6675 = vmul.f32 %v6547, %v6231
        %v6676 = vmul.f32 %v6548, %v6233
        %v6677 = vmul.f32 %v6549, %v6235
        %v6678 = vmul.f32 %v6550, %v6237
        %v6679 = vmul.f32 %v6551, %v6239
        %v6680 = vmul.f32 %v6552, %v6241
        %v6681 = vmul.f32 %v6553, %v6243
        %v6682 = vmul.f32 %v6554, %v6245
        %v6683 = vmul.f32 %v6555, %v6247
        %v6684 = vmul.f32 %v6556, %v6249
        %v6685 = vmul.f32 %v6557, %v6251
        %v6686 = vmul.f32 %v6558, %v6253
        %v6687 = vmul.f32 %v6559, %v6255
        %v6688 = vmul.f32 %v6560, %v6257
        %v6689 = vmul.f32 %v6561, %v6259
        %v6690 = vmul.f32 %v6562, %v6261
        %v6691 = vmul.f32 %v6563, %v6263
        %v6692 = vmul.f32 %v6564, %v6265
        %v6693 = vmul.f32 %v6565, %v6267
        %v6694 = vmul.f32 %v6566, %v6269
        %v6695 = vmul.f32 %v6567, %v6271
        %v6696 = vmul.f32 %v6568, %v6273
        %v6697 = vmul.f32 %v6569, %v6275
        %v6698 = vmul.f32 %v6570, %v6277
        %v6699 = vmul.f32 %v6571, %v6279
        %v6700 = vmul.f32 %v6572, %v6281
        %v6701 = vmul.f32 %v6573, %v6283
        %v6702 = vmul.f32 %v6574, %v6285
        %v6703 = vmul.f32 %v6575, %v6287
        %v6704 = vmul.f32 %v6576, %v6289
        %v6705 = vmul.f32 %v6577, %v6291
        %v6706 = vmul.f32 %v6578, %v6293
        %v6707 = vmul.f32 %v6579, %v6295
        %v6708 = vmul.f32 %v6580, %v6297
        %v6709 = vmul.f32 %v6581, %v6299
        %v6710 = vmul.f32 %v6582, %v6301
        %v6711 = vmul.f32 %v6583, %v6303
        %v6712 = vmul.f32 %v6584, %v6305
        %v6713 = vmul.f32 %v6585, %v6307
        %v6714 = vmul.f32 %v6586, %v6309
        %v6715 = vmul.f32 %v6587, %v6311
        %v6716 = vmul.f32 %v6588, %v6313
        %v6717 = vmul.f32 %v6589, %v6315
        %v6718 = vmul.f32 %v6590, %v6317
        %v6719 = vmul.f32 %v6591, %v6319
        %v6720 = vmul.f32 %v6592, %v6321
        %v6721 = vmul.f32 %v6593, %v6323
        %v6722 = vmul.f32 %v6594, %v6325
        %v6723 = vmul.f32 %v6595, %v6327
        %v6724 = vmul.f32 %v6596, %v6329
        %v6725 = vmul.f32 %v6597, %v6331
        %v6726 = vmul.f32 %v6598, %v6333
        %v6727 = vmul.f32 %v6599, %v6335
        %v6728 = vmul.f32 %v6600, %v6337
        %v6729 = vmul.f32 %v6601, %v6339
        %v6730 = vmul.f32 %v6602, %v6341
        %v6731 = vmul.f32 %v6603, %v6343
        %v6732 = vmul.f32 %v6604, %v6345
        %v6733 = vmul.f32 %v6605, %v6347
        %v6734 = vmul.f32 %v6606, %v6349
        %v6735 = vmul.f32 %v6607, %v6351
        %v6736 = vadd.f32 %v6608, 1.4214138
        %v6737 = vadd.f32 %v6609, 1.4214138
        %v6738 = vadd.f32 %v6610, 1.4214138
        %v6739 = vadd.f32 %v6611, 1.4214138
        %v6740 = vadd.f32 %v6612, 1.4214138
        %v6741 = vadd.f32 %v6613, 1.4214138
        %v6742 = vadd.f32 %v6614, 1.4214138
        %v6743 = vadd.f32 %v6615, 1.4214138
        %v6744 = vadd.f32 %v6616, 1.4214138
        %v6745 = vadd.f32 %v6617, 1.4214138
        %v6746 = vadd.f32 %v6618, 1.4214138
        %v6747 = vadd.f32 %v6619, 1.4214138
        %v6748 = vadd.f32 %v6620, 1.4214138
        %v6749 = vadd.f32 %v6621, 1.4214138
        %v6750 = vadd.f32 %v6622, 1.4214138
        %v6751 = vadd.f32 %v6623, 1.4214138
        %v6752 = vadd.f32 %v6624, 1.4214138
        %v6753 = vadd.f32 %v6625, 1.4214138
        %v6754 = vadd.f32 %v6626, 1.4214138
        %v6755 = vadd.f32 %v6627, 1.4214138
        %v6756 = vadd.f32 %v6628, 1.4214138
        %v6757 = vadd.f32 %v6629, 1.4214138
        %v6758 = vadd.f32 %v6630, 1.4214138
        %v6759 = vadd.f32 %v6631, 1.4214138
        %v6760 = vadd.f32 %v6632, 1.4214138
        %v6761 = vadd.f32 %v6633, 1.4214138
        %v6762 = vadd.f32 %v6634, 1.4214138
        %v6763 = vadd.f32 %v6635, 1.4214138
        %v6764 = vadd.f32 %v6636, 1.4214138
        %v6765 = vadd.f32 %v6637, 1.4214138
        %v6766 = vadd.f32 %v6638, 1.4214138
        %v6767 = vadd.f32 %v6639, 1.4214138
        %v6768 = vadd.f32 %v6640, 1.4214138
        %v6769 = vadd.f32 %v6641, 1.4214138
        %v6770 = vadd.f32 %v6642, 1.4214138
        %v6771 = vadd.f32 %v6643, 1.4214138
        %v6772 = vadd.f32 %v6644, 1.4214138
        %v6773 = vadd.f32 %v6645, 1.4214138
        %v6774 = vadd.f32 %v6646, 1.4214138
        %v6775 = vadd.f32 %v6647, 1.4214138
        %v6776 = vadd.f32 %v6648, 1.4214138
        %v6777 = vadd.f32 %v6649, 1.4214138
        %v6778 = vadd.f32 %v6650, 1.4214138
        %v6779 = vadd.f32 %v6651, 1.4214138
        %v6780 = vadd.f32 %v6652, 1.4214138
        %v6781 = vadd.f32 %v6653, 1.4214138
        %v6782 = vadd.f32 %v6654, 1.4214138
        %v6783 = vadd.f32 %v6655, 1.4214138
        %v6784 = vadd.f32 %v6656, 1.4214138
        %v6785 = vadd.f32 %v6657, 1.4214138
        %v6786 = vadd.f32 %v6658, 1.4214138
        %v6787 = vadd.f32 %v6659, 1.4214138
        %v6788 = vadd.f32 %v6660, 1.4214138
        %v6789 = vadd.f32 %v6661, 1.4214138
        %v6790 = vadd.f32 %v6662, 1.4214138
        %v6791 = vadd.f32 %v6663, 1.4214138
        %v6792 = vadd.f32 %v6664, 1.4214138
        %v6793 = vadd.f32 %v6665, 1.4214138
        %v6794 = vadd.f32 %v6666, 1.4214138
        %v6795 = vadd.f32 %v6667, 1.4214138
        %v6796 = vadd.f32 %v6668, 1.4214138
        %v6797 = vadd.f32 %v6669, 1.4214138
        %v6798 = vadd.f32 %v6670, 1.4214138
        %v6799 = vadd.f32 %v6671, 1.4214138
        %v6800 = vadd.f32 %v6672, 1.4214138
        %v6801 = vadd.f32 %v6673, 1.4214138
        %v6802 = vadd.f32 %v6674, 1.4214138
        %v6803 = vadd.f32 %v6675, 1.4214138
        %v6804 = vadd.f32 %v6676, 1.4214138
        %v6805 = vadd.f32 %v6677, 1.4214138
        %v6806 = vadd.f32 %v6678, 1.4214138
        %v6807 = vadd.f32 %v6679, 1.4214138
        %v6808 = vadd.f32 %v6680, 1.4214138
        %v6809 = vadd.f32 %v6681, 1.4214138
        %v6810 = vadd.f32 %v6682, 1.4214138
        %v6811 = vadd.f32 %v6683, 1.4214138
        %v6812 = vadd.f32 %v6684, 1.4214138
        %v6813 = vadd.f32 %v6685, 1.4214138
        %v6814 = vadd.f32 %v6686, 1.4214138
        %v6815 = vadd.f32 %v6687, 1.4214138
        %v6816 = vadd.f32 %v6688, 1.4214138
        %v6817 = vadd.f32 %v6689, 1.4214138
        %v6818 = vadd.f32 %v6690, 1.4214138
        %v6819 = vadd.f32 %v6691, 1.4214138
        %v6820 = vadd.f32 %v6692, 1.4214138
        %v6821 = vadd.f32 %v6693, 1.4214138
        %v6822 = vadd.f32 %v6694, 1.4214138
        %v6823 = vadd.f32 %v6695, 1.4214138
        %v6824 = vadd.f32 %v6696, 1.4214138
        %v6825 = vadd.f32 %v6697, 1.4214138
        %v6826 = vadd.f32 %v6698, 1.4214138
        %v6827 = vadd.f32 %v6699, 1.4214138
        %v6828 = vadd.f32 %v6700, 1.4214138
        %v6829 = vadd.f32 %v6701, 1.4214138
        %v6830 = vadd.f32 %v6702, 1.4214138
        %v6831 = vadd.f32 %v6703, 1.4214138
        %v6832 = vadd.f32 %v6704, 1.4214138
        %v6833 = vadd.f32 %v6705, 1.4214138
        %v6834 = vadd.f32 %v6706, 1.4214138
        %v6835 = vadd.f32 %v6707, 1.4214138
        %v6836 = vadd.f32 %v6708, 1.4214138
        %v6837 = vadd.f32 %v6709, 1.4214138
        %v6838 = vadd.f32 %v6710, 1.4214138
        %v6839 = vadd.f32 %v6711, 1.4214138
        %v6840 = vadd.f32 %v6712, 1.4214138
        %v6841 = vadd.f32 %v6713, 1.4214138
        %v6842 = vadd.f32 %v6714, 1.4214138
        %v6843 = vadd.f32 %v6715, 1.4214138
        %v6844 = vadd.f32 %v6716, 1.4214138
        %v6845 = vadd.f32 %v6717, 1.4214138
        %v6846 = vadd.f32 %v6718, 1.4214138
        %v6847 = vadd.f32 %v6719, 1.4214138
        %v6848 = vadd.f32 %v6720, 1.4214138
        %v6849 = vadd.f32 %v6721, 1.4214138
        %v6850 = vadd.f32 %v6722, 1.4214138
        %v6851 = vadd.f32 %v6723, 1.4214138
        %v6852 = vadd.f32 %v6724, 1.4214138
        %v6853 = vadd.f32 %v6725, 1.4214138
        %v6854 = vadd.f32 %v6726, 1.4214138
        %v6855 = vadd.f32 %v6727, 1.4214138
        %v6856 = vadd.f32 %v6728, 1.4214138
        %v6857 = vadd.f32 %v6729, 1.4214138
        %v6858 = vadd.f32 %v6730, 1.4214138
        %v6859 = vadd.f32 %v6731, 1.4214138
        %v6860 = vadd.f32 %v6732, 1.4214138
        %v6861 = vadd.f32 %v6733, 1.4214138
        %v6862 = vadd.f32 %v6734, 1.4214138
        %v6863 = vadd.f32 %v6735, 1.4214138
        %v6864 = vmul.f32 %v6736, %v6097
        %v6865 = vmul.f32 %v6737, %v6099
        %v6866 = vmul.f32 %v6738, %v6101
        %v6867 = vmul.f32 %v6739, %v6103
        %v6868 = vmul.f32 %v6740, %v6105
        %v6869 = vmul.f32 %v6741, %v6107
        %v6870 = vmul.f32 %v6742, %v6109
        %v6871 = vmul.f32 %v6743, %v6111
        %v6872 = vmul.f32 %v6744, %v6113
        %v6873 = vmul.f32 %v6745, %v6115
        %v6874 = vmul.f32 %v6746, %v6117
        %v6875 = vmul.f32 %v6747, %v6119
        %v6876 = vmul.f32 %v6748, %v6121
        %v6877 = vmul.f32 %v6749, %v6123
        %v6878 = vmul.f32 %v6750, %v6125
        %v6879 = vmul.f32 %v6751, %v6127
        %v6880 = vmul.f32 %v6752, %v6129
        %v6881 = vmul.f32 %v6753, %v6131
        %v6882 = vmul.f32 %v6754, %v6133
        %v6883 = vmul.f32 %v6755, %v6135
        %v6884 = vmul.f32 %v6756, %v6137
        %v6885 = vmul.f32 %v6757, %v6139
        %v6886 = vmul.f32 %v6758, %v6141
        %v6887 = vmul.f32 %v6759, %v6143
        %v6888 = vmul.f32 %v6760, %v6145
        %v6889 = vmul.f32 %v6761, %v6147
        %v6890 = vmul.f32 %v6762, %v6149
        %v6891 = vmul.f32 %v6763, %v6151
        %v6892 = vmul.f32 %v6764, %v6153
        %v6893 = vmul.f32 %v6765, %v6155
        %v6894 = vmul.f32 %v6766, %v6157
        %v6895 = vmul.f32 %v6767, %v6159
        %v6896 = vmul.f32 %v6768, %v6161
        %v6897 = vmul.f32 %v6769, %v6163
        %v6898 = vmul.f32 %v6770, %v6165
        %v6899 = vmul.f32 %v6771, %v6167
        %v6900 = vmul.f32 %v6772, %v6169
        %v6901 = vmul.f32 %v6773, %v6171
        %v6902 = vmul.f32 %v6774, %v6173
        %v6903 = vmul.f32 %v6775, %v6175
        %v6904 = vmul.f32 %v6776, %v6177
        %v6905 = vmul.f32 %v6777, %v6179
        %v6906 = vmul.f32 %v6778, %v6181
        %v6907 = vmul.f32 %v6779, %v6183
        %v6908 = vmul.f32 %v6780, %v6185
        %v6909 = vmul.f32 %v6781, %v6187
        %v6910 = vmul.f32 %v6782, %v6189
        %v6911 = vmul.f32 %v6783, %v6191
        %v6912 = vmul.f32 %v6784, %v6193
        %v6913 = vmul.f32 %v6785, %v6195
        %v6914 = vmul.f32 %v6786, %v6197
        %v6915 = vmul.f32 %v6787, %v6199
        %v6916 = vmul.f32 %v6788, %v6201
        %v6917 = vmul.f32 %v6789, %v6203
        %v6918 = vmul.f32 %v6790, %v6205
        %v6919 = vmul.f32 %v6791, %v6207
        %v6920 = vmul.f32 %v6792, %v6209
        %v6921 = vmul.f32 %v6793, %v6211
        %v6922 = vmul.f32 %v6794, %v6213
        %v6923 = vmul.f32 %v6795, %v6215
        %v6924 = vmul.f32 %v6796, %v6217
        %v6925 = vmul.f32 %v6797, %v6219
        %v6926 = vmul.f32 %v6798, %v6221
        %v6927 = vmul.f32 %v6799, %v6223
        %v6928 = vmul.f32 %v6800, %v6225
        %v6929 = vmul.f32 %v6801, %v6227
        %v6930 = vmul.f32 %v6802, %v6229
        %v6931 = vmul.f32 %v6803, %v6231
        %v6932 = vmul.f32 %v6804, %v6233
        %v6933 = vmul.f32 %v6805, %v6235
        %v6934 = vmul.f32 %v6806, %v6237
        %v6935 = vmul.f32 %v6807, %v6239
        %v6936 = vmul.f32 %v6808, %v6241
        %v6937 = vmul.f32 %v6809, %v6243
        %v6938 = vmul.f32 %v6810, %v6245
        %v6939 = vmul.f32 %v6811, %v6247
        %v6940 = vmul.f32 %v6812, %v6249
        %v6941 = vmul.f32 %v6813, %v6251
        %v6942 = vmul.f32 %v6814, %v6253
        %v6943 = vmul.f32 %v6815, %v6255
        %v6944 = vmul.f32 %v6816, %v6257
        %v6945 = vmul.f32 %v6817, %v6259
        %v6946 = vmul.f32 %v6818, %v6261
        %v6947 = vmul.f32 %v6819, %v6263
        %v6948 = vmul.f32 %v6820, %v6265
        %v6949 = vmul.f32 %v6821, %v6267
        %v6950 = vmul.f32 %v6822, %v6269
        %v6951 = vmul.f32 %v6823, %v6271
        %v6952 = vmul.f32 %v6824, %v6273
        %v6953 = vmul.f32 %v6825, %v6275
        %v6954 = vmul.f32 %v6826, %v6277
        %v6955 = vmul.f32 %v6827, %v6279
        %v6956 = vmul.f32 %v6828, %v6281
        %v6957 = vmul.f32 %v6829, %v6283
        %v6958 = vmul.f32 %v6830, %v6285
        %v6959 = vmul.f32 %v6831, %v6287
        %v6960 = vmul.f32 %v6832, %v6289
        %v6961 = vmul.f32 %v6833, %v6291
        %v6962 = vmul.f32 %v6834, %v6293
        %v6963 = vmul.f32 %v6835, %v6295
        %v6964 = vmul.f32 %v6836, %v6297
        %v6965 = vmul.f32 %v6837, %v6299
        %v6966 = vmul.f32 %v6838, %v6301
        %v6967 = vmul.f32 %v6839, %v6303
        %v6968 = vmul.f32 %v6840, %v6305
        %v6969 = vmul.f32 %v6841, %v6307
        %v6970 = vmul.f32 %v6842, %v6309
        %v6971 = vmul.f32 %v6843, %v6311
        %v6972 = vmul.f32 %v6844, %v6313
        %v6973 = vmul.f32 %v6845, %v6315
        %v6974 = vmul.f32 %v6846, %v6317
        %v6975 = vmul.f32 %v6847, %v6319
        %v6976 = vmul.f32 %v6848, %v6321
        %v6977 = vmul.f32 %v6849, %v6323
        %v6978 = vmul.f32 %v6850, %v6325
        %v6979 = vmul.f32 %v6851, %v6327
        %v6980 = vmul.f32 %v6852, %v6329
        %v6981 = vmul.f32 %v6853, %v6331
        %v6982 = vmul.f32 %v6854, %v6333
        %v6983 = vmul.f32 %v6855, %v6335
        %v6984 = vmul.f32 %v6856, %v6337
        %v6985 = vmul.f32 %v6857, %v6339
        %v6986 = vmul.f32 %v6858, %v6341
        %v6987 = vmul.f32 %v6859, %v6343
        %v6988 = vmul.f32 %v6860, %v6345
        %v6989 = vmul.f32 %v6861, %v6347
        %v6990 = vmul.f32 %v6862, %v6349
        %v6991 = vmul.f32 %v6863, %v6351
        %v6992 = vadd.f32 %v6864, -0.28449672
        %v6993 = vadd.f32 %v6865, -0.28449672
        %v6994 = vadd.f32 %v6866, -0.28449672
        %v6995 = vadd.f32 %v6867, -0.28449672
        %v6996 = vadd.f32 %v6868, -0.28449672
        %v6997 = vadd.f32 %v6869, -0.28449672
        %v6998 = vadd.f32 %v6870, -0.28449672
        %v6999 = vadd.f32 %v6871, -0.28449672
        %v7000 = vadd.f32 %v6872, -0.28449672
        %v7001 = vadd.f32 %v6873, -0.28449672
        %v7002 = vadd.f32 %v6874, -0.28449672
        %v7003 = vadd.f32 %v6875, -0.28449672
        %v7004 = vadd.f32 %v6876, -0.28449672
        %v7005 = vadd.f32 %v6877, -0.28449672
        %v7006 = vadd.f32 %v6878, -0.28449672
        %v7007 = vadd.f32 %v6879, -0.28449672
        %v7008 = vadd.f32 %v6880, -0.28449672
        %v7009 = vadd.f32 %v6881, -0.28449672
        %v7010 = vadd.f32 %v6882, -0.28449672
        %v7011 = vadd.f32 %v6883, -0.28449672
        %v7012 = vadd.f32 %v6884, -0.28449672
        %v7013 = vadd.f32 %v6885, -0.28449672
        %v7014 = vadd.f32 %v6886, -0.28449672
        %v7015 = vadd.f32 %v6887, -0.28449672
        %v7016 = vadd.f32 %v6888, -0.28449672
        %v7017 = vadd.f32 %v6889, -0.28449672
        %v7018 = vadd.f32 %v6890, -0.28449672
        %v7019 = vadd.f32 %v6891, -0.28449672
        %v7020 = vadd.f32 %v6892, -0.28449672
        %v7021 = vadd.f32 %v6893, -0.28449672
        %v7022 = vadd.f32 %v6894, -0.28449672
        %v7023 = vadd.f32 %v6895, -0.28449672
        %v7024 = vadd.f32 %v6896, -0.28449672
        %v7025 = vadd.f32 %v6897, -0.28449672
        %v7026 = vadd.f32 %v6898, -0.28449672
        %v7027 = vadd.f32 %v6899, -0.28449672
        %v7028 = vadd.f32 %v6900, -0.28449672
        %v7029 = vadd.f32 %v6901, -0.28449672
        %v7030 = vadd.f32 %v6902, -0.28449672
        %v7031 = vadd.f32 %v6903, -0.28449672
        %v7032 = vadd.f32 %v6904, -0.28449672
        %v7033 = vadd.f32 %v6905, -0.28449672
        %v7034 = vadd.f32 %v6906, -0.28449672
        %v7035 = vadd.f32 %v6907, -0.28449672
        %v7036 = vadd.f32 %v6908, -0.28449672
        %v7037 = vadd.f32 %v6909, -0.28449672
        %v7038 = vadd.f32 %v6910, -0.28449672
        %v7039 = vadd.f32 %v6911, -0.28449672
        %v7040 = vadd.f32 %v6912, -0.28449672
        %v7041 = vadd.f32 %v6913, -0.28449672
        %v7042 = vadd.f32 %v6914, -0.28449672
        %v7043 = vadd.f32 %v6915, -0.28449672
        %v7044 = vadd.f32 %v6916, -0.28449672
        %v7045 = vadd.f32 %v6917, -0.28449672
        %v7046 = vadd.f32 %v6918, -0.28449672
        %v7047 = vadd.f32 %v6919, -0.28449672
        %v7048 = vadd.f32 %v6920, -0.28449672
        %v7049 = vadd.f32 %v6921, -0.28449672
        %v7050 = vadd.f32 %v6922, -0.28449672
        %v7051 = vadd.f32 %v6923, -0.28449672
        %v7052 = vadd.f32 %v6924, -0.28449672
        %v7053 = vadd.f32 %v6925, -0.28449672
        %v7054 = vadd.f32 %v6926, -0.28449672
        %v7055 = vadd.f32 %v6927, -0.28449672
        %v7056 = vadd.f32 %v6928, -0.28449672
        %v7057 = vadd.f32 %v6929, -0.28449672
        %v7058 = vadd.f32 %v6930, -0.28449672
        %v7059 = vadd.f32 %v6931, -0.28449672
        %v7060 = vadd.f32 %v6932, -0.28449672
        %v7061 = vadd.f32 %v6933, -0.28449672
        %v7062 = vadd.f32 %v6934, -0.28449672
        %v7063 = vadd.f32 %v6935, -0.28449672
        %v7064 = vadd.f32 %v6936, -0.28449672
        %v7065 = vadd.f32 %v6937, -0.28449672
        %v7066 = vadd.f32 %v6938, -0.28449672
        %v7067 = vadd.f32 %v6939, -0.28449672
        %v7068 = vadd.f32 %v6940, -0.28449672
        %v7069 = vadd.f32 %v6941, -0.28449672
        %v7070 = vadd.f32 %v6942, -0.28449672
        %v7071 = vadd.f32 %v6943, -0.28449672
        %v7072 = vadd.f32 %v6944, -0.28449672
        %v7073 = vadd.f32 %v6945, -0.28449672
        %v7074 = vadd.f32 %v6946, -0.28449672
        %v7075 = vadd.f32 %v6947, -0.28449672
        %v7076 = vadd.f32 %v6948, -0.28449672
        %v7077 = vadd.f32 %v6949, -0.28449672
        %v7078 = vadd.f32 %v6950, -0.28449672
        %v7079 = vadd.f32 %v6951, -0.28449672
        %v7080 = vadd.f32 %v6952, -0.28449672
        %v7081 = vadd.f32 %v6953, -0.28449672
        %v7082 = vadd.f32 %v6954, -0.28449672
        %v7083 = vadd.f32 %v6955, -0.28449672
        %v7084 = vadd.f32 %v6956, -0.28449672
        %v7085 = vadd.f32 %v6957, -0.28449672
        %v7086 = vadd.f32 %v6958, -0.28449672
        %v7087 = vadd.f32 %v6959, -0.28449672
        %v7088 = vadd.f32 %v6960, -0.28449672
        %v7089 = vadd.f32 %v6961, -0.28449672
        %v7090 = vadd.f32 %v6962, -0.28449672
        %v7091 = vadd.f32 %v6963, -0.28449672
        %v7092 = vadd.f32 %v6964, -0.28449672
        %v7093 = vadd.f32 %v6965, -0.28449672
        %v7094 = vadd.f32 %v6966, -0.28449672
        %v7095 = vadd.f32 %v6967, -0.28449672
        %v7096 = vadd.f32 %v6968, -0.28449672
        %v7097 = vadd.f32 %v6969, -0.28449672
        %v7098 = vadd.f32 %v6970, -0.28449672
        %v7099 = vadd.f32 %v6971, -0.28449672
        %v7100 = vadd.f32 %v6972, -0.28449672
        %v7101 = vadd.f32 %v6973, -0.28449672
        %v7102 = vadd.f32 %v6974, -0.28449672
        %v7103 = vadd.f32 %v6975, -0.28449672
        %v7104 = vadd.f32 %v6976, -0.28449672
        %v7105 = vadd.f32 %v6977, -0.28449672
        %v7106 = vadd.f32 %v6978, -0.28449672
        %v7107 = vadd.f32 %v6979, -0.28449672
        %v7108 = vadd.f32 %v6980, -0.28449672
        %v7109 = vadd.f32 %v6981, -0.28449672
        %v7110 = vadd.f32 %v6982, -0.28449672
        %v7111 = vadd.f32 %v6983, -0.28449672
        %v7112 = vadd.f32 %v6984, -0.28449672
        %v7113 = vadd.f32 %v6985, -0.28449672
        %v7114 = vadd.f32 %v6986, -0.28449672
        %v7115 = vadd.f32 %v6987, -0.28449672
        %v7116 = vadd.f32 %v6988, -0.28449672
        %v7117 = vadd.f32 %v6989, -0.28449672
        %v7118 = vadd.f32 %v6990, -0.28449672
        %v7119 = vadd.f32 %v6991, -0.28449672
        %v7120 = vmul.f32 %v6992, %v6097
        %v7121 = vmul.f32 %v6993, %v6099
        %v7122 = vmul.f32 %v6994, %v6101
        %v7123 = vmul.f32 %v6995, %v6103
        %v7124 = vmul.f32 %v6996, %v6105
        %v7125 = vmul.f32 %v6997, %v6107
        %v7126 = vmul.f32 %v6998, %v6109
        %v7127 = vmul.f32 %v6999, %v6111
        %v7128 = vmul.f32 %v7000, %v6113
        %v7129 = vmul.f32 %v7001, %v6115
        %v7130 = vmul.f32 %v7002, %v6117
        %v7131 = vmul.f32 %v7003, %v6119
        %v7132 = vmul.f32 %v7004, %v6121
        %v7133 = vmul.f32 %v7005, %v6123
        %v7134 = vmul.f32 %v7006, %v6125
        %v7135 = vmul.f32 %v7007, %v6127
        %v7136 = vmul.f32 %v7008, %v6129
        %v7137 = vmul.f32 %v7009, %v6131
        %v7138 = vmul.f32 %v7010, %v6133
        %v7139 = vmul.f32 %v7011, %v6135
        %v7140 = vmul.f32 %v7012, %v6137
        %v7141 = vmul.f32 %v7013, %v6139
        %v7142 = vmul.f32 %v7014, %v6141
        %v7143 = vmul.f32 %v7015, %v6143
        %v7144 = vmul.f32 %v7016, %v6145
        %v7145 = vmul.f32 %v7017, %v6147
        %v7146 = vmul.f32 %v7018, %v6149
        %v7147 = vmul.f32 %v7019, %v6151
        %v7148 = vmul.f32 %v7020, %v6153
        %v7149 = vmul.f32 %v7021, %v6155
        %v7150 = vmul.f32 %v7022, %v6157
        %v7151 = vmul.f32 %v7023, %v6159
        %v7152 = vmul.f32 %v7024, %v6161
        %v7153 = vmul.f32 %v7025, %v6163
        %v7154 = vmul.f32 %v7026, %v6165
        %v7155 = vmul.f32 %v7027, %v6167
        %v7156 = vmul.f32 %v7028, %v6169
        %v7157 = vmul.f32 %v7029, %v6171
        %v7158 = vmul.f32 %v7030, %v6173
        %v7159 = vmul.f32 %v7031, %v6175
        %v7160 = vmul.f32 %v7032, %v6177
        %v7161 = vmul.f32 %v7033, %v6179
        %v7162 = vmul.f32 %v7034, %v6181
        %v7163 = vmul.f32 %v7035, %v6183
        %v7164 = vmul.f32 %v7036, %v6185
        %v7165 = vmul.f32 %v7037, %v6187
        %v7166 = vmul.f32 %v7038, %v6189
        %v7167 = vmul.f32 %v7039, %v6191
        %v7168 = vmul.f32 %v7040, %v6193
        %v7169 = vmul.f32 %v7041, %v6195
        %v7170 = vmul.f32 %v7042, %v6197
        %v7171 = vmul.f32 %v7043, %v6199
        %v7172 = vmul.f32 %v7044, %v6201
        %v7173 = vmul.f32 %v7045, %v6203
        %v7174 = vmul.f32 %v7046, %v6205
        %v7175 = vmul.f32 %v7047, %v6207
        %v7176 = vmul.f32 %v7048, %v6209
        %v7177 = vmul.f32 %v7049, %v6211
        %v7178 = vmul.f32 %v7050, %v6213
        %v7179 = vmul.f32 %v7051, %v6215
        %v7180 = vmul.f32 %v7052, %v6217
        %v7181 = vmul.f32 %v7053, %v6219
        %v7182 = vmul.f32 %v7054, %v6221
        %v7183 = vmul.f32 %v7055, %v6223
        %v7184 = vmul.f32 %v7056, %v6225
        %v7185 = vmul.f32 %v7057, %v6227
        %v7186 = vmul.f32 %v7058, %v6229
        %v7187 = vmul.f32 %v7059, %v6231
        %v7188 = vmul.f32 %v7060, %v6233
        %v7189 = vmul.f32 %v7061, %v6235
        %v7190 = vmul.f32 %v7062, %v6237
        %v7191 = vmul.f32 %v7063, %v6239
        %v7192 = vmul.f32 %v7064, %v6241
        %v7193 = vmul.f32 %v7065, %v6243
        %v7194 = vmul.f32 %v7066, %v6245
        %v7195 = vmul.f32 %v7067, %v6247
        %v7196 = vmul.f32 %v7068, %v6249
        %v7197 = vmul.f32 %v7069, %v6251
        %v7198 = vmul.f32 %v7070, %v6253
        %v7199 = vmul.f32 %v7071, %v6255
        %v7200 = vmul.f32 %v7072, %v6257
        %v7201 = vmul.f32 %v7073, %v6259
        %v7202 = vmul.f32 %v7074, %v6261
        %v7203 = vmul.f32 %v7075, %v6263
        %v7204 = vmul.f32 %v7076, %v6265
        %v7205 = vmul.f32 %v7077, %v6267
        %v7206 = vmul.f32 %v7078, %v6269
        %v7207 = vmul.f32 %v7079, %v6271
        %v7208 = vmul.f32 %v7080, %v6273
        %v7209 = vmul.f32 %v7081, %v6275
        %v7210 = vmul.f32 %v7082, %v6277
        %v7211 = vmul.f32 %v7083, %v6279
        %v7212 = vmul.f32 %v7084, %v6281
        %v7213 = vmul.f32 %v7085, %v6283
        %v7214 = vmul.f32 %v7086, %v6285
        %v7215 = vmul.f32 %v7087, %v6287
        %v7216 = vmul.f32 %v7088, %v6289
        %v7217 = vmul.f32 %v7089, %v6291
        %v7218 = vmul.f32 %v7090, %v6293
        %v7219 = vmul.f32 %v7091, %v6295
        %v7220 = vmul.f32 %v7092, %v6297
        %v7221 = vmul.f32 %v7093, %v6299
        %v7222 = vmul.f32 %v7094, %v6301
        %v7223 = vmul.f32 %v7095, %v6303
        %v7224 = vmul.f32 %v7096, %v6305
        %v7225 = vmul.f32 %v7097, %v6307
        %v7226 = vmul.f32 %v7098, %v6309
        %v7227 = vmul.f32 %v7099, %v6311
        %v7228 = vmul.f32 %v7100, %v6313
        %v7229 = vmul.f32 %v7101, %v6315
        %v7230 = vmul.f32 %v7102, %v6317
        %v7231 = vmul.f32 %v7103, %v6319
        %v7232 = vmul.f32 %v7104, %v6321
        %v7233 = vmul.f32 %v7105, %v6323
        %v7234 = vmul.f32 %v7106, %v6325
        %v7235 = vmul.f32 %v7107, %v6327
        %v7236 = vmul.f32 %v7108, %v6329
        %v7237 = vmul.f32 %v7109, %v6331
        %v7238 = vmul.f32 %v7110, %v6333
        %v7239 = vmul.f32 %v7111, %v6335
        %v7240 = vmul.f32 %v7112, %v6337
        %v7241 = vmul.f32 %v7113, %v6339
        %v7242 = vmul.f32 %v7114, %v6341
        %v7243 = vmul.f32 %v7115, %v6343
        %v7244 = vmul.f32 %v7116, %v6345
        %v7245 = vmul.f32 %v7117, %v6347
        %v7246 = vmul.f32 %v7118, %v6349
        %v7247 = vmul.f32 %v7119, %v6351
        %v7248 = vadd.f32 %v7120, 0.2548296
        %v7249 = vadd.f32 %v7121, 0.2548296
        %v7250 = vadd.f32 %v7122, 0.2548296
        %v7251 = vadd.f32 %v7123, 0.2548296
        %v7252 = vadd.f32 %v7124, 0.2548296
        %v7253 = vadd.f32 %v7125, 0.2548296
        %v7254 = vadd.f32 %v7126, 0.2548296
        %v7255 = vadd.f32 %v7127, 0.2548296
        %v7256 = vadd.f32 %v7128, 0.2548296
        %v7257 = vadd.f32 %v7129, 0.2548296
        %v7258 = vadd.f32 %v7130, 0.2548296
        %v7259 = vadd.f32 %v7131, 0.2548296
        %v7260 = vadd.f32 %v7132, 0.2548296
        %v7261 = vadd.f32 %v7133, 0.2548296
        %v7262 = vadd.f32 %v7134, 0.2548296
        %v7263 = vadd.f32 %v7135, 0.2548296
        %v7264 = vadd.f32 %v7136, 0.2548296
        %v7265 = vadd.f32 %v7137, 0.2548296
        %v7266 = vadd.f32 %v7138, 0.2548296
        %v7267 = vadd.f32 %v7139, 0.2548296
        %v7268 = vadd.f32 %v7140, 0.2548296
        %v7269 = vadd.f32 %v7141, 0.2548296
        %v7270 = vadd.f32 %v7142, 0.2548296
        %v7271 = vadd.f32 %v7143, 0.2548296
        %v7272 = vadd.f32 %v7144, 0.2548296
        %v7273 = vadd.f32 %v7145, 0.2548296
        %v7274 = vadd.f32 %v7146, 0.2548296
        %v7275 = vadd.f32 %v7147, 0.2548296
        %v7276 = vadd.f32 %v7148, 0.2548296
        %v7277 = vadd.f32 %v7149, 0.2548296
        %v7278 = vadd.f32 %v7150, 0.2548296
        %v7279 = vadd.f32 %v7151, 0.2548296
        %v7280 = vadd.f32 %v7152, 0.2548296
        %v7281 = vadd.f32 %v7153, 0.2548296
        %v7282 = vadd.f32 %v7154, 0.2548296
        %v7283 = vadd.f32 %v7155, 0.2548296
        %v7284 = vadd.f32 %v7156, 0.2548296
        %v7285 = vadd.f32 %v7157, 0.2548296
        %v7286 = vadd.f32 %v7158, 0.2548296
        %v7287 = vadd.f32 %v7159, 0.2548296
        %v7288 = vadd.f32 %v7160, 0.2548296
        %v7289 = vadd.f32 %v7161, 0.2548296
        %v7290 = vadd.f32 %v7162, 0.2548296
        %v7291 = vadd.f32 %v7163, 0.2548296
        %v7292 = vadd.f32 %v7164, 0.2548296
        %v7293 = vadd.f32 %v7165, 0.2548296
        %v7294 = vadd.f32 %v7166, 0.2548296
        %v7295 = vadd.f32 %v7167, 0.2548296
        %v7296 = vadd.f32 %v7168, 0.2548296
        %v7297 = vadd.f32 %v7169, 0.2548296
        %v7298 = vadd.f32 %v7170, 0.2548296
        %v7299 = vadd.f32 %v7171, 0.2548296
        %v7300 = vadd.f32 %v7172, 0.2548296
        %v7301 = vadd.f32 %v7173, 0.2548296
        %v7302 = vadd.f32 %v7174, 0.2548296
        %v7303 = vadd.f32 %v7175, 0.2548296
        %v7304 = vadd.f32 %v7176, 0.2548296
        %v7305 = vadd.f32 %v7177, 0.2548296
        %v7306 = vadd.f32 %v7178, 0.2548296
        %v7307 = vadd.f32 %v7179, 0.2548296
        %v7308 = vadd.f32 %v7180, 0.2548296
        %v7309 = vadd.f32 %v7181, 0.2548296
        %v7310 = vadd.f32 %v7182, 0.2548296
        %v7311 = vadd.f32 %v7183, 0.2548296
        %v7312 = vadd.f32 %v7184, 0.2548296
        %v7313 = vadd.f32 %v7185, 0.2548296
        %v7314 = vadd.f32 %v7186, 0.2548296
        %v7315 = vadd.f32 %v7187, 0.2548296
        %v7316 = vadd.f32 %v7188, 0.2548296
        %v7317 = vadd.f32 %v7189, 0.2548296
        %v7318 = vadd.f32 %v7190, 0.2548296
        %v7319 = vadd.f32 %v7191, 0.2548296
        %v7320 = vadd.f32 %v7192, 0.2548296
        %v7321 = vadd.f32 %v7193, 0.2548296
        %v7322 = vadd.f32 %v7194, 0.2548296
        %v7323 = vadd.f32 %v7195, 0.2548296
        %v7324 = vadd.f32 %v7196, 0.2548296
        %v7325 = vadd.f32 %v7197, 0.2548296
        %v7326 = vadd.f32 %v7198, 0.2548296
        %v7327 = vadd.f32 %v7199, 0.2548296
        %v7328 = vadd.f32 %v7200, 0.2548296
        %v7329 = vadd.f32 %v7201, 0.2548296
        %v7330 = vadd.f32 %v7202, 0.2548296
        %v7331 = vadd.f32 %v7203, 0.2548296
        %v7332 = vadd.f32 %v7204, 0.2548296
        %v7333 = vadd.f32 %v7205, 0.2548296
        %v7334 = vadd.f32 %v7206, 0.2548296
        %v7335 = vadd.f32 %v7207, 0.2548296
        %v7336 = vadd.f32 %v7208, 0.2548296
        %v7337 = vadd.f32 %v7209, 0.2548296
        %v7338 = vadd.f32 %v7210, 0.2548296
        %v7339 = vadd.f32 %v7211, 0.2548296
        %v7340 = vadd.f32 %v7212, 0.2548296
        %v7341 = vadd.f32 %v7213, 0.2548296
        %v7342 = vadd.f32 %v7214, 0.2548296
        %v7343 = vadd.f32 %v7215, 0.2548296
        %v7344 = vadd.f32 %v7216, 0.2548296
        %v7345 = vadd.f32 %v7217, 0.2548296
        %v7346 = vadd.f32 %v7218, 0.2548296
        %v7347 = vadd.f32 %v7219, 0.2548296
        %v7348 = vadd.f32 %v7220, 0.2548296
        %v7349 = vadd.f32 %v7221, 0.2548296
        %v7350 = vadd.f32 %v7222, 0.2548296
        %v7351 = vadd.f32 %v7223, 0.2548296
        %v7352 = vadd.f32 %v7224, 0.2548296
        %v7353 = vadd.f32 %v7225, 0.2548296
        %v7354 = vadd.f32 %v7226, 0.2548296
        %v7355 = vadd.f32 %v7227, 0.2548296
        %v7356 = vadd.f32 %v7228, 0.2548296
        %v7357 = vadd.f32 %v7229, 0.2548296
        %v7358 = vadd.f32 %v7230, 0.2548296
        %v7359 = vadd.f32 %v7231, 0.2548296
        %v7360 = vadd.f32 %v7232, 0.2548296
        %v7361 = vadd.f32 %v7233, 0.2548296
        %v7362 = vadd.f32 %v7234, 0.2548296
        %v7363 = vadd.f32 %v7235, 0.2548296
        %v7364 = vadd.f32 %v7236, 0.2548296
        %v7365 = vadd.f32 %v7237, 0.2548296
        %v7366 = vadd.f32 %v7238, 0.2548296
        %v7367 = vadd.f32 %v7239, 0.2548296
        %v7368 = vadd.f32 %v7240, 0.2548296
        %v7369 = vadd.f32 %v7241, 0.2548296
        %v7370 = vadd.f32 %v7242, 0.2548296
        %v7371 = vadd.f32 %v7243, 0.2548296
        %v7372 = vadd.f32 %v7244, 0.2548296
        %v7373 = vadd.f32 %v7245, 0.2548296
        %v7374 = vadd.f32 %v7246, 0.2548296
        %v7375 = vadd.f32 %v7247, 0.2548296
        %v7376 = vmul.f32 %v7248, %v6097
        %v7377 = vmul.f32 %v7249, %v6099
        %v7378 = vmul.f32 %v7250, %v6101
        %v7379 = vmul.f32 %v7251, %v6103
        %v7380 = vmul.f32 %v7252, %v6105
        %v7381 = vmul.f32 %v7253, %v6107
        %v7382 = vmul.f32 %v7254, %v6109
        %v7383 = vmul.f32 %v7255, %v6111
        %v7384 = vmul.f32 %v7256, %v6113
        %v7385 = vmul.f32 %v7257, %v6115
        %v7386 = vmul.f32 %v7258, %v6117
        %v7387 = vmul.f32 %v7259, %v6119
        %v7388 = vmul.f32 %v7260, %v6121
        %v7389 = vmul.f32 %v7261, %v6123
        %v7390 = vmul.f32 %v7262, %v6125
        %v7391 = vmul.f32 %v7263, %v6127
        %v7392 = vmul.f32 %v7264, %v6129
        %v7393 = vmul.f32 %v7265, %v6131
        %v7394 = vmul.f32 %v7266, %v6133
        %v7395 = vmul.f32 %v7267, %v6135
        %v7396 = vmul.f32 %v7268, %v6137
        %v7397 = vmul.f32 %v7269, %v6139
        %v7398 = vmul.f32 %v7270, %v6141
        %v7399 = vmul.f32 %v7271, %v6143
        %v7400 = vmul.f32 %v7272, %v6145
        %v7401 = vmul.f32 %v7273, %v6147
        %v7402 = vmul.f32 %v7274, %v6149
        %v7403 = vmul.f32 %v7275, %v6151
        %v7404 = vmul.f32 %v7276, %v6153
        %v7405 = vmul.f32 %v7277, %v6155
        %v7406 = vmul.f32 %v7278, %v6157
        %v7407 = vmul.f32 %v7279, %v6159
        %v7408 = vmul.f32 %v7280, %v6161
        %v7409 = vmul.f32 %v7281, %v6163
        %v7410 = vmul.f32 %v7282, %v6165
        %v7411 = vmul.f32 %v7283, %v6167
        %v7412 = vmul.f32 %v7284, %v6169
        %v7413 = vmul.f32 %v7285, %v6171
        %v7414 = vmul.f32 %v7286, %v6173
        %v7415 = vmul.f32 %v7287, %v6175
        %v7416 = vmul.f32 %v7288, %v6177
        %v7417 = vmul.f32 %v7289, %v6179
        %v7418 = vmul.f32 %v7290, %v6181
        %v7419 = vmul.f32 %v7291, %v6183
        %v7420 = vmul.f32 %v7292, %v6185
        %v7421 = vmul.f32 %v7293, %v6187
        %v7422 = vmul.f32 %v7294, %v6189
        %v7423 = vmul.f32 %v7295, %v6191
        %v7424 = vmul.f32 %v7296, %v6193
        %v7425 = vmul.f32 %v7297, %v6195
        %v7426 = vmul.f32 %v7298, %v6197
        %v7427 = vmul.f32 %v7299, %v6199
        %v7428 = vmul.f32 %v7300, %v6201
        %v7429 = vmul.f32 %v7301, %v6203
        %v7430 = vmul.f32 %v7302, %v6205
        %v7431 = vmul.f32 %v7303, %v6207
        %v7432 = vmul.f32 %v7304, %v6209
        %v7433 = vmul.f32 %v7305, %v6211
        %v7434 = vmul.f32 %v7306, %v6213
        %v7435 = vmul.f32 %v7307, %v6215
        %v7436 = vmul.f32 %v7308, %v6217
        %v7437 = vmul.f32 %v7309, %v6219
        %v7438 = vmul.f32 %v7310, %v6221
        %v7439 = vmul.f32 %v7311, %v6223
        %v7440 = vmul.f32 %v7312, %v6225
        %v7441 = vmul.f32 %v7313, %v6227
        %v7442 = vmul.f32 %v7314, %v6229
        %v7443 = vmul.f32 %v7315, %v6231
        %v7444 = vmul.f32 %v7316, %v6233
        %v7445 = vmul.f32 %v7317, %v6235
        %v7446 = vmul.f32 %v7318, %v6237
        %v7447 = vmul.f32 %v7319, %v6239
        %v7448 = vmul.f32 %v7320, %v6241
        %v7449 = vmul.f32 %v7321, %v6243
        %v7450 = vmul.f32 %v7322, %v6245
        %v7451 = vmul.f32 %v7323, %v6247
        %v7452 = vmul.f32 %v7324, %v6249
        %v7453 = vmul.f32 %v7325, %v6251
        %v7454 = vmul.f32 %v7326, %v6253
        %v7455 = vmul.f32 %v7327, %v6255
        %v7456 = vmul.f32 %v7328, %v6257
        %v7457 = vmul.f32 %v7329, %v6259
        %v7458 = vmul.f32 %v7330, %v6261
        %v7459 = vmul.f32 %v7331, %v6263
        %v7460 = vmul.f32 %v7332, %v6265
        %v7461 = vmul.f32 %v7333, %v6267
        %v7462 = vmul.f32 %v7334, %v6269
        %v7463 = vmul.f32 %v7335, %v6271
        %v7464 = vmul.f32 %v7336, %v6273
        %v7465 = vmul.f32 %v7337, %v6275
        %v7466 = vmul.f32 %v7338, %v6277
        %v7467 = vmul.f32 %v7339, %v6279
        %v7468 = vmul.f32 %v7340, %v6281
        %v7469 = vmul.f32 %v7341, %v6283
        %v7470 = vmul.f32 %v7342, %v6285
        %v7471 = vmul.f32 %v7343, %v6287
        %v7472 = vmul.f32 %v7344, %v6289
        %v7473 = vmul.f32 %v7345, %v6291
        %v7474 = vmul.f32 %v7346, %v6293
        %v7475 = vmul.f32 %v7347, %v6295
        %v7476 = vmul.f32 %v7348, %v6297
        %v7477 = vmul.f32 %v7349, %v6299
        %v7478 = vmul.f32 %v7350, %v6301
        %v7479 = vmul.f32 %v7351, %v6303
        %v7480 = vmul.f32 %v7352, %v6305
        %v7481 = vmul.f32 %v7353, %v6307
        %v7482 = vmul.f32 %v7354, %v6309
        %v7483 = vmul.f32 %v7355, %v6311
        %v7484 = vmul.f32 %v7356, %v6313
        %v7485 = vmul.f32 %v7357, %v6315
        %v7486 = vmul.f32 %v7358, %v6317
        %v7487 = vmul.f32 %v7359, %v6319
        %v7488 = vmul.f32 %v7360, %v6321
        %v7489 = vmul.f32 %v7361, %v6323
        %v7490 = vmul.f32 %v7362, %v6325
        %v7491 = vmul.f32 %v7363, %v6327
        %v7492 = vmul.f32 %v7364, %v6329
        %v7493 = vmul.f32 %v7365, %v6331
        %v7494 = vmul.f32 %v7366, %v6333
        %v7495 = vmul.f32 %v7367, %v6335
        %v7496 = vmul.f32 %v7368, %v6337
        %v7497 = vmul.f32 %v7369, %v6339
        %v7498 = vmul.f32 %v7370, %v6341
        %v7499 = vmul.f32 %v7371, %v6343
        %v7500 = vmul.f32 %v7372, %v6345
        %v7501 = vmul.f32 %v7373, %v6347
        %v7502 = vmul.f32 %v7374, %v6349
        %v7503 = vmul.f32 %v7375, %v6351
        %v7504 = vsub.f32 0.0, %v5712
        %v7505 = vsub.f32 0.0, %v5713
        %v7506 = vsub.f32 0.0, %v5714
        %v7507 = vsub.f32 0.0, %v5715
        %v7508 = vsub.f32 0.0, %v5716
        %v7509 = vsub.f32 0.0, %v5717
        %v7510 = vsub.f32 0.0, %v5718
        %v7511 = vsub.f32 0.0, %v5719
        %v7512 = vsub.f32 0.0, %v5720
        %v7513 = vsub.f32 0.0, %v5721
        %v7514 = vsub.f32 0.0, %v5722
        %v7515 = vsub.f32 0.0, %v5723
        %v7516 = vsub.f32 0.0, %v5724
        %v7517 = vsub.f32 0.0, %v5725
        %v7518 = vsub.f32 0.0, %v5726
        %v7519 = vsub.f32 0.0, %v5727
        %v7520 = vsub.f32 0.0, %v5728
        %v7521 = vsub.f32 0.0, %v5729
        %v7522 = vsub.f32 0.0, %v5730
        %v7523 = vsub.f32 0.0, %v5731
        %v7524 = vsub.f32 0.0, %v5732
        %v7525 = vsub.f32 0.0, %v5733
        %v7526 = vsub.f32 0.0, %v5734
        %v7527 = vsub.f32 0.0, %v5735
        %v7528 = vsub.f32 0.0, %v5736
        %v7529 = vsub.f32 0.0, %v5737
        %v7530 = vsub.f32 0.0, %v5738
        %v7531 = vsub.f32 0.0, %v5739
        %v7532 = vsub.f32 0.0, %v5740
        %v7533 = vsub.f32 0.0, %v5741
        %v7534 = vsub.f32 0.0, %v5742
        %v7535 = vsub.f32 0.0, %v5743
        %v7536 = vsub.f32 0.0, %v5744
        %v7537 = vsub.f32 0.0, %v5745
        %v7538 = vsub.f32 0.0, %v5746
        %v7539 = vsub.f32 0.0, %v5747
        %v7540 = vsub.f32 0.0, %v5748
        %v7541 = vsub.f32 0.0, %v5749
        %v7542 = vsub.f32 0.0, %v5750
        %v7543 = vsub.f32 0.0, %v5751
        %v7544 = vsub.f32 0.0, %v5752
        %v7545 = vsub.f32 0.0, %v5753
        %v7546 = vsub.f32 0.0, %v5754
        %v7547 = vsub.f32 0.0, %v5755
        %v7548 = vsub.f32 0.0, %v5756
        %v7549 = vsub.f32 0.0, %v5757
        %v7550 = vsub.f32 0.0, %v5758
        %v7551 = vsub.f32 0.0, %v5759
        %v7552 = vsub.f32 0.0, %v5760
        %v7553 = vsub.f32 0.0, %v5761
        %v7554 = vsub.f32 0.0, %v5762
        %v7555 = vsub.f32 0.0, %v5763
        %v7556 = vsub.f32 0.0, %v5764
        %v7557 = vsub.f32 0.0, %v5765
        %v7558 = vsub.f32 0.0, %v5766
        %v7559 = vsub.f32 0.0, %v5767
        %v7560 = vsub.f32 0.0, %v5768
        %v7561 = vsub.f32 0.0, %v5769
        %v7562 = vsub.f32 0.0, %v5770
        %v7563 = vsub.f32 0.0, %v5771
        %v7564 = vsub.f32 0.0, %v5772
        %v7565 = vsub.f32 0.0, %v5773
        %v7566 = vsub.f32 0.0, %v5774
        %v7567 = vsub.f32 0.0, %v5775
        %v7568 = vsub.f32 0.0, %v5776
        %v7569 = vsub.f32 0.0, %v5777
        %v7570 = vsub.f32 0.0, %v5778
        %v7571 = vsub.f32 0.0, %v5779
        %v7572 = vsub.f32 0.0, %v5780
        %v7573 = vsub.f32 0.0, %v5781
        %v7574 = vsub.f32 0.0, %v5782
        %v7575 = vsub.f32 0.0, %v5783
        %v7576 = vsub.f32 0.0, %v5784
        %v7577 = vsub.f32 0.0, %v5785
        %v7578 = vsub.f32 0.0, %v5786
        %v7579 = vsub.f32 0.0, %v5787
        %v7580 = vsub.f32 0.0, %v5788
        %v7581 = vsub.f32 0.0, %v5789
        %v7582 = vsub.f32 0.0, %v5790
        %v7583 = vsub.f32 0.0, %v5791
        %v7584 = vsub.f32 0.0, %v5792
        %v7585 = vsub.f32 0.0, %v5793
        %v7586 = vsub.f32 0.0, %v5794
        %v7587 = vsub.f32 0.0, %v5795
        %v7588 = vsub.f32 0.0, %v5796
        %v7589 = vsub.f32 0.0, %v5797
        %v7590 = vsub.f32 0.0, %v5798
        %v7591 = vsub.f32 0.0, %v5799
        %v7592 = vsub.f32 0.0, %v5800
        %v7593 = vsub.f32 0.0, %v5801
        %v7594 = vsub.f32 0.0, %v5802
        %v7595 = vsub.f32 0.0, %v5803
        %v7596 = vsub.f32 0.0, %v5804
        %v7597 = vsub.f32 0.0, %v5805
        %v7598 = vsub.f32 0.0, %v5806
        %v7599 = vsub.f32 0.0, %v5807
        %v7600 = vsub.f32 0.0, %v5808
        %v7601 = vsub.f32 0.0, %v5809
        %v7602 = vsub.f32 0.0, %v5810
        %v7603 = vsub.f32 0.0, %v5811
        %v7604 = vsub.f32 0.0, %v5812
        %v7605 = vsub.f32 0.0, %v5813
        %v7606 = vsub.f32 0.0, %v5814
        %v7607 = vsub.f32 0.0, %v5815
        %v7608 = vsub.f32 0.0, %v5816
        %v7609 = vsub.f32 0.0, %v5817
        %v7610 = vsub.f32 0.0, %v5818
        %v7611 = vsub.f32 0.0, %v5819
        %v7612 = vsub.f32 0.0, %v5820
        %v7613 = vsub.f32 0.0, %v5821
        %v7614 = vsub.f32 0.0, %v5822
        %v7615 = vsub.f32 0.0, %v5823
        %v7616 = vsub.f32 0.0, %v5824
        %v7617 = vsub.f32 0.0, %v5825
        %v7618 = vsub.f32 0.0, %v5826
        %v7619 = vsub.f32 0.0, %v5827
        %v7620 = vsub.f32 0.0, %v5828
        %v7621 = vsub.f32 0.0, %v5829
        %v7622 = vsub.f32 0.0, %v5830
        %v7623 = vsub.f32 0.0, %v5831
        %v7624 = vsub.f32 0.0, %v5832
        %v7625 = vsub.f32 0.0, %v5833
        %v7626 = vsub.f32 0.0, %v5834
        %v7627 = vsub.f32 0.0, %v5835
        %v7628 = vsub.f32 0.0, %v5836
        %v7629 = vsub.f32 0.0, %v5837
        %v7630 = vsub.f32 0.0, %v5838
        %v7631 = vsub.f32 0.0, %v5839
        %v7632 = vmul.f32 %v7504, %v5712
        %v7633 = vmul.f32 %v7505, %v5713
        %v7634 = vmul.f32 %v7506, %v5714
        %v7635 = vmul.f32 %v7507, %v5715
        %v7636 = vmul.f32 %v7508, %v5716
        %v7637 = vmul.f32 %v7509, %v5717
        %v7638 = vmul.f32 %v7510, %v5718
        %v7639 = vmul.f32 %v7511, %v5719
        %v7640 = vmul.f32 %v7512, %v5720
        %v7641 = vmul.f32 %v7513, %v5721
        %v7642 = vmul.f32 %v7514, %v5722
        %v7643 = vmul.f32 %v7515, %v5723
        %v7644 = vmul.f32 %v7516, %v5724
        %v7645 = vmul.f32 %v7517, %v5725
        %v7646 = vmul.f32 %v7518, %v5726
        %v7647 = vmul.f32 %v7519, %v5727
        %v7648 = vmul.f32 %v7520, %v5728
        %v7649 = vmul.f32 %v7521, %v5729
        %v7650 = vmul.f32 %v7522, %v5730
        %v7651 = vmul.f32 %v7523, %v5731
        %v7652 = vmul.f32 %v7524, %v5732
        %v7653 = vmul.f32 %v7525, %v5733
        %v7654 = vmul.f32 %v7526, %v5734
        %v7655 = vmul.f32 %v7527, %v5735
        %v7656 = vmul.f32 %v7528, %v5736
        %v7657 = vmul.f32 %v7529, %v5737
        %v7658 = vmul.f32 %v7530, %v5738
        %v7659 = vmul.f32 %v7531, %v5739
        %v7660 = vmul.f32 %v7532, %v5740
        %v7661 = vmul.f32 %v7533, %v5741
        %v7662 = vmul.f32 %v7534, %v5742
        %v7663 = vmul.f32 %v7535, %v5743
        %v7664 = vmul.f32 %v7536, %v5744
        %v7665 = vmul.f32 %v7537, %v5745
        %v7666 = vmul.f32 %v7538, %v5746
        %v7667 = vmul.f32 %v7539, %v5747
        %v7668 = vmul.f32 %v7540, %v5748
        %v7669 = vmul.f32 %v7541, %v5749
        %v7670 = vmul.f32 %v7542, %v5750
        %v7671 = vmul.f32 %v7543, %v5751
        %v7672 = vmul.f32 %v7544, %v5752
        %v7673 = vmul.f32 %v7545, %v5753
        %v7674 = vmul.f32 %v7546, %v5754
        %v7675 = vmul.f32 %v7547, %v5755
        %v7676 = vmul.f32 %v7548, %v5756
        %v7677 = vmul.f32 %v7549, %v5757
        %v7678 = vmul.f32 %v7550, %v5758
        %v7679 = vmul.f32 %v7551, %v5759
        %v7680 = vmul.f32 %v7552, %v5760
        %v7681 = vmul.f32 %v7553, %v5761
        %v7682 = vmul.f32 %v7554, %v5762
        %v7683 = vmul.f32 %v7555, %v5763
        %v7684 = vmul.f32 %v7556, %v5764
        %v7685 = vmul.f32 %v7557, %v5765
        %v7686 = vmul.f32 %v7558, %v5766
        %v7687 = vmul.f32 %v7559, %v5767
        %v7688 = vmul.f32 %v7560, %v5768
        %v7689 = vmul.f32 %v7561, %v5769
        %v7690 = vmul.f32 %v7562, %v5770
        %v7691 = vmul.f32 %v7563, %v5771
        %v7692 = vmul.f32 %v7564, %v5772
        %v7693 = vmul.f32 %v7565, %v5773
        %v7694 = vmul.f32 %v7566, %v5774
        %v7695 = vmul.f32 %v7567, %v5775
        %v7696 = vmul.f32 %v7568, %v5776
        %v7697 = vmul.f32 %v7569, %v5777
        %v7698 = vmul.f32 %v7570, %v5778
        %v7699 = vmul.f32 %v7571, %v5779
        %v7700 = vmul.f32 %v7572, %v5780
        %v7701 = vmul.f32 %v7573, %v5781
        %v7702 = vmul.f32 %v7574, %v5782
        %v7703 = vmul.f32 %v7575, %v5783
        %v7704 = vmul.f32 %v7576, %v5784
        %v7705 = vmul.f32 %v7577, %v5785
        %v7706 = vmul.f32 %v7578, %v5786
        %v7707 = vmul.f32 %v7579, %v5787
        %v7708 = vmul.f32 %v7580, %v5788
        %v7709 = vmul.f32 %v7581, %v5789
        %v7710 = vmul.f32 %v7582, %v5790
        %v7711 = vmul.f32 %v7583, %v5791
        %v7712 = vmul.f32 %v7584, %v5792
        %v7713 = vmul.f32 %v7585, %v5793
        %v7714 = vmul.f32 %v7586, %v5794
        %v7715 = vmul.f32 %v7587, %v5795
        %v7716 = vmul.f32 %v7588, %v5796
        %v7717 = vmul.f32 %v7589, %v5797
        %v7718 = vmul.f32 %v7590, %v5798
        %v7719 = vmul.f32 %v7591, %v5799
        %v7720 = vmul.f32 %v7592, %v5800
        %v7721 = vmul.f32 %v7593, %v5801
        %v7722 = vmul.f32 %v7594, %v5802
        %v7723 = vmul.f32 %v7595, %v5803
        %v7724 = vmul.f32 %v7596, %v5804
        %v7725 = vmul.f32 %v7597, %v5805
        %v7726 = vmul.f32 %v7598, %v5806
        %v7727 = vmul.f32 %v7599, %v5807
        %v7728 = vmul.f32 %v7600, %v5808
        %v7729 = vmul.f32 %v7601, %v5809
        %v7730 = vmul.f32 %v7602, %v5810
        %v7731 = vmul.f32 %v7603, %v5811
        %v7732 = vmul.f32 %v7604, %v5812
        %v7733 = vmul.f32 %v7605, %v5813
        %v7734 = vmul.f32 %v7606, %v5814
        %v7735 = vmul.f32 %v7607, %v5815
        %v7736 = vmul.f32 %v7608, %v5816
        %v7737 = vmul.f32 %v7609, %v5817
        %v7738 = vmul.f32 %v7610, %v5818
        %v7739 = vmul.f32 %v7611, %v5819
        %v7740 = vmul.f32 %v7612, %v5820
        %v7741 = vmul.f32 %v7613, %v5821
        %v7742 = vmul.f32 %v7614, %v5822
        %v7743 = vmul.f32 %v7615, %v5823
        %v7744 = vmul.f32 %v7616, %v5824
        %v7745 = vmul.f32 %v7617, %v5825
        %v7746 = vmul.f32 %v7618, %v5826
        %v7747 = vmul.f32 %v7619, %v5827
        %v7748 = vmul.f32 %v7620, %v5828
        %v7749 = vmul.f32 %v7621, %v5829
        %v7750 = vmul.f32 %v7622, %v5830
        %v7751 = vmul.f32 %v7623, %v5831
        %v7752 = vmul.f32 %v7624, %v5832
        %v7753 = vmul.f32 %v7625, %v5833
        %v7754 = vmul.f32 %v7626, %v5834
        %v7755 = vmul.f32 %v7627, %v5835
        %v7756 = vmul.f32 %v7628, %v5836
        %v7757 = vmul.f32 %v7629, %v5837
        %v7758 = vmul.f32 %v7630, %v5838
        %v7759 = vmul.f32 %v7631, %v5839
        %v7760 = vmul.f32 %v7632, 1.442695
        %v7761 = vpow.pop %v7760
        %v7762 = vmul.f32 %v7633, 1.442695
        %v7763 = vpow.pop %v7762
        %v7764 = vmul.f32 %v7634, 1.442695
        %v7765 = vpow.pop %v7764
        %v7766 = vmul.f32 %v7635, 1.442695
        %v7767 = vpow.pop %v7766
        %v7768 = vmul.f32 %v7636, 1.442695
        %v7769 = vpow.pop %v7768
        %v7770 = vmul.f32 %v7637, 1.442695
        %v7771 = vpow.pop %v7770
        %v7772 = vmul.f32 %v7638, 1.442695
        %v7773 = vpow.pop %v7772
        %v7774 = vmul.f32 %v7639, 1.442695
        %v7775 = vpow.pop %v7774
        %v7776 = vmul.f32 %v7640, 1.442695
        %v7777 = vpow.pop %v7776
        %v7778 = vmul.f32 %v7641, 1.442695
        %v7779 = vpow.pop %v7778
        %v7780 = vmul.f32 %v7642, 1.442695
        %v7781 = vpow.pop %v7780
        %v7782 = vmul.f32 %v7643, 1.442695
        %v7783 = vpow.pop %v7782
        %v7784 = vmul.f32 %v7644, 1.442695
        %v7785 = vpow.pop %v7784
        %v7786 = vmul.f32 %v7645, 1.442695
        %v7787 = vpow.pop %v7786
        %v7788 = vmul.f32 %v7646, 1.442695
        %v7789 = vpow.pop %v7788
        %v7790 = vmul.f32 %v7647, 1.442695
        %v7791 = vpow.pop %v7790
        %v7792 = vmul.f32 %v7648, 1.442695
        %v7793 = vpow.pop %v7792
        %v7794 = vmul.f32 %v7649, 1.442695
        %v7795 = vpow.pop %v7794
        %v7796 = vmul.f32 %v7650, 1.442695
        %v7797 = vpow.pop %v7796
        %v7798 = vmul.f32 %v7651, 1.442695
        %v7799 = vpow.pop %v7798
        %v7800 = vmul.f32 %v7652, 1.442695
        %v7801 = vpow.pop %v7800
        %v7802 = vmul.f32 %v7653, 1.442695
        %v7803 = vpow.pop %v7802
        %v7804 = vmul.f32 %v7654, 1.442695
        %v7805 = vpow.pop %v7804
        %v7806 = vmul.f32 %v7655, 1.442695
        %v7807 = vpow.pop %v7806
        %v7808 = vmul.f32 %v7656, 1.442695
        %v7809 = vpow.pop %v7808
        %v7810 = vmul.f32 %v7657, 1.442695
        %v7811 = vpow.pop %v7810
        %v7812 = vmul.f32 %v7658, 1.442695
        %v7813 = vpow.pop %v7812
        %v7814 = vmul.f32 %v7659, 1.442695
        %v7815 = vpow.pop %v7814
        %v7816 = vmul.f32 %v7660, 1.442695
        %v7817 = vpow.pop %v7816
        %v7818 = vmul.f32 %v7661, 1.442695
        %v7819 = vpow.pop %v7818
        %v7820 = vmul.f32 %v7662, 1.442695
        %v7821 = vpow.pop %v7820
        %v7822 = vmul.f32 %v7663, 1.442695
        %v7823 = vpow.pop %v7822
        %v7824 = vmul.f32 %v7664, 1.442695
        %v7825 = vpow.pop %v7824
        %v7826 = vmul.f32 %v7665, 1.442695
        %v7827 = vpow.pop %v7826
        %v7828 = vmul.f32 %v7666, 1.442695
        %v7829 = vpow.pop %v7828
        %v7830 = vmul.f32 %v7667, 1.442695
        %v7831 = vpow.pop %v7830
        %v7832 = vmul.f32 %v7668, 1.442695
        %v7833 = vpow.pop %v7832
        %v7834 = vmul.f32 %v7669, 1.442695
        %v7835 = vpow.pop %v7834
        %v7836 = vmul.f32 %v7670, 1.442695
        %v7837 = vpow.pop %v7836
        %v7838 = vmul.f32 %v7671, 1.442695
        %v7839 = vpow.pop %v7838
        %v7840 = vmul.f32 %v7672, 1.442695
        %v7841 = vpow.pop %v7840
        %v7842 = vmul.f32 %v7673, 1.442695
        %v7843 = vpow.pop %v7842
        %v7844 = vmul.f32 %v7674, 1.442695
        %v7845 = vpow.pop %v7844
        %v7846 = vmul.f32 %v7675, 1.442695
        %v7847 = vpow.pop %v7846
        %v7848 = vmul.f32 %v7676, 1.442695
        %v7849 = vpow.pop %v7848
        %v7850 = vmul.f32 %v7677, 1.442695
        %v7851 = vpow.pop %v7850
        %v7852 = vmul.f32 %v7678, 1.442695
        %v7853 = vpow.pop %v7852
        %v7854 = vmul.f32 %v7679, 1.442695
        %v7855 = vpow.pop %v7854
        %v7856 = vmul.f32 %v7680, 1.442695
        %v7857 = vpow.pop %v7856
        %v7858 = vmul.f32 %v7681, 1.442695
        %v7859 = vpow.pop %v7858
        %v7860 = vmul.f32 %v7682, 1.442695
        %v7861 = vpow.pop %v7860
        %v7862 = vmul.f32 %v7683, 1.442695
        %v7863 = vpow.pop %v7862
        %v7864 = vmul.f32 %v7684, 1.442695
        %v7865 = vpow.pop %v7864
        %v7866 = vmul.f32 %v7685, 1.442695
        %v7867 = vpow.pop %v7866
        %v7868 = vmul.f32 %v7686, 1.442695
        %v7869 = vpow.pop %v7868
        %v7870 = vmul.f32 %v7687, 1.442695
        %v7871 = vpow.pop %v7870
        %v7872 = vmul.f32 %v7688, 1.442695
        %v7873 = vpow.pop %v7872
        %v7874 = vmul.f32 %v7689, 1.442695
        %v7875 = vpow.pop %v7874
        %v7876 = vmul.f32 %v7690, 1.442695
        %v7877 = vpow.pop %v7876
        %v7878 = vmul.f32 %v7691, 1.442695
        %v7879 = vpow.pop %v7878
        %v7880 = vmul.f32 %v7692, 1.442695
        %v7881 = vpow.pop %v7880
        %v7882 = vmul.f32 %v7693, 1.442695
        %v7883 = vpow.pop %v7882
        %v7884 = vmul.f32 %v7694, 1.442695
        %v7885 = vpow.pop %v7884
        %v7886 = vmul.f32 %v7695, 1.442695
        %v7887 = vpow.pop %v7886
        %v7888 = vmul.f32 %v7696, 1.442695
        %v7889 = vpow.pop %v7888
        %v7890 = vmul.f32 %v7697, 1.442695
        %v7891 = vpow.pop %v7890
        %v7892 = vmul.f32 %v7698, 1.442695
        %v7893 = vpow.pop %v7892
        %v7894 = vmul.f32 %v7699, 1.442695
        %v7895 = vpow.pop %v7894
        %v7896 = vmul.f32 %v7700, 1.442695
        %v7897 = vpow.pop %v7896
        %v7898 = vmul.f32 %v7701, 1.442695
        %v7899 = vpow.pop %v7898
        %v7900 = vmul.f32 %v7702, 1.442695
        %v7901 = vpow.pop %v7900
        %v7902 = vmul.f32 %v7703, 1.442695
        %v7903 = vpow.pop %v7902
        %v7904 = vmul.f32 %v7704, 1.442695
        %v7905 = vpow.pop %v7904
        %v7906 = vmul.f32 %v7705, 1.442695
        %v7907 = vpow.pop %v7906
        %v7908 = vmul.f32 %v7706, 1.442695
        %v7909 = vpow.pop %v7908
        %v7910 = vmul.f32 %v7707, 1.442695
        %v7911 = vpow.pop %v7910
        %v7912 = vmul.f32 %v7708, 1.442695
        %v7913 = vpow.pop %v7912
        %v7914 = vmul.f32 %v7709, 1.442695
        %v7915 = vpow.pop %v7914
        %v7916 = vmul.f32 %v7710, 1.442695
        %v7917 = vpow.pop %v7916
        %v7918 = vmul.f32 %v7711, 1.442695
        %v7919 = vpow.pop %v7918
        %v7920 = vmul.f32 %v7712, 1.442695
        %v7921 = vpow.pop %v7920
        %v7922 = vmul.f32 %v7713, 1.442695
        %v7923 = vpow.pop %v7922
        %v7924 = vmul.f32 %v7714, 1.442695
        %v7925 = vpow.pop %v7924
        %v7926 = vmul.f32 %v7715, 1.442695
        %v7927 = vpow.pop %v7926
        %v7928 = vmul.f32 %v7716, 1.442695
        %v7929 = vpow.pop %v7928
        %v7930 = vmul.f32 %v7717, 1.442695
        %v7931 = vpow.pop %v7930
        %v7932 = vmul.f32 %v7718, 1.442695
        %v7933 = vpow.pop %v7932
        %v7934 = vmul.f32 %v7719, 1.442695
        %v7935 = vpow.pop %v7934
        %v7936 = vmul.f32 %v7720, 1.442695
        %v7937 = vpow.pop %v7936
        %v7938 = vmul.f32 %v7721, 1.442695
        %v7939 = vpow.pop %v7938
        %v7940 = vmul.f32 %v7722, 1.442695
        %v7941 = vpow.pop %v7940
        %v7942 = vmul.f32 %v7723, 1.442695
        %v7943 = vpow.pop %v7942
        %v7944 = vmul.f32 %v7724, 1.442695
        %v7945 = vpow.pop %v7944
        %v7946 = vmul.f32 %v7725, 1.442695
        %v7947 = vpow.pop %v7946
        %v7948 = vmul.f32 %v7726, 1.442695
        %v7949 = vpow.pop %v7948
        %v7950 = vmul.f32 %v7727, 1.442695
        %v7951 = vpow.pop %v7950
        %v7952 = vmul.f32 %v7728, 1.442695
        %v7953 = vpow.pop %v7952
        %v7954 = vmul.f32 %v7729, 1.442695
        %v7955 = vpow.pop %v7954
        %v7956 = vmul.f32 %v7730, 1.442695
        %v7957 = vpow.pop %v7956
        %v7958 = vmul.f32 %v7731, 1.442695
        %v7959 = vpow.pop %v7958
        %v7960 = vmul.f32 %v7732, 1.442695
        %v7961 = vpow.pop %v7960
        %v7962 = vmul.f32 %v7733, 1.442695
        %v7963 = vpow.pop %v7962
        %v7964 = vmul.f32 %v7734, 1.442695
        %v7965 = vpow.pop %v7964
        %v7966 = vmul.f32 %v7735, 1.442695
        %v7967 = vpow.pop %v7966
        %v7968 = vmul.f32 %v7736, 1.442695
        %v7969 = vpow.pop %v7968
        %v7970 = vmul.f32 %v7737, 1.442695
        %v7971 = vpow.pop %v7970
        %v7972 = vmul.f32 %v7738, 1.442695
        %v7973 = vpow.pop %v7972
        %v7974 = vmul.f32 %v7739, 1.442695
        %v7975 = vpow.pop %v7974
        %v7976 = vmul.f32 %v7740, 1.442695
        %v7977 = vpow.pop %v7976
        %v7978 = vmul.f32 %v7741, 1.442695
        %v7979 = vpow.pop %v7978
        %v7980 = vmul.f32 %v7742, 1.442695
        %v7981 = vpow.pop %v7980
        %v7982 = vmul.f32 %v7743, 1.442695
        %v7983 = vpow.pop %v7982
        %v7984 = vmul.f32 %v7744, 1.442695
        %v7985 = vpow.pop %v7984
        %v7986 = vmul.f32 %v7745, 1.442695
        %v7987 = vpow.pop %v7986
        %v7988 = vmul.f32 %v7746, 1.442695
        %v7989 = vpow.pop %v7988
        %v7990 = vmul.f32 %v7747, 1.442695
        %v7991 = vpow.pop %v7990
        %v7992 = vmul.f32 %v7748, 1.442695
        %v7993 = vpow.pop %v7992
        %v7994 = vmul.f32 %v7749, 1.442695
        %v7995 = vpow.pop %v7994
        %v7996 = vmul.f32 %v7750, 1.442695
        %v7997 = vpow.pop %v7996
        %v7998 = vmul.f32 %v7751, 1.442695
        %v7999 = vpow.pop %v7998
        %v8000 = vmul.f32 %v7752, 1.442695
        %v8001 = vpow.pop %v8000
        %v8002 = vmul.f32 %v7753, 1.442695
        %v8003 = vpow.pop %v8002
        %v8004 = vmul.f32 %v7754, 1.442695
        %v8005 = vpow.pop %v8004
        %v8006 = vmul.f32 %v7755, 1.442695
        %v8007 = vpow.pop %v8006
        %v8008 = vmul.f32 %v7756, 1.442695
        %v8009 = vpow.pop %v8008
        %v8010 = vmul.f32 %v7757, 1.442695
        %v8011 = vpow.pop %v8010
        %v8012 = vmul.f32 %v7758, 1.442695
        %v8013 = vpow.pop %v8012
        %v8014 = vmul.f32 %v7759, 1.442695
        %v8015 = vpow.pop %v8014
        %v8016 = vmul.f32 %v7376, %v7761
        %v8017 = vmul.f32 %v7377, %v7763
        %v8018 = vmul.f32 %v7378, %v7765
        %v8019 = vmul.f32 %v7379, %v7767
        %v8020 = vmul.f32 %v7380, %v7769
        %v8021 = vmul.f32 %v7381, %v7771
        %v8022 = vmul.f32 %v7382, %v7773
        %v8023 = vmul.f32 %v7383, %v7775
        %v8024 = vmul.f32 %v7384, %v7777
        %v8025 = vmul.f32 %v7385, %v7779
        %v8026 = vmul.f32 %v7386, %v7781
        %v8027 = vmul.f32 %v7387, %v7783
        %v8028 = vmul.f32 %v7388, %v7785
        %v8029 = vmul.f32 %v7389, %v7787
        %v8030 = vmul.f32 %v7390, %v7789
        %v8031 = vmul.f32 %v7391, %v7791
        %v8032 = vmul.f32 %v7392, %v7793
        %v8033 = vmul.f32 %v7393, %v7795
        %v8034 = vmul.f32 %v7394, %v7797
        %v8035 = vmul.f32 %v7395, %v7799
        %v8036 = vmul.f32 %v7396, %v7801
        %v8037 = vmul.f32 %v7397, %v7803
        %v8038 = vmul.f32 %v7398, %v7805
        %v8039 = vmul.f32 %v7399, %v7807
        %v8040 = vmul.f32 %v7400, %v7809
        %v8041 = vmul.f32 %v7401, %v7811
        %v8042 = vmul.f32 %v7402, %v7813
        %v8043 = vmul.f32 %v7403, %v7815
        %v8044 = vmul.f32 %v7404, %v7817
        %v8045 = vmul.f32 %v7405, %v7819
        %v8046 = vmul.f32 %v7406, %v7821
        %v8047 = vmul.f32 %v7407, %v7823
        %v8048 = vmul.f32 %v7408, %v7825
        %v8049 = vmul.f32 %v7409, %v7827
        %v8050 = vmul.f32 %v7410, %v7829
        %v8051 = vmul.f32 %v7411, %v7831
        %v8052 = vmul.f32 %v7412, %v7833
        %v8053 = vmul.f32 %v7413, %v7835
        %v8054 = vmul.f32 %v7414, %v7837
        %v8055 = vmul.f32 %v7415, %v7839
        %v8056 = vmul.f32 %v7416, %v7841
        %v8057 = vmul.f32 %v7417, %v7843
        %v8058 = vmul.f32 %v7418, %v7845
        %v8059 = vmul.f32 %v7419, %v7847
        %v8060 = vmul.f32 %v7420, %v7849
        %v8061 = vmul.f32 %v7421, %v7851
        %v8062 = vmul.f32 %v7422, %v7853
        %v8063 = vmul.f32 %v7423, %v7855
        %v8064 = vmul.f32 %v7424, %v7857
        %v8065 = vmul.f32 %v7425, %v7859
        %v8066 = vmul.f32 %v7426, %v7861
        %v8067 = vmul.f32 %v7427, %v7863
        %v8068 = vmul.f32 %v7428, %v7865
        %v8069 = vmul.f32 %v7429, %v7867
        %v8070 = vmul.f32 %v7430, %v7869
        %v8071 = vmul.f32 %v7431, %v7871
        %v8072 = vmul.f32 %v7432, %v7873
        %v8073 = vmul.f32 %v7433, %v7875
        %v8074 = vmul.f32 %v7434, %v7877
        %v8075 = vmul.f32 %v7435, %v7879
        %v8076 = vmul.f32 %v7436, %v7881
        %v8077 = vmul.f32 %v7437, %v7883
        %v8078 = vmul.f32 %v7438, %v7885
        %v8079 = vmul.f32 %v7439, %v7887
        %v8080 = vmul.f32 %v7440, %v7889
        %v8081 = vmul.f32 %v7441, %v7891
        %v8082 = vmul.f32 %v7442, %v7893
        %v8083 = vmul.f32 %v7443, %v7895
        %v8084 = vmul.f32 %v7444, %v7897
        %v8085 = vmul.f32 %v7445, %v7899
        %v8086 = vmul.f32 %v7446, %v7901
        %v8087 = vmul.f32 %v7447, %v7903
        %v8088 = vmul.f32 %v7448, %v7905
        %v8089 = vmul.f32 %v7449, %v7907
        %v8090 = vmul.f32 %v7450, %v7909
        %v8091 = vmul.f32 %v7451, %v7911
        %v8092 = vmul.f32 %v7452, %v7913
        %v8093 = vmul.f32 %v7453, %v7915
        %v8094 = vmul.f32 %v7454, %v7917
        %v8095 = vmul.f32 %v7455, %v7919
        %v8096 = vmul.f32 %v7456, %v7921
        %v8097 = vmul.f32 %v7457, %v7923
        %v8098 = vmul.f32 %v7458, %v7925
        %v8099 = vmul.f32 %v7459, %v7927
        %v8100 = vmul.f32 %v7460, %v7929
        %v8101 = vmul.f32 %v7461, %v7931
        %v8102 = vmul.f32 %v7462, %v7933
        %v8103 = vmul.f32 %v7463, %v7935
        %v8104 = vmul.f32 %v7464, %v7937
        %v8105 = vmul.f32 %v7465, %v7939
        %v8106 = vmul.f32 %v7466, %v7941
        %v8107 = vmul.f32 %v7467, %v7943
        %v8108 = vmul.f32 %v7468, %v7945
        %v8109 = vmul.f32 %v7469, %v7947
        %v8110 = vmul.f32 %v7470, %v7949
        %v8111 = vmul.f32 %v7471, %v7951
        %v8112 = vmul.f32 %v7472, %v7953
        %v8113 = vmul.f32 %v7473, %v7955
        %v8114 = vmul.f32 %v7474, %v7957
        %v8115 = vmul.f32 %v7475, %v7959
        %v8116 = vmul.f32 %v7476, %v7961
        %v8117 = vmul.f32 %v7477, %v7963
        %v8118 = vmul.f32 %v7478, %v7965
        %v8119 = vmul.f32 %v7479, %v7967
        %v8120 = vmul.f32 %v7480, %v7969
        %v8121 = vmul.f32 %v7481, %v7971
        %v8122 = vmul.f32 %v7482, %v7973
        %v8123 = vmul.f32 %v7483, %v7975
        %v8124 = vmul.f32 %v7484, %v7977
        %v8125 = vmul.f32 %v7485, %v7979
        %v8126 = vmul.f32 %v7486, %v7981
        %v8127 = vmul.f32 %v7487, %v7983
        %v8128 = vmul.f32 %v7488, %v7985
        %v8129 = vmul.f32 %v7489, %v7987
        %v8130 = vmul.f32 %v7490, %v7989
        %v8131 = vmul.f32 %v7491, %v7991
        %v8132 = vmul.f32 %v7492, %v7993
        %v8133 = vmul.f32 %v7493, %v7995
        %v8134 = vmul.f32 %v7494, %v7997
        %v8135 = vmul.f32 %v7495, %v7999
        %v8136 = vmul.f32 %v7496, %v8001
        %v8137 = vmul.f32 %v7497, %v8003
        %v8138 = vmul.f32 %v7498, %v8005
        %v8139 = vmul.f32 %v7499, %v8007
        %v8140 = vmul.f32 %v7500, %v8009
        %v8141 = vmul.f32 %v7501, %v8011
        %v8142 = vmul.f32 %v7502, %v8013
        %v8143 = vmul.f32 %v7503, %v8015
        %v8144 = vsub.f32 1.0, %v8016
        %v8145 = vsub.f32 1.0, %v8017
        %v8146 = vsub.f32 1.0, %v8018
        %v8147 = vsub.f32 1.0, %v8019
        %v8148 = vsub.f32 1.0, %v8020
        %v8149 = vsub.f32 1.0, %v8021
        %v8150 = vsub.f32 1.0, %v8022
        %v8151 = vsub.f32 1.0, %v8023
        %v8152 = vsub.f32 1.0, %v8024
        %v8153 = vsub.f32 1.0, %v8025
        %v8154 = vsub.f32 1.0, %v8026
        %v8155 = vsub.f32 1.0, %v8027
        %v8156 = vsub.f32 1.0, %v8028
        %v8157 = vsub.f32 1.0, %v8029
        %v8158 = vsub.f32 1.0, %v8030
        %v8159 = vsub.f32 1.0, %v8031
        %v8160 = vsub.f32 1.0, %v8032
        %v8161 = vsub.f32 1.0, %v8033
        %v8162 = vsub.f32 1.0, %v8034
        %v8163 = vsub.f32 1.0, %v8035
        %v8164 = vsub.f32 1.0, %v8036
        %v8165 = vsub.f32 1.0, %v8037
        %v8166 = vsub.f32 1.0, %v8038
        %v8167 = vsub.f32 1.0, %v8039
        %v8168 = vsub.f32 1.0, %v8040
        %v8169 = vsub.f32 1.0, %v8041
        %v8170 = vsub.f32 1.0, %v8042
        %v8171 = vsub.f32 1.0, %v8043
        %v8172 = vsub.f32 1.0, %v8044
        %v8173 = vsub.f32 1.0, %v8045
        %v8174 = vsub.f32 1.0, %v8046
        %v8175 = vsub.f32 1.0, %v8047
        %v8176 = vsub.f32 1.0, %v8048
        %v8177 = vsub.f32 1.0, %v8049
        %v8178 = vsub.f32 1.0, %v8050
        %v8179 = vsub.f32 1.0, %v8051
        %v8180 = vsub.f32 1.0, %v8052
        %v8181 = vsub.f32 1.0, %v8053
        %v8182 = vsub.f32 1.0, %v8054
        %v8183 = vsub.f32 1.0, %v8055
        %v8184 = vsub.f32 1.0, %v8056
        %v8185 = vsub.f32 1.0, %v8057
        %v8186 = vsub.f32 1.0, %v8058
        %v8187 = vsub.f32 1.0, %v8059
        %v8188 = vsub.f32 1.0, %v8060
        %v8189 = vsub.f32 1.0, %v8061
        %v8190 = vsub.f32 1.0, %v8062
        %v8191 = vsub.f32 1.0, %v8063
        %v8192 = vsub.f32 1.0, %v8064
        %v8193 = vsub.f32 1.0, %v8065
        %v8194 = vsub.f32 1.0, %v8066
        %v8195 = vsub.f32 1.0, %v8067
        %v8196 = vsub.f32 1.0, %v8068
        %v8197 = vsub.f32 1.0, %v8069
        %v8198 = vsub.f32 1.0, %v8070
        %v8199 = vsub.f32 1.0, %v8071
        %v8200 = vsub.f32 1.0, %v8072
        %v8201 = vsub.f32 1.0, %v8073
        %v8202 = vsub.f32 1.0, %v8074
        %v8203 = vsub.f32 1.0, %v8075
        %v8204 = vsub.f32 1.0, %v8076
        %v8205 = vsub.f32 1.0, %v8077
        %v8206 = vsub.f32 1.0, %v8078
        %v8207 = vsub.f32 1.0, %v8079
        %v8208 = vsub.f32 1.0, %v8080
        %v8209 = vsub.f32 1.0, %v8081
        %v8210 = vsub.f32 1.0, %v8082
        %v8211 = vsub.f32 1.0, %v8083
        %v8212 = vsub.f32 1.0, %v8084
        %v8213 = vsub.f32 1.0, %v8085
        %v8214 = vsub.f32 1.0, %v8086
        %v8215 = vsub.f32 1.0, %v8087
        %v8216 = vsub.f32 1.0, %v8088
        %v8217 = vsub.f32 1.0, %v8089
        %v8218 = vsub.f32 1.0, %v8090
        %v8219 = vsub.f32 1.0, %v8091
        %v8220 = vsub.f32 1.0, %v8092
        %v8221 = vsub.f32 1.0, %v8093
        %v8222 = vsub.f32 1.0, %v8094
        %v8223 = vsub.f32 1.0, %v8095
        %v8224 = vsub.f32 1.0, %v8096
        %v8225 = vsub.f32 1.0, %v8097
        %v8226 = vsub.f32 1.0, %v8098
        %v8227 = vsub.f32 1.0, %v8099
        %v8228 = vsub.f32 1.0, %v8100
        %v8229 = vsub.f32 1.0, %v8101
        %v8230 = vsub.f32 1.0, %v8102
        %v8231 = vsub.f32 1.0, %v8103
        %v8232 = vsub.f32 1.0, %v8104
        %v8233 = vsub.f32 1.0, %v8105
        %v8234 = vsub.f32 1.0, %v8106
        %v8235 = vsub.f32 1.0, %v8107
        %v8236 = vsub.f32 1.0, %v8108
        %v8237 = vsub.f32 1.0, %v8109
        %v8238 = vsub.f32 1.0, %v8110
        %v8239 = vsub.f32 1.0, %v8111
        %v8240 = vsub.f32 1.0, %v8112
        %v8241 = vsub.f32 1.0, %v8113
        %v8242 = vsub.f32 1.0, %v8114
        %v8243 = vsub.f32 1.0, %v8115
        %v8244 = vsub.f32 1.0, %v8116
        %v8245 = vsub.f32 1.0, %v8117
        %v8246 = vsub.f32 1.0, %v8118
        %v8247 = vsub.f32 1.0, %v8119
        %v8248 = vsub.f32 1.0, %v8120
        %v8249 = vsub.f32 1.0, %v8121
        %v8250 = vsub.f32 1.0, %v8122
        %v8251 = vsub.f32 1.0, %v8123
        %v8252 = vsub.f32 1.0, %v8124
        %v8253 = vsub.f32 1.0, %v8125
        %v8254 = vsub.f32 1.0, %v8126
        %v8255 = vsub.f32 1.0, %v8127
        %v8256 = vsub.f32 1.0, %v8128
        %v8257 = vsub.f32 1.0, %v8129
        %v8258 = vsub.f32 1.0, %v8130
        %v8259 = vsub.f32 1.0, %v8131
        %v8260 = vsub.f32 1.0, %v8132
        %v8261 = vsub.f32 1.0, %v8133
        %v8262 = vsub.f32 1.0, %v8134
        %v8263 = vsub.f32 1.0, %v8135
        %v8264 = vsub.f32 1.0, %v8136
        %v8265 = vsub.f32 1.0, %v8137
        %v8266 = vsub.f32 1.0, %v8138
        %v8267 = vsub.f32 1.0, %v8139
        %v8268 = vsub.f32 1.0, %v8140
        %v8269 = vsub.f32 1.0, %v8141
        %v8270 = vsub.f32 1.0, %v8142
        %v8271 = vsub.f32 1.0, %v8143
        %vm8272 = vcmp.ge.f32.partialorder %v5584, 0.0
        %vm8273 = vcmp.ge.f32.partialorder %v5585, 0.0
        %vm8274 = vcmp.ge.f32.partialorder %v5586, 0.0
        %vm8275 = vcmp.ge.f32.partialorder %v5587, 0.0
        %vm8276 = vcmp.ge.f32.partialorder %v5588, 0.0
        %vm8277 = vcmp.ge.f32.partialorder %v5589, 0.0
        %vm8278 = vcmp.ge.f32.partialorder %v5590, 0.0
        %vm8279 = vcmp.ge.f32.partialorder %v5591, 0.0
        %vm8280 = vcmp.ge.f32.partialorder %v5592, 0.0
        %vm8281 = vcmp.ge.f32.partialorder %v5593, 0.0
        %vm8282 = vcmp.ge.f32.partialorder %v5594, 0.0
        %vm8283 = vcmp.ge.f32.partialorder %v5595, 0.0
        %vm8284 = vcmp.ge.f32.partialorder %v5596, 0.0
        %vm8285 = vcmp.ge.f32.partialorder %v5597, 0.0
        %vm8286 = vcmp.ge.f32.partialorder %v5598, 0.0
        %vm8287 = vcmp.ge.f32.partialorder %v5599, 0.0
        %vm8288 = vcmp.ge.f32.partialorder %v5600, 0.0
        %vm8289 = vcmp.ge.f32.partialorder %v5601, 0.0
        %vm8290 = vcmp.ge.f32.partialorder %v5602, 0.0
        %vm8291 = vcmp.ge.f32.partialorder %v5603, 0.0
        %vm8292 = vcmp.ge.f32.partialorder %v5604, 0.0
        %vm8293 = vcmp.ge.f32.partialorder %v5605, 0.0
        %vm8294 = vcmp.ge.f32.partialorder %v5606, 0.0
        %vm8295 = vcmp.ge.f32.partialorder %v5607, 0.0
        %vm8296 = vcmp.ge.f32.partialorder %v5608, 0.0
        %vm8297 = vcmp.ge.f32.partialorder %v5609, 0.0
        %vm8298 = vcmp.ge.f32.partialorder %v5610, 0.0
        %vm8299 = vcmp.ge.f32.partialorder %v5611, 0.0
        %vm8300 = vcmp.ge.f32.partialorder %v5612, 0.0
        %vm8301 = vcmp.ge.f32.partialorder %v5613, 0.0
        %vm8302 = vcmp.ge.f32.partialorder %v5614, 0.0
        %vm8303 = vcmp.ge.f32.partialorder %v5615, 0.0
        %vm8304 = vcmp.ge.f32.partialorder %v5616, 0.0
        %vm8305 = vcmp.ge.f32.partialorder %v5617, 0.0
        %vm8306 = vcmp.ge.f32.partialorder %v5618, 0.0
        %vm8307 = vcmp.ge.f32.partialorder %v5619, 0.0
        %vm8308 = vcmp.ge.f32.partialorder %v5620, 0.0
        %vm8309 = vcmp.ge.f32.partialorder %v5621, 0.0
        %vm8310 = vcmp.ge.f32.partialorder %v5622, 0.0
        %vm8311 = vcmp.ge.f32.partialorder %v5623, 0.0
        %vm8312 = vcmp.ge.f32.partialorder %v5624, 0.0
        %vm8313 = vcmp.ge.f32.partialorder %v5625, 0.0
        %vm8314 = vcmp.ge.f32.partialorder %v5626, 0.0
        %vm8315 = vcmp.ge.f32.partialorder %v5627, 0.0
        %vm8316 = vcmp.ge.f32.partialorder %v5628, 0.0
        %vm8317 = vcmp.ge.f32.partialorder %v5629, 0.0
        %vm8318 = vcmp.ge.f32.partialorder %v5630, 0.0
        %vm8319 = vcmp.ge.f32.partialorder %v5631, 0.0
        %vm8320 = vcmp.ge.f32.partialorder %v5632, 0.0
        %vm8321 = vcmp.ge.f32.partialorder %v5633, 0.0
        %vm8322 = vcmp.ge.f32.partialorder %v5634, 0.0
        %vm8323 = vcmp.ge.f32.partialorder %v5635, 0.0
        %vm8324 = vcmp.ge.f32.partialorder %v5636, 0.0
        %vm8325 = vcmp.ge.f32.partialorder %v5637, 0.0
        %vm8326 = vcmp.ge.f32.partialorder %v5638, 0.0
        %vm8327 = vcmp.ge.f32.partialorder %v5639, 0.0
        %vm8328 = vcmp.ge.f32.partialorder %v5640, 0.0
        %vm8329 = vcmp.ge.f32.partialorder %v5641, 0.0
        %vm8330 = vcmp.ge.f32.partialorder %v5642, 0.0
        %vm8331 = vcmp.ge.f32.partialorder %v5643, 0.0
        %vm8332 = vcmp.ge.f32.partialorder %v5644, 0.0
        %vm8333 = vcmp.ge.f32.partialorder %v5645, 0.0
        %vm8334 = vcmp.ge.f32.partialorder %v5646, 0.0
        %vm8335 = vcmp.ge.f32.partialorder %v5647, 0.0
        %vm8336 = vcmp.ge.f32.partialorder %v5648, 0.0
        %vm8337 = vcmp.ge.f32.partialorder %v5649, 0.0
        %vm8338 = vcmp.ge.f32.partialorder %v5650, 0.0
        %vm8339 = vcmp.ge.f32.partialorder %v5651, 0.0
        %vm8340 = vcmp.ge.f32.partialorder %v5652, 0.0
        %vm8341 = vcmp.ge.f32.partialorder %v5653, 0.0
        %vm8342 = vcmp.ge.f32.partialorder %v5654, 0.0
        %vm8343 = vcmp.ge.f32.partialorder %v5655, 0.0
        %vm8344 = vcmp.ge.f32.partialorder %v5656, 0.0
        %vm8345 = vcmp.ge.f32.partialorder %v5657, 0.0
        %vm8346 = vcmp.ge.f32.partialorder %v5658, 0.0
        %vm8347 = vcmp.ge.f32.partialorder %v5659, 0.0
        %vm8348 = vcmp.ge.f32.partialorder %v5660, 0.0
        %vm8349 = vcmp.ge.f32.partialorder %v5661, 0.0
        %vm8350 = vcmp.ge.f32.partialorder %v5662, 0.0
        %vm8351 = vcmp.ge.f32.partialorder %v5663, 0.0
        %vm8352 = vcmp.ge.f32.partialorder %v5664, 0.0
        %vm8353 = vcmp.ge.f32.partialorder %v5665, 0.0
        %vm8354 = vcmp.ge.f32.partialorder %v5666, 0.0
        %vm8355 = vcmp.ge.f32.partialorder %v5667, 0.0
        %vm8356 = vcmp.ge.f32.partialorder %v5668, 0.0
        %vm8357 = vcmp.ge.f32.partialorder %v5669, 0.0
        %vm8358 = vcmp.ge.f32.partialorder %v5670, 0.0
        %vm8359 = vcmp.ge.f32.partialorder %v5671, 0.0
        %vm8360 = vcmp.ge.f32.partialorder %v5672, 0.0
        %vm8361 = vcmp.ge.f32.partialorder %v5673, 0.0
        %vm8362 = vcmp.ge.f32.partialorder %v5674, 0.0
        %vm8363 = vcmp.ge.f32.partialorder %v5675, 0.0
        %vm8364 = vcmp.ge.f32.partialorder %v5676, 0.0
        %vm8365 = vcmp.ge.f32.partialorder %v5677, 0.0
        %vm8366 = vcmp.ge.f32.partialorder %v5678, 0.0
        %vm8367 = vcmp.ge.f32.partialorder %v5679, 0.0
        %vm8368 = vcmp.ge.f32.partialorder %v5680, 0.0
        %vm8369 = vcmp.ge.f32.partialorder %v5681, 0.0
        %vm8370 = vcmp.ge.f32.partialorder %v5682, 0.0
        %vm8371 = vcmp.ge.f32.partialorder %v5683, 0.0
        %vm8372 = vcmp.ge.f32.partialorder %v5684, 0.0
        %vm8373 = vcmp.ge.f32.partialorder %v5685, 0.0
        %vm8374 = vcmp.ge.f32.partialorder %v5686, 0.0
        %vm8375 = vcmp.ge.f32.partialorder %v5687, 0.0
        %vm8376 = vcmp.ge.f32.partialorder %v5688, 0.0
        %vm8377 = vcmp.ge.f32.partialorder %v5689, 0.0
        %vm8378 = vcmp.ge.f32.partialorder %v5690, 0.0
        %vm8379 = vcmp.ge.f32.partialorder %v5691, 0.0
        %vm8380 = vcmp.ge.f32.partialorder %v5692, 0.0
        %vm8381 = vcmp.ge.f32.partialorder %v5693, 0.0
        %vm8382 = vcmp.ge.f32.partialorder %v5694, 0.0
        %vm8383 = vcmp.ge.f32.partialorder %v5695, 0.0
        %vm8384 = vcmp.ge.f32.partialorder %v5696, 0.0
        %vm8385 = vcmp.ge.f32.partialorder %v5697, 0.0
        %vm8386 = vcmp.ge.f32.partialorder %v5698, 0.0
        %vm8387 = vcmp.ge.f32.partialorder %v5699, 0.0
        %vm8388 = vcmp.ge.f32.partialorder %v5700, 0.0
        %vm8389 = vcmp.ge.f32.partialorder %v5701, 0.0
        %vm8390 = vcmp.ge.f32.partialorder %v5702, 0.0
        %vm8391 = vcmp.ge.f32.partialorder %v5703, 0.0
        %vm8392 = vcmp.ge.f32.partialorder %v5704, 0.0
        %vm8393 = vcmp.ge.f32.partialorder %v5705, 0.0
        %vm8394 = vcmp.ge.f32.partialorder %v5706, 0.0
        %vm8395 = vcmp.ge.f32.partialorder %v5707, 0.0
        %vm8396 = vcmp.ge.f32.partialorder %v5708, 0.0
        %vm8397 = vcmp.ge.f32.partialorder %v5709, 0.0
        %vm8398 = vcmp.ge.f32.partialorder %v5710, 0.0
        %vm8399 = vcmp.ge.f32.partialorder %v5711, 0.0
        %v8400 = vsub.f32 0.0, %v8144
        %v8401 = vsub.f32 0.0, %v8145
        %v8402 = vsub.f32 0.0, %v8146
        %v8403 = vsub.f32 0.0, %v8147
        %v8404 = vsub.f32 0.0, %v8148
        %v8405 = vsub.f32 0.0, %v8149
        %v8406 = vsub.f32 0.0, %v8150
        %v8407 = vsub.f32 0.0, %v8151
        %v8408 = vsub.f32 0.0, %v8152
        %v8409 = vsub.f32 0.0, %v8153
        %v8410 = vsub.f32 0.0, %v8154
        %v8411 = vsub.f32 0.0, %v8155
        %v8412 = vsub.f32 0.0, %v8156
        %v8413 = vsub.f32 0.0, %v8157
        %v8414 = vsub.f32 0.0, %v8158
        %v8415 = vsub.f32 0.0, %v8159
        %v8416 = vsub.f32 0.0, %v8160
        %v8417 = vsub.f32 0.0, %v8161
        %v8418 = vsub.f32 0.0, %v8162
        %v8419 = vsub.f32 0.0, %v8163
        %v8420 = vsub.f32 0.0, %v8164
        %v8421 = vsub.f32 0.0, %v8165
        %v8422 = vsub.f32 0.0, %v8166
        %v8423 = vsub.f32 0.0, %v8167
        %v8424 = vsub.f32 0.0, %v8168
        %v8425 = vsub.f32 0.0, %v8169
        %v8426 = vsub.f32 0.0, %v8170
        %v8427 = vsub.f32 0.0, %v8171
        %v8428 = vsub.f32 0.0, %v8172
        %v8429 = vsub.f32 0.0, %v8173
        %v8430 = vsub.f32 0.0, %v8174
        %v8431 = vsub.f32 0.0, %v8175
        %v8432 = vsub.f32 0.0, %v8176
        %v8433 = vsub.f32 0.0, %v8177
        %v8434 = vsub.f32 0.0, %v8178
        %v8435 = vsub.f32 0.0, %v8179
        %v8436 = vsub.f32 0.0, %v8180
        %v8437 = vsub.f32 0.0, %v8181
        %v8438 = vsub.f32 0.0, %v8182
        %v8439 = vsub.f32 0.0, %v8183
        %v8440 = vsub.f32 0.0, %v8184
        %v8441 = vsub.f32 0.0, %v8185
        %v8442 = vsub.f32 0.0, %v8186
        %v8443 = vsub.f32 0.0, %v8187
        %v8444 = vsub.f32 0.0, %v8188
        %v8445 = vsub.f32 0.0, %v8189
        %v8446 = vsub.f32 0.0, %v8190
        %v8447 = vsub.f32 0.0, %v8191
        %v8448 = vsub.f32 0.0, %v8192
        %v8449 = vsub.f32 0.0, %v8193
        %v8450 = vsub.f32 0.0, %v8194
        %v8451 = vsub.f32 0.0, %v8195
        %v8452 = vsub.f32 0.0, %v8196
        %v8453 = vsub.f32 0.0, %v8197
        %v8454 = vsub.f32 0.0, %v8198
        %v8455 = vsub.f32 0.0, %v8199
        %v8456 = vsub.f32 0.0, %v8200
        %v8457 = vsub.f32 0.0, %v8201
        %v8458 = vsub.f32 0.0, %v8202
        %v8459 = vsub.f32 0.0, %v8203
        %v8460 = vsub.f32 0.0, %v8204
        %v8461 = vsub.f32 0.0, %v8205
        %v8462 = vsub.f32 0.0, %v8206
        %v8463 = vsub.f32 0.0, %v8207
        %v8464 = vsub.f32 0.0, %v8208
        %v8465 = vsub.f32 0.0, %v8209
        %v8466 = vsub.f32 0.0, %v8210
        %v8467 = vsub.f32 0.0, %v8211
        %v8468 = vsub.f32 0.0, %v8212
        %v8469 = vsub.f32 0.0, %v8213
        %v8470 = vsub.f32 0.0, %v8214
        %v8471 = vsub.f32 0.0, %v8215
        %v8472 = vsub.f32 0.0, %v8216
        %v8473 = vsub.f32 0.0, %v8217
        %v8474 = vsub.f32 0.0, %v8218
        %v8475 = vsub.f32 0.0, %v8219
        %v8476 = vsub.f32 0.0, %v8220
        %v8477 = vsub.f32 0.0, %v8221
        %v8478 = vsub.f32 0.0, %v8222
        %v8479 = vsub.f32 0.0, %v8223
        %v8480 = vsub.f32 0.0, %v8224
        %v8481 = vsub.f32 0.0, %v8225
        %v8482 = vsub.f32 0.0, %v8226
        %v8483 = vsub.f32 0.0, %v8227
        %v8484 = vsub.f32 0.0, %v8228
        %v8485 = vsub.f32 0.0, %v8229
        %v8486 = vsub.f32 0.0, %v8230
        %v8487 = vsub.f32 0.0, %v8231
        %v8488 = vsub.f32 0.0, %v8232
        %v8489 = vsub.f32 0.0, %v8233
        %v8490 = vsub.f32 0.0, %v8234
        %v8491 = vsub.f32 0.0, %v8235
        %v8492 = vsub.f32 0.0, %v8236
        %v8493 = vsub.f32 0.0, %v8237
        %v8494 = vsub.f32 0.0, %v8238
        %v8495 = vsub.f32 0.0, %v8239
        %v8496 = vsub.f32 0.0, %v8240
        %v8497 = vsub.f32 0.0, %v8241
        %v8498 = vsub.f32 0.0, %v8242
        %v8499 = vsub.f32 0.0, %v8243
        %v8500 = vsub.f32 0.0, %v8244
        %v8501 = vsub.f32 0.0, %v8245
        %v8502 = vsub.f32 0.0, %v8246
        %v8503 = vsub.f32 0.0, %v8247
        %v8504 = vsub.f32 0.0, %v8248
        %v8505 = vsub.f32 0.0, %v8249
        %v8506 = vsub.f32 0.0, %v8250
        %v8507 = vsub.f32 0.0, %v8251
        %v8508 = vsub.f32 0.0, %v8252
        %v8509 = vsub.f32 0.0, %v8253
        %v8510 = vsub.f32 0.0, %v8254
        %v8511 = vsub.f32 0.0, %v8255
        %v8512 = vsub.f32 0.0, %v8256
        %v8513 = vsub.f32 0.0, %v8257
        %v8514 = vsub.f32 0.0, %v8258
        %v8515 = vsub.f32 0.0, %v8259
        %v8516 = vsub.f32 0.0, %v8260
        %v8517 = vsub.f32 0.0, %v8261
        %v8518 = vsub.f32 0.0, %v8262
        %v8519 = vsub.f32 0.0, %v8263
        %v8520 = vsub.f32 0.0, %v8264
        %v8521 = vsub.f32 0.0, %v8265
        %v8522 = vsub.f32 0.0, %v8266
        %v8523 = vsub.f32 0.0, %v8267
        %v8524 = vsub.f32 0.0, %v8268
        %v8525 = vsub.f32 0.0, %v8269
        %v8526 = vsub.f32 0.0, %v8270
        %v8527 = vsub.f32 0.0, %v8271
        %v8528 = vsel %vm8272, %v8144, %v8400
        %v8529 = vsel %vm8273, %v8145, %v8401
        %v8530 = vsel %vm8274, %v8146, %v8402
        %v8531 = vsel %vm8275, %v8147, %v8403
        %v8532 = vsel %vm8276, %v8148, %v8404
        %v8533 = vsel %vm8277, %v8149, %v8405
        %v8534 = vsel %vm8278, %v8150, %v8406
        %v8535 = vsel %vm8279, %v8151, %v8407
        %v8536 = vsel %vm8280, %v8152, %v8408
        %v8537 = vsel %vm8281, %v8153, %v8409
        %v8538 = vsel %vm8282, %v8154, %v8410
        %v8539 = vsel %vm8283, %v8155, %v8411
        %v8540 = vsel %vm8284, %v8156, %v8412
        %v8541 = vsel %vm8285, %v8157, %v8413
        %v8542 = vsel %vm8286, %v8158, %v8414
        %v8543 = vsel %vm8287, %v8159, %v8415
        %v8544 = vsel %vm8288, %v8160, %v8416
        %v8545 = vsel %vm8289, %v8161, %v8417
        %v8546 = vsel %vm8290, %v8162, %v8418
        %v8547 = vsel %vm8291, %v8163, %v8419
        %v8548 = vsel %vm8292, %v8164, %v8420
        %v8549 = vsel %vm8293, %v8165, %v8421
        %v8550 = vsel %vm8294, %v8166, %v8422
        %v8551 = vsel %vm8295, %v8167, %v8423
        %v8552 = vsel %vm8296, %v8168, %v8424
        %v8553 = vsel %vm8297, %v8169, %v8425
        %v8554 = vsel %vm8298, %v8170, %v8426
        %v8555 = vsel %vm8299, %v8171, %v8427
        %v8556 = vsel %vm8300, %v8172, %v8428
        %v8557 = vsel %vm8301, %v8173, %v8429
        %v8558 = vsel %vm8302, %v8174, %v8430
        %v8559 = vsel %vm8303, %v8175, %v8431
        %v8560 = vsel %vm8304, %v8176, %v8432
        %v8561 = vsel %vm8305, %v8177, %v8433
        %v8562 = vsel %vm8306, %v8178, %v8434
        %v8563 = vsel %vm8307, %v8179, %v8435
        %v8564 = vsel %vm8308, %v8180, %v8436
        %v8565 = vsel %vm8309, %v8181, %v8437
        %v8566 = vsel %vm8310, %v8182, %v8438
        %v8567 = vsel %vm8311, %v8183, %v8439
        %v8568 = vsel %vm8312, %v8184, %v8440
        %v8569 = vsel %vm8313, %v8185, %v8441
        %v8570 = vsel %vm8314, %v8186, %v8442
        %v8571 = vsel %vm8315, %v8187, %v8443
        %v8572 = vsel %vm8316, %v8188, %v8444
        %v8573 = vsel %vm8317, %v8189, %v8445
        %v8574 = vsel %vm8318, %v8190, %v8446
        %v8575 = vsel %vm8319, %v8191, %v8447
        %v8576 = vsel %vm8320, %v8192, %v8448
        %v8577 = vsel %vm8321, %v8193, %v8449
        %v8578 = vsel %vm8322, %v8194, %v8450
        %v8579 = vsel %vm8323, %v8195, %v8451
        %v8580 = vsel %vm8324, %v8196, %v8452
        %v8581 = vsel %vm8325, %v8197, %v8453
        %v8582 = vsel %vm8326, %v8198, %v8454
        %v8583 = vsel %vm8327, %v8199, %v8455
        %v8584 = vsel %vm8328, %v8200, %v8456
        %v8585 = vsel %vm8329, %v8201, %v8457
        %v8586 = vsel %vm8330, %v8202, %v8458
        %v8587 = vsel %vm8331, %v8203, %v8459
        %v8588 = vsel %vm8332, %v8204, %v8460
        %v8589 = vsel %vm8333, %v8205, %v8461
        %v8590 = vsel %vm8334, %v8206, %v8462
        %v8591 = vsel %vm8335, %v8207, %v8463
        %v8592 = vsel %vm8336, %v8208, %v8464
        %v8593 = vsel %vm8337, %v8209, %v8465
        %v8594 = vsel %vm8338, %v8210, %v8466
        %v8595 = vsel %vm8339, %v8211, %v8467
        %v8596 = vsel %vm8340, %v8212, %v8468
        %v8597 = vsel %vm8341, %v8213, %v8469
        %v8598 = vsel %vm8342, %v8214, %v8470
        %v8599 = vsel %vm8343, %v8215, %v8471
        %v8600 = vsel %vm8344, %v8216, %v8472
        %v8601 = vsel %vm8345, %v8217, %v8473
        %v8602 = vsel %vm8346, %v8218, %v8474
        %v8603 = vsel %vm8347, %v8219, %v8475
        %v8604 = vsel %vm8348, %v8220, %v8476
        %v8605 = vsel %vm8349, %v8221, %v8477
        %v8606 = vsel %vm8350, %v8222, %v8478
        %v8607 = vsel %vm8351, %v8223, %v8479
        %v8608 = vsel %vm8352, %v8224, %v8480
        %v8609 = vsel %vm8353, %v8225, %v8481
        %v8610 = vsel %vm8354, %v8226, %v8482
        %v8611 = vsel %vm8355, %v8227, %v8483
        %v8612 = vsel %vm8356, %v8228, %v8484
        %v8613 = vsel %vm8357, %v8229, %v8485
        %v8614 = vsel %vm8358, %v8230, %v8486
        %v8615 = vsel %vm8359, %v8231, %v8487
        %v8616 = vsel %vm8360, %v8232, %v8488
        %v8617 = vsel %vm8361, %v8233, %v8489
        %v8618 = vsel %vm8362, %v8234, %v8490
        %v8619 = vsel %vm8363, %v8235, %v8491
        %v8620 = vsel %vm8364, %v8236, %v8492
        %v8621 = vsel %vm8365, %v8237, %v8493
        %v8622 = vsel %vm8366, %v8238, %v8494
        %v8623 = vsel %vm8367, %v8239, %v8495
        %v8624 = vsel %vm8368, %v8240, %v8496
        %v8625 = vsel %vm8369, %v8241, %v8497
        %v8626 = vsel %vm8370, %v8242, %v8498
        %v8627 = vsel %vm8371, %v8243, %v8499
        %v8628 = vsel %vm8372, %v8244, %v8500
        %v8629 = vsel %vm8373, %v8245, %v8501
        %v8630 = vsel %vm8374, %v8246, %v8502
        %v8631 = vsel %vm8375, %v8247, %v8503
        %v8632 = vsel %vm8376, %v8248, %v8504
        %v8633 = vsel %vm8377, %v8249, %v8505
        %v8634 = vsel %vm8378, %v8250, %v8506
        %v8635 = vsel %vm8379, %v8251, %v8507
        %v8636 = vsel %vm8380, %v8252, %v8508
        %v8637 = vsel %vm8381, %v8253, %v8509
        %v8638 = vsel %vm8382, %v8254, %v8510
        %v8639 = vsel %vm8383, %v8255, %v8511
        %v8640 = vsel %vm8384, %v8256, %v8512
        %v8641 = vsel %vm8385, %v8257, %v8513
        %v8642 = vsel %vm8386, %v8258, %v8514
        %v8643 = vsel %vm8387, %v8259, %v8515
        %v8644 = vsel %vm8388, %v8260, %v8516
        %v8645 = vsel %vm8389, %v8261, %v8517
        %v8646 = vsel %vm8390, %v8262, %v8518
        %v8647 = vsel %vm8391, %v8263, %v8519
        %v8648 = vsel %vm8392, %v8264, %v8520
        %v8649 = vsel %vm8393, %v8265, %v8521
        %v8650 = vsel %vm8394, %v8266, %v8522
        %v8651 = vsel %vm8395, %v8267, %v8523
        %v8652 = vsel %vm8396, %v8268, %v8524
        %v8653 = vsel %vm8397, %v8269, %v8525
        %v8654 = vsel %vm8398, %v8270, %v8526
        %v8655 = vsel %vm8399, %v8271, %v8527
        %v8656 = vadd.f32 %v8528, 1.0
        %v8657 = vadd.f32 %v8529, 1.0
        %v8658 = vadd.f32 %v8530, 1.0
        %v8659 = vadd.f32 %v8531, 1.0
        %v8660 = vadd.f32 %v8532, 1.0
        %v8661 = vadd.f32 %v8533, 1.0
        %v8662 = vadd.f32 %v8534, 1.0
        %v8663 = vadd.f32 %v8535, 1.0
        %v8664 = vadd.f32 %v8536, 1.0
        %v8665 = vadd.f32 %v8537, 1.0
        %v8666 = vadd.f32 %v8538, 1.0
        %v8667 = vadd.f32 %v8539, 1.0
        %v8668 = vadd.f32 %v8540, 1.0
        %v8669 = vadd.f32 %v8541, 1.0
        %v8670 = vadd.f32 %v8542, 1.0
        %v8671 = vadd.f32 %v8543, 1.0
        %v8672 = vadd.f32 %v8544, 1.0
        %v8673 = vadd.f32 %v8545, 1.0
        %v8674 = vadd.f32 %v8546, 1.0
        %v8675 = vadd.f32 %v8547, 1.0
        %v8676 = vadd.f32 %v8548, 1.0
        %v8677 = vadd.f32 %v8549, 1.0
        %v8678 = vadd.f32 %v8550, 1.0
        %v8679 = vadd.f32 %v8551, 1.0
        %v8680 = vadd.f32 %v8552, 1.0
        %v8681 = vadd.f32 %v8553, 1.0
        %v8682 = vadd.f32 %v8554, 1.0
        %v8683 = vadd.f32 %v8555, 1.0
        %v8684 = vadd.f32 %v8556, 1.0
        %v8685 = vadd.f32 %v8557, 1.0
        %v8686 = vadd.f32 %v8558, 1.0
        %v8687 = vadd.f32 %v8559, 1.0
        %v8688 = vadd.f32 %v8560, 1.0
        %v8689 = vadd.f32 %v8561, 1.0
        %v8690 = vadd.f32 %v8562, 1.0
        %v8691 = vadd.f32 %v8563, 1.0
        %v8692 = vadd.f32 %v8564, 1.0
        %v8693 = vadd.f32 %v8565, 1.0
        %v8694 = vadd.f32 %v8566, 1.0
        %v8695 = vadd.f32 %v8567, 1.0
        %v8696 = vadd.f32 %v8568, 1.0
        %v8697 = vadd.f32 %v8569, 1.0
        %v8698 = vadd.f32 %v8570, 1.0
        %v8699 = vadd.f32 %v8571, 1.0
        %v8700 = vadd.f32 %v8572, 1.0
        %v8701 = vadd.f32 %v8573, 1.0
        %v8702 = vadd.f32 %v8574, 1.0
        %v8703 = vadd.f32 %v8575, 1.0
        %v8704 = vadd.f32 %v8576, 1.0
        %v8705 = vadd.f32 %v8577, 1.0
        %v8706 = vadd.f32 %v8578, 1.0
        %v8707 = vadd.f32 %v8579, 1.0
        %v8708 = vadd.f32 %v8580, 1.0
        %v8709 = vadd.f32 %v8581, 1.0
        %v8710 = vadd.f32 %v8582, 1.0
        %v8711 = vadd.f32 %v8583, 1.0
        %v8712 = vadd.f32 %v8584, 1.0
        %v8713 = vadd.f32 %v8585, 1.0
        %v8714 = vadd.f32 %v8586, 1.0
        %v8715 = vadd.f32 %v8587, 1.0
        %v8716 = vadd.f32 %v8588, 1.0
        %v8717 = vadd.f32 %v8589, 1.0
        %v8718 = vadd.f32 %v8590, 1.0
        %v8719 = vadd.f32 %v8591, 1.0
        %v8720 = vadd.f32 %v8592, 1.0
        %v8721 = vadd.f32 %v8593, 1.0
        %v8722 = vadd.f32 %v8594, 1.0
        %v8723 = vadd.f32 %v8595, 1.0
        %v8724 = vadd.f32 %v8596, 1.0
        %v8725 = vadd.f32 %v8597, 1.0
        %v8726 = vadd.f32 %v8598, 1.0
        %v8727 = vadd.f32 %v8599, 1.0
        %v8728 = vadd.f32 %v8600, 1.0
        %v8729 = vadd.f32 %v8601, 1.0
        %v8730 = vadd.f32 %v8602, 1.0
        %v8731 = vadd.f32 %v8603, 1.0
        %v8732 = vadd.f32 %v8604, 1.0
        %v8733 = vadd.f32 %v8605, 1.0
        %v8734 = vadd.f32 %v8606, 1.0
        %v8735 = vadd.f32 %v8607, 1.0
        %v8736 = vadd.f32 %v8608, 1.0
        %v8737 = vadd.f32 %v8609, 1.0
        %v8738 = vadd.f32 %v8610, 1.0
        %v8739 = vadd.f32 %v8611, 1.0
        %v8740 = vadd.f32 %v8612, 1.0
        %v8741 = vadd.f32 %v8613, 1.0
        %v8742 = vadd.f32 %v8614, 1.0
        %v8743 = vadd.f32 %v8615, 1.0
        %v8744 = vadd.f32 %v8616, 1.0
        %v8745 = vadd.f32 %v8617, 1.0
        %v8746 = vadd.f32 %v8618, 1.0
        %v8747 = vadd.f32 %v8619, 1.0
        %v8748 = vadd.f32 %v8620, 1.0
        %v8749 = vadd.f32 %v8621, 1.0
        %v8750 = vadd.f32 %v8622, 1.0
        %v8751 = vadd.f32 %v8623, 1.0
        %v8752 = vadd.f32 %v8624, 1.0
        %v8753 = vadd.f32 %v8625, 1.0
        %v8754 = vadd.f32 %v8626, 1.0
        %v8755 = vadd.f32 %v8627, 1.0
        %v8756 = vadd.f32 %v8628, 1.0
        %v8757 = vadd.f32 %v8629, 1.0
        %v8758 = vadd.f32 %v8630, 1.0
        %v8759 = vadd.f32 %v8631, 1.0
        %v8760 = vadd.f32 %v8632, 1.0
        %v8761 = vadd.f32 %v8633, 1.0
        %v8762 = vadd.f32 %v8634, 1.0
        %v8763 = vadd.f32 %v8635, 1.0
        %v8764 = vadd.f32 %v8636, 1.0
        %v8765 = vadd.f32 %v8637, 1.0
        %v8766 = vadd.f32 %v8638, 1.0
        %v8767 = vadd.f32 %v8639, 1.0
        %v8768 = vadd.f32 %v8640, 1.0
        %v8769 = vadd.f32 %v8641, 1.0
        %v8770 = vadd.f32 %v8642, 1.0
        %v8771 = vadd.f32 %v8643, 1.0
        %v8772 = vadd.f32 %v8644, 1.0
        %v8773 = vadd.f32 %v8645, 1.0
        %v8774 = vadd.f32 %v8646, 1.0
        %v8775 = vadd.f32 %v8647, 1.0
        %v8776 = vadd.f32 %v8648, 1.0
        %v8777 = vadd.f32 %v8649, 1.0
        %v8778 = vadd.f32 %v8650, 1.0
        %v8779 = vadd.f32 %v8651, 1.0
        %v8780 = vadd.f32 %v8652, 1.0
        %v8781 = vadd.f32 %v8653, 1.0
        %v8782 = vadd.f32 %v8654, 1.0
        %v8783 = vadd.f32 %v8655, 1.0
        %v8784 = vmul.f32 %v5456, %v8656
        %v8785 = vmul.f32 %v5457, %v8657
        %v8786 = vmul.f32 %v5458, %v8658
        %v8787 = vmul.f32 %v5459, %v8659
        %v8788 = vmul.f32 %v5460, %v8660
        %v8789 = vmul.f32 %v5461, %v8661
        %v8790 = vmul.f32 %v5462, %v8662
        %v8791 = vmul.f32 %v5463, %v8663
        %v8792 = vmul.f32 %v5464, %v8664
        %v8793 = vmul.f32 %v5465, %v8665
        %v8794 = vmul.f32 %v5466, %v8666
        %v8795 = vmul.f32 %v5467, %v8667
        %v8796 = vmul.f32 %v5468, %v8668
        %v8797 = vmul.f32 %v5469, %v8669
        %v8798 = vmul.f32 %v5470, %v8670
        %v8799 = vmul.f32 %v5471, %v8671
        %v8800 = vmul.f32 %v5472, %v8672
        %v8801 = vmul.f32 %v5473, %v8673
        %v8802 = vmul.f32 %v5474, %v8674
        %v8803 = vmul.f32 %v5475, %v8675
        %v8804 = vmul.f32 %v5476, %v8676
        %v8805 = vmul.f32 %v5477, %v8677
        %v8806 = vmul.f32 %v5478, %v8678
        %v8807 = vmul.f32 %v5479, %v8679
        %v8808 = vmul.f32 %v5480, %v8680
        %v8809 = vmul.f32 %v5481, %v8681
        %v8810 = vmul.f32 %v5482, %v8682
        %v8811 = vmul.f32 %v5483, %v8683
        %v8812 = vmul.f32 %v5484, %v8684
        %v8813 = vmul.f32 %v5485, %v8685
        %v8814 = vmul.f32 %v5486, %v8686
        %v8815 = vmul.f32 %v5487, %v8687
        %v8816 = vmul.f32 %v5488, %v8688
        %v8817 = vmul.f32 %v5489, %v8689
        %v8818 = vmul.f32 %v5490, %v8690
        %v8819 = vmul.f32 %v5491, %v8691
        %v8820 = vmul.f32 %v5492, %v8692
        %v8821 = vmul.f32 %v5493, %v8693
        %v8822 = vmul.f32 %v5494, %v8694
        %v8823 = vmul.f32 %v5495, %v8695
        %v8824 = vmul.f32 %v5496, %v8696
        %v8825 = vmul.f32 %v5497, %v8697
        %v8826 = vmul.f32 %v5498, %v8698
        %v8827 = vmul.f32 %v5499, %v8699
        %v8828 = vmul.f32 %v5500, %v8700
        %v8829 = vmul.f32 %v5501, %v8701
        %v8830 = vmul.f32 %v5502, %v8702
        %v8831 = vmul.f32 %v5503, %v8703
        %v8832 = vmul.f32 %v5504, %v8704
        %v8833 = vmul.f32 %v5505, %v8705
        %v8834 = vmul.f32 %v5506, %v8706
        %v8835 = vmul.f32 %v5507, %v8707
        %v8836 = vmul.f32 %v5508, %v8708
        %v8837 = vmul.f32 %v5509, %v8709
        %v8838 = vmul.f32 %v5510, %v8710
        %v8839 = vmul.f32 %v5511, %v8711
        %v8840 = vmul.f32 %v5512, %v8712
        %v8841 = vmul.f32 %v5513, %v8713
        %v8842 = vmul.f32 %v5514, %v8714
        %v8843 = vmul.f32 %v5515, %v8715
        %v8844 = vmul.f32 %v5516, %v8716
        %v8845 = vmul.f32 %v5517, %v8717
        %v8846 = vmul.f32 %v5518, %v8718
        %v8847 = vmul.f32 %v5519, %v8719
        %v8848 = vmul.f32 %v5520, %v8720
        %v8849 = vmul.f32 %v5521, %v8721
        %v8850 = vmul.f32 %v5522, %v8722
        %v8851 = vmul.f32 %v5523, %v8723
        %v8852 = vmul.f32 %v5524, %v8724
        %v8853 = vmul.f32 %v5525, %v8725
        %v8854 = vmul.f32 %v5526, %v8726
        %v8855 = vmul.f32 %v5527, %v8727
        %v8856 = vmul.f32 %v5528, %v8728
        %v8857 = vmul.f32 %v5529, %v8729
        %v8858 = vmul.f32 %v5530, %v8730
        %v8859 = vmul.f32 %v5531, %v8731
        %v8860 = vmul.f32 %v5532, %v8732
        %v8861 = vmul.f32 %v5533, %v8733
        %v8862 = vmul.f32 %v5534, %v8734
        %v8863 = vmul.f32 %v5535, %v8735
        %v8864 = vmul.f32 %v5536, %v8736
        %v8865 = vmul.f32 %v5537, %v8737
        %v8866 = vmul.f32 %v5538, %v8738
        %v8867 = vmul.f32 %v5539, %v8739
        %v8868 = vmul.f32 %v5540, %v8740
        %v8869 = vmul.f32 %v5541, %v8741
        %v8870 = vmul.f32 %v5542, %v8742
        %v8871 = vmul.f32 %v5543, %v8743
        %v8872 = vmul.f32 %v5544, %v8744
        %v8873 = vmul.f32 %v5545, %v8745
        %v8874 = vmul.f32 %v5546, %v8746
        %v8875 = vmul.f32 %v5547, %v8747
        %v8876 = vmul.f32 %v5548, %v8748
        %v8877 = vmul.f32 %v5549, %v8749
        %v8878 = vmul.f32 %v5550, %v8750
        %v8879 = vmul.f32 %v5551, %v8751
        %v8880 = vmul.f32 %v5552, %v8752
        %v8881 = vmul.f32 %v5553, %v8753
        %v8882 = vmul.f32 %v5554, %v8754
        %v8883 = vmul.f32 %v5555, %v8755
        %v8884 = vmul.f32 %v5556, %v8756
        %v8885 = vmul.f32 %v5557, %v8757
        %v8886 = vmul.f32 %v5558, %v8758
        %v8887 = vmul.f32 %v5559, %v8759
        %v8888 = vmul.f32 %v5560, %v8760
        %v8889 = vmul.f32 %v5561, %v8761
        %v8890 = vmul.f32 %v5562, %v8762
        %v8891 = vmul.f32 %v5563, %v8763
        %v8892 = vmul.f32 %v5564, %v8764
        %v8893 = vmul.f32 %v5565, %v8765
        %v8894 = vmul.f32 %v5566, %v8766
        %v8895 = vmul.f32 %v5567, %v8767
        %v8896 = vmul.f32 %v5568, %v8768
        %v8897 = vmul.f32 %v5569, %v8769
        %v8898 = vmul.f32 %v5570, %v8770
        %v8899 = vmul.f32 %v5571, %v8771
        %v8900 = vmul.f32 %v5572, %v8772
        %v8901 = vmul.f32 %v5573, %v8773
        %v8902 = vmul.f32 %v5574, %v8774
        %v8903 = vmul.f32 %v5575, %v8775
        %v8904 = vmul.f32 %v5576, %v8776
        %v8905 = vmul.f32 %v5577, %v8777
        %v8906 = vmul.f32 %v5578, %v8778
        %v8907 = vmul.f32 %v5579, %v8779
        %v8908 = vmul.f32 %v5580, %v8780
        %v8909 = vmul.f32 %v5581, %v8781
        %v8910 = vmul.f32 %v5582, %v8782
        %v8911 = vmul.f32 %v5583, %v8783
        %v8912 = vld [vmem:[%s5] sm:$0xff]
        %v8913 = vld [vmem:[%s5 + $0x8] sm:$0xff]
        %v8914 = vld [vmem:[%s5 + $0x10] sm:$0xff]
        %v8915 = vld [vmem:[%s5 + $0x18] sm:$0xff]
        %v8916 = vld [vmem:[%s5 + $0x20] sm:$0xff]
        %v8917 = vld [vmem:[%s5 + $0x28] sm:$0xff]
        %v8918 = vld [vmem:[%s5 + $0x30] sm:$0xff]
        %v8919 = vld [vmem:[%s5 + $0x38] sm:$0xff]
        %v8920 = vld [vmem:[%s5 + $0x40] sm:$0xff]
        %v8921 = vld [vmem:[%s5 + $0x48] sm:$0xff]
        %v8922 = vld [vmem:[%s5 + $0x50] sm:$0xff]
        %v8923 = vld [vmem:[%s5 + $0x58] sm:$0xff]
        %v8924 = vld [vmem:[%s5 + $0x60] sm:$0xff]
        %v8925 = vld [vmem:[%s5 + $0x68] sm:$0xff]
        %v8926 = vld [vmem:[%s5 + $0x70] sm:$0xff]
        %v8927 = vld [vmem:[%s5 + $0x78] sm:$0xff]
        %v8928 = vld [vmem:[%s5 + $0x80] sm:$0xff]
        %v8929 = vld [vmem:[%s5 + $0x88] sm:$0xff]
        %v8930 = vld [vmem:[%s5 + $0x90] sm:$0xff]
        %v8931 = vld [vmem:[%s5 + $0x98] sm:$0xff]
        %v8932 = vld [vmem:[%s5 + $0xa0] sm:$0xff]
        %v8933 = vld [vmem:[%s5 + $0xa8] sm:$0xff]
        %v8934 = vld [vmem:[%s5 + $0xb0] sm:$0xff]
        %v8935 = vld [vmem:[%s5 + $0xb8] sm:$0xff]
        %v8936 = vld [vmem:[%s5 + $0xc0] sm:$0xff]
        %v8937 = vld [vmem:[%s5 + $0xc8] sm:$0xff]
        %v8938 = vld [vmem:[%s5 + $0xd0] sm:$0xff]
        %v8939 = vld [vmem:[%s5 + $0xd8] sm:$0xff]
        %v8940 = vld [vmem:[%s5 + $0xe0] sm:$0xff]
        %v8941 = vld [vmem:[%s5 + $0xe8] sm:$0xff]
        %v8942 = vld [vmem:[%s5 + $0xf0] sm:$0xff]
        %v8943 = vld [vmem:[%s5 + $0xf8] sm:$0xff]
        %8945 = vset.pattern.permute.xlu0 0
        %8946 = vperm.xlu0 %8945, %v8912
        %v8947 = vpop.permute.xlu0 %8946
        %8950 = vset.pattern.permute.xlu0 0
        %8951 = vperm.xlu0 %8950, %v8913
        %v8952 = vpop.permute.xlu0 %8951
        %8955 = vset.pattern.permute.xlu0 0
        %8956 = vperm.xlu0 %8955, %v8914
        %v8957 = vpop.permute.xlu0 %8956
        %8960 = vset.pattern.permute.xlu0 0
        %8961 = vperm.xlu0 %8960, %v8915
        %v8962 = vpop.permute.xlu0 %8961
        %8965 = vset.pattern.permute.xlu0 0
        %8966 = vperm.xlu0 %8965, %v8916
        %v8967 = vpop.permute.xlu0 %8966
        %8970 = vset.pattern.permute.xlu0 0
        %8971 = vperm.xlu0 %8970, %v8917
        %v8972 = vpop.permute.xlu0 %8971
        %8975 = vset.pattern.permute.xlu0 0
        %8976 = vperm.xlu0 %8975, %v8918
        %v8977 = vpop.permute.xlu0 %8976
        %8980 = vset.pattern.permute.xlu0 0
        %8981 = vperm.xlu0 %8980, %v8919
        %v8982 = vpop.permute.xlu0 %8981
        %8985 = vset.pattern.permute.xlu0 0
        %8986 = vperm.xlu0 %8985, %v8920
        %v8987 = vpop.permute.xlu0 %8986
        %8990 = vset.pattern.permute.xlu0 0
        %8991 = vperm.xlu0 %8990, %v8921
        %v8992 = vpop.permute.xlu0 %8991
        %8995 = vset.pattern.permute.xlu0 0
        %8996 = vperm.xlu0 %8995, %v8922
        %v8997 = vpop.permute.xlu0 %8996
        %9000 = vset.pattern.permute.xlu0 0
        %9001 = vperm.xlu0 %9000, %v8923
        %v9002 = vpop.permute.xlu0 %9001
        %9005 = vset.pattern.permute.xlu0 0
        %9006 = vperm.xlu0 %9005, %v8924
        %v9007 = vpop.permute.xlu0 %9006
        %9010 = vset.pattern.permute.xlu0 0
        %9011 = vperm.xlu0 %9010, %v8925
        %v9012 = vpop.permute.xlu0 %9011
        %9015 = vset.pattern.permute.xlu0 0
        %9016 = vperm.xlu0 %9015, %v8926
        %v9017 = vpop.permute.xlu0 %9016
        %9020 = vset.pattern.permute.xlu0 0
        %9021 = vperm.xlu0 %9020, %v8927
        %v9022 = vpop.permute.xlu0 %9021
        %9025 = vset.pattern.permute.xlu0 0
        %9026 = vperm.xlu0 %9025, %v8928
        %v9027 = vpop.permute.xlu0 %9026
        %9030 = vset.pattern.permute.xlu0 0
        %9031 = vperm.xlu0 %9030, %v8929
        %v9032 = vpop.permute.xlu0 %9031
        %9035 = vset.pattern.permute.xlu0 0
        %9036 = vperm.xlu0 %9035, %v8930
        %v9037 = vpop.permute.xlu0 %9036
        %9040 = vset.pattern.permute.xlu0 0
        %9041 = vperm.xlu0 %9040, %v8931
        %v9042 = vpop.permute.xlu0 %9041
        %9045 = vset.pattern.permute.xlu0 0
        %9046 = vperm.xlu0 %9045, %v8932
        %v9047 = vpop.permute.xlu0 %9046
        %9050 = vset.pattern.permute.xlu0 0
        %9051 = vperm.xlu0 %9050, %v8933
        %v9052 = vpop.permute.xlu0 %9051
        %9055 = vset.pattern.permute.xlu0 0
        %9056 = vperm.xlu0 %9055, %v8934
        %v9057 = vpop.permute.xlu0 %9056
        %9060 = vset.pattern.permute.xlu0 0
        %9061 = vperm.xlu0 %9060, %v8935
        %v9062 = vpop.permute.xlu0 %9061
        %9065 = vset.pattern.permute.xlu0 0
        %9066 = vperm.xlu0 %9065, %v8936
        %v9067 = vpop.permute.xlu0 %9066
        %9070 = vset.pattern.permute.xlu0 0
        %9071 = vperm.xlu0 %9070, %v8937
        %v9072 = vpop.permute.xlu0 %9071
        %9075 = vset.pattern.permute.xlu0 0
        %9076 = vperm.xlu0 %9075, %v8938
        %v9077 = vpop.permute.xlu0 %9076
        %9080 = vset.pattern.permute.xlu0 0
        %9081 = vperm.xlu0 %9080, %v8939
        %v9082 = vpop.permute.xlu0 %9081
        %9085 = vset.pattern.permute.xlu0 0
        %9086 = vperm.xlu0 %9085, %v8940
        %v9087 = vpop.permute.xlu0 %9086
        %9090 = vset.pattern.permute.xlu0 0
        %9091 = vperm.xlu0 %9090, %v8941
        %v9092 = vpop.permute.xlu0 %9091
        %9095 = vset.pattern.permute.xlu0 0
        %9096 = vperm.xlu0 %9095, %v8942
        %v9097 = vpop.permute.xlu0 %9096
        %9100 = vset.pattern.permute.xlu0 0
        %9101 = vperm.xlu0 %9100, %v8943
        %v9102 = vpop.permute.xlu0 %9101
        %v9104 = vmul.f32 %v8784, %v8947
        %v9105 = vmul.f32 %v8785, %v8947
        %v9106 = vmul.f32 %v8786, %v8947
        %v9107 = vmul.f32 %v8787, %v8947
        %v9108 = vmul.f32 %v8788, %v8952
        %v9109 = vmul.f32 %v8789, %v8952
        %v9110 = vmul.f32 %v8790, %v8952
        %v9111 = vmul.f32 %v8791, %v8952
        %v9112 = vmul.f32 %v8792, %v8957
        %v9113 = vmul.f32 %v8793, %v8957
        %v9114 = vmul.f32 %v8794, %v8957
        %v9115 = vmul.f32 %v8795, %v8957
        %v9116 = vmul.f32 %v8796, %v8962
        %v9117 = vmul.f32 %v8797, %v8962
        %v9118 = vmul.f32 %v8798, %v8962
        %v9119 = vmul.f32 %v8799, %v8962
        %v9120 = vmul.f32 %v8800, %v8967
        %v9121 = vmul.f32 %v8801, %v8967
        %v9122 = vmul.f32 %v8802, %v8967
        %v9123 = vmul.f32 %v8803, %v8967
        %v9124 = vmul.f32 %v8804, %v8972
        %v9125 = vmul.f32 %v8805, %v8972
        %v9126 = vmul.f32 %v8806, %v8972
        %v9127 = vmul.f32 %v8807, %v8972
        %v9128 = vmul.f32 %v8808, %v8977
        %v9129 = vmul.f32 %v8809, %v8977
        %v9130 = vmul.f32 %v8810, %v8977
        %v9131 = vmul.f32 %v8811, %v8977
        %v9132 = vmul.f32 %v8812, %v8982
        %v9133 = vmul.f32 %v8813, %v8982
        %v9134 = vmul.f32 %v8814, %v8982
        %v9135 = vmul.f32 %v8815, %v8982
        %v9136 = vmul.f32 %v8816, %v8987
        %v9137 = vmul.f32 %v8817, %v8987
        %v9138 = vmul.f32 %v8818, %v8987
        %v9139 = vmul.f32 %v8819, %v8987
        %v9140 = vmul.f32 %v8820, %v8992
        %v9141 = vmul.f32 %v8821, %v8992
        %v9142 = vmul.f32 %v8822, %v8992
        %v9143 = vmul.f32 %v8823, %v8992
        %v9144 = vmul.f32 %v8824, %v8997
        %v9145 = vmul.f32 %v8825, %v8997
        %v9146 = vmul.f32 %v8826, %v8997
        %v9147 = vmul.f32 %v8827, %v8997
        %v9148 = vmul.f32 %v8828, %v9002
        %v9149 = vmul.f32 %v8829, %v9002
        %v9150 = vmul.f32 %v8830, %v9002
        %v9151 = vmul.f32 %v8831, %v9002
        %v9152 = vmul.f32 %v8832, %v9007
        %v9153 = vmul.f32 %v8833, %v9007
        %v9154 = vmul.f32 %v8834, %v9007
        %v9155 = vmul.f32 %v8835, %v9007
        %v9156 = vmul.f32 %v8836, %v9012
        %v9157 = vmul.f32 %v8837, %v9012
        %v9158 = vmul.f32 %v8838, %v9012
        %v9159 = vmul.f32 %v8839, %v9012
        %v9160 = vmul.f32 %v8840, %v9017
        %v9161 = vmul.f32 %v8841, %v9017
        %v9162 = vmul.f32 %v8842, %v9017
        %v9163 = vmul.f32 %v8843, %v9017
        %v9164 = vmul.f32 %v8844, %v9022
        %v9165 = vmul.f32 %v8845, %v9022
        %v9166 = vmul.f32 %v8846, %v9022
        %v9167 = vmul.f32 %v8847, %v9022
        %v9168 = vmul.f32 %v8848, %v9027
        %v9169 = vmul.f32 %v8849, %v9027
        %v9170 = vmul.f32 %v8850, %v9027
        %v9171 = vmul.f32 %v8851, %v9027
        %v9172 = vmul.f32 %v8852, %v9032
        %v9173 = vmul.f32 %v8853, %v9032
        %v9174 = vmul.f32 %v8854, %v9032
        %v9175 = vmul.f32 %v8855, %v9032
        %v9176 = vmul.f32 %v8856, %v9037
        %v9177 = vmul.f32 %v8857, %v9037
        %v9178 = vmul.f32 %v8858, %v9037
        %v9179 = vmul.f32 %v8859, %v9037
        %v9180 = vmul.f32 %v8860, %v9042
        %v9181 = vmul.f32 %v8861, %v9042
        %v9182 = vmul.f32 %v8862, %v9042
        %v9183 = vmul.f32 %v8863, %v9042
        %v9184 = vmul.f32 %v8864, %v9047
        %v9185 = vmul.f32 %v8865, %v9047
        %v9186 = vmul.f32 %v8866, %v9047
        %v9187 = vmul.f32 %v8867, %v9047
        %v9188 = vmul.f32 %v8868, %v9052
        %v9189 = vmul.f32 %v8869, %v9052
        %v9190 = vmul.f32 %v8870, %v9052
        %v9191 = vmul.f32 %v8871, %v9052
        %v9192 = vmul.f32 %v8872, %v9057
        %v9193 = vmul.f32 %v8873, %v9057
        %v9194 = vmul.f32 %v8874, %v9057
        %v9195 = vmul.f32 %v8875, %v9057
        %v9196 = vmul.f32 %v8876, %v9062
        %v9197 = vmul.f32 %v8877, %v9062
        %v9198 = vmul.f32 %v8878, %v9062
        %v9199 = vmul.f32 %v8879, %v9062
        %v9200 = vmul.f32 %v8880, %v9067
        %v9201 = vmul.f32 %v8881, %v9067
        %v9202 = vmul.f32 %v8882, %v9067
        %v9203 = vmul.f32 %v8883, %v9067
        %v9204 = vmul.f32 %v8884, %v9072
        %v9205 = vmul.f32 %v8885, %v9072
        %v9206 = vmul.f32 %v8886, %v9072
        %v9207 = vmul.f32 %v8887, %v9072
        %v9208 = vmul.f32 %v8888, %v9077
        %v9209 = vmul.f32 %v8889, %v9077
        %v9210 = vmul.f32 %v8890, %v9077
        %v9211 = vmul.f32 %v8891, %v9077
        %v9212 = vmul.f32 %v8892, %v9082
        %v9213 = vmul.f32 %v8893, %v9082
        %v9214 = vmul.f32 %v8894, %v9082
        %v9215 = vmul.f32 %v8895, %v9082
        %v9216 = vmul.f32 %v8896, %v9087
        %v9217 = vmul.f32 %v8897, %v9087
        %v9218 = vmul.f32 %v8898, %v9087
        %v9219 = vmul.f32 %v8899, %v9087
        %v9220 = vmul.f32 %v8900, %v9092
        %v9221 = vmul.f32 %v8901, %v9092
        %v9222 = vmul.f32 %v8902, %v9092
        %v9223 = vmul.f32 %v8903, %v9092
        %v9224 = vmul.f32 %v8904, %v9097
        %v9225 = vmul.f32 %v8905, %v9097
        %v9226 = vmul.f32 %v8906, %v9097
        %v9227 = vmul.f32 %v8907, %v9097
        %v9228 = vmul.f32 %v8908, %v9102
        %v9229 = vmul.f32 %v8909, %v9102
        %v9230 = vmul.f32 %v8910, %v9102
        %v9231 = vmul.f32 %v8911, %v9102
        %v9232 = vadd.f32 %v9104, %v9108
        %v9233 = vadd.f32 %v9232, %v9112
        %v9234 = vadd.f32 %v9233, %v9116
        %v9235 = vadd.f32 %v9234, %v9120
        %v9236 = vadd.f32 %v9235, %v9124
        %v9237 = vadd.f32 %v9236, %v9128
        %v9238 = vadd.f32 %v9237, %v9132
        %v9239 = vadd.f32 %v9238, %v9136
        %v9240 = vadd.f32 %v9239, %v9140
        %v9241 = vadd.f32 %v9240, %v9144
        %v9242 = vadd.f32 %v9241, %v9148
        %v9243 = vadd.f32 %v9242, %v9152
        %v9244 = vadd.f32 %v9243, %v9156
        %v9245 = vadd.f32 %v9244, %v9160
        %v9246 = vadd.f32 %v9245, %v9164
        %v9247 = vadd.f32 %v9246, %v9168
        %v9248 = vadd.f32 %v9247, %v9172
        %v9249 = vadd.f32 %v9248, %v9176
        %v9250 = vadd.f32 %v9249, %v9180
        %v9251 = vadd.f32 %v9250, %v9184
        %v9252 = vadd.f32 %v9251, %v9188
        %v9253 = vadd.f32 %v9252, %v9192
        %v9254 = vadd.f32 %v9253, %v9196
        %v9255 = vadd.f32 %v9254, %v9200
        %v9256 = vadd.f32 %v9255, %v9204
        %v9257 = vadd.f32 %v9256, %v9208
        %v9258 = vadd.f32 %v9257, %v9212
        %v9259 = vadd.f32 %v9258, %v9216
        %v9260 = vadd.f32 %v9259, %v9220
        %v9261 = vadd.f32 %v9260, %v9224
        %v9262 = vadd.f32 %v9261, %v9228
        %v9263 = vrot.slane %v9262, 4
        %v9264 = vadd.f32 %v9262, %v9263
        %v9265 = vrot.slane %v9264, 2
        %v9266 = vadd.f32 %v9264, %v9265
        %v9267 = vrot.slane %v9266, 1
        %v9268 = vadd.f32 %v9266, %v9267
        %v9269 = vadd.f32 %v9105, %v9109
        %v9270 = vadd.f32 %v9269, %v9113
        %v9271 = vadd.f32 %v9270, %v9117
        %v9272 = vadd.f32 %v9271, %v9121
        %v9273 = vadd.f32 %v9272, %v9125
        %v9274 = vadd.f32 %v9273, %v9129
        %v9275 = vadd.f32 %v9274, %v9133
        %v9276 = vadd.f32 %v9275, %v9137
        %v9277 = vadd.f32 %v9276, %v9141
        %v9278 = vadd.f32 %v9277, %v9145
        %v9279 = vadd.f32 %v9278, %v9149
        %v9280 = vadd.f32 %v9279, %v9153
        %v9281 = vadd.f32 %v9280, %v9157
        %v9282 = vadd.f32 %v9281, %v9161
        %v9283 = vadd.f32 %v9282, %v9165
        %v9284 = vadd.f32 %v9283, %v9169
        %v9285 = vadd.f32 %v9284, %v9173
        %v9286 = vadd.f32 %v9285, %v9177
        %v9287 = vadd.f32 %v9286, %v9181
        %v9288 = vadd.f32 %v9287, %v9185
        %v9289 = vadd.f32 %v9288, %v9189
        %v9290 = vadd.f32 %v9289, %v9193
        %v9291 = vadd.f32 %v9290, %v9197
        %v9292 = vadd.f32 %v9291, %v9201
        %v9293 = vadd.f32 %v9292, %v9205
        %v9294 = vadd.f32 %v9293, %v9209
        %v9295 = vadd.f32 %v9294, %v9213
        %v9296 = vadd.f32 %v9295, %v9217
        %v9297 = vadd.f32 %v9296, %v9221
        %v9298 = vadd.f32 %v9297, %v9225
        %v9299 = vadd.f32 %v9298, %v9229
        %v9300 = vrot.slane %v9299, 4
        %v9301 = vadd.f32 %v9299, %v9300
        %v9302 = vrot.slane %v9301, 2
        %v9303 = vadd.f32 %v9301, %v9302
        %v9304 = vrot.slane %v9303, 1
        %v9305 = vadd.f32 %v9303, %v9304
        %v9306 = vadd.f32 %v9106, %v9110
        %v9307 = vadd.f32 %v9306, %v9114
        %v9308 = vadd.f32 %v9307, %v9118
        %v9309 = vadd.f32 %v9308, %v9122
        %v9310 = vadd.f32 %v9309, %v9126
        %v9311 = vadd.f32 %v9310, %v9130
        %v9312 = vadd.f32 %v9311, %v9134
        %v9313 = vadd.f32 %v9312, %v9138
        %v9314 = vadd.f32 %v9313, %v9142
        %v9315 = vadd.f32 %v9314, %v9146
        %v9316 = vadd.f32 %v9315, %v9150
        %v9317 = vadd.f32 %v9316, %v9154
        %v9318 = vadd.f32 %v9317, %v9158
        %v9319 = vadd.f32 %v9318, %v9162
        %v9320 = vadd.f32 %v9319, %v9166
        %v9321 = vadd.f32 %v9320, %v9170
        %v9322 = vadd.f32 %v9321, %v9174
        %v9323 = vadd.f32 %v9322, %v9178
        %v9324 = vadd.f32 %v9323, %v9182
        %v9325 = vadd.f32 %v9324, %v9186
        %v9326 = vadd.f32 %v9325, %v9190
        %v9327 = vadd.f32 %v9326, %v9194
        %v9328 = vadd.f32 %v9327, %v9198
        %v9329 = vadd.f32 %v9328, %v9202
        %v9330 = vadd.f32 %v9329, %v9206
        %v9331 = vadd.f32 %v9330, %v9210
        %v9332 = vadd.f32 %v9331, %v9214
        %v9333 = vadd.f32 %v9332, %v9218
        %v9334 = vadd.f32 %v9333, %v9222
        %v9335 = vadd.f32 %v9334, %v9226
        %v9336 = vadd.f32 %v9335, %v9230
        %v9337 = vrot.slane %v9336, 4
        %v9338 = vadd.f32 %v9336, %v9337
        %v9339 = vrot.slane %v9338, 2
        %v9340 = vadd.f32 %v9338, %v9339
        %v9341 = vrot.slane %v9340, 1
        %v9342 = vadd.f32 %v9340, %v9341
        %v9343 = vadd.f32 %v9107, %v9111
        %v9344 = vadd.f32 %v9343, %v9115
        %v9345 = vadd.f32 %v9344, %v9119
        %v9346 = vadd.f32 %v9345, %v9123
        %v9347 = vadd.f32 %v9346, %v9127
        %v9348 = vadd.f32 %v9347, %v9131
        %v9349 = vadd.f32 %v9348, %v9135
        %v9350 = vadd.f32 %v9349, %v9139
        %v9351 = vadd.f32 %v9350, %v9143
        %v9352 = vadd.f32 %v9351, %v9147
        %v9353 = vadd.f32 %v9352, %v9151
        %v9354 = vadd.f32 %v9353, %v9155
        %v9355 = vadd.f32 %v9354, %v9159
        %v9356 = vadd.f32 %v9355, %v9163
        %v9357 = vadd.f32 %v9356, %v9167
        %v9358 = vadd.f32 %v9357, %v9171
        %v9359 = vadd.f32 %v9358, %v9175
        %v9360 = vadd.f32 %v9359, %v9179
        %v9361 = vadd.f32 %v9360, %v9183
        %v9362 = vadd.f32 %v9361, %v9187
        %v9363 = vadd.f32 %v9362, %v9191
        %v9364 = vadd.f32 %v9363, %v9195
        %v9365 = vadd.f32 %v9364, %v9199
        %v9366 = vadd.f32 %v9365, %v9203
        %v9367 = vadd.f32 %v9366, %v9207
        %v9368 = vadd.f32 %v9367, %v9211
        %v9369 = vadd.f32 %v9368, %v9215
        %v9370 = vadd.f32 %v9369, %v9219
        %v9371 = vadd.f32 %v9370, %v9223
        %v9372 = vadd.f32 %v9371, %v9227
        %v9373 = vadd.f32 %v9372, %v9231
        %v9374 = vrot.slane %v9373, 4
        %v9375 = vadd.f32 %v9373, %v9374
        %v9376 = vrot.slane %v9375, 2
        %v9377 = vadd.f32 %v9375, %v9376
        %v9378 = vrot.slane %v9377, 1
        %v9379 = vadd.f32 %v9377, %v9378
        %9380 = vset.pattern.permute.xlu0 1
        %9381 = vperm.xlu0 %9380, %v8912
        %v9382 = vpop.permute.xlu0 %9381
        %9384 = vset.pattern.permute.xlu0 1
        %9385 = vperm.xlu0 %9384, %v8913
        %v9386 = vpop.permute.xlu0 %9385
        %9388 = vset.pattern.permute.xlu0 1
        %9389 = vperm.xlu0 %9388, %v8914
        %v9390 = vpop.permute.xlu0 %9389
        %9392 = vset.pattern.permute.xlu0 1
        %9393 = vperm.xlu0 %9392, %v8915
        %v9394 = vpop.permute.xlu0 %9393
        %9396 = vset.pattern.permute.xlu0 1
        %9397 = vperm.xlu0 %9396, %v8916
        %v9398 = vpop.permute.xlu0 %9397
        %9400 = vset.pattern.permute.xlu0 1
        %9401 = vperm.xlu0 %9400, %v8917
        %v9402 = vpop.permute.xlu0 %9401
        %9404 = vset.pattern.permute.xlu0 1
        %9405 = vperm.xlu0 %9404, %v8918
        %v9406 = vpop.permute.xlu0 %9405
        %9408 = vset.pattern.permute.xlu0 1
        %9409 = vperm.xlu0 %9408, %v8919
        %v9410 = vpop.permute.xlu0 %9409
        %9412 = vset.pattern.permute.xlu0 1
        %9413 = vperm.xlu0 %9412, %v8920
        %v9414 = vpop.permute.xlu0 %9413
        %9416 = vset.pattern.permute.xlu0 1
        %9417 = vperm.xlu0 %9416, %v8921
        %v9418 = vpop.permute.xlu0 %9417
        %9420 = vset.pattern.permute.xlu0 1
        %9421 = vperm.xlu0 %9420, %v8922
        %v9422 = vpop.permute.xlu0 %9421
        %9424 = vset.pattern.permute.xlu0 1
        %9425 = vperm.xlu0 %9424, %v8923
        %v9426 = vpop.permute.xlu0 %9425
        %9428 = vset.pattern.permute.xlu0 1
        %9429 = vperm.xlu0 %9428, %v8924
        %v9430 = vpop.permute.xlu0 %9429
        %9432 = vset.pattern.permute.xlu0 1
        %9433 = vperm.xlu0 %9432, %v8925
        %v9434 = vpop.permute.xlu0 %9433
        %9436 = vset.pattern.permute.xlu0 1
        %9437 = vperm.xlu0 %9436, %v8926
        %v9438 = vpop.permute.xlu0 %9437
        %9440 = vset.pattern.permute.xlu0 1
        %9441 = vperm.xlu0 %9440, %v8927
        %v9442 = vpop.permute.xlu0 %9441
        %9444 = vset.pattern.permute.xlu0 1
        %9445 = vperm.xlu0 %9444, %v8928
        %v9446 = vpop.permute.xlu0 %9445
        %9448 = vset.pattern.permute.xlu0 1
        %9449 = vperm.xlu0 %9448, %v8929
        %v9450 = vpop.permute.xlu0 %9449
        %9452 = vset.pattern.permute.xlu0 1
        %9453 = vperm.xlu0 %9452, %v8930
        %v9454 = vpop.permute.xlu0 %9453
        %9456 = vset.pattern.permute.xlu0 1
        %9457 = vperm.xlu0 %9456, %v8931
        %v9458 = vpop.permute.xlu0 %9457
        %9460 = vset.pattern.permute.xlu0 1
        %9461 = vperm.xlu0 %9460, %v8932
        %v9462 = vpop.permute.xlu0 %9461
        %9464 = vset.pattern.permute.xlu0 1
        %9465 = vperm.xlu0 %9464, %v8933
        %v9466 = vpop.permute.xlu0 %9465
        %9468 = vset.pattern.permute.xlu0 1
        %9469 = vperm.xlu0 %9468, %v8934
        %v9470 = vpop.permute.xlu0 %9469
        %9472 = vset.pattern.permute.xlu0 1
        %9473 = vperm.xlu0 %9472, %v8935
        %v9474 = vpop.permute.xlu0 %9473
        %9476 = vset.pattern.permute.xlu0 1
        %9477 = vperm.xlu0 %9476, %v8936
        %v9478 = vpop.permute.xlu0 %9477
        %9480 = vset.pattern.permute.xlu0 1
        %9481 = vperm.xlu0 %9480, %v8937
        %v9482 = vpop.permute.xlu0 %9481
        %9484 = vset.pattern.permute.xlu0 1
        %9485 = vperm.xlu0 %9484, %v8938
        %v9486 = vpop.permute.xlu0 %9485
        %9488 = vset.pattern.permute.xlu0 1
        %9489 = vperm.xlu0 %9488, %v8939
        %v9490 = vpop.permute.xlu0 %9489
        %9492 = vset.pattern.permute.xlu0 1
        %9493 = vperm.xlu0 %9492, %v8940
        %v9494 = vpop.permute.xlu0 %9493
        %9496 = vset.pattern.permute.xlu0 1
        %9497 = vperm.xlu0 %9496, %v8941
        %v9498 = vpop.permute.xlu0 %9497
        %9500 = vset.pattern.permute.xlu0 1
        %9501 = vperm.xlu0 %9500, %v8942
        %v9502 = vpop.permute.xlu0 %9501
        %9504 = vset.pattern.permute.xlu0 1
        %9505 = vperm.xlu0 %9504, %v8943
        %v9506 = vpop.permute.xlu0 %9505
        %v9508 = vmul.f32 %v8784, %v9382
        %v9509 = vmul.f32 %v8785, %v9382
        %v9510 = vmul.f32 %v8786, %v9382
        %v9511 = vmul.f32 %v8787, %v9382
        %v9512 = vmul.f32 %v8788, %v9386
        %v9513 = vmul.f32 %v8789, %v9386
        %v9514 = vmul.f32 %v8790, %v9386
        %v9515 = vmul.f32 %v8791, %v9386
        %v9516 = vmul.f32 %v8792, %v9390
        %v9517 = vmul.f32 %v8793, %v9390
        %v9518 = vmul.f32 %v8794, %v9390
        %v9519 = vmul.f32 %v8795, %v9390
        %v9520 = vmul.f32 %v8796, %v9394
        %v9521 = vmul.f32 %v8797, %v9394
        %v9522 = vmul.f32 %v8798, %v9394
        %v9523 = vmul.f32 %v8799, %v9394
        %v9524 = vmul.f32 %v8800, %v9398
        %v9525 = vmul.f32 %v8801, %v9398
        %v9526 = vmul.f32 %v8802, %v9398
        %v9527 = vmul.f32 %v8803, %v9398
        %v9528 = vmul.f32 %v8804, %v9402
        %v9529 = vmul.f32 %v8805, %v9402
        %v9530 = vmul.f32 %v8806, %v9402
        %v9531 = vmul.f32 %v8807, %v9402
        %v9532 = vmul.f32 %v8808, %v9406
        %v9533 = vmul.f32 %v8809, %v9406
        %v9534 = vmul.f32 %v8810, %v9406
        %v9535 = vmul.f32 %v8811, %v9406
        %v9536 = vmul.f32 %v8812, %v9410
        %v9537 = vmul.f32 %v8813, %v9410
        %v9538 = vmul.f32 %v8814, %v9410
        %v9539 = vmul.f32 %v8815, %v9410
        %v9540 = vmul.f32 %v8816, %v9414
        %v9541 = vmul.f32 %v8817, %v9414
        %v9542 = vmul.f32 %v8818, %v9414
        %v9543 = vmul.f32 %v8819, %v9414
        %v9544 = vmul.f32 %v8820, %v9418
        %v9545 = vmul.f32 %v8821, %v9418
        %v9546 = vmul.f32 %v8822, %v9418
        %v9547 = vmul.f32 %v8823, %v9418
        %v9548 = vmul.f32 %v8824, %v9422
        %v9549 = vmul.f32 %v8825, %v9422
        %v9550 = vmul.f32 %v8826, %v9422
        %v9551 = vmul.f32 %v8827, %v9422
        %v9552 = vmul.f32 %v8828, %v9426
        %v9553 = vmul.f32 %v8829, %v9426
        %v9554 = vmul.f32 %v8830, %v9426
        %v9555 = vmul.f32 %v8831, %v9426
        %v9556 = vmul.f32 %v8832, %v9430
        %v9557 = vmul.f32 %v8833, %v9430
        %v9558 = vmul.f32 %v8834, %v9430
        %v9559 = vmul.f32 %v8835, %v9430
        %v9560 = vmul.f32 %v8836, %v9434
        %v9561 = vmul.f32 %v8837, %v9434
        %v9562 = vmul.f32 %v8838, %v9434
        %v9563 = vmul.f32 %v8839, %v9434
        %v9564 = vmul.f32 %v8840, %v9438
        %v9565 = vmul.f32 %v8841, %v9438
        %v9566 = vmul.f32 %v8842, %v9438
        %v9567 = vmul.f32 %v8843, %v9438
        %v9568 = vmul.f32 %v8844, %v9442
        %v9569 = vmul.f32 %v8845, %v9442
        %v9570 = vmul.f32 %v8846, %v9442
        %v9571 = vmul.f32 %v8847, %v9442
        %v9572 = vmul.f32 %v8848, %v9446
        %v9573 = vmul.f32 %v8849, %v9446
        %v9574 = vmul.f32 %v8850, %v9446
        %v9575 = vmul.f32 %v8851, %v9446
        %v9576 = vmul.f32 %v8852, %v9450
        %v9577 = vmul.f32 %v8853, %v9450
        %v9578 = vmul.f32 %v8854, %v9450
        %v9579 = vmul.f32 %v8855, %v9450
        %v9580 = vmul.f32 %v8856, %v9454
        %v9581 = vmul.f32 %v8857, %v9454
        %v9582 = vmul.f32 %v8858, %v9454
        %v9583 = vmul.f32 %v8859, %v9454
        %v9584 = vmul.f32 %v8860, %v9458
        %v9585 = vmul.f32 %v8861, %v9458
        %v9586 = vmul.f32 %v8862, %v9458
        %v9587 = vmul.f32 %v8863, %v9458
        %v9588 = vmul.f32 %v8864, %v9462
        %v9589 = vmul.f32 %v8865, %v9462
        %v9590 = vmul.f32 %v8866, %v9462
        %v9591 = vmul.f32 %v8867, %v9462
        %v9592 = vmul.f32 %v8868, %v9466
        %v9593 = vmul.f32 %v8869, %v9466
        %v9594 = vmul.f32 %v8870, %v9466
        %v9595 = vmul.f32 %v8871, %v9466
        %v9596 = vmul.f32 %v8872, %v9470
        %v9597 = vmul.f32 %v8873, %v9470
        %v9598 = vmul.f32 %v8874, %v9470
        %v9599 = vmul.f32 %v8875, %v9470
        %v9600 = vmul.f32 %v8876, %v9474
        %v9601 = vmul.f32 %v8877, %v9474
        %v9602 = vmul.f32 %v8878, %v9474
        %v9603 = vmul.f32 %v8879, %v9474
        %v9604 = vmul.f32 %v8880, %v9478
        %v9605 = vmul.f32 %v8881, %v9478
        %v9606 = vmul.f32 %v8882, %v9478
        %v9607 = vmul.f32 %v8883, %v9478
        %v9608 = vmul.f32 %v8884, %v9482
        %v9609 = vmul.f32 %v8885, %v9482
        %v9610 = vmul.f32 %v8886, %v9482
        %v9611 = vmul.f32 %v8887, %v9482
        %v9612 = vmul.f32 %v8888, %v9486
        %v9613 = vmul.f32 %v8889, %v9486
        %v9614 = vmul.f32 %v8890, %v9486
        %v9615 = vmul.f32 %v8891, %v9486
        %v9616 = vmul.f32 %v8892, %v9490
        %v9617 = vmul.f32 %v8893, %v9490
        %v9618 = vmul.f32 %v8894, %v9490
        %v9619 = vmul.f32 %v8895, %v9490
        %v9620 = vmul.f32 %v8896, %v9494
        %v9621 = vmul.f32 %v8897, %v9494
        %v9622 = vmul.f32 %v8898, %v9494
        %v9623 = vmul.f32 %v8899, %v9494
        %v9624 = vmul.f32 %v8900, %v9498
        %v9625 = vmul.f32 %v8901, %v9498
        %v9626 = vmul.f32 %v8902, %v9498
        %v9627 = vmul.f32 %v8903, %v9498
        %v9628 = vmul.f32 %v8904, %v9502
        %v9629 = vmul.f32 %v8905, %v9502
        %v9630 = vmul.f32 %v8906, %v9502
        %v9631 = vmul.f32 %v8907, %v9502
        %v9632 = vmul.f32 %v8908, %v9506
        %v9633 = vmul.f32 %v8909, %v9506
        %v9634 = vmul.f32 %v8910, %v9506
        %v9635 = vmul.f32 %v8911, %v9506
        %v9636 = vadd.f32 %v9508, %v9512
        %v9637 = vadd.f32 %v9636, %v9516
        %v9638 = vadd.f32 %v9637, %v9520
        %v9639 = vadd.f32 %v9638, %v9524
        %v9640 = vadd.f32 %v9639, %v9528
        %v9641 = vadd.f32 %v9640, %v9532
        %v9642 = vadd.f32 %v9641, %v9536
        %v9643 = vadd.f32 %v9642, %v9540
        %v9644 = vadd.f32 %v9643, %v9544
        %v9645 = vadd.f32 %v9644, %v9548
        %v9646 = vadd.f32 %v9645, %v9552
        %v9647 = vadd.f32 %v9646, %v9556
        %v9648 = vadd.f32 %v9647, %v9560
        %v9649 = vadd.f32 %v9648, %v9564
        %v9650 = vadd.f32 %v9649, %v9568
        %v9651 = vadd.f32 %v9650, %v9572
        %v9652 = vadd.f32 %v9651, %v9576
        %v9653 = vadd.f32 %v9652, %v9580
        %v9654 = vadd.f32 %v9653, %v9584
        %v9655 = vadd.f32 %v9654, %v9588
        %v9656 = vadd.f32 %v9655, %v9592
        %v9657 = vadd.f32 %v9656, %v9596
        %v9658 = vadd.f32 %v9657, %v9600
        %v9659 = vadd.f32 %v9658, %v9604
        %v9660 = vadd.f32 %v9659, %v9608
        %v9661 = vadd.f32 %v9660, %v9612
        %v9662 = vadd.f32 %v9661, %v9616
        %v9663 = vadd.f32 %v9662, %v9620
        %v9664 = vadd.f32 %v9663, %v9624
        %v9665 = vadd.f32 %v9664, %v9628
        %v9666 = vadd.f32 %v9665, %v9632
        %v9667 = vrot.slane %v9666, 4
        %v9668 = vadd.f32 %v9666, %v9667
        %v9669 = vrot.slane %v9668, 2
        %v9670 = vadd.f32 %v9668, %v9669
        %v9671 = vrot.slane %v9670, 1
        %v9672 = vadd.f32 %v9670, %v9671
        %v9673 = vadd.f32 %v9509, %v9513
        %v9674 = vadd.f32 %v9673, %v9517
        %v9675 = vadd.f32 %v9674, %v9521
        %v9676 = vadd.f32 %v9675, %v9525
        %v9677 = vadd.f32 %v9676, %v9529
        %v9678 = vadd.f32 %v9677, %v9533
        %v9679 = vadd.f32 %v9678, %v9537
        %v9680 = vadd.f32 %v9679, %v9541
        %v9681 = vadd.f32 %v9680, %v9545
        %v9682 = vadd.f32 %v9681, %v9549
        %v9683 = vadd.f32 %v9682, %v9553
        %v9684 = vadd.f32 %v9683, %v9557
        %v9685 = vadd.f32 %v9684, %v9561
        %v9686 = vadd.f32 %v9685, %v9565
        %v9687 = vadd.f32 %v9686, %v9569
        %v9688 = vadd.f32 %v9687, %v9573
        %v9689 = vadd.f32 %v9688, %v9577
        %v9690 = vadd.f32 %v9689, %v9581
        %v9691 = vadd.f32 %v9690, %v9585
        %v9692 = vadd.f32 %v9691, %v9589
        %v9693 = vadd.f32 %v9692, %v9593
        %v9694 = vadd.f32 %v9693, %v9597
        %v9695 = vadd.f32 %v9694, %v9601
        %v9696 = vadd.f32 %v9695, %v9605
        %v9697 = vadd.f32 %v9696, %v9609
        %v9698 = vadd.f32 %v9697, %v9613
        %v9699 = vadd.f32 %v9698, %v9617
        %v9700 = vadd.f32 %v9699, %v9621
        %v9701 = vadd.f32 %v9700, %v9625
        %v9702 = vadd.f32 %v9701, %v9629
        %v9703 = vadd.f32 %v9702, %v9633
        %v9704 = vrot.slane %v9703, 4
        %v9705 = vadd.f32 %v9703, %v9704
        %v9706 = vrot.slane %v9705, 2
        %v9707 = vadd.f32 %v9705, %v9706
        %v9708 = vrot.slane %v9707, 1
        %v9709 = vadd.f32 %v9707, %v9708
        %v9710 = vadd.f32 %v9510, %v9514
        %v9711 = vadd.f32 %v9710, %v9518
        %v9712 = vadd.f32 %v9711, %v9522
        %v9713 = vadd.f32 %v9712, %v9526
        %v9714 = vadd.f32 %v9713, %v9530
        %v9715 = vadd.f32 %v9714, %v9534
        %v9716 = vadd.f32 %v9715, %v9538
        %v9717 = vadd.f32 %v9716, %v9542
        %v9718 = vadd.f32 %v9717, %v9546
        %v9719 = vadd.f32 %v9718, %v9550
        %v9720 = vadd.f32 %v9719, %v9554
        %v9721 = vadd.f32 %v9720, %v9558
        %v9722 = vadd.f32 %v9721, %v9562
        %v9723 = vadd.f32 %v9722, %v9566
        %v9724 = vadd.f32 %v9723, %v9570
        %v9725 = vadd.f32 %v9724, %v9574
        %v9726 = vadd.f32 %v9725, %v9578
        %v9727 = vadd.f32 %v9726, %v9582
        %v9728 = vadd.f32 %v9727, %v9586
        %v9729 = vadd.f32 %v9728, %v9590
        %v9730 = vadd.f32 %v9729, %v9594
        %v9731 = vadd.f32 %v9730, %v9598
        %v9732 = vadd.f32 %v9731, %v9602
        %v9733 = vadd.f32 %v9732, %v9606
        %v9734 = vadd.f32 %v9733, %v9610
        %v9735 = vadd.f32 %v9734, %v9614
        %v9736 = vadd.f32 %v9735, %v9618
        %v9737 = vadd.f32 %v9736, %v9622
        %v9738 = vadd.f32 %v9737, %v9626
        %v9739 = vadd.f32 %v9738, %v9630
        %v9740 = vadd.f32 %v9739, %v9634
        %v9741 = vrot.slane %v9740, 4
        %v9742 = vadd.f32 %v9740, %v9741
        %v9743 = vrot.slane %v9742, 2
        %v9744 = vadd.f32 %v9742, %v9743
        %v9745 = vrot.slane %v9744, 1
        %v9746 = vadd.f32 %v9744, %v9745
        %v9747 = vadd.f32 %v9511, %v9515
        %v9748 = vadd.f32 %v9747, %v9519
        %v9749 = vadd.f32 %v9748, %v9523
        %v9750 = vadd.f32 %v9749, %v9527
        %v9751 = vadd.f32 %v9750, %v9531
        %v9752 = vadd.f32 %v9751, %v9535
        %v9753 = vadd.f32 %v9752, %v9539
        %v9754 = vadd.f32 %v9753, %v9543
        %v9755 = vadd.f32 %v9754, %v9547
        %v9756 = vadd.f32 %v9755, %v9551
        %v9757 = vadd.f32 %v9756, %v9555
        %v9758 = vadd.f32 %v9757, %v9559
        %v9759 = vadd.f32 %v9758, %v9563
        %v9760 = vadd.f32 %v9759, %v9567
        %v9761 = vadd.f32 %v9760, %v9571
        %v9762 = vadd.f32 %v9761, %v9575
        %v9763 = vadd.f32 %v9762, %v9579
        %v9764 = vadd.f32 %v9763, %v9583
        %v9765 = vadd.f32 %v9764, %v9587
        %v9766 = vadd.f32 %v9765, %v9591
        %v9767 = vadd.f32 %v9766, %v9595
        %v9768 = vadd.f32 %v9767, %v9599
        %v9769 = vadd.f32 %v9768, %v9603
        %v9770 = vadd.f32 %v9769, %v9607
        %v9771 = vadd.f32 %v9770, %v9611
        %v9772 = vadd.f32 %v9771, %v9615
        %v9773 = vadd.f32 %v9772, %v9619
        %v9774 = vadd.f32 %v9773, %v9623
        %v9775 = vadd.f32 %v9774, %v9627
        %v9776 = vadd.f32 %v9775, %v9631
        %v9777 = vadd.f32 %v9776, %v9635
        %v9778 = vrot.slane %v9777, 4
        %v9779 = vadd.f32 %v9777, %v9778
        %v9780 = vrot.slane %v9779, 2
        %v9781 = vadd.f32 %v9779, %v9780
        %v9782 = vrot.slane %v9781, 1
        %v9783 = vadd.f32 %v9781, %v9782
        %vm9784 = vcmask 1040384
        %v9785 = vsel %vm9784, %v9268, %v9672
        %v9786 = vsel %vm9784, %v9305, %v9709
        %v9787 = vsel %vm9784, %v9342, %v9746
        %v9788 = vsel %vm9784, %v9379, %v9783
        %v9789 = vld [vmem:[%s6] sm:$0x3]
        %9791 = vset.pattern.permute.xlu0 0
        %9792 = vperm.xlu0 %9791, %v9789
        %v9793 = vpop.permute.xlu0 %9792
        %v9795 = vadd.f32 %v9785, %v9793
        %v9796 = vadd.f32 %v9786, %v9793
        %v9797 = vadd.f32 %v9787, %v9793
        %v9798 = vadd.f32 %v9788, %v9793
        %v9803 = vcombine.low %v9795, %v9796
        %v9804 = vcombine.low %v9797, %v9798
        %v9806 = vunpack.c.l.s4 1983009808
        %v9807 = vunpack.c.0.s8 %v9806
        %v9808 = vlaneseq
        %v9809 = vshrl.u32 %v9808, 7
        %v9810 = vsub.s32 %v9807, %v9809
        %v9811 = vrot.slane %v9803, %v9810
        %v9813 = vunpack.c.l.s4 1983009808
        %v9814 = vunpack.c.0.s8 %v9813
        %v9815 = vlaneseq
        %v9816 = vshrl.u32 %v9815, 7
        %v9817 = vsub.s32 %v9814, %v9816
        %v9818 = vrot.slane %v9804, %v9817
        %v9819 = vcombine.low %v9811, %v9818
        %9821 = vst [vmem:[%s361] sm:$0xff] %v9819
        %s9822 = smul.u32 4, %s18
        %p9823 = scmp.lt.s32.totalorder %s9822, 7
        %s9824 = scalar_select %p9823, %s9822, 7
        %s9825 = smul.addr %s9824, 2
        %s9826 = scalar_lea.vmem %s7, %s9825
        // Predicated region
        $region72: #{mlp_forward.1} parent=66 // pred_check
          %p9827 = pneg %p188
        $region73: #{mlp_forward.1} parent=66 // pred_check_branch
          %9829 = sbr.rel (%p9827) target = $region75
        $region74: #{mlp_forward.1} parent=66 // pred_region
          %s9830 = smul.u32 4, %s18
        $region75: #{mlp_forward.1} parent=66 // pred_fallthru
          _
      $region67: #{mlp_forward.1} parent=5 // pred_fallthru
        _
      %p9831 = scmp.le.s32.totalorder 2, %s13
      // Predicated region
      $region76: #{mlp_forward.1} parent=5 // pred_check
        %p9832 = pneg %p9831
      $region77: #{mlp_forward.1} parent=5 // pred_check_branch
        %9834 = sbr.rel (%p9832) target = $region79
      $region78: #{mlp_forward.1} parent=5 // pred_region
        %s9835 = ssub.s32 %s13, 2
        // Predicated region
        $region80: #{mlp_forward.1} parent=78 // pred_check
          %p9836 = pneg %p194
        $region81: #{mlp_forward.1} parent=78 // pred_check_branch
          %9838 = sbr.rel (%p9836) target = $region83
        $region82: #{mlp_forward.1} parent=78 // pred_region
          %s9839 = smul.u32 4, %s19
          %p9840 = scmp.lt.s32.totalorder %s9839, 7
          %s9841 = scalar_select %p9840, %s9839, 7
          %s9842 = smul.addr %s9841, 2
          %s9843 = scalar_lea.vmem %s7, %s9842
        $region83: #{mlp_forward.1} parent=78 // pred_fallthru
          _
      $region79: #{mlp_forward.1} parent=5 // pred_fallthru
        _
    $region6: #{mlp_forward.1} parent=1 // loop_footer
      %s17 = sadd.s32 1, %s13
    $region7: #{mlp_forward.1} parent=1 // loop_footer_branch
      %12 = sbr.rel target = $region3
    $region8: #{mlp_forward.1} parent=1 // loop_exit
      _

</llo_original>
